<compile_context>
chip_gen: v6e
topology: v6e:2x2x1
jax: 0.10.0
libtpu: 0.0.40
codegen_flags: <defaults>
</compile_context>

<pallas_src>
import math

import jax
import jax.numpy as jnp
from jax import lax
from jax.experimental import pallas as pl
from jax.experimental.pallas import tpu as pltpu


def _vmem_limit_bytes():
    """Generation-aware scoped-VMEM limit: ~3/4 of physical, capped at 96 MiB.
    v5e/v6e (128 MiB physical) -> 96 MiB; v7x (64 MiB physical) -> 48 MiB."""
    cap = 64 * 1024 * 1024
    try:
        info = pltpu.get_tpu_info()
        cap = int(getattr(info, "vmem_capacity_bytes", cap)) or cap
    except Exception:
        pass
    return min(96 * 1024 * 1024, (cap * 3) // 4)


VMEM_LIMIT_BYTES = _vmem_limit_bytes()


def _pick_tile(dim, preferred, align):
    """Largest tile <= preferred that divides `dim` and is a multiple of
    `align`; falls back to the full dim (always a legal block size)."""
    if dim <= preferred:
        return dim
    t = (preferred // align) * align
    while t > align and dim % t:
        t -= align
    return t if (t >= align and dim % t == 0) else dim


# --------------------------- blocked matmul kernels --------------------------
def _matmul_bias_kernel(x_ref, w_ref, b_ref, o_ref):
    # x: (tM, K) bf16, w: (K, tN) bf16, b: (1, tN) f32 -> o: (tM, tN)
    o_ref[...] = (jnp.dot(x_ref[...], w_ref[...],
                          preferred_element_type=jnp.float32)
                  + b_ref[...]).astype(o_ref.dtype)


def _matmul_kernel(x_ref, w_ref, o_ref):
    o_ref[...] = jnp.dot(x_ref[...], w_ref[...],
                         preferred_element_type=jnp.float32).astype(o_ref.dtype)


def _blocked_matmul(x, w_t, bias=None, *, tile_m=512, tile_n=512,
                    out_dtype=jnp.float32):
    """out = x @ w_t (+ bias), grid-blocked over (cols, rows), bf16 MXU inputs.

    Grid order is weight-column OUTER / row INNER so a weight block is
    streamed from HBM once and stays resident while all row tiles sweep it
    (key for the lm_head where W_lm dominates HBM traffic).

    K (= d_model = hidden_size) stays un-blocked (a single 128-lane tile).
    TODO(synk): add a K grid axis + f32 accumulator scratch if K is blocked.
    """
    M, K = x.shape
    K2, N = w_t.shape
    assert K == K2
    tM = _pick_tile(M, tile_m, 16)     # 16: bf16 packed-sublane alignment
    tN = _pick_tile(N, tile_n, 128)
    grid = (N // tN, M // tM)          # vocab/cols outer (slow), rows inner
    in_specs = [pl.BlockSpec((tM, K), lambda j, i: (i, 0)),
                pl.BlockSpec((K, tN), lambda j, i: (0, j))]
    args = [x, w_t]
    kernel = _matmul_kernel
    if bias is not None:
        in_specs.append(pl.BlockSpec((1, tN), lambda j, i: (0, j)))
        args.append(bias)
        kernel = _matmul_bias_kernel
    return pl.pallas_call(
        kernel,
        out_shape=jax.ShapeDtypeStruct((M, N), out_dtype),
        grid=grid,
        in_specs=in_specs,
        out_specs=pl.BlockSpec((tM, tN), lambda j, i: (i, j)),
        compiler_params=pltpu.CompilerParams(
            dimension_semantics=("parallel", "parallel"),
            vmem_limit_bytes=VMEM_LIMIT_BYTES),
    )(*args)


# ------------------------------- LSTM kernel ---------------------------------
def _lstm_kernel(gx_ref, whh_ref, h0_ref, c0_ref,
                 out_ref, hout_ref, cout_ref, h_scr, c_scr):
    # gx_ref  : (tT, B, 4H) bf16  precomputed x @ W_ih^T + (b_ih + b_hh)
    # whh_ref : (H, 4H)     bf16  W_hh^T (resident across the whole grid)
    # h0/c0   : (B, H)      f32   initial state
    # out_ref : (B, tT, H)  bf16  hidden states, written batch-first
    # hout/cout: (B, H)     f32   running final state
    # h_scr/c_scr: (B, H)   f32   state carried across time chunks
    ct = pl.program_id(0)

    @pl.when(ct == 0)
    def _():
        h_scr[...] = h0_ref[...]
        c_scr[...] = c0_ref[...]

    H = h_scr.shape[-1]
    tT = gx_ref.shape[0]

    def step(t, h, c):
        # W_hh^T is re-read from VMEM each step: hoisting a 128x512 bf16 tile
        # into vregs would pin ~32/64 vregs across the whole unroll (spills).
        # TODO(synk): pltpu.matmul_push_rhs once per chunk to keep W_hh staged
        # in the MXU instead of re-pushing the weight every timestep.
        gates = gx_ref[t].astype(jnp.float32) + jnp.dot(
            h.astype(jnp.bfloat16), whh_ref[...],
            preferred_element_type=jnp.float32)
        # gate order i, f, g, o; slices are 128-lane aligned (H % 128 == 0);
        # gate math in f32 (v5e has no bf16 VPU/EUP).
        i_g = jax.nn.sigmoid(gates[:, 0 * H:1 * H])
        f_g = jax.nn.sigmoid(gates[:, 1 * H:2 * H])
        g_g = jnp.tanh(gates[:, 2 * H:3 * H])
        o_g = jax.nn.sigmoid(gates[:, 3 * H:4 * H])
        c = f_g * c + i_g * g_g
        h = o_g * jnp.tanh(c)
        return h, c

    h = h_scr[...]
    c = c_scr[...]
    # Two timesteps per iteration so each output store is a full (Bp, 2, H)
    # slab = one packed bf16 sublane pair -> unmasked stores, and the hidden
    # states go straight into the pipelined output block (no staging buffer).
    for t0 in range(0, tT - (tT % 2), 2):
        h_a, c = step(t0, h, c)
        h, c = step(t0 + 1, h_a, c)
        out_ref[:, t0:t0 + 2, :] = jnp.stack([h_a, h], axis=1).astype(out_ref.dtype)
    if tT % 2:
        h, c = step(tT - 1, h, c)
        # TODO(synk): odd tail is a masked sub-sublane bf16 store; avoided by
        # choosing an even time chunk whenever T allows.
        out_ref[:, tT - 1, :] = h.astype(out_ref.dtype)

    h_scr[...] = h
    c_scr[...] = c
    hout_ref[...] = h
    cout_ref[...] = c


def _pick_time_chunk(T, Bp, H, *, max_chunk=64, budget_bytes=8 * 1024 * 1024):
    """Largest divisor of T (preferring multiples of 16, capped at max_chunk)
    whose double-buffered gx + output blocks fit a conservative VMEM budget."""
    def fits(t):
        gx = 2 * (t * Bp * 4 * H * 2)      # double-buffered bf16 gate block
        out = 2 * (Bp * t * H * 2)         # double-buffered bf16 output block
        return gx + out <= budget_bytes
    for align in (16, 8, 2, 1):
        cands = [t for t in range(align, min(T, max_chunk) + 1, align)
                 if T % t == 0 and fits(t)]
        if cands:
            return max(cands)
    return T  # TODO(synk): remainder masking for pathological (huge prime) T


def run_lstm(gx_tbg, whh_t_bf16, h0, c0, *, out_dtype=jnp.bfloat16):
    T, Bp, G = gx_tbg.shape
    H = h0.shape[-1]
    assert G == 4 * H
    tT = _pick_time_chunk(T, Bp, H)
    grid = (T // tT,)
    return pl.pallas_call(
        _lstm_kernel,
        out_shape=(jax.ShapeDtypeStruct((Bp, T, H), out_dtype),
                   jax.ShapeDtypeStruct((Bp, H), jnp.float32),
                   jax.ShapeDtypeStruct((Bp, H), jnp.float32)),
        grid=grid,
        in_specs=[pl.BlockSpec((tT, Bp, G), lambda ct: (ct, 0, 0)),
                  pl.BlockSpec((H, G), lambda ct: (0, 0)),
                  pl.BlockSpec((Bp, H), lambda ct: (0, 0)),
                  pl.BlockSpec((Bp, H), lambda ct: (0, 0))],
        out_specs=(pl.BlockSpec((Bp, tT, H), lambda ct: (0, ct, 0)),
                   pl.BlockSpec((Bp, H), lambda ct: (0, 0)),
                   pl.BlockSpec((Bp, H), lambda ct: (0, 0))),
        scratch_shapes=[pltpu.VMEM((Bp, H), jnp.float32),
                        pltpu.VMEM((Bp, H), jnp.float32)],
        # h0 -> h_out, c0 -> c_out: update the state buffers in place.
        input_output_aliases={2: 1, 3: 2},
        compiler_params=pltpu.CompilerParams(
            # Serial recurrence: state carried in scratch across time chunks.
            # TODO(synk): leading "parallel" batch-block axis for v7x's 2 TCs
            # once the padded batch is large enough to split (>= 16 rows).
            dimension_semantics=("arbitrary",),
            vmem_limit_bytes=VMEM_LIMIT_BYTES),
    )(gx_tbg, whh_t_bf16, h0, c0)


# ------------------------------- LSTMG model ---------------------------------
class LSTMGParams:
    """Deterministic synthetic parameters matching LSTMG's shapes."""

    def __init__(self, key, vocab_size, d_model, hidden_size):
        assert d_model == hidden_size, "lm_head requires d_model == hidden_size"
        assert hidden_size % 128 == 0 and vocab_size % 128 == 0, \
            "use lane-aligned (multiple-of-128) H and V"
        ks = jax.random.split(key, 5)
        self.vocab_size = vocab_size
        self.d_model = d_model
        self.hidden_size = hidden_size
        # Stand-in for the frozen encoder's scaled word embedding.
        # TODO(synk): real BART/BERT/T5 encoder needs an external checkpoint.
        self.emb_table = jax.random.normal(ks[0], (vocab_size, d_model),
                                           jnp.float32) * 0.02
        k = 1.0 / math.sqrt(hidden_size)
        self.w_ih = jax.random.uniform(ks[1], (4 * hidden_size, d_model),
                                       jnp.float32, -k, k)
        self.w_hh = jax.random.uniform(ks[2], (4 * hidden_size, hidden_size),
                                       jnp.float32, -k, k)
        self.bias = (jax.random.uniform(ks[3], (4 * hidden_size,),
                                        jnp.float32, -k, k)
                     + jax.random.uniform(ks[4], (4 * hidden_size,),
                                          jnp.float32, -k, k))
        # lm_head: init_weights() does uniform_(-1, 1), shape (V, d_model).
        self.w_lm = jax.random.uniform(jax.random.PRNGKey(1),
                                       (vocab_size, d_model),
                                       jnp.float32, -1.0, 1.0)
        # bf16 pre-transposed copies for the MXU (f32 accumulation in-kernel).
        self.w_ih_t_bf16 = self.w_ih.T.astype(jnp.bfloat16)
        self.w_hh_t_bf16 = self.w_hh.T.astype(jnp.bfloat16)
        self.w_lm_t_bf16 = self.w_lm.T.astype(jnp.bfloat16)
        self.bias_row = self.bias.reshape(1, -1)


def lstmg_forward(params, input_seq, input_mask, hidden_in, mem_in):
    # input_seq/input_mask: (B, T) int32; hidden_in/mem_in: (1, B, H) f32.
    del input_mask  # TODO(synk): mask only feeds the frozen encoder (replaced).
    B, T = input_seq.shape
    D, H = params.d_model, params.hidden_size
    Bp = max(8, -(-B // 8) * 8)       # pad batch to a sublane/MXU-row multiple

    # input_seq[input_seq == -100] = 1
    ids = jnp.where(input_seq == -100, 1, input_seq)
    ids_p = jnp.pad(ids, ((0, Bp - B), (0, 0)), constant_values=1)
    # Scaled word-embedding lookup, built time-major for the recurrence (glue).
    embs = (params.emb_table[ids_p.T] * math.sqrt(D)).astype(jnp.bfloat16)  # (T,Bp,D)

    # 1) Input projection for ALL timesteps as one MXU GEMM (bias folded in,
    #    f32 accumulate, emitted in bf16 to halve the recurrence's HBM read).
    gx = _blocked_matmul(embs.reshape(T * Bp, D), params.w_ih_t_bf16,
                         params.bias_row,
                         out_dtype=jnp.bfloat16)              # (T*Bp, 4H) bf16
    gx = gx.reshape(T, Bp, 4 * H)

    # 2) Recurrence: only h @ W_hh^T + gate math per step, streamed over time,
    #    output written batch-first (no HBM transpose round-trip afterwards).
    h0 = jnp.pad(hidden_in[0], ((0, Bp - B), (0, 0)))
    c0 = jnp.pad(mem_in[0], ((0, Bp - B), (0, 0)))
    out_bth, h_out, c_out = run_lstm(gx, params.w_hh_t_bf16, h0, c0)

    # 3) Dropout is identity at eval; lm_head on batch-first flattened hiddens.
    #    (Vocab-outer grid: W_lm streamed from HBM exactly once.)
    x_flat = out_bth[:B].reshape(B * T, H)                    # bf16
    logits = _blocked_matmul(x_flat, params.w_lm_t_bf16)      # (B*T, V) f32
    return logits, (h_out[:B][None], c_out[:B][None])


# ----------------------------------- main -------------------------------------
if __name__ == "__main__":
    B, T = 2, 32
    D = H = 128          # module default hidden_size=128; d_model set equal
    V = 512

    params = LSTMGParams(jax.random.PRNGKey(0), vocab_size=V,
                         d_model=D, hidden_size=H)

    key = jax.random.PRNGKey(0)
    k_ids, k_h, k_c = jax.random.split(key, 3)
    input_seq = jax.random.randint(k_ids, (B, T), 0, V, jnp.int32)
    input_seq = input_seq.at[0, 0].set(-100)     # exercise the -100 -> 1 path
    input_mask = jnp.ones((B, T), jnp.int32)
    hidden_in = jax.random.normal(k_h, (1, B, H), jnp.float32) * 0.1
    mem_in = jax.random.normal(k_c, (1, B, H), jnp.float32) * 0.1

    fwd = jax.jit(lambda s, m, h, c: lstmg_forward(params, s, m, h, c))
    logits, (h_out, c_out) = fwd(input_seq, input_mask, hidden_in, mem_in)
    jax.block_until_ready((logits, h_out, c_out))

    assert logits.shape == (B * T, V)
    assert h_out.shape == (1, B, H) and c_out.shape == (1, B, H)

    # Pure-JAX reference using the same mixed-precision recipe as the kernels
    # (bf16 weights/activations into the matmuls, bf16 gx, f32 state).
    def ref_forward():
        ids = jnp.where(input_seq == -100, 1, input_seq)
        embs = (params.emb_table[ids] * math.sqrt(D)).astype(jnp.bfloat16)
        wih = params.w_ih.astype(jnp.bfloat16)
        whh = params.w_hh.astype(jnp.bfloat16)
        wlm = params.w_lm.astype(jnp.bfloat16)
        gx = (jnp.einsum('btd,gd->btg', embs, wih,
                         preferred_element_type=jnp.float32)
              + params.bias).astype(jnp.bfloat16)             # (B, T, 4H)

        def step(carry, g_t):
            h, c = carry
            g = g_t.astype(jnp.float32) + jnp.dot(
                h.astype(jnp.bfloat16), whh.T,
                preferred_element_type=jnp.float32)
            i, f, gg, o = jnp.split(g, 4, axis=-1)
            c = jax.nn.sigmoid(f) * c + jax.nn.sigmoid(i) * jnp.tanh(gg)
            h = jax.nn.sigmoid(o) * jnp.tanh(c)
            return (h, c), h.astype(jnp.bfloat16)

        (hf, cf), outs = lax.scan(step, (hidden_in[0], mem_in[0]),
                                  jnp.transpose(gx, (1, 0, 2)))
        out = jnp.transpose(outs, (1, 0, 2)).reshape(-1, H)
        return (jnp.dot(out, wlm.T, preferred_element_type=jnp.float32), hf, cf)

    ref_logits, ref_h, ref_c = ref_forward()
    assert jnp.allclose(h_out[0], ref_h, atol=1e-2, rtol=1e-2)
    assert jnp.allclose(c_out[0], ref_c, atol=1e-2, rtol=1e-2)
    assert jnp.allclose(logits, ref_logits, atol=5e-2, rtol=5e-2)

    print("KERNEL_OK")
</pallas_src>

<mosaic_0001>
module attributes {stable_mosaic.version = 11 : i64} {
  func.func @_matmul_bias_kernel(%arg0: i32, %arg1: i32, %arg2: memref<256x128xbf16, #tpu.memory_space<vmem>>, %arg3: memref<128x512xbf16, #tpu.memory_space<vmem>>, %arg4: memref<1x512xf32, #tpu.memory_space<vmem>>, %arg5: memref<256x512xbf16, #tpu.memory_space<vmem>>) attributes {dimension_semantics = [#tpu.dimension_semantics<parallel>, #tpu.dimension_semantics<parallel>], iteration_bounds = array<i64: 1, 1>, scalar_prefetch = 0 : i64, scratch_operands = 0 : i64, tpu.core_type = #tpu.core_type<tc>, window_params = [{transform_indices = @transform_0, window_bounds = array<i64: 256, 128>}, {transform_indices = @transform_1, window_bounds = array<i64: 128, 512>}, {transform_indices = @transform_2, window_bounds = array<i64: 1, 512>}, {transform_indices = @transform_3, window_bounds = array<i64: 256, 512>}]} {
    %c0 = arith.constant 0 : index
    %c0_0 = arith.constant 0 : index
    %0 = vector.load %arg2[%c0, %c0_0] : memref<256x128xbf16, #tpu.memory_space<vmem>>, vector<256x128xbf16>
    %c0_1 = arith.constant 0 : index
    %c0_2 = arith.constant 0 : index
    %1 = vector.load %arg3[%c0_1, %c0_2] : memref<128x512xbf16, #tpu.memory_space<vmem>>, vector<128x512xbf16>
    %cst = arith.constant dense<0.000000e+00> : vector<256x512xf32>
    %2 = tpu.matmul %0, %1, %cst {dimension_numbers = #tpu.dot_dimension_numbers<[1], [0], [0], [1], [0, 0, 1, 1], [], []>} : vector<256x128xbf16>, vector<128x512xbf16>, vector<256x512xf32> -> vector<256x512xf32>
    %c0_3 = arith.constant 0 : index
    %c0_4 = arith.constant 0 : index
    %3 = vector.load %arg4[%c0_3, %c0_4] : memref<1x512xf32, #tpu.memory_space<vmem>>, vector<1x512xf32>
    %4 = vector.broadcast %3 : vector<1x512xf32> to vector<256x512xf32>
    %5 = arith.addf %2, %4 : vector<256x512xf32>
    %6 = arith.truncf %5 : vector<256x512xf32> to vector<256x512xbf16>
    %c0_5 = arith.constant 0 : index
    %c0_6 = arith.constant 0 : index
    %7 = vector.load %arg5[%c0_5, %c0_6] : memref<256x512xbf16, #tpu.memory_space<vmem>>, vector<256x512xbf16>
    tpu.vector_store %arg5[%c0_5, %c0_6], %6 {strides = array<i32>} : memref<256x512xbf16, #tpu.memory_space<vmem>>, vector<256x512xbf16>,
    return
  }
  func.func @transform_0(%arg0: i32, %arg1: i32) -> (i32, i32) {
    %c0_i32 = arith.constant 0 : i32
    %c0_i32_0 = arith.constant 0 : i32
    return %arg1, %c0_i32 : i32, i32
  }
  func.func @transform_1(%arg0: i32, %arg1: i32) -> (i32, i32) {
    %c0_i32 = arith.constant 0 : i32
    %c0_i32_0 = arith.constant 0 : i32
    return %c0_i32, %arg0 : i32, i32
  }
  func.func @transform_2(%arg0: i32, %arg1: i32) -> (i32, i32) {
    %c0_i32 = arith.constant 0 : i32
    %c0_i32_0 = arith.constant 0 : i32
    return %c0_i32, %arg0 : i32, i32
  }
  func.func @transform_3(%arg0: i32, %arg1: i32) -> (i32, i32) {
    %c0_i32 = arith.constant 0 : i32
    return %arg1, %arg0 : i32, i32
  }
}

module attributes {stable_mosaic.version = 11 : i64} {
  func.func @_matmul_kernel(%arg0: i32, %arg1: i32, %arg2: memref<64x128xbf16, #tpu.memory_space<vmem>>, %arg3: memref<128x512xbf16, #tpu.memory_space<vmem>>, %arg4: memref<64x512xf32, #tpu.memory_space<vmem>>) attributes {dimension_semantics = [#tpu.dimension_semantics<parallel>, #tpu.dimension_semantics<parallel>], iteration_bounds = array<i64: 1, 1>, scalar_prefetch = 0 : i64, scratch_operands = 0 : i64, tpu.core_type = #tpu.core_type<tc>, window_params = [{transform_indices = @transform_0, window_bounds = array<i64: 64, 128>}, {transform_indices = @transform_1, window_bounds = array<i64: 128, 512>}, {transform_indices = @transform_2, window_bounds = array<i64: 64, 512>}]} {
    %c0 = arith.constant 0 : index
    %c0_0 = arith.constant 0 : index
    %0 = vector.load %arg2[%c0, %c0_0] : memref<64x128xbf16, #tpu.memory_space<vmem>>, vector<64x128xbf16>
    %c0_1 = arith.constant 0 : index
    %c0_2 = arith.constant 0 : index
    %1 = vector.load %arg3[%c0_1, %c0_2] : memref<128x512xbf16, #tpu.memory_space<vmem>>, vector<128x512xbf16>
    %cst = arith.constant dense<0.000000e+00> : vector<64x512xf32>
    %2 = tpu.matmul %0, %1, %cst {dimension_numbers = #tpu.dot_dimension_numbers<[1], [0], [0], [1], [0, 0, 1, 1], [], []>} : vector<64x128xbf16>, vector<128x512xbf16>, vector<64x512xf32> -> vector<64x512xf32>
    %c0_3 = arith.constant 0 : index
    %c0_4 = arith.constant 0 : index
    %3 = vector.load %arg4[%c0_3, %c0_4] : memref<64x512xf32, #tpu.memory_space<vmem>>, vector<64x512xf32>
    tpu.vector_store %arg4[%c0_3, %c0_4], %2 {strides = array<i32>} : memref<64x512xf32, #tpu.memory_space<vmem>>, vector<64x512xf32>,
    return
  }
  func.func @transform_0(%arg0: i32, %arg1: i32) -> (i32, i32) {
    %c0_i32 = arith.constant 0 : i32
    %c0_i32_0 = arith.constant 0 : i32
    return %arg1, %c0_i32 : i32, i32
  }
  func.func @transform_1(%arg0: i32, %arg1: i32) -> (i32, i32) {
    %c0_i32 = arith.constant 0 : i32
    %c0_i32_0 = arith.constant 0 : i32
    return %c0_i32, %arg0 : i32, i32
  }
  func.func @transform_2(%arg0: i32, %arg1: i32) -> (i32, i32) {
    %c0_i32 = arith.constant 0 : i32
    return %arg1, %arg0 : i32, i32
  }
}

module attributes {stable_mosaic.version = 11 : i64} {
  func.func @_lstm_kernel(%arg0: i32, %arg1: memref<32x8x512xbf16, #tpu.memory_space<vmem>>, %arg2: memref<128x512xbf16, #tpu.memory_space<vmem>>, %arg3: memref<8x128xf32, #tpu.memory_space<vmem>>, %arg4: memref<8x128xf32, #tpu.memory_space<vmem>>, %arg5: memref<8x32x128xbf16, #tpu.memory_space<vmem>>, %arg6: memref<8x128xf32, #tpu.memory_space<vmem>>, %arg7: memref<8x128xf32, #tpu.memory_space<vmem>>, %arg8: memref<8x128xf32, #tpu.memory_space<vmem>>, %arg9: memref<8x128xf32, #tpu.memory_space<vmem>>) attributes {dimension_semantics = [#tpu.dimension_semantics<arbitrary>], iteration_bounds = array<i64: 1>, scalar_prefetch = 0 : i64, scratch_operands = 2 : i64, tpu.core_type = #tpu.core_type<tc>, window_params = [{transform_indices = @transform_0, window_bounds = array<i64: 32, 8, 512>}, {pipeline_mode = #tpu.pipeline_mode<synchronous>, transform_indices = @transform_1, window_bounds = array<i64: 128, 512>}, {pipeline_mode = #tpu.pipeline_mode<synchronous>, transform_indices = @transform_2, window_bounds = array<i64: 8, 128>}, {pipeline_mode = #tpu.pipeline_mode<synchronous>, transform_indices = @transform_3, window_bounds = array<i64: 8, 128>}, {transform_indices = @transform_4, window_bounds = array<i64: 8, 32, 128>}, {pipeline_mode = #tpu.pipeline_mode<synchronous>, transform_indices = @transform_5, window_bounds = array<i64: 8, 128>}, {pipeline_mode = #tpu.pipeline_mode<synchronous>, transform_indices = @transform_6, window_bounds = array<i64: 8, 128>}]} {
    %c0_i32 = arith.constant 0 : i32
    %0 = arith.cmpi eq, %arg0, %c0_i32 : i32
    %1 = arith.extui %0 : i1 to i32
    %c0_i32_0 = arith.constant 0 : i32
    %2 = arith.cmpi ne, %1, %c0_i32_0 : i32
    scf.if %2 {
      %c0_316 = arith.constant 0 : index
      %c0_317 = arith.constant 0 : index
      %1113 = vector.load %arg3[%c0_316, %c0_317] : memref<8x128xf32, #tpu.memory_space<vmem>>, vector<8x128xf32>
      %c0_318 = arith.constant 0 : index
      %c0_319 = arith.constant 0 : index
      %1114 = vector.load %arg8[%c0_318, %c0_319] : memref<8x128xf32, #tpu.memory_space<vmem>>, vector<8x128xf32>
      tpu.vector_store %arg8[%c0_318, %c0_319], %1113 {strides = array<i32>} : memref<8x128xf32, #tpu.memory_space<vmem>>, vector<8x128xf32>,
      %c0_320 = arith.constant 0 : index
      %c0_321 = arith.constant 0 : index
      %1115 = vector.load %arg4[%c0_320, %c0_321] : memref<8x128xf32, #tpu.memory_space<vmem>>, vector<8x128xf32>
      %c0_322 = arith.constant 0 : index
      %c0_323 = arith.constant 0 : index
      %1116 = vector.load %arg9[%c0_322, %c0_323] : memref<8x128xf32, #tpu.memory_space<vmem>>, vector<8x128xf32>
      tpu.vector_store %arg9[%c0_322, %c0_323], %1115 {strides = array<i32>} : memref<8x128xf32, #tpu.memory_space<vmem>>, vector<8x128xf32>,
    } else {
    }
    %c0 = arith.constant 0 : index
    %c0_1 = arith.constant 0 : index
    %3 = vector.load %arg8[%c0, %c0_1] : memref<8x128xf32, #tpu.memory_space<vmem>>, vector<8x128xf32>
    %c0_2 = arith.constant 0 : index
    %c0_3 = arith.constant 0 : index
    %4 = vector.load %arg9[%c0_2, %c0_3] : memref<8x128xf32, #tpu.memory_space<vmem>>, vector<8x128xf32>
    %c0_4 = arith.constant 0 : index
    %c0_5 = arith.constant 0 : index
    %c0_6 = arith.constant 0 : index
    %5 = vector.load %arg1[%c0_4, %c0_5, %c0_6] : memref<32x8x512xbf16, #tpu.memory_space<vmem>>, vector<1x8x512xbf16>
    %6 = vector.shape_cast %5 : vector<1x8x512xbf16> to vector<8x512xbf16>
    %7 = arith.extf %6 : vector<8x512xbf16> to vector<8x512xf32>
    %8 = arith.truncf %3 : vector<8x128xf32> to vector<8x128xbf16>
    %c0_7 = arith.constant 0 : index
    %c0_8 = arith.constant 0 : index
    %9 = vector.load %arg2[%c0_7, %c0_8] : memref<128x512xbf16, #tpu.memory_space<vmem>>, vector<128x512xbf16>
    %cst = arith.constant dense<0.000000e+00> : vector<8x512xf32>
    %10 = tpu.matmul %8, %9, %cst {dimension_numbers = #tpu.dot_dimension_numbers<[1], [0], [0], [1], [0, 0, 1, 1], [], []>} : vector<8x128xbf16>, vector<128x512xbf16>, vector<8x512xf32> -> vector<8x512xf32>
    %11 = arith.addf %7, %10 : vector<8x512xf32>
    %12 = vector.extract_strided_slice %11 {offsets = [0, 0], sizes = [8, 128], strides = [1, 1]} : vector<8x512xf32> to vector<8x128xf32>
    %13 = arith.negf %12 : vector<8x128xf32>
    %14 = math.exp %13 : vector<8x128xf32>
    %cst_9 = arith.constant 1.000000e+00 : f32
    %15 = vector.broadcast %cst_9 : f32 to vector<8x128xf32>
    %16 = arith.addf %15, %14 : vector<8x128xf32>
    %17 = arith.divf %15, %16 : vector<8x128xf32>
    %18 = vector.extract_strided_slice %11 {offsets = [0, 128], sizes = [8, 128], strides = [1, 1]} : vector<8x512xf32> to vector<8x128xf32>
    %19 = arith.negf %18 : vector<8x128xf32>
    %20 = math.exp %19 : vector<8x128xf32>
    %cst_10 = arith.constant 1.000000e+00 : f32
    %21 = vector.broadcast %cst_10 : f32 to vector<8x128xf32>
    %22 = arith.addf %21, %20 : vector<8x128xf32>
    %23 = arith.divf %21, %22 : vector<8x128xf32>
    %24 = vector.extract_strided_slice %11 {offsets = [0, 256], sizes = [8, 128], strides = [1, 1]} : vector<8x512xf32> to vector<8x128xf32>
    %25 = math.tanh %24 : vector<8x128xf32>
    %26 = vector.extract_strided_slice %11 {offsets = [0, 384], sizes = [8, 128], strides = [1, 1]} : vector<8x512xf32> to vector<8x128xf32>
    %27 = arith.negf %26 : vector<8x128xf32>
    %28 = math.exp %27 : vector<8x128xf32>
    %cst_11 = arith.constant 1.000000e+00 : f32
    %29 = vector.broadcast %cst_11 : f32 to vector<8x128xf32>
    %30 = arith.addf %29, %28 : vector<8x128xf32>
    %31 = arith.divf %29, %30 : vector<8x128xf32>
    %32 = arith.mulf %23, %4 : vector<8x128xf32>
    %33 = arith.mulf %17, %25 : vector<8x128xf32>
    %34 = arith.addf %32, %33 : vector<8x128xf32>
    %35 = math.tanh %34 : vector<8x128xf32>
    %36 = arith.mulf %31, %35 : vector<8x128xf32>
    %c1 = arith.constant 1 : index
    %c0_12 = arith.constant 0 : index
    %c0_13 = arith.constant 0 : index
    %37 = vector.load %arg1[%c1, %c0_12, %c0_13] : memref<32x8x512xbf16, #tpu.memory_space<vmem>>, vector<1x8x512xbf16>
    %38 = vector.shape_cast %37 : vector<1x8x512xbf16> to vector<8x512xbf16>
    %39 = arith.extf %38 : vector<8x512xbf16> to vector<8x512xf32>
    %40 = arith.truncf %36 : vector<8x128xf32> to vector<8x128xbf16>
    %c0_14 = arith.constant 0 : index
    %c0_15 = arith.constant 0 : index
    %41 = vector.load %arg2[%c0_14, %c0_15] : memref<128x512xbf16, #tpu.memory_space<vmem>>, vector<128x512xbf16>
    %cst_16 = arith.constant dense<0.000000e+00> : vector<8x512xf32>
    %42 = tpu.matmul %40, %41, %cst_16 {dimension_numbers = #tpu.dot_dimension_numbers<[1], [0], [0], [1], [0, 0, 1, 1], [], []>} : vector<8x128xbf16>, vector<128x512xbf16>, vector<8x512xf32> -> vector<8x512xf32>
    %43 = arith.addf %39, %42 : vector<8x512xf32>
    %44 = vector.extract_strided_slice %43 {offsets = [0, 0], sizes = [8, 128], strides = [1, 1]} : vector<8x512xf32> to vector<8x128xf32>
    %45 = arith.negf %44 : vector<8x128xf32>
    %46 = math.exp %45 : vector<8x128xf32>
    %cst_17 = arith.constant 1.000000e+00 : f32
    %47 = vector.broadcast %cst_17 : f32 to vector<8x128xf32>
    %48 = arith.addf %47, %46 : vector<8x128xf32>
    %49 = arith.divf %47, %48 : vector<8x128xf32>
    %50 = vector.extract_strided_slice %43 {offsets = [0, 128], sizes = [8, 128], strides = [1, 1]} : vector<8x512xf32> to vector<8x128xf32>
    %51 = arith.negf %50 : vector<8x128xf32>
    %52 = math.exp %51 : vector<8x128xf32>
    %cst_18 = arith.constant 1.000000e+00 : f32
    %53 = vector.broadcast %cst_18 : f32 to vector<8x128xf32>
    %54 = arith.addf %53, %52 : vector<8x128xf32>
    %55 = arith.divf %53, %54 : vector<8x128xf32>
    %56 = vector.extract_strided_slice %43 {offsets = [0, 256], sizes = [8, 128], strides = [1, 1]} : vector<8x512xf32> to vector<8x128xf32>
    %57 = math.tanh %56 : vector<8x128xf32>
    %58 = vector.extract_strided_slice %43 {offsets = [0, 384], sizes = [8, 128], strides = [1, 1]} : vector<8x512xf32> to vector<8x128xf32>
    %59 = arith.negf %58 : vector<8x128xf32>
    %60 = math.exp %59 : vector<8x128xf32>
    %cst_19 = arith.constant 1.000000e+00 : f32
    %61 = vector.broadcast %cst_19 : f32 to vector<8x128xf32>
    %62 = arith.addf %61, %60 : vector<8x128xf32>
    %63 = arith.divf %61, %62 : vector<8x128xf32>
    %64 = arith.mulf %55, %34 : vector<8x128xf32>
    %65 = arith.mulf %49, %57 : vector<8x128xf32>
    %66 = arith.addf %64, %65 : vector<8x128xf32>
    %67 = math.tanh %66 : vector<8x128xf32>
    %68 = arith.mulf %63, %67 : vector<8x128xf32>
    %69 = vector.shape_cast %36 : vector<8x128xf32> to vector<8x1x128xf32>
    %70 = vector.shape_cast %68 : vector<8x128xf32> to vector<8x1x128xf32>
    %71 = tpu.concatenate %69, %70 in 1 : vector<8x1x128xf32>, vector<8x1x128xf32> -> vector<8x2x128xf32>
    %72 = arith.truncf %71 : vector<8x2x128xf32> to vector<8x2x128xbf16>
    %c0_20 = arith.constant 0 : index
    %c0_21 = arith.constant 0 : index
    %c0_22 = arith.constant 0 : index
    %73 = vector.load %arg5[%c0_20, %c0_21, %c0_22] : memref<8x32x128xbf16, #tpu.memory_space<vmem>>, vector<8x2x128xbf16>
    tpu.vector_store %arg5[%c0_20, %c0_21, %c0_22], %72 {strides = array<i32>} : memref<8x32x128xbf16, #tpu.memory_space<vmem>>, vector<8x2x128xbf16>,
    %c2 = arith.constant 2 : index
    %c0_23 = arith.constant 0 : index
    %c0_24 = arith.constant 0 : index
    %74 = vector.load %arg1[%c2, %c0_23, %c0_24] : memref<32x8x512xbf16, #tpu.memory_space<vmem>>, vector<1x8x512xbf16>
    %75 = vector.shape_cast %74 : vector<1x8x512xbf16> to vector<8x512xbf16>
    %76 = arith.extf %75 : vector<8x512xbf16> to vector<8x512xf32>
    %77 = arith.truncf %68 : vector<8x128xf32> to vector<8x128xbf16>
    %c0_25 = arith.constant 0 : index
    %c0_26 = arith.constant 0 : index
    %78 = vector.load %arg2[%c0_25, %c0_26] : memref<128x512xbf16, #tpu.memory_space<vmem>>, vector<128x512xbf16>
    %cst_27 = arith.constant dense<0.000000e+00> : vector<8x512xf32>
    %79 = tpu.matmul %77, %78, %cst_27 {dimension_numbers = #tpu.dot_dimension_numbers<[1], [0], [0], [1], [0, 0, 1, 1], [], []>} : vector<8x128xbf16>, vector<128x512xbf16>, vector<8x512xf32> -> vector<8x512xf32>
    %80 = arith.addf %76, %79 : vector<8x512xf32>
    %81 = vector.extract_strided_slice %80 {offsets = [0, 0], sizes = [8, 128], strides = [1, 1]} : vector<8x512xf32> to vector<8x128xf32>
    %82 = arith.negf %81 : vector<8x128xf32>
    %83 = math.exp %82 : vector<8x128xf32>
    %cst_28 = arith.constant 1.000000e+00 : f32
    %84 = vector.broadcast %cst_28 : f32 to vector<8x128xf32>
    %85 = arith.addf %84, %83 : vector<8x128xf32>
    %86 = arith.divf %84, %85 : vector<8x128xf32>
    %87 = vector.extract_strided_slice %80 {offsets = [0, 128], sizes = [8, 128], strides = [1, 1]} : vector<8x512xf32> to vector<8x128xf32>
    %88 = arith.negf %87 : vector<8x128xf32>
    %89 = math.exp %88 : vector<8x128xf32>
    %cst_29 = arith.constant 1.000000e+00 : f32
    %90 = vector.broadcast %cst_29 : f32 to vector<8x128xf32>
    %91 = arith.addf %90, %89 : vector<8x128xf32>
    %92 = arith.divf %90, %91 : vector<8x128xf32>
    %93 = vector.extract_strided_slice %80 {offsets = [0, 256], sizes = [8, 128], strides = [1, 1]} : vector<8x512xf32> to vector<8x128xf32>
    %94 = math.tanh %93 : vector<8x128xf32>
    %95 = vector.extract_strided_slice %80 {offsets = [0, 384], sizes = [8, 128], strides = [1, 1]} : vector<8x512xf32> to vector<8x128xf32>
    %96 = arith.negf %95 : vector<8x128xf32>
    %97 = math.exp %96 : vector<8x128xf32>
    %cst_30 = arith.constant 1.000000e+00 : f32
    %98 = vector.broadcast %cst_30 : f32 to vector<8x128xf32>
    %99 = arith.addf %98, %97 : vector<8x128xf32>
    %100 = arith.divf %98, %99 : vector<8x128xf32>
    %101 = arith.mulf %92, %66 : vector<8x128xf32>
    %102 = arith.mulf %86, %94 : vector<8x128xf32>
    %103 = arith.addf %101, %102 : vector<8x128xf32>
    %104 = math.tanh %103 : vector<8x128xf32>
    %105 = arith.mulf %100, %104 : vector<8x128xf32>
    %c3 = arith.constant 3 : index
    %c0_31 = arith.constant 0 : index
    %c0_32 = arith.constant 0 : index
    %106 = vector.load %arg1[%c3, %c0_31, %c0_32] : memref<32x8x512xbf16, #tpu.memory_space<vmem>>, vector<1x8x512xbf16>
    %107 = vector.shape_cast %106 : vector<1x8x512xbf16> to vector<8x512xbf16>
    %108 = arith.extf %107 : vector<8x512xbf16> to vector<8x512xf32>
    %109 = arith.truncf %105 : vector<8x128xf32> to vector<8x128xbf16>
    %c0_33 = arith.constant 0 : index
    %c0_34 = arith.constant 0 : index
    %110 = vector.load %arg2[%c0_33, %c0_34] : memref<128x512xbf16, #tpu.memory_space<vmem>>, vector<128x512xbf16>
    %cst_35 = arith.constant dense<0.000000e+00> : vector<8x512xf32>
    %111 = tpu.matmul %109, %110, %cst_35 {dimension_numbers = #tpu.dot_dimension_numbers<[1], [0], [0], [1], [0, 0, 1, 1], [], []>} : vector<8x128xbf16>, vector<128x512xbf16>, vector<8x512xf32> -> vector<8x512xf32>
    %112 = arith.addf %108, %111 : vector<8x512xf32>
    %113 = vector.extract_strided_slice %112 {offsets = [0, 0], sizes = [8, 128], strides = [1, 1]} : vector<8x512xf32> to vector<8x128xf32>
    %114 = arith.negf %113 : vector<8x128xf32>
    %115 = math.exp %114 : vector<8x128xf32>
    %cst_36 = arith.constant 1.000000e+00 : f32
    %116 = vector.broadcast %cst_36 : f32 to vector<8x128xf32>
    %117 = arith.addf %116, %115 : vector<8x128xf32>
    %118 = arith.divf %116, %117 : vector<8x128xf32>
    %119 = vector.extract_strided_slice %112 {offsets = [0, 128], sizes = [8, 128], strides = [1, 1]} : vector<8x512xf32> to vector<8x128xf32>
    %120 = arith.negf %119 : vector<8x128xf32>
    %121 = math.exp %120 : vector<8x128xf32>
    %cst_37 = arith.constant 1.000000e+00 : f32
    %122 = vector.broadcast %cst_37 : f32 to vector<8x128xf32>
    %123 = arith.addf %122, %121 : vector<8x128xf32>
    %124 = arith.divf %122, %123 : vector<8x128xf32>
    %125 = vector.extract_strided_slice %112 {offsets = [0, 256], sizes = [8, 128], strides = [1, 1]} : vector<8x512xf32> to vector<8x128xf32>
    %126 = math.tanh %125 : vector<8x128xf32>
    %127 = vector.extract_strided_slice %112 {offsets = [0, 384], sizes = [8, 128], strides = [1, 1]} : vector<8x512xf32> to vector<8x128xf32>
    %128 = arith.negf %127 : vector<8x128xf32>
    %129 = math.exp %128 : vector<8x128xf32>
    %cst_38 = arith.constant 1.000000e+00 : f32
    %130 = vector.broadcast %cst_38 : f32 to vector<8x128xf32>
    %131 = arith.addf %130, %129 : vector<8x128xf32>
    %132 = arith.divf %130, %131 : vector<8x128xf32>
    %133 = arith.mulf %124, %103 : vector<8x128xf32>
    %134 = arith.mulf %118, %126 : vector<8x128xf32>
    %135 = arith.addf %133, %134 : vector<8x128xf32>
    %136 = math.tanh %135 : vector<8x128xf32>
    %137 = arith.mulf %132, %136 : vector<8x128xf32>
    %138 = vector.shape_cast %105 : vector<8x128xf32> to vector<8x1x128xf32>
    %139 = vector.shape_cast %137 : vector<8x128xf32> to vector<8x1x128xf32>
    %140 = tpu.concatenate %138, %139 in 1 : vector<8x1x128xf32>, vector<8x1x128xf32> -> vector<8x2x128xf32>
    %141 = arith.truncf %140 : vector<8x2x128xf32> to vector<8x2x128xbf16>
    %c0_39 = arith.constant 0 : index
    %c2_40 = arith.constant 2 : index
    %c0_41 = arith.constant 0 : index
    %142 = vector.load %arg5[%c0_39, %c2_40, %c0_41] : memref<8x32x128xbf16, #tpu.memory_space<vmem>>, vector<8x2x128xbf16>
    tpu.vector_store %arg5[%c0_39, %c2_40, %c0_41], %141 {strides = array<i32>} : memref<8x32x128xbf16, #tpu.memory_space<vmem>>, vector<8x2x128xbf16>,
    %c4 = arith.constant 4 : index
    %c0_42 = arith.constant 0 : index
    %c0_43 = arith.constant 0 : index
    %143 = vector.load %arg1[%c4, %c0_42, %c0_43] : memref<32x8x512xbf16, #tpu.memory_space<vmem>>, vector<1x8x512xbf16>
    %144 = vector.shape_cast %143 : vector<1x8x512xbf16> to vector<8x512xbf16>
    %145 = arith.extf %144 : vector<8x512xbf16> to vector<8x512xf32>
    %146 = arith.truncf %137 : vector<8x128xf32> to vector<8x128xbf16>
    %c0_44 = arith.constant 0 : index
    %c0_45 = arith.constant 0 : index
    %147 = vector.load %arg2[%c0_44, %c0_45] : memref<128x512xbf16, #tpu.memory_space<vmem>>, vector<128x512xbf16>
    %cst_46 = arith.constant dense<0.000000e+00> : vector<8x512xf32>
    %148 = tpu.matmul %146, %147, %cst_46 {dimension_numbers = #tpu.dot_dimension_numbers<[1], [0], [0], [1], [0, 0, 1, 1], [], []>} : vector<8x128xbf16>, vector<128x512xbf16>, vector<8x512xf32> -> vector<8x512xf32>
    %149 = arith.addf %145, %148 : vector<8x512xf32>
    %150 = vector.extract_strided_slice %149 {offsets = [0, 0], sizes = [8, 128], strides = [1, 1]} : vector<8x512xf32> to vector<8x128xf32>
    %151 = arith.negf %150 : vector<8x128xf32>
    %152 = math.exp %151 : vector<8x128xf32>
    %cst_47 = arith.constant 1.000000e+00 : f32
    %153 = vector.broadcast %cst_47 : f32 to vector<8x128xf32>
    %154 = arith.addf %153, %152 : vector<8x128xf32>
    %155 = arith.divf %153, %154 : vector<8x128xf32>
    %156 = vector.extract_strided_slice %149 {offsets = [0, 128], sizes = [8, 128], strides = [1, 1]} : vector<8x512xf32> to vector<8x128xf32>
    %157 = arith.negf %156 : vector<8x128xf32>
    %158 = math.exp %157 : vector<8x128xf32>
    %cst_48 = arith.constant 1.000000e+00 : f32
    %159 = vector.broadcast %cst_48 : f32 to vector<8x128xf32>
    %160 = arith.addf %159, %158 : vector<8x128xf32>
    %161 = arith.divf %159, %160 : vector<8x128xf32>
    %162 = vector.extract_strided_slice %149 {offsets = [0, 256], sizes = [8, 128], strides = [1, 1]} : vector<8x512xf32> to vector<8x128xf32>
    %163 = math.tanh %162 : vector<8x128xf32>
    %164 = vector.extract_strided_slice %149 {offsets = [0, 384], sizes = [8, 128], strides = [1, 1]} : vector<8x512xf32> to vector<8x128xf32>
    %165 = arith.negf %164 : vector<8x128xf32>
    %166 = math.exp %165 : vector<8x128xf32>
    %cst_49 = arith.constant 1.000000e+00 : f32
    %167 = vector.broadcast %cst_49 : f32 to vector<8x128xf32>
    %168 = arith.addf %167, %166 : vector<8x128xf32>
    %169 = arith.divf %167, %168 : vector<8x128xf32>
    %170 = arith.mulf %161, %135 : vector<8x128xf32>
    %171 = arith.mulf %155, %163 : vector<8x128xf32>
    %172 = arith.addf %170, %171 : vector<8x128xf32>
    %173 = math.tanh %172 : vector<8x128xf32>
    %174 = arith.mulf %169, %173 : vector<8x128xf32>
    %c5 = arith.constant 5 : index
    %c0_50 = arith.constant 0 : index
    %c0_51 = arith.constant 0 : index
    %175 = vector.load %arg1[%c5, %c0_50, %c0_51] : memref<32x8x512xbf16, #tpu.memory_space<vmem>>, vector<1x8x512xbf16>
    %176 = vector.shape_cast %175 : vector<1x8x512xbf16> to vector<8x512xbf16>
    %177 = arith.extf %176 : vector<8x512xbf16> to vector<8x512xf32>
    %178 = arith.truncf %174 : vector<8x128xf32> to vector<8x128xbf16>
    %c0_52 = arith.constant 0 : index
    %c0_53 = arith.constant 0 : index
    %179 = vector.load %arg2[%c0_52, %c0_53] : memref<128x512xbf16, #tpu.memory_space<vmem>>, vector<128x512xbf16>
    %cst_54 = arith.constant dense<0.000000e+00> : vector<8x512xf32>
    %180 = tpu.matmul %178, %179, %cst_54 {dimension_numbers = #tpu.dot_dimension_numbers<[1], [0], [0], [1], [0, 0, 1, 1], [], []>} : vector<8x128xbf16>, vector<128x512xbf16>, vector<8x512xf32> -> vector<8x512xf32>
    %181 = arith.addf %177, %180 : vector<8x512xf32>
    %182 = vector.extract_strided_slice %181 {offsets = [0, 0], sizes = [8, 128], strides = [1, 1]} : vector<8x512xf32> to vector<8x128xf32>
    %183 = arith.negf %182 : vector<8x128xf32>
    %184 = math.exp %183 : vector<8x128xf32>
    %cst_55 = arith.constant 1.000000e+00 : f32
    %185 = vector.broadcast %cst_55 : f32 to vector<8x128xf32>
    %186 = arith.addf %185, %184 : vector<8x128xf32>
    %187 = arith.divf %185, %186 : vector<8x128xf32>
    %188 = vector.extract_strided_slice %181 {offsets = [0, 128], sizes = [8, 128], strides = [1, 1]} : vector<8x512xf32> to vector<8x128xf32>
    %189 = arith.negf %188 : vector<8x128xf32>
    %190 = math.exp %189 : vector<8x128xf32>
    %cst_56 = arith.constant 1.000000e+00 : f32
    %191 = vector.broadcast %cst_56 : f32 to vector<8x128xf32>
    %192 = arith.addf %191, %190 : vector<8x128xf32>
    %193 = arith.divf %191, %192 : vector<8x128xf32>
    %194 = vector.extract_strided_slice %181 {offsets = [0, 256], sizes = [8, 128], strides = [1, 1]} : vector<8x512xf32> to vector<8x128xf32>
    %195 = math.tanh %194 : vector<8x128xf32>
    %196 = vector.extract_strided_slice %181 {offsets = [0, 384], sizes = [8, 128], strides = [1, 1]} : vector<8x512xf32> to vector<8x128xf32>
    %197 = arith.negf %196 : vector<8x128xf32>
    %198 = math.exp %197 : vector<8x128xf32>
    %cst_57 = arith.constant 1.000000e+00 : f32
    %199 = vector.broadcast %cst_57 : f32 to vector<8x128xf32>
    %200 = arith.addf %199, %198 : vector<8x128xf32>
    %201 = arith.divf %199, %200 : vector<8x128xf32>
    %202 = arith.mulf %193, %172 : vector<8x128xf32>
    %203 = arith.mulf %187, %195 : vector<8x128xf32>
    %204 = arith.addf %202, %203 : vector<8x128xf32>
    %205 = math.tanh %204 : vector<8x128xf32>
    %206 = arith.mulf %201, %205 : vector<8x128xf32>
    %207 = vector.shape_cast %174 : vector<8x128xf32> to vector<8x1x128xf32>
    %208 = vector.shape_cast %206 : vector<8x128xf32> to vector<8x1x128xf32>
    %209 = tpu.concatenate %207, %208 in 1 : vector<8x1x128xf32>, vector<8x1x128xf32> -> vector<8x2x128xf32>
    %210 = arith.truncf %209 : vector<8x2x128xf32> to vector<8x2x128xbf16>
    %c0_58 = arith.constant 0 : index
    %c4_59 = arith.constant 4 : index
    %c0_60 = arith.constant 0 : index
    %211 = vector.load %arg5[%c0_58, %c4_59, %c0_60] : memref<8x32x128xbf16, #tpu.memory_space<vmem>>, vector<8x2x128xbf16>
    tpu.vector_store %arg5[%c0_58, %c4_59, %c0_60], %210 {strides = array<i32>} : memref<8x32x128xbf16, #tpu.memory_space<vmem>>, vector<8x2x128xbf16>,
    %c6 = arith.constant 6 : index
    %c0_61 = arith.constant 0 : index
    %c0_62 = arith.constant 0 : index
    %212 = vector.load %arg1[%c6, %c0_61, %c0_62] : memref<32x8x512xbf16, #tpu.memory_space<vmem>>, vector<1x8x512xbf16>
    %213 = vector.shape_cast %212 : vector<1x8x512xbf16> to vector<8x512xbf16>
    %214 = arith.extf %213 : vector<8x512xbf16> to vector<8x512xf32>
    %215 = arith.truncf %206 : vector<8x128xf32> to vector<8x128xbf16>
    %c0_63 = arith.constant 0 : index
    %c0_64 = arith.constant 0 : index
    %216 = vector.load %arg2[%c0_63, %c0_64] : memref<128x512xbf16, #tpu.memory_space<vmem>>, vector<128x512xbf16>
    %cst_65 = arith.constant dense<0.000000e+00> : vector<8x512xf32>
    %217 = tpu.matmul %215, %216, %cst_65 {dimension_numbers = #tpu.dot_dimension_numbers<[1], [0], [0], [1], [0, 0, 1, 1], [], []>} : vector<8x128xbf16>, vector<128x512xbf16>, vector<8x512xf32> -> vector<8x512xf32>
    %218 = arith.addf %214, %217 : vector<8x512xf32>
    %219 = vector.extract_strided_slice %218 {offsets = [0, 0], sizes = [8, 128], strides = [1, 1]} : vector<8x512xf32> to vector<8x128xf32>
    %220 = arith.negf %219 : vector<8x128xf32>
    %221 = math.exp %220 : vector<8x128xf32>
    %cst_66 = arith.constant 1.000000e+00 : f32
    %222 = vector.broadcast %cst_66 : f32 to vector<8x128xf32>
    %223 = arith.addf %222, %221 : vector<8x128xf32>
    %224 = arith.divf %222, %223 : vector<8x128xf32>
    %225 = vector.extract_strided_slice %218 {offsets = [0, 128], sizes = [8, 128], strides = [1, 1]} : vector<8x512xf32> to vector<8x128xf32>
    %226 = arith.negf %225 : vector<8x128xf32>
    %227 = math.exp %226 : vector<8x128xf32>
    %cst_67 = arith.constant 1.000000e+00 : f32
    %228 = vector.broadcast %cst_67 : f32 to vector<8x128xf32>
    %229 = arith.addf %228, %227 : vector<8x128xf32>
    %230 = arith.divf %228, %229 : vector<8x128xf32>
    %231 = vector.extract_strided_slice %218 {offsets = [0, 256], sizes = [8, 128], strides = [1, 1]} : vector<8x512xf32> to vector<8x128xf32>
    %232 = math.tanh %231 : vector<8x128xf32>
    %233 = vector.extract_strided_slice %218 {offsets = [0, 384], sizes = [8, 128], strides = [1, 1]} : vector<8x512xf32> to vector<8x128xf32>
    %234 = arith.negf %233 : vector<8x128xf32>
    %235 = math.exp %234 : vector<8x128xf32>
    %cst_68 = arith.constant 1.000000e+00 : f32
    %236 = vector.broadcast %cst_68 : f32 to vector<8x128xf32>
    %237 = arith.addf %236, %235 : vector<8x128xf32>
    %238 = arith.divf %236, %237 : vector<8x128xf32>
    %239 = arith.mulf %230, %204 : vector<8x128xf32>
    %240 = arith.mulf %224, %232 : vector<8x128xf32>
    %241 = arith.addf %239, %240 : vector<8x128xf32>
    %242 = math.tanh %241 : vector<8x128xf32>
    %243 = arith.mulf %238, %242 : vector<8x128xf32>
    %c7 = arith.constant 7 : index
    %c0_69 = arith.constant 0 : index
    %c0_70 = arith.constant 0 : index
    %244 = vector.load %arg1[%c7, %c0_69, %c0_70] : memref<32x8x512xbf16, #tpu.memory_space<vmem>>, vector<1x8x512xbf16>
    %245 = vector.shape_cast %244 : vector<1x8x512xbf16> to vector<8x512xbf16>
    %246 = arith.extf %245 : vector<8x512xbf16> to vector<8x512xf32>
    %247 = arith.truncf %243 : vector<8x128xf32> to vector<8x128xbf16>
    %c0_71 = arith.constant 0 : index
    %c0_72 = arith.constant 0 : index
    %248 = vector.load %arg2[%c0_71, %c0_72] : memref<128x512xbf16, #tpu.memory_space<vmem>>, vector<128x512xbf16>
    %cst_73 = arith.constant dense<0.000000e+00> : vector<8x512xf32>
    %249 = tpu.matmul %247, %248, %cst_73 {dimension_numbers = #tpu.dot_dimension_numbers<[1], [0], [0], [1], [0, 0, 1, 1], [], []>} : vector<8x128xbf16>, vector<128x512xbf16>, vector<8x512xf32> -> vector<8x512xf32>
    %250 = arith.addf %246, %249 : vector<8x512xf32>
    %251 = vector.extract_strided_slice %250 {offsets = [0, 0], sizes = [8, 128], strides = [1, 1]} : vector<8x512xf32> to vector<8x128xf32>
    %252 = arith.negf %251 : vector<8x128xf32>
    %253 = math.exp %252 : vector<8x128xf32>
    %cst_74 = arith.constant 1.000000e+00 : f32
    %254 = vector.broadcast %cst_74 : f32 to vector<8x128xf32>
    %255 = arith.addf %254, %253 : vector<8x128xf32>
    %256 = arith.divf %254, %255 : vector<8x128xf32>
    %257 = vector.extract_strided_slice %250 {offsets = [0, 128], sizes = [8, 128], strides = [1, 1]} : vector<8x512xf32> to vector<8x128xf32>
    %258 = arith.negf %257 : vector<8x128xf32>
    %259 = math.exp %258 : vector<8x128xf32>
    %cst_75 = arith.constant 1.000000e+00 : f32
    %260 = vector.broadcast %cst_75 : f32 to vector<8x128xf32>
    %261 = arith.addf %260, %259 : vector<8x128xf32>
    %262 = arith.divf %260, %261 : vector<8x128xf32>
    %263 = vector.extract_strided_slice %250 {offsets = [0, 256], sizes = [8, 128], strides = [1, 1]} : vector<8x512xf32> to vector<8x128xf32>
    %264 = math.tanh %263 : vector<8x128xf32>
    %265 = vector.extract_strided_slice %250 {offsets = [0, 384], sizes = [8, 128], strides = [1, 1]} : vector<8x512xf32> to vector<8x128xf32>
    %266 = arith.negf %265 : vector<8x128xf32>
    %267 = math.exp %266 : vector<8x128xf32>
    %cst_76 = arith.constant 1.000000e+00 : f32
    %268 = vector.broadcast %cst_76 : f32 to vector<8x128xf32>
    %269 = arith.addf %268, %267 : vector<8x128xf32>
    %270 = arith.divf %268, %269 : vector<8x128xf32>
    %271 = arith.mulf %262, %241 : vector<8x128xf32>
    %272 = arith.mulf %256, %264 : vector<8x128xf32>
    %273 = arith.addf %271, %272 : vector<8x128xf32>
    %274 = math.tanh %273 : vector<8x128xf32>
    %275 = arith.mulf %270, %274 : vector<8x128xf32>
    %276 = vector.shape_cast %243 : vector<8x128xf32> to vector<8x1x128xf32>
    %277 = vector.shape_cast %275 : vector<8x128xf32> to vector<8x1x128xf32>
    %278 = tpu.concatenate %276, %277 in 1 : vector<8x1x128xf32>, vector<8x1x128xf32> -> vector<8x2x128xf32>
    %279 = arith.truncf %278 : vector<8x2x128xf32> to vector<8x2x128xbf16>
    %c0_77 = arith.constant 0 : index
    %c6_78 = arith.constant 6 : index
    %c0_79 = arith.constant 0 : index
    %280 = vector.load %arg5[%c0_77, %c6_78, %c0_79] : memref<8x32x128xbf16, #tpu.memory_space<vmem>>, vector<8x2x128xbf16>
    tpu.vector_store %arg5[%c0_77, %c6_78, %c0_79], %279 {strides = array<i32>} : memref<8x32x128xbf16, #tpu.memory_space<vmem>>, vector<8x2x128xbf16>,
    %c8 = arith.constant 8 : index
    %c0_80 = arith.constant 0 : index
    %c0_81 = arith.constant 0 : index
    %281 = vector.load %arg1[%c8, %c0_80, %c0_81] : memref<32x8x512xbf16, #tpu.memory_space<vmem>>, vector<1x8x512xbf16>
    %282 = vector.shape_cast %281 : vector<1x8x512xbf16> to vector<8x512xbf16>
    %283 = arith.extf %282 : vector<8x512xbf16> to vector<8x512xf32>
    %284 = arith.truncf %275 : vector<8x128xf32> to vector<8x128xbf16>
    %c0_82 = arith.constant 0 : index
    %c0_83 = arith.constant 0 : index
    %285 = vector.load %arg2[%c0_82, %c0_83] : memref<128x512xbf16, #tpu.memory_space<vmem>>, vector<128x512xbf16>
    %cst_84 = arith.constant dense<0.000000e+00> : vector<8x512xf32>
    %286 = tpu.matmul %284, %285, %cst_84 {dimension_numbers = #tpu.dot_dimension_numbers<[1], [0], [0], [1], [0, 0, 1, 1], [], []>} : vector<8x128xbf16>, vector<128x512xbf16>, vector<8x512xf32> -> vector<8x512xf32>
    %287 = arith.addf %283, %286 : vector<8x512xf32>
    %288 = vector.extract_strided_slice %287 {offsets = [0, 0], sizes = [8, 128], strides = [1, 1]} : vector<8x512xf32> to vector<8x128xf32>
    %289 = arith.negf %288 : vector<8x128xf32>
    %290 = math.exp %289 : vector<8x128xf32>
    %cst_85 = arith.constant 1.000000e+00 : f32
    %291 = vector.broadcast %cst_85 : f32 to vector<8x128xf32>
    %292 = arith.addf %291, %290 : vector<8x128xf32>
    %293 = arith.divf %291, %292 : vector<8x128xf32>
    %294 = vector.extract_strided_slice %287 {offsets = [0, 128], sizes = [8, 128], strides = [1, 1]} : vector<8x512xf32> to vector<8x128xf32>
    %295 = arith.negf %294 : vector<8x128xf32>
    %296 = math.exp %295 : vector<8x128xf32>
    %cst_86 = arith.constant 1.000000e+00 : f32
    %297 = vector.broadcast %cst_86 : f32 to vector<8x128xf32>
    %298 = arith.addf %297, %296 : vector<8x128xf32>
    %299 = arith.divf %297, %298 : vector<8x128xf32>
    %300 = vector.extract_strided_slice %287 {offsets = [0, 256], sizes = [8, 128], strides = [1, 1]} : vector<8x512xf32> to vector<8x128xf32>
    %301 = math.tanh %300 : vector<8x128xf32>
    %302 = vector.extract_strided_slice %287 {offsets = [0, 384], sizes = [8, 128], strides = [1, 1]} : vector<8x512xf32> to vector<8x128xf32>
    %303 = arith.negf %302 : vector<8x128xf32>
    %304 = math.exp %303 : vector<8x128xf32>
    %cst_87 = arith.constant 1.000000e+00 : f32
    %305 = vector.broadcast %cst_87 : f32 to vector<8x128xf32>
    %306 = arith.addf %305, %304 : vector<8x128xf32>
    %307 = arith.divf %305, %306 : vector<8x128xf32>
    %308 = arith.mulf %299, %273 : vector<8x128xf32>
    %309 = arith.mulf %293, %301 : vector<8x128xf32>
    %310 = arith.addf %308, %309 : vector<8x128xf32>
    %311 = math.tanh %310 : vector<8x128xf32>
    %312 = arith.mulf %307, %311 : vector<8x128xf32>
    %c9 = arith.constant 9 : index
    %c0_88 = arith.constant 0 : index
    %c0_89 = arith.constant 0 : index
    %313 = vector.load %arg1[%c9, %c0_88, %c0_89] : memref<32x8x512xbf16, #tpu.memory_space<vmem>>, vector<1x8x512xbf16>
    %314 = vector.shape_cast %313 : vector<1x8x512xbf16> to vector<8x512xbf16>
    %315 = arith.extf %314 : vector<8x512xbf16> to vector<8x512xf32>
    %316 = arith.truncf %312 : vector<8x128xf32> to vector<8x128xbf16>
    %c0_90 = arith.constant 0 : index
    %c0_91 = arith.constant 0 : index
    %317 = vector.load %arg2[%c0_90, %c0_91] : memref<128x512xbf16, #tpu.memory_space<vmem>>, vector<128x512xbf16>
    %cst_92 = arith.constant dense<0.000000e+00> : vector<8x512xf32>
    %318 = tpu.matmul %316, %317, %cst_92 {dimension_numbers = #tpu.dot_dimension_numbers<[1], [0], [0], [1], [0, 0, 1, 1], [], []>} : vector<8x128xbf16>, vector<128x512xbf16>, vector<8x512xf32> -> vector<8x512xf32>
    %319 = arith.addf %315, %318 : vector<8x512xf32>
    %320 = vector.extract_strided_slice %319 {offsets = [0, 0], sizes = [8, 128], strides = [1, 1]} : vector<8x512xf32> to vector<8x128xf32>
    %321 = arith.negf %320 : vector<8x128xf32>
    %322 = math.exp %321 : vector<8x128xf32>
    %cst_93 = arith.constant 1.000000e+00 : f32
    %323 = vector.broadcast %cst_93 : f32 to vector<8x128xf32>
    %324 = arith.addf %323, %322 : vector<8x128xf32>
    %325 = arith.divf %323, %324 : vector<8x128xf32>
    %326 = vector.extract_strided_slice %319 {offsets = [0, 128], sizes = [8, 128], strides = [1, 1]} : vector<8x512xf32> to vector<8x128xf32>
    %327 = arith.negf %326 : vector<8x128xf32>
    %328 = math.exp %327 : vector<8x128xf32>
    %cst_94 = arith.constant 1.000000e+00 : f32
    %329 = vector.broadcast %cst_94 : f32 to vector<8x128xf32>
    %330 = arith.addf %329, %328 : vector<8x128xf32>
    %331 = arith.divf %329, %330 : vector<8x128xf32>
    %332 = vector.extract_strided_slice %319 {offsets = [0, 256], sizes = [8, 128], strides = [1, 1]} : vector<8x512xf32> to vector<8x128xf32>
    %333 = math.tanh %332 : vector<8x128xf32>
    %334 = vector.extract_strided_slice %319 {offsets = [0, 384], sizes = [8, 128], strides = [1, 1]} : vector<8x512xf32> to vector<8x128xf32>
    %335 = arith.negf %334 : vector<8x128xf32>
    %336 = math.exp %335 : vector<8x128xf32>
    %cst_95 = arith.constant 1.000000e+00 : f32
    %337 = vector.broadcast %cst_95 : f32 to vector<8x128xf32>
    %338 = arith.addf %337, %336 : vector<8x128xf32>
    %339 = arith.divf %337, %338 : vector<8x128xf32>
    %340 = arith.mulf %331, %310 : vector<8x128xf32>
    %341 = arith.mulf %325, %333 : vector<8x128xf32>
    %342 = arith.addf %340, %341 : vector<8x128xf32>
    %343 = math.tanh %342 : vector<8x128xf32>
    %344 = arith.mulf %339, %343 : vector<8x128xf32>
    %345 = vector.shape_cast %312 : vector<8x128xf32> to vector<8x1x128xf32>
    %346 = vector.shape_cast %344 : vector<8x128xf32> to vector<8x1x128xf32>
    %347 = tpu.concatenate %345, %346 in 1 : vector<8x1x128xf32>, vector<8x1x128xf32> -> vector<8x2x128xf32>
    %348 = arith.truncf %347 : vector<8x2x128xf32> to vector<8x2x128xbf16>
    %c0_96 = arith.constant 0 : index
    %c8_97 = arith.constant 8 : index
    %c0_98 = arith.constant 0 : index
    %349 = vector.load %arg5[%c0_96, %c8_97, %c0_98] : memref<8x32x128xbf16, #tpu.memory_space<vmem>>, vector<8x2x128xbf16>
    tpu.vector_store %arg5[%c0_96, %c8_97, %c0_98], %348 {strides = array<i32>} : memref<8x32x128xbf16, #tpu.memory_space<vmem>>, vector<8x2x128xbf16>,
    %c10 = arith.constant 10 : index
    %c0_99 = arith.constant 0 : index
    %c0_100 = arith.constant 0 : index
    %350 = vector.load %arg1[%c10, %c0_99, %c0_100] : memref<32x8x512xbf16, #tpu.memory_space<vmem>>, vector<1x8x512xbf16>
    %351 = vector.shape_cast %350 : vector<1x8x512xbf16> to vector<8x512xbf16>
    %352 = arith.extf %351 : vector<8x512xbf16> to vector<8x512xf32>
    %353 = arith.truncf %344 : vector<8x128xf32> to vector<8x128xbf16>
    %c0_101 = arith.constant 0 : index
    %c0_102 = arith.constant 0 : index
    %354 = vector.load %arg2[%c0_101, %c0_102] : memref<128x512xbf16, #tpu.memory_space<vmem>>, vector<128x512xbf16>
    %cst_103 = arith.constant dense<0.000000e+00> : vector<8x512xf32>
    %355 = tpu.matmul %353, %354, %cst_103 {dimension_numbers = #tpu.dot_dimension_numbers<[1], [0], [0], [1], [0, 0, 1, 1], [], []>} : vector<8x128xbf16>, vector<128x512xbf16>, vector<8x512xf32> -> vector<8x512xf32>
    %356 = arith.addf %352, %355 : vector<8x512xf32>
    %357 = vector.extract_strided_slice %356 {offsets = [0, 0], sizes = [8, 128], strides = [1, 1]} : vector<8x512xf32> to vector<8x128xf32>
    %358 = arith.negf %357 : vector<8x128xf32>
    %359 = math.exp %358 : vector<8x128xf32>
    %cst_104 = arith.constant 1.000000e+00 : f32
    %360 = vector.broadcast %cst_104 : f32 to vector<8x128xf32>
    %361 = arith.addf %360, %359 : vector<8x128xf32>
    %362 = arith.divf %360, %361 : vector<8x128xf32>
    %363 = vector.extract_strided_slice %356 {offsets = [0, 128], sizes = [8, 128], strides = [1, 1]} : vector<8x512xf32> to vector<8x128xf32>
    %364 = arith.negf %363 : vector<8x128xf32>
    %365 = math.exp %364 : vector<8x128xf32>
    %cst_105 = arith.constant 1.000000e+00 : f32
    %366 = vector.broadcast %cst_105 : f32 to vector<8x128xf32>
    %367 = arith.addf %366, %365 : vector<8x128xf32>
    %368 = arith.divf %366, %367 : vector<8x128xf32>
    %369 = vector.extract_strided_slice %356 {offsets = [0, 256], sizes = [8, 128], strides = [1, 1]} : vector<8x512xf32> to vector<8x128xf32>
    %370 = math.tanh %369 : vector<8x128xf32>
    %371 = vector.extract_strided_slice %356 {offsets = [0, 384], sizes = [8, 128], strides = [1, 1]} : vector<8x512xf32> to vector<8x128xf32>
    %372 = arith.negf %371 : vector<8x128xf32>
    %373 = math.exp %372 : vector<8x128xf32>
    %cst_106 = arith.constant 1.000000e+00 : f32
    %374 = vector.broadcast %cst_106 : f32 to vector<8x128xf32>
    %375 = arith.addf %374, %373 : vector<8x128xf32>
    %376 = arith.divf %374, %375 : vector<8x128xf32>
    %377 = arith.mulf %368, %342 : vector<8x128xf32>
    %378 = arith.mulf %362, %370 : vector<8x128xf32>
    %379 = arith.addf %377, %378 : vector<8x128xf32>
    %380 = math.tanh %379 : vector<8x128xf32>
    %381 = arith.mulf %376, %380 : vector<8x128xf32>
    %c11 = arith.constant 11 : index
    %c0_107 = arith.constant 0 : index
    %c0_108 = arith.constant 0 : index
    %382 = vector.load %arg1[%c11, %c0_107, %c0_108] : memref<32x8x512xbf16, #tpu.memory_space<vmem>>, vector<1x8x512xbf16>
    %383 = vector.shape_cast %382 : vector<1x8x512xbf16> to vector<8x512xbf16>
    %384 = arith.extf %383 : vector<8x512xbf16> to vector<8x512xf32>
    %385 = arith.truncf %381 : vector<8x128xf32> to vector<8x128xbf16>
    %c0_109 = arith.constant 0 : index
    %c0_110 = arith.constant 0 : index
    %386 = vector.load %arg2[%c0_109, %c0_110] : memref<128x512xbf16, #tpu.memory_space<vmem>>, vector<128x512xbf16>
    %cst_111 = arith.constant dense<0.000000e+00> : vector<8x512xf32>
    %387 = tpu.matmul %385, %386, %cst_111 {dimension_numbers = #tpu.dot_dimension_numbers<[1], [0], [0], [1], [0, 0, 1, 1], [], []>} : vector<8x128xbf16>, vector<128x512xbf16>, vector<8x512xf32> -> vector<8x512xf32>
    %388 = arith.addf %384, %387 : vector<8x512xf32>
    %389 = vector.extract_strided_slice %388 {offsets = [0, 0], sizes = [8, 128], strides = [1, 1]} : vector<8x512xf32> to vector<8x128xf32>
    %390 = arith.negf %389 : vector<8x128xf32>
    %391 = math.exp %390 : vector<8x128xf32>
    %cst_112 = arith.constant 1.000000e+00 : f32
    %392 = vector.broadcast %cst_112 : f32 to vector<8x128xf32>
    %393 = arith.addf %392, %391 : vector<8x128xf32>
    %394 = arith.divf %392, %393 : vector<8x128xf32>
    %395 = vector.extract_strided_slice %388 {offsets = [0, 128], sizes = [8, 128], strides = [1, 1]} : vector<8x512xf32> to vector<8x128xf32>
    %396 = arith.negf %395 : vector<8x128xf32>
    %397 = math.exp %396 : vector<8x128xf32>
    %cst_113 = arith.constant 1.000000e+00 : f32
    %398 = vector.broadcast %cst_113 : f32 to vector<8x128xf32>
    %399 = arith.addf %398, %397 : vector<8x128xf32>
    %400 = arith.divf %398, %399 : vector<8x128xf32>
    %401 = vector.extract_strided_slice %388 {offsets = [0, 256], sizes = [8, 128], strides = [1, 1]} : vector<8x512xf32> to vector<8x128xf32>
    %402 = math.tanh %401 : vector<8x128xf32>
    %403 = vector.extract_strided_slice %388 {offsets = [0, 384], sizes = [8, 128], strides = [1, 1]} : vector<8x512xf32> to vector<8x128xf32>
    %404 = arith.negf %403 : vector<8x128xf32>
    %405 = math.exp %404 : vector<8x128xf32>
    %cst_114 = arith.constant 1.000000e+00 : f32
    %406 = vector.broadcast %cst_114 : f32 to vector<8x128xf32>
    %407 = arith.addf %406, %405 : vector<8x128xf32>
    %408 = arith.divf %406, %407 : vector<8x128xf32>
    %409 = arith.mulf %400, %379 : vector<8x128xf32>
    %410 = arith.mulf %394, %402 : vector<8x128xf32>
    %411 = arith.addf %409, %410 : vector<8x128xf32>
    %412 = math.tanh %411 : vector<8x128xf32>
    %413 = arith.mulf %408, %412 : vector<8x128xf32>
    %414 = vector.shape_cast %381 : vector<8x128xf32> to vector<8x1x128xf32>
    %415 = vector.shape_cast %413 : vector<8x128xf32> to vector<8x1x128xf32>
    %416 = tpu.concatenate %414, %415 in 1 : vector<8x1x128xf32>, vector<8x1x128xf32> -> vector<8x2x128xf32>
    %417 = arith.truncf %416 : vector<8x2x128xf32> to vector<8x2x128xbf16>
    %c0_115 = arith.constant 0 : index
    %c10_116 = arith.constant 10 : index
    %c0_117 = arith.constant 0 : index
    %418 = vector.load %arg5[%c0_115, %c10_116, %c0_117] : memref<8x32x128xbf16, #tpu.memory_space<vmem>>, vector<8x2x128xbf16>
    tpu.vector_store %arg5[%c0_115, %c10_116, %c0_117], %417 {strides = array<i32>} : memref<8x32x128xbf16, #tpu.memory_space<vmem>>, vector<8x2x128xbf16>,
    %c12 = arith.constant 12 : index
    %c0_118 = arith.constant 0 : index
    %c0_119 = arith.constant 0 : index
    %419 = vector.load %arg1[%c12, %c0_118, %c0_119] : memref<32x8x512xbf16, #tpu.memory_space<vmem>>, vector<1x8x512xbf16>
    %420 = vector.shape_cast %419 : vector<1x8x512xbf16> to vector<8x512xbf16>
    %421 = arith.extf %420 : vector<8x512xbf16> to vector<8x512xf32>
    %422 = arith.truncf %413 : vector<8x128xf32> to vector<8x128xbf16>
    %c0_120 = arith.constant 0 : index
    %c0_121 = arith.constant 0 : index
    %423 = vector.load %arg2[%c0_120, %c0_121] : memref<128x512xbf16, #tpu.memory_space<vmem>>, vector<128x512xbf16>
    %cst_122 = arith.constant dense<0.000000e+00> : vector<8x512xf32>
    %424 = tpu.matmul %422, %423, %cst_122 {dimension_numbers = #tpu.dot_dimension_numbers<[1], [0], [0], [1], [0, 0, 1, 1], [], []>} : vector<8x128xbf16>, vector<128x512xbf16>, vector<8x512xf32> -> vector<8x512xf32>
    %425 = arith.addf %421, %424 : vector<8x512xf32>
    %426 = vector.extract_strided_slice %425 {offsets = [0, 0], sizes = [8, 128], strides = [1, 1]} : vector<8x512xf32> to vector<8x128xf32>
    %427 = arith.negf %426 : vector<8x128xf32>
    %428 = math.exp %427 : vector<8x128xf32>
    %cst_123 = arith.constant 1.000000e+00 : f32
    %429 = vector.broadcast %cst_123 : f32 to vector<8x128xf32>
    %430 = arith.addf %429, %428 : vector<8x128xf32>
    %431 = arith.divf %429, %430 : vector<8x128xf32>
    %432 = vector.extract_strided_slice %425 {offsets = [0, 128], sizes = [8, 128], strides = [1, 1]} : vector<8x512xf32> to vector<8x128xf32>
    %433 = arith.negf %432 : vector<8x128xf32>
    %434 = math.exp %433 : vector<8x128xf32>
    %cst_124 = arith.constant 1.000000e+00 : f32
    %435 = vector.broadcast %cst_124 : f32 to vector<8x128xf32>
    %436 = arith.addf %435, %434 : vector<8x128xf32>
    %437 = arith.divf %435, %436 : vector<8x128xf32>
    %438 = vector.extract_strided_slice %425 {offsets = [0, 256], sizes = [8, 128], strides = [1, 1]} : vector<8x512xf32> to vector<8x128xf32>
    %439 = math.tanh %438 : vector<8x128xf32>
    %440 = vector.extract_strided_slice %425 {offsets = [0, 384], sizes = [8, 128], strides = [1, 1]} : vector<8x512xf32> to vector<8x128xf32>
    %441 = arith.negf %440 : vector<8x128xf32>
    %442 = math.exp %441 : vector<8x128xf32>
    %cst_125 = arith.constant 1.000000e+00 : f32
    %443 = vector.broadcast %cst_125 : f32 to vector<8x128xf32>
    %444 = arith.addf %443, %442 : vector<8x128xf32>
    %445 = arith.divf %443, %444 : vector<8x128xf32>
    %446 = arith.mulf %437, %411 : vector<8x128xf32>
    %447 = arith.mulf %431, %439 : vector<8x128xf32>
    %448 = arith.addf %446, %447 : vector<8x128xf32>
    %449 = math.tanh %448 : vector<8x128xf32>
    %450 = arith.mulf %445, %449 : vector<8x128xf32>
    %c13 = arith.constant 13 : index
    %c0_126 = arith.constant 0 : index
    %c0_127 = arith.constant 0 : index
    %451 = vector.load %arg1[%c13, %c0_126, %c0_127] : memref<32x8x512xbf16, #tpu.memory_space<vmem>>, vector<1x8x512xbf16>
    %452 = vector.shape_cast %451 : vector<1x8x512xbf16> to vector<8x512xbf16>
    %453 = arith.extf %452 : vector<8x512xbf16> to vector<8x512xf32>
    %454 = arith.truncf %450 : vector<8x128xf32> to vector<8x128xbf16>
    %c0_128 = arith.constant 0 : index
    %c0_129 = arith.constant 0 : index
    %455 = vector.load %arg2[%c0_128, %c0_129] : memref<128x512xbf16, #tpu.memory_space<vmem>>, vector<128x512xbf16>
    %cst_130 = arith.constant dense<0.000000e+00> : vector<8x512xf32>
    %456 = tpu.matmul %454, %455, %cst_130 {dimension_numbers = #tpu.dot_dimension_numbers<[1], [0], [0], [1], [0, 0, 1, 1], [], []>} : vector<8x128xbf16>, vector<128x512xbf16>, vector<8x512xf32> -> vector<8x512xf32>
    %457 = arith.addf %453, %456 : vector<8x512xf32>
    %458 = vector.extract_strided_slice %457 {offsets = [0, 0], sizes = [8, 128], strides = [1, 1]} : vector<8x512xf32> to vector<8x128xf32>
    %459 = arith.negf %458 : vector<8x128xf32>
    %460 = math.exp %459 : vector<8x128xf32>
    %cst_131 = arith.constant 1.000000e+00 : f32
    %461 = vector.broadcast %cst_131 : f32 to vector<8x128xf32>
    %462 = arith.addf %461, %460 : vector<8x128xf32>
    %463 = arith.divf %461, %462 : vector<8x128xf32>
    %464 = vector.extract_strided_slice %457 {offsets = [0, 128], sizes = [8, 128], strides = [1, 1]} : vector<8x512xf32> to vector<8x128xf32>
    %465 = arith.negf %464 : vector<8x128xf32>
    %466 = math.exp %465 : vector<8x128xf32>
    %cst_132 = arith.constant 1.000000e+00 : f32
    %467 = vector.broadcast %cst_132 : f32 to vector<8x128xf32>
    %468 = arith.addf %467, %466 : vector<8x128xf32>
    %469 = arith.divf %467, %468 : vector<8x128xf32>
    %470 = vector.extract_strided_slice %457 {offsets = [0, 256], sizes = [8, 128], strides = [1, 1]} : vector<8x512xf32> to vector<8x128xf32>
    %471 = math.tanh %470 : vector<8x128xf32>
    %472 = vector.extract_strided_slice %457 {offsets = [0, 384], sizes = [8, 128], strides = [1, 1]} : vector<8x512xf32> to vector<8x128xf32>
    %473 = arith.negf %472 : vector<8x128xf32>
    %474 = math.exp %473 : vector<8x128xf32>
    %cst_133 = arith.constant 1.000000e+00 : f32
    %475 = vector.broadcast %cst_133 : f32 to vector<8x128xf32>
    %476 = arith.addf %475, %474 : vector<8x128xf32>
    %477 = arith.divf %475, %476 : vector<8x128xf32>
    %478 = arith.mulf %469, %448 : vector<8x128xf32>
    %479 = arith.mulf %463, %471 : vector<8x128xf32>
    %480 = arith.addf %478, %479 : vector<8x128xf32>
    %481 = math.tanh %480 : vector<8x128xf32>
    %482 = arith.mulf %477, %481 : vector<8x128xf32>
    %483 = vector.shape_cast %450 : vector<8x128xf32> to vector<8x1x128xf32>
    %484 = vector.shape_cast %482 : vector<8x128xf32> to vector<8x1x128xf32>
    %485 = tpu.concatenate %483, %484 in 1 : vector<8x1x128xf32>, vector<8x1x128xf32> -> vector<8x2x128xf32>
    %486 = arith.truncf %485 : vector<8x2x128xf32> to vector<8x2x128xbf16>
    %c0_134 = arith.constant 0 : index
    %c12_135 = arith.constant 12 : index
    %c0_136 = arith.constant 0 : index
    %487 = vector.load %arg5[%c0_134, %c12_135, %c0_136] : memref<8x32x128xbf16, #tpu.memory_space<vmem>>, vector<8x2x128xbf16>
    tpu.vector_store %arg5[%c0_134, %c12_135, %c0_136], %486 {strides = array<i32>} : memref<8x32x128xbf16, #tpu.memory_space<vmem>>, vector<8x2x128xbf16>,
    %c14 = arith.constant 14 : index
    %c0_137 = arith.constant 0 : index
    %c0_138 = arith.constant 0 : index
    %488 = vector.load %arg1[%c14, %c0_137, %c0_138] : memref<32x8x512xbf16, #tpu.memory_space<vmem>>, vector<1x8x512xbf16>
    %489 = vector.shape_cast %488 : vector<1x8x512xbf16> to vector<8x512xbf16>
    %490 = arith.extf %489 : vector<8x512xbf16> to vector<8x512xf32>
    %491 = arith.truncf %482 : vector<8x128xf32> to vector<8x128xbf16>
    %c0_139 = arith.constant 0 : index
    %c0_140 = arith.constant 0 : index
    %492 = vector.load %arg2[%c0_139, %c0_140] : memref<128x512xbf16, #tpu.memory_space<vmem>>, vector<128x512xbf16>
    %cst_141 = arith.constant dense<0.000000e+00> : vector<8x512xf32>
    %493 = tpu.matmul %491, %492, %cst_141 {dimension_numbers = #tpu.dot_dimension_numbers<[1], [0], [0], [1], [0, 0, 1, 1], [], []>} : vector<8x128xbf16>, vector<128x512xbf16>, vector<8x512xf32> -> vector<8x512xf32>
    %494 = arith.addf %490, %493 : vector<8x512xf32>
    %495 = vector.extract_strided_slice %494 {offsets = [0, 0], sizes = [8, 128], strides = [1, 1]} : vector<8x512xf32> to vector<8x128xf32>
    %496 = arith.negf %495 : vector<8x128xf32>
    %497 = math.exp %496 : vector<8x128xf32>
    %cst_142 = arith.constant 1.000000e+00 : f32
    %498 = vector.broadcast %cst_142 : f32 to vector<8x128xf32>
    %499 = arith.addf %498, %497 : vector<8x128xf32>
    %500 = arith.divf %498, %499 : vector<8x128xf32>
    %501 = vector.extract_strided_slice %494 {offsets = [0, 128], sizes = [8, 128], strides = [1, 1]} : vector<8x512xf32> to vector<8x128xf32>
    %502 = arith.negf %501 : vector<8x128xf32>
    %503 = math.exp %502 : vector<8x128xf32>
    %cst_143 = arith.constant 1.000000e+00 : f32
    %504 = vector.broadcast %cst_143 : f32 to vector<8x128xf32>
    %505 = arith.addf %504, %503 : vector<8x128xf32>
    %506 = arith.divf %504, %505 : vector<8x128xf32>
    %507 = vector.extract_strided_slice %494 {offsets = [0, 256], sizes = [8, 128], strides = [1, 1]} : vector<8x512xf32> to vector<8x128xf32>
    %508 = math.tanh %507 : vector<8x128xf32>
    %509 = vector.extract_strided_slice %494 {offsets = [0, 384], sizes = [8, 128], strides = [1, 1]} : vector<8x512xf32> to vector<8x128xf32>
    %510 = arith.negf %509 : vector<8x128xf32>
    %511 = math.exp %510 : vector<8x128xf32>
    %cst_144 = arith.constant 1.000000e+00 : f32
    %512 = vector.broadcast %cst_144 : f32 to vector<8x128xf32>
    %513 = arith.addf %512, %511 : vector<8x128xf32>
    %514 = arith.divf %512, %513 : vector<8x128xf32>
    %515 = arith.mulf %506, %480 : vector<8x128xf32>
    %516 = arith.mulf %500, %508 : vector<8x128xf32>
    %517 = arith.addf %515, %516 : vector<8x128xf32>
    %518 = math.tanh %517 : vector<8x128xf32>
    %519 = arith.mulf %514, %518 : vector<8x128xf32>
    %c15 = arith.constant 15 : index
    %c0_145 = arith.constant 0 : index
    %c0_146 = arith.constant 0 : index
    %520 = vector.load %arg1[%c15, %c0_145, %c0_146] : memref<32x8x512xbf16, #tpu.memory_space<vmem>>, vector<1x8x512xbf16>
    %521 = vector.shape_cast %520 : vector<1x8x512xbf16> to vector<8x512xbf16>
    %522 = arith.extf %521 : vector<8x512xbf16> to vector<8x512xf32>
    %523 = arith.truncf %519 : vector<8x128xf32> to vector<8x128xbf16>
    %c0_147 = arith.constant 0 : index
    %c0_148 = arith.constant 0 : index
    %524 = vector.load %arg2[%c0_147, %c0_148] : memref<128x512xbf16, #tpu.memory_space<vmem>>, vector<128x512xbf16>
    %cst_149 = arith.constant dense<0.000000e+00> : vector<8x512xf32>
    %525 = tpu.matmul %523, %524, %cst_149 {dimension_numbers = #tpu.dot_dimension_numbers<[1], [0], [0], [1], [0, 0, 1, 1], [], []>} : vector<8x128xbf16>, vector<128x512xbf16>, vector<8x512xf32> -> vector<8x512xf32>
    %526 = arith.addf %522, %525 : vector<8x512xf32>
    %527 = vector.extract_strided_slice %526 {offsets = [0, 0], sizes = [8, 128], strides = [1, 1]} : vector<8x512xf32> to vector<8x128xf32>
    %528 = arith.negf %527 : vector<8x128xf32>
    %529 = math.exp %528 : vector<8x128xf32>
    %cst_150 = arith.constant 1.000000e+00 : f32
    %530 = vector.broadcast %cst_150 : f32 to vector<8x128xf32>
    %531 = arith.addf %530, %529 : vector<8x128xf32>
    %532 = arith.divf %530, %531 : vector<8x128xf32>
    %533 = vector.extract_strided_slice %526 {offsets = [0, 128], sizes = [8, 128], strides = [1, 1]} : vector<8x512xf32> to vector<8x128xf32>
    %534 = arith.negf %533 : vector<8x128xf32>
    %535 = math.exp %534 : vector<8x128xf32>
    %cst_151 = arith.constant 1.000000e+00 : f32
    %536 = vector.broadcast %cst_151 : f32 to vector<8x128xf32>
    %537 = arith.addf %536, %535 : vector<8x128xf32>
    %538 = arith.divf %536, %537 : vector<8x128xf32>
    %539 = vector.extract_strided_slice %526 {offsets = [0, 256], sizes = [8, 128], strides = [1, 1]} : vector<8x512xf32> to vector<8x128xf32>
    %540 = math.tanh %539 : vector<8x128xf32>
    %541 = vector.extract_strided_slice %526 {offsets = [0, 384], sizes = [8, 128], strides = [1, 1]} : vector<8x512xf32> to vector<8x128xf32>
    %542 = arith.negf %541 : vector<8x128xf32>
    %543 = math.exp %542 : vector<8x128xf32>
    %cst_152 = arith.constant 1.000000e+00 : f32
    %544 = vector.broadcast %cst_152 : f32 to vector<8x128xf32>
    %545 = arith.addf %544, %543 : vector<8x128xf32>
    %546 = arith.divf %544, %545 : vector<8x128xf32>
    %547 = arith.mulf %538, %517 : vector<8x128xf32>
    %548 = arith.mulf %532, %540 : vector<8x128xf32>
    %549 = arith.addf %547, %548 : vector<8x128xf32>
    %550 = math.tanh %549 : vector<8x128xf32>
    %551 = arith.mulf %546, %550 : vector<8x128xf32>
    %552 = vector.shape_cast %519 : vector<8x128xf32> to vector<8x1x128xf32>
    %553 = vector.shape_cast %551 : vector<8x128xf32> to vector<8x1x128xf32>
    %554 = tpu.concatenate %552, %553 in 1 : vector<8x1x128xf32>, vector<8x1x128xf32> -> vector<8x2x128xf32>
    %555 = arith.truncf %554 : vector<8x2x128xf32> to vector<8x2x128xbf16>
    %c0_153 = arith.constant 0 : index
    %c14_154 = arith.constant 14 : index
    %c0_155 = arith.constant 0 : index
    %556 = vector.load %arg5[%c0_153, %c14_154, %c0_155] : memref<8x32x128xbf16, #tpu.memory_space<vmem>>, vector<8x2x128xbf16>
    tpu.vector_store %arg5[%c0_153, %c14_154, %c0_155], %555 {strides = array<i32>} : memref<8x32x128xbf16, #tpu.memory_space<vmem>>, vector<8x2x128xbf16>,
    %c16 = arith.constant 16 : index
    %c0_156 = arith.constant 0 : index
    %c0_157 = arith.constant 0 : index
    %557 = vector.load %arg1[%c16, %c0_156, %c0_157] : memref<32x8x512xbf16, #tpu.memory_space<vmem>>, vector<1x8x512xbf16>
    %558 = vector.shape_cast %557 : vector<1x8x512xbf16> to vector<8x512xbf16>
    %559 = arith.extf %558 : vector<8x512xbf16> to vector<8x512xf32>
    %560 = arith.truncf %551 : vector<8x128xf32> to vector<8x128xbf16>
    %c0_158 = arith.constant 0 : index
    %c0_159 = arith.constant 0 : index
    %561 = vector.load %arg2[%c0_158, %c0_159] : memref<128x512xbf16, #tpu.memory_space<vmem>>, vector<128x512xbf16>
    %cst_160 = arith.constant dense<0.000000e+00> : vector<8x512xf32>
    %562 = tpu.matmul %560, %561, %cst_160 {dimension_numbers = #tpu.dot_dimension_numbers<[1], [0], [0], [1], [0, 0, 1, 1], [], []>} : vector<8x128xbf16>, vector<128x512xbf16>, vector<8x512xf32> -> vector<8x512xf32>
    %563 = arith.addf %559, %562 : vector<8x512xf32>
    %564 = vector.extract_strided_slice %563 {offsets = [0, 0], sizes = [8, 128], strides = [1, 1]} : vector<8x512xf32> to vector<8x128xf32>
    %565 = arith.negf %564 : vector<8x128xf32>
    %566 = math.exp %565 : vector<8x128xf32>
    %cst_161 = arith.constant 1.000000e+00 : f32
    %567 = vector.broadcast %cst_161 : f32 to vector<8x128xf32>
    %568 = arith.addf %567, %566 : vector<8x128xf32>
    %569 = arith.divf %567, %568 : vector<8x128xf32>
    %570 = vector.extract_strided_slice %563 {offsets = [0, 128], sizes = [8, 128], strides = [1, 1]} : vector<8x512xf32> to vector<8x128xf32>
    %571 = arith.negf %570 : vector<8x128xf32>
    %572 = math.exp %571 : vector<8x128xf32>
    %cst_162 = arith.constant 1.000000e+00 : f32
    %573 = vector.broadcast %cst_162 : f32 to vector<8x128xf32>
    %574 = arith.addf %573, %572 : vector<8x128xf32>
    %575 = arith.divf %573, %574 : vector<8x128xf32>
    %576 = vector.extract_strided_slice %563 {offsets = [0, 256], sizes = [8, 128], strides = [1, 1]} : vector<8x512xf32> to vector<8x128xf32>
    %577 = math.tanh %576 : vector<8x128xf32>
    %578 = vector.extract_strided_slice %563 {offsets = [0, 384], sizes = [8, 128], strides = [1, 1]} : vector<8x512xf32> to vector<8x128xf32>
    %579 = arith.negf %578 : vector<8x128xf32>
    %580 = math.exp %579 : vector<8x128xf32>
    %cst_163 = arith.constant 1.000000e+00 : f32
    %581 = vector.broadcast %cst_163 : f32 to vector<8x128xf32>
    %582 = arith.addf %581, %580 : vector<8x128xf32>
    %583 = arith.divf %581, %582 : vector<8x128xf32>
    %584 = arith.mulf %575, %549 : vector<8x128xf32>
    %585 = arith.mulf %569, %577 : vector<8x128xf32>
    %586 = arith.addf %584, %585 : vector<8x128xf32>
    %587 = math.tanh %586 : vector<8x128xf32>
    %588 = arith.mulf %583, %587 : vector<8x128xf32>
    %c17 = arith.constant 17 : index
    %c0_164 = arith.constant 0 : index
    %c0_165 = arith.constant 0 : index
    %589 = vector.load %arg1[%c17, %c0_164, %c0_165] : memref<32x8x512xbf16, #tpu.memory_space<vmem>>, vector<1x8x512xbf16>
    %590 = vector.shape_cast %589 : vector<1x8x512xbf16> to vector<8x512xbf16>
    %591 = arith.extf %590 : vector<8x512xbf16> to vector<8x512xf32>
    %592 = arith.truncf %588 : vector<8x128xf32> to vector<8x128xbf16>
    %c0_166 = arith.constant 0 : index
    %c0_167 = arith.constant 0 : index
    %593 = vector.load %arg2[%c0_166, %c0_167] : memref<128x512xbf16, #tpu.memory_space<vmem>>, vector<128x512xbf16>
    %cst_168 = arith.constant dense<0.000000e+00> : vector<8x512xf32>
    %594 = tpu.matmul %592, %593, %cst_168 {dimension_numbers = #tpu.dot_dimension_numbers<[1], [0], [0], [1], [0, 0, 1, 1], [], []>} : vector<8x128xbf16>, vector<128x512xbf16>, vector<8x512xf32> -> vector<8x512xf32>
    %595 = arith.addf %591, %594 : vector<8x512xf32>
    %596 = vector.extract_strided_slice %595 {offsets = [0, 0], sizes = [8, 128], strides = [1, 1]} : vector<8x512xf32> to vector<8x128xf32>
    %597 = arith.negf %596 : vector<8x128xf32>
    %598 = math.exp %597 : vector<8x128xf32>
    %cst_169 = arith.constant 1.000000e+00 : f32
    %599 = vector.broadcast %cst_169 : f32 to vector<8x128xf32>
    %600 = arith.addf %599, %598 : vector<8x128xf32>
    %601 = arith.divf %599, %600 : vector<8x128xf32>
    %602 = vector.extract_strided_slice %595 {offsets = [0, 128], sizes = [8, 128], strides = [1, 1]} : vector<8x512xf32> to vector<8x128xf32>
    %603 = arith.negf %602 : vector<8x128xf32>
    %604 = math.exp %603 : vector<8x128xf32>
    %cst_170 = arith.constant 1.000000e+00 : f32
    %605 = vector.broadcast %cst_170 : f32 to vector<8x128xf32>
    %606 = arith.addf %605, %604 : vector<8x128xf32>
    %607 = arith.divf %605, %606 : vector<8x128xf32>
    %608 = vector.extract_strided_slice %595 {offsets = [0, 256], sizes = [8, 128], strides = [1, 1]} : vector<8x512xf32> to vector<8x128xf32>
    %609 = math.tanh %608 : vector<8x128xf32>
    %610 = vector.extract_strided_slice %595 {offsets = [0, 384], sizes = [8, 128], strides = [1, 1]} : vector<8x512xf32> to vector<8x128xf32>
    %611 = arith.negf %610 : vector<8x128xf32>
    %612 = math.exp %611 : vector<8x128xf32>
    %cst_171 = arith.constant 1.000000e+00 : f32
    %613 = vector.broadcast %cst_171 : f32 to vector<8x128xf32>
    %614 = arith.addf %613, %612 : vector<8x128xf32>
    %615 = arith.divf %613, %614 : vector<8x128xf32>
    %616 = arith.mulf %607, %586 : vector<8x128xf32>
    %617 = arith.mulf %601, %609 : vector<8x128xf32>
    %618 = arith.addf %616, %617 : vector<8x128xf32>
    %619 = math.tanh %618 : vector<8x128xf32>
    %620 = arith.mulf %615, %619 : vector<8x128xf32>
    %621 = vector.shape_cast %588 : vector<8x128xf32> to vector<8x1x128xf32>
    %622 = vector.shape_cast %620 : vector<8x128xf32> to vector<8x1x128xf32>
    %623 = tpu.concatenate %621, %622 in 1 : vector<8x1x128xf32>, vector<8x1x128xf32> -> vector<8x2x128xf32>
    %624 = arith.truncf %623 : vector<8x2x128xf32> to vector<8x2x128xbf16>
    %c0_172 = arith.constant 0 : index
    %c16_173 = arith.constant 16 : index
    %c0_174 = arith.constant 0 : index
    %625 = vector.load %arg5[%c0_172, %c16_173, %c0_174] : memref<8x32x128xbf16, #tpu.memory_space<vmem>>, vector<8x2x128xbf16>
    tpu.vector_store %arg5[%c0_172, %c16_173, %c0_174], %624 {strides = array<i32>} : memref<8x32x128xbf16, #tpu.memory_space<vmem>>, vector<8x2x128xbf16>,
    %c18 = arith.constant 18 : index
    %c0_175 = arith.constant 0 : index
    %c0_176 = arith.constant 0 : index
    %626 = vector.load %arg1[%c18, %c0_175, %c0_176] : memref<32x8x512xbf16, #tpu.memory_space<vmem>>, vector<1x8x512xbf16>
    %627 = vector.shape_cast %626 : vector<1x8x512xbf16> to vector<8x512xbf16>
    %628 = arith.extf %627 : vector<8x512xbf16> to vector<8x512xf32>
    %629 = arith.truncf %620 : vector<8x128xf32> to vector<8x128xbf16>
    %c0_177 = arith.constant 0 : index
    %c0_178 = arith.constant 0 : index
    %630 = vector.load %arg2[%c0_177, %c0_178] : memref<128x512xbf16, #tpu.memory_space<vmem>>, vector<128x512xbf16>
    %cst_179 = arith.constant dense<0.000000e+00> : vector<8x512xf32>
    %631 = tpu.matmul %629, %630, %cst_179 {dimension_numbers = #tpu.dot_dimension_numbers<[1], [0], [0], [1], [0, 0, 1, 1], [], []>} : vector<8x128xbf16>, vector<128x512xbf16>, vector<8x512xf32> -> vector<8x512xf32>
    %632 = arith.addf %628, %631 : vector<8x512xf32>
    %633 = vector.extract_strided_slice %632 {offsets = [0, 0], sizes = [8, 128], strides = [1, 1]} : vector<8x512xf32> to vector<8x128xf32>
    %634 = arith.negf %633 : vector<8x128xf32>
    %635 = math.exp %634 : vector<8x128xf32>
    %cst_180 = arith.constant 1.000000e+00 : f32
    %636 = vector.broadcast %cst_180 : f32 to vector<8x128xf32>
    %637 = arith.addf %636, %635 : vector<8x128xf32>
    %638 = arith.divf %636, %637 : vector<8x128xf32>
    %639 = vector.extract_strided_slice %632 {offsets = [0, 128], sizes = [8, 128], strides = [1, 1]} : vector<8x512xf32> to vector<8x128xf32>
    %640 = arith.negf %639 : vector<8x128xf32>
    %641 = math.exp %640 : vector<8x128xf32>
    %cst_181 = arith.constant 1.000000e+00 : f32
    %642 = vector.broadcast %cst_181 : f32 to vector<8x128xf32>
    %643 = arith.addf %642, %641 : vector<8x128xf32>
    %644 = arith.divf %642, %643 : vector<8x128xf32>
    %645 = vector.extract_strided_slice %632 {offsets = [0, 256], sizes = [8, 128], strides = [1, 1]} : vector<8x512xf32> to vector<8x128xf32>
    %646 = math.tanh %645 : vector<8x128xf32>
    %647 = vector.extract_strided_slice %632 {offsets = [0, 384], sizes = [8, 128], strides = [1, 1]} : vector<8x512xf32> to vector<8x128xf32>
    %648 = arith.negf %647 : vector<8x128xf32>
    %649 = math.exp %648 : vector<8x128xf32>
    %cst_182 = arith.constant 1.000000e+00 : f32
    %650 = vector.broadcast %cst_182 : f32 to vector<8x128xf32>
    %651 = arith.addf %650, %649 : vector<8x128xf32>
    %652 = arith.divf %650, %651 : vector<8x128xf32>
    %653 = arith.mulf %644, %618 : vector<8x128xf32>
    %654 = arith.mulf %638, %646 : vector<8x128xf32>
    %655 = arith.addf %653, %654 : vector<8x128xf32>
    %656 = math.tanh %655 : vector<8x128xf32>
    %657 = arith.mulf %652, %656 : vector<8x128xf32>
    %c19 = arith.constant 19 : index
    %c0_183 = arith.constant 0 : index
    %c0_184 = arith.constant 0 : index
    %658 = vector.load %arg1[%c19, %c0_183, %c0_184] : memref<32x8x512xbf16, #tpu.memory_space<vmem>>, vector<1x8x512xbf16>
    %659 = vector.shape_cast %658 : vector<1x8x512xbf16> to vector<8x512xbf16>
    %660 = arith.extf %659 : vector<8x512xbf16> to vector<8x512xf32>
    %661 = arith.truncf %657 : vector<8x128xf32> to vector<8x128xbf16>
    %c0_185 = arith.constant 0 : index
    %c0_186 = arith.constant 0 : index
    %662 = vector.load %arg2[%c0_185, %c0_186] : memref<128x512xbf16, #tpu.memory_space<vmem>>, vector<128x512xbf16>
    %cst_187 = arith.constant dense<0.000000e+00> : vector<8x512xf32>
    %663 = tpu.matmul %661, %662, %cst_187 {dimension_numbers = #tpu.dot_dimension_numbers<[1], [0], [0], [1], [0, 0, 1, 1], [], []>} : vector<8x128xbf16>, vector<128x512xbf16>, vector<8x512xf32> -> vector<8x512xf32>
    %664 = arith.addf %660, %663 : vector<8x512xf32>
    %665 = vector.extract_strided_slice %664 {offsets = [0, 0], sizes = [8, 128], strides = [1, 1]} : vector<8x512xf32> to vector<8x128xf32>
    %666 = arith.negf %665 : vector<8x128xf32>
    %667 = math.exp %666 : vector<8x128xf32>
    %cst_188 = arith.constant 1.000000e+00 : f32
    %668 = vector.broadcast %cst_188 : f32 to vector<8x128xf32>
    %669 = arith.addf %668, %667 : vector<8x128xf32>
    %670 = arith.divf %668, %669 : vector<8x128xf32>
    %671 = vector.extract_strided_slice %664 {offsets = [0, 128], sizes = [8, 128], strides = [1, 1]} : vector<8x512xf32> to vector<8x128xf32>
    %672 = arith.negf %671 : vector<8x128xf32>
    %673 = math.exp %672 : vector<8x128xf32>
    %cst_189 = arith.constant 1.000000e+00 : f32
    %674 = vector.broadcast %cst_189 : f32 to vector<8x128xf32>
    %675 = arith.addf %674, %673 : vector<8x128xf32>
    %676 = arith.divf %674, %675 : vector<8x128xf32>
    %677 = vector.extract_strided_slice %664 {offsets = [0, 256], sizes = [8, 128], strides = [1, 1]} : vector<8x512xf32> to vector<8x128xf32>
    %678 = math.tanh %677 : vector<8x128xf32>
    %679 = vector.extract_strided_slice %664 {offsets = [0, 384], sizes = [8, 128], strides = [1, 1]} : vector<8x512xf32> to vector<8x128xf32>
    %680 = arith.negf %679 : vector<8x128xf32>
    %681 = math.exp %680 : vector<8x128xf32>
    %cst_190 = arith.constant 1.000000e+00 : f32
    %682 = vector.broadcast %cst_190 : f32 to vector<8x128xf32>
    %683 = arith.addf %682, %681 : vector<8x128xf32>
    %684 = arith.divf %682, %683 : vector<8x128xf32>
    %685 = arith.mulf %676, %655 : vector<8x128xf32>
    %686 = arith.mulf %670, %678 : vector<8x128xf32>
    %687 = arith.addf %685, %686 : vector<8x128xf32>
    %688 = math.tanh %687 : vector<8x128xf32>
    %689 = arith.mulf %684, %688 : vector<8x128xf32>
    %690 = vector.shape_cast %657 : vector<8x128xf32> to vector<8x1x128xf32>
    %691 = vector.shape_cast %689 : vector<8x128xf32> to vector<8x1x128xf32>
    %692 = tpu.concatenate %690, %691 in 1 : vector<8x1x128xf32>, vector<8x1x128xf32> -> vector<8x2x128xf32>
    %693 = arith.truncf %692 : vector<8x2x128xf32> to vector<8x2x128xbf16>
    %c0_191 = arith.constant 0 : index
    %c18_192 = arith.constant 18 : index
    %c0_193 = arith.constant 0 : index
    %694 = vector.load %arg5[%c0_191, %c18_192, %c0_193] : memref<8x32x128xbf16, #tpu.memory_space<vmem>>, vector<8x2x128xbf16>
    tpu.vector_store %arg5[%c0_191, %c18_192, %c0_193], %693 {strides = array<i32>} : memref<8x32x128xbf16, #tpu.memory_space<vmem>>, vector<8x2x128xbf16>,
    %c20 = arith.constant 20 : index
    %c0_194 = arith.constant 0 : index
    %c0_195 = arith.constant 0 : index
    %695 = vector.load %arg1[%c20, %c0_194, %c0_195] : memref<32x8x512xbf16, #tpu.memory_space<vmem>>, vector<1x8x512xbf16>
    %696 = vector.shape_cast %695 : vector<1x8x512xbf16> to vector<8x512xbf16>
    %697 = arith.extf %696 : vector<8x512xbf16> to vector<8x512xf32>
    %698 = arith.truncf %689 : vector<8x128xf32> to vector<8x128xbf16>
    %c0_196 = arith.constant 0 : index
    %c0_197 = arith.constant 0 : index
    %699 = vector.load %arg2[%c0_196, %c0_197] : memref<128x512xbf16, #tpu.memory_space<vmem>>, vector<128x512xbf16>
    %cst_198 = arith.constant dense<0.000000e+00> : vector<8x512xf32>
    %700 = tpu.matmul %698, %699, %cst_198 {dimension_numbers = #tpu.dot_dimension_numbers<[1], [0], [0], [1], [0, 0, 1, 1], [], []>} : vector<8x128xbf16>, vector<128x512xbf16>, vector<8x512xf32> -> vector<8x512xf32>
    %701 = arith.addf %697, %700 : vector<8x512xf32>
    %702 = vector.extract_strided_slice %701 {offsets = [0, 0], sizes = [8, 128], strides = [1, 1]} : vector<8x512xf32> to vector<8x128xf32>
    %703 = arith.negf %702 : vector<8x128xf32>
    %704 = math.exp %703 : vector<8x128xf32>
    %cst_199 = arith.constant 1.000000e+00 : f32
    %705 = vector.broadcast %cst_199 : f32 to vector<8x128xf32>
    %706 = arith.addf %705, %704 : vector<8x128xf32>
    %707 = arith.divf %705, %706 : vector<8x128xf32>
    %708 = vector.extract_strided_slice %701 {offsets = [0, 128], sizes = [8, 128], strides = [1, 1]} : vector<8x512xf32> to vector<8x128xf32>
    %709 = arith.negf %708 : vector<8x128xf32>
    %710 = math.exp %709 : vector<8x128xf32>
    %cst_200 = arith.constant 1.000000e+00 : f32
    %711 = vector.broadcast %cst_200 : f32 to vector<8x128xf32>
    %712 = arith.addf %711, %710 : vector<8x128xf32>
    %713 = arith.divf %711, %712 : vector<8x128xf32>
    %714 = vector.extract_strided_slice %701 {offsets = [0, 256], sizes = [8, 128], strides = [1, 1]} : vector<8x512xf32> to vector<8x128xf32>
    %715 = math.tanh %714 : vector<8x128xf32>
    %716 = vector.extract_strided_slice %701 {offsets = [0, 384], sizes = [8, 128], strides = [1, 1]} : vector<8x512xf32> to vector<8x128xf32>
    %717 = arith.negf %716 : vector<8x128xf32>
    %718 = math.exp %717 : vector<8x128xf32>
    %cst_201 = arith.constant 1.000000e+00 : f32
    %719 = vector.broadcast %cst_201 : f32 to vector<8x128xf32>
    %720 = arith.addf %719, %718 : vector<8x128xf32>
    %721 = arith.divf %719, %720 : vector<8x128xf32>
    %722 = arith.mulf %713, %687 : vector<8x128xf32>
    %723 = arith.mulf %707, %715 : vector<8x128xf32>
    %724 = arith.addf %722, %723 : vector<8x128xf32>
    %725 = math.tanh %724 : vector<8x128xf32>
    %726 = arith.mulf %721, %725 : vector<8x128xf32>
    %c21 = arith.constant 21 : index
    %c0_202 = arith.constant 0 : index
    %c0_203 = arith.constant 0 : index
    %727 = vector.load %arg1[%c21, %c0_202, %c0_203] : memref<32x8x512xbf16, #tpu.memory_space<vmem>>, vector<1x8x512xbf16>
    %728 = vector.shape_cast %727 : vector<1x8x512xbf16> to vector<8x512xbf16>
    %729 = arith.extf %728 : vector<8x512xbf16> to vector<8x512xf32>
    %730 = arith.truncf %726 : vector<8x128xf32> to vector<8x128xbf16>
    %c0_204 = arith.constant 0 : index
    %c0_205 = arith.constant 0 : index
    %731 = vector.load %arg2[%c0_204, %c0_205] : memref<128x512xbf16, #tpu.memory_space<vmem>>, vector<128x512xbf16>
    %cst_206 = arith.constant dense<0.000000e+00> : vector<8x512xf32>
    %732 = tpu.matmul %730, %731, %cst_206 {dimension_numbers = #tpu.dot_dimension_numbers<[1], [0], [0], [1], [0, 0, 1, 1], [], []>} : vector<8x128xbf16>, vector<128x512xbf16>, vector<8x512xf32> -> vector<8x512xf32>
    %733 = arith.addf %729, %732 : vector<8x512xf32>
    %734 = vector.extract_strided_slice %733 {offsets = [0, 0], sizes = [8, 128], strides = [1, 1]} : vector<8x512xf32> to vector<8x128xf32>
    %735 = arith.negf %734 : vector<8x128xf32>
    %736 = math.exp %735 : vector<8x128xf32>
    %cst_207 = arith.constant 1.000000e+00 : f32
    %737 = vector.broadcast %cst_207 : f32 to vector<8x128xf32>
    %738 = arith.addf %737, %736 : vector<8x128xf32>
    %739 = arith.divf %737, %738 : vector<8x128xf32>
    %740 = vector.extract_strided_slice %733 {offsets = [0, 128], sizes = [8, 128], strides = [1, 1]} : vector<8x512xf32> to vector<8x128xf32>
    %741 = arith.negf %740 : vector<8x128xf32>
    %742 = math.exp %741 : vector<8x128xf32>
    %cst_208 = arith.constant 1.000000e+00 : f32
    %743 = vector.broadcast %cst_208 : f32 to vector<8x128xf32>
    %744 = arith.addf %743, %742 : vector<8x128xf32>
    %745 = arith.divf %743, %744 : vector<8x128xf32>
    %746 = vector.extract_strided_slice %733 {offsets = [0, 256], sizes = [8, 128], strides = [1, 1]} : vector<8x512xf32> to vector<8x128xf32>
    %747 = math.tanh %746 : vector<8x128xf32>
    %748 = vector.extract_strided_slice %733 {offsets = [0, 384], sizes = [8, 128], strides = [1, 1]} : vector<8x512xf32> to vector<8x128xf32>
    %749 = arith.negf %748 : vector<8x128xf32>
    %750 = math.exp %749 : vector<8x128xf32>
    %cst_209 = arith.constant 1.000000e+00 : f32
    %751 = vector.broadcast %cst_209 : f32 to vector<8x128xf32>
    %752 = arith.addf %751, %750 : vector<8x128xf32>
    %753 = arith.divf %751, %752 : vector<8x128xf32>
    %754 = arith.mulf %745, %724 : vector<8x128xf32>
    %755 = arith.mulf %739, %747 : vector<8x128xf32>
    %756 = arith.addf %754, %755 : vector<8x128xf32>
    %757 = math.tanh %756 : vector<8x128xf32>
    %758 = arith.mulf %753, %757 : vector<8x128xf32>
    %759 = vector.shape_cast %726 : vector<8x128xf32> to vector<8x1x128xf32>
    %760 = vector.shape_cast %758 : vector<8x128xf32> to vector<8x1x128xf32>
    %761 = tpu.concatenate %759, %760 in 1 : vector<8x1x128xf32>, vector<8x1x128xf32> -> vector<8x2x128xf32>
    %762 = arith.truncf %761 : vector<8x2x128xf32> to vector<8x2x128xbf16>
    %c0_210 = arith.constant 0 : index
    %c20_211 = arith.constant 20 : index
    %c0_212 = arith.constant 0 : index
    %763 = vector.load %arg5[%c0_210, %c20_211, %c0_212] : memref<8x32x128xbf16, #tpu.memory_space<vmem>>, vector<8x2x128xbf16>
    tpu.vector_store %arg5[%c0_210, %c20_211, %c0_212], %762 {strides = array<i32>} : memref<8x32x128xbf16, #tpu.memory_space<vmem>>, vector<8x2x128xbf16>,
    %c22 = arith.constant 22 : index
    %c0_213 = arith.constant 0 : index
    %c0_214 = arith.constant 0 : index
    %764 = vector.load %arg1[%c22, %c0_213, %c0_214] : memref<32x8x512xbf16, #tpu.memory_space<vmem>>, vector<1x8x512xbf16>
    %765 = vector.shape_cast %764 : vector<1x8x512xbf16> to vector<8x512xbf16>
    %766 = arith.extf %765 : vector<8x512xbf16> to vector<8x512xf32>
    %767 = arith.truncf %758 : vector<8x128xf32> to vector<8x128xbf16>
    %c0_215 = arith.constant 0 : index
    %c0_216 = arith.constant 0 : index
    %768 = vector.load %arg2[%c0_215, %c0_216] : memref<128x512xbf16, #tpu.memory_space<vmem>>, vector<128x512xbf16>
    %cst_217 = arith.constant dense<0.000000e+00> : vector<8x512xf32>
    %769 = tpu.matmul %767, %768, %cst_217 {dimension_numbers = #tpu.dot_dimension_numbers<[1], [0], [0], [1], [0, 0, 1, 1], [], []>} : vector<8x128xbf16>, vector<128x512xbf16>, vector<8x512xf32> -> vector<8x512xf32>
    %770 = arith.addf %766, %769 : vector<8x512xf32>
    %771 = vector.extract_strided_slice %770 {offsets = [0, 0], sizes = [8, 128], strides = [1, 1]} : vector<8x512xf32> to vector<8x128xf32>
    %772 = arith.negf %771 : vector<8x128xf32>
    %773 = math.exp %772 : vector<8x128xf32>
    %cst_218 = arith.constant 1.000000e+00 : f32
    %774 = vector.broadcast %cst_218 : f32 to vector<8x128xf32>
    %775 = arith.addf %774, %773 : vector<8x128xf32>
    %776 = arith.divf %774, %775 : vector<8x128xf32>
    %777 = vector.extract_strided_slice %770 {offsets = [0, 128], sizes = [8, 128], strides = [1, 1]} : vector<8x512xf32> to vector<8x128xf32>
    %778 = arith.negf %777 : vector<8x128xf32>
    %779 = math.exp %778 : vector<8x128xf32>
    %cst_219 = arith.constant 1.000000e+00 : f32
    %780 = vector.broadcast %cst_219 : f32 to vector<8x128xf32>
    %781 = arith.addf %780, %779 : vector<8x128xf32>
    %782 = arith.divf %780, %781 : vector<8x128xf32>
    %783 = vector.extract_strided_slice %770 {offsets = [0, 256], sizes = [8, 128], strides = [1, 1]} : vector<8x512xf32> to vector<8x128xf32>
    %784 = math.tanh %783 : vector<8x128xf32>
    %785 = vector.extract_strided_slice %770 {offsets = [0, 384], sizes = [8, 128], strides = [1, 1]} : vector<8x512xf32> to vector<8x128xf32>
    %786 = arith.negf %785 : vector<8x128xf32>
    %787 = math.exp %786 : vector<8x128xf32>
    %cst_220 = arith.constant 1.000000e+00 : f32
    %788 = vector.broadcast %cst_220 : f32 to vector<8x128xf32>
    %789 = arith.addf %788, %787 : vector<8x128xf32>
    %790 = arith.divf %788, %789 : vector<8x128xf32>
    %791 = arith.mulf %782, %756 : vector<8x128xf32>
    %792 = arith.mulf %776, %784 : vector<8x128xf32>
    %793 = arith.addf %791, %792 : vector<8x128xf32>
    %794 = math.tanh %793 : vector<8x128xf32>
    %795 = arith.mulf %790, %794 : vector<8x128xf32>
    %c23 = arith.constant 23 : index
    %c0_221 = arith.constant 0 : index
    %c0_222 = arith.constant 0 : index
    %796 = vector.load %arg1[%c23, %c0_221, %c0_222] : memref<32x8x512xbf16, #tpu.memory_space<vmem>>, vector<1x8x512xbf16>
    %797 = vector.shape_cast %796 : vector<1x8x512xbf16> to vector<8x512xbf16>
    %798 = arith.extf %797 : vector<8x512xbf16> to vector<8x512xf32>
    %799 = arith.truncf %795 : vector<8x128xf32> to vector<8x128xbf16>
    %c0_223 = arith.constant 0 : index
    %c0_224 = arith.constant 0 : index
    %800 = vector.load %arg2[%c0_223, %c0_224] : memref<128x512xbf16, #tpu.memory_space<vmem>>, vector<128x512xbf16>
    %cst_225 = arith.constant dense<0.000000e+00> : vector<8x512xf32>
    %801 = tpu.matmul %799, %800, %cst_225 {dimension_numbers = #tpu.dot_dimension_numbers<[1], [0], [0], [1], [0, 0, 1, 1], [], []>} : vector<8x128xbf16>, vector<128x512xbf16>, vector<8x512xf32> -> vector<8x512xf32>
    %802 = arith.addf %798, %801 : vector<8x512xf32>
    %803 = vector.extract_strided_slice %802 {offsets = [0, 0], sizes = [8, 128], strides = [1, 1]} : vector<8x512xf32> to vector<8x128xf32>
    %804 = arith.negf %803 : vector<8x128xf32>
    %805 = math.exp %804 : vector<8x128xf32>
    %cst_226 = arith.constant 1.000000e+00 : f32
    %806 = vector.broadcast %cst_226 : f32 to vector<8x128xf32>
    %807 = arith.addf %806, %805 : vector<8x128xf32>
    %808 = arith.divf %806, %807 : vector<8x128xf32>
    %809 = vector.extract_strided_slice %802 {offsets = [0, 128], sizes = [8, 128], strides = [1, 1]} : vector<8x512xf32> to vector<8x128xf32>
    %810 = arith.negf %809 : vector<8x128xf32>
    %811 = math.exp %810 : vector<8x128xf32>
    %cst_227 = arith.constant 1.000000e+00 : f32
    %812 = vector.broadcast %cst_227 : f32 to vector<8x128xf32>
    %813 = arith.addf %812, %811 : vector<8x128xf32>
    %814 = arith.divf %812, %813 : vector<8x128xf32>
    %815 = vector.extract_strided_slice %802 {offsets = [0, 256], sizes = [8, 128], strides = [1, 1]} : vector<8x512xf32> to vector<8x128xf32>
    %816 = math.tanh %815 : vector<8x128xf32>
    %817 = vector.extract_strided_slice %802 {offsets = [0, 384], sizes = [8, 128], strides = [1, 1]} : vector<8x512xf32> to vector<8x128xf32>
    %818 = arith.negf %817 : vector<8x128xf32>
    %819 = math.exp %818 : vector<8x128xf32>
    %cst_228 = arith.constant 1.000000e+00 : f32
    %820 = vector.broadcast %cst_228 : f32 to vector<8x128xf32>
    %821 = arith.addf %820, %819 : vector<8x128xf32>
    %822 = arith.divf %820, %821 : vector<8x128xf32>
    %823 = arith.mulf %814, %793 : vector<8x128xf32>
    %824 = arith.mulf %808, %816 : vector<8x128xf32>
    %825 = arith.addf %823, %824 : vector<8x128xf32>
    %826 = math.tanh %825 : vector<8x128xf32>
    %827 = arith.mulf %822, %826 : vector<8x128xf32>
    %828 = vector.shape_cast %795 : vector<8x128xf32> to vector<8x1x128xf32>
    %829 = vector.shape_cast %827 : vector<8x128xf32> to vector<8x1x128xf32>
    %830 = tpu.concatenate %828, %829 in 1 : vector<8x1x128xf32>, vector<8x1x128xf32> -> vector<8x2x128xf32>
    %831 = arith.truncf %830 : vector<8x2x128xf32> to vector<8x2x128xbf16>
    %c0_229 = arith.constant 0 : index
    %c22_230 = arith.constant 22 : index
    %c0_231 = arith.constant 0 : index
    %832 = vector.load %arg5[%c0_229, %c22_230, %c0_231] : memref<8x32x128xbf16, #tpu.memory_space<vmem>>, vector<8x2x128xbf16>
    tpu.vector_store %arg5[%c0_229, %c22_230, %c0_231], %831 {strides = array<i32>} : memref<8x32x128xbf16, #tpu.memory_space<vmem>>, vector<8x2x128xbf16>,
    %c24 = arith.constant 24 : index
    %c0_232 = arith.constant 0 : index
    %c0_233 = arith.constant 0 : index
    %833 = vector.load %arg1[%c24, %c0_232, %c0_233] : memref<32x8x512xbf16, #tpu.memory_space<vmem>>, vector<1x8x512xbf16>
    %834 = vector.shape_cast %833 : vector<1x8x512xbf16> to vector<8x512xbf16>
    %835 = arith.extf %834 : vector<8x512xbf16> to vector<8x512xf32>
    %836 = arith.truncf %827 : vector<8x128xf32> to vector<8x128xbf16>
    %c0_234 = arith.constant 0 : index
    %c0_235 = arith.constant 0 : index
    %837 = vector.load %arg2[%c0_234, %c0_235] : memref<128x512xbf16, #tpu.memory_space<vmem>>, vector<128x512xbf16>
    %cst_236 = arith.constant dense<0.000000e+00> : vector<8x512xf32>
    %838 = tpu.matmul %836, %837, %cst_236 {dimension_numbers = #tpu.dot_dimension_numbers<[1], [0], [0], [1], [0, 0, 1, 1], [], []>} : vector<8x128xbf16>, vector<128x512xbf16>, vector<8x512xf32> -> vector<8x512xf32>
    %839 = arith.addf %835, %838 : vector<8x512xf32>
    %840 = vector.extract_strided_slice %839 {offsets = [0, 0], sizes = [8, 128], strides = [1, 1]} : vector<8x512xf32> to vector<8x128xf32>
    %841 = arith.negf %840 : vector<8x128xf32>
    %842 = math.exp %841 : vector<8x128xf32>
    %cst_237 = arith.constant 1.000000e+00 : f32
    %843 = vector.broadcast %cst_237 : f32 to vector<8x128xf32>
    %844 = arith.addf %843, %842 : vector<8x128xf32>
    %845 = arith.divf %843, %844 : vector<8x128xf32>
    %846 = vector.extract_strided_slice %839 {offsets = [0, 128], sizes = [8, 128], strides = [1, 1]} : vector<8x512xf32> to vector<8x128xf32>
    %847 = arith.negf %846 : vector<8x128xf32>
    %848 = math.exp %847 : vector<8x128xf32>
    %cst_238 = arith.constant 1.000000e+00 : f32
    %849 = vector.broadcast %cst_238 : f32 to vector<8x128xf32>
    %850 = arith.addf %849, %848 : vector<8x128xf32>
    %851 = arith.divf %849, %850 : vector<8x128xf32>
    %852 = vector.extract_strided_slice %839 {offsets = [0, 256], sizes = [8, 128], strides = [1, 1]} : vector<8x512xf32> to vector<8x128xf32>
    %853 = math.tanh %852 : vector<8x128xf32>
    %854 = vector.extract_strided_slice %839 {offsets = [0, 384], sizes = [8, 128], strides = [1, 1]} : vector<8x512xf32> to vector<8x128xf32>
    %855 = arith.negf %854 : vector<8x128xf32>
    %856 = math.exp %855 : vector<8x128xf32>
    %cst_239 = arith.constant 1.000000e+00 : f32
    %857 = vector.broadcast %cst_239 : f32 to vector<8x128xf32>
    %858 = arith.addf %857, %856 : vector<8x128xf32>
    %859 = arith.divf %857, %858 : vector<8x128xf32>
    %860 = arith.mulf %851, %825 : vector<8x128xf32>
    %861 = arith.mulf %845, %853 : vector<8x128xf32>
    %862 = arith.addf %860, %861 : vector<8x128xf32>
    %863 = math.tanh %862 : vector<8x128xf32>
    %864 = arith.mulf %859, %863 : vector<8x128xf32>
    %c25 = arith.constant 25 : index
    %c0_240 = arith.constant 0 : index
    %c0_241 = arith.constant 0 : index
    %865 = vector.load %arg1[%c25, %c0_240, %c0_241] : memref<32x8x512xbf16, #tpu.memory_space<vmem>>, vector<1x8x512xbf16>
    %866 = vector.shape_cast %865 : vector<1x8x512xbf16> to vector<8x512xbf16>
    %867 = arith.extf %866 : vector<8x512xbf16> to vector<8x512xf32>
    %868 = arith.truncf %864 : vector<8x128xf32> to vector<8x128xbf16>
    %c0_242 = arith.constant 0 : index
    %c0_243 = arith.constant 0 : index
    %869 = vector.load %arg2[%c0_242, %c0_243] : memref<128x512xbf16, #tpu.memory_space<vmem>>, vector<128x512xbf16>
    %cst_244 = arith.constant dense<0.000000e+00> : vector<8x512xf32>
    %870 = tpu.matmul %868, %869, %cst_244 {dimension_numbers = #tpu.dot_dimension_numbers<[1], [0], [0], [1], [0, 0, 1, 1], [], []>} : vector<8x128xbf16>, vector<128x512xbf16>, vector<8x512xf32> -> vector<8x512xf32>
    %871 = arith.addf %867, %870 : vector<8x512xf32>
    %872 = vector.extract_strided_slice %871 {offsets = [0, 0], sizes = [8, 128], strides = [1, 1]} : vector<8x512xf32> to vector<8x128xf32>
    %873 = arith.negf %872 : vector<8x128xf32>
    %874 = math.exp %873 : vector<8x128xf32>
    %cst_245 = arith.constant 1.000000e+00 : f32
    %875 = vector.broadcast %cst_245 : f32 to vector<8x128xf32>
    %876 = arith.addf %875, %874 : vector<8x128xf32>
    %877 = arith.divf %875, %876 : vector<8x128xf32>
    %878 = vector.extract_strided_slice %871 {offsets = [0, 128], sizes = [8, 128], strides = [1, 1]} : vector<8x512xf32> to vector<8x128xf32>
    %879 = arith.negf %878 : vector<8x128xf32>
    %880 = math.exp %879 : vector<8x128xf32>
    %cst_246 = arith.constant 1.000000e+00 : f32
    %881 = vector.broadcast %cst_246 : f32 to vector<8x128xf32>
    %882 = arith.addf %881, %880 : vector<8x128xf32>
    %883 = arith.divf %881, %882 : vector<8x128xf32>
    %884 = vector.extract_strided_slice %871 {offsets = [0, 256], sizes = [8, 128], strides = [1, 1]} : vector<8x512xf32> to vector<8x128xf32>
    %885 = math.tanh %884 : vector<8x128xf32>
    %886 = vector.extract_strided_slice %871 {offsets = [0, 384], sizes = [8, 128], strides = [1, 1]} : vector<8x512xf32> to vector<8x128xf32>
    %887 = arith.negf %886 : vector<8x128xf32>
    %888 = math.exp %887 : vector<8x128xf32>
    %cst_247 = arith.constant 1.000000e+00 : f32
    %889 = vector.broadcast %cst_247 : f32 to vector<8x128xf32>
    %890 = arith.addf %889, %888 : vector<8x128xf32>
    %891 = arith.divf %889, %890 : vector<8x128xf32>
    %892 = arith.mulf %883, %862 : vector<8x128xf32>
    %893 = arith.mulf %877, %885 : vector<8x128xf32>
    %894 = arith.addf %892, %893 : vector<8x128xf32>
    %895 = math.tanh %894 : vector<8x128xf32>
    %896 = arith.mulf %891, %895 : vector<8x128xf32>
    %897 = vector.shape_cast %864 : vector<8x128xf32> to vector<8x1x128xf32>
    %898 = vector.shape_cast %896 : vector<8x128xf32> to vector<8x1x128xf32>
    %899 = tpu.concatenate %897, %898 in 1 : vector<8x1x128xf32>, vector<8x1x128xf32> -> vector<8x2x128xf32>
    %900 = arith.truncf %899 : vector<8x2x128xf32> to vector<8x2x128xbf16>
    %c0_248 = arith.constant 0 : index
    %c24_249 = arith.constant 24 : index
    %c0_250 = arith.constant 0 : index
    %901 = vector.load %arg5[%c0_248, %c24_249, %c0_250] : memref<8x32x128xbf16, #tpu.memory_space<vmem>>, vector<8x2x128xbf16>
    tpu.vector_store %arg5[%c0_248, %c24_249, %c0_250], %900 {strides = array<i32>} : memref<8x32x128xbf16, #tpu.memory_space<vmem>>, vector<8x2x128xbf16>,
    %c26 = arith.constant 26 : index
    %c0_251 = arith.constant 0 : index
    %c0_252 = arith.constant 0 : index
    %902 = vector.load %arg1[%c26, %c0_251, %c0_252] : memref<32x8x512xbf16, #tpu.memory_space<vmem>>, vector<1x8x512xbf16>
    %903 = vector.shape_cast %902 : vector<1x8x512xbf16> to vector<8x512xbf16>
    %904 = arith.extf %903 : vector<8x512xbf16> to vector<8x512xf32>
    %905 = arith.truncf %896 : vector<8x128xf32> to vector<8x128xbf16>
    %c0_253 = arith.constant 0 : index
    %c0_254 = arith.constant 0 : index
    %906 = vector.load %arg2[%c0_253, %c0_254] : memref<128x512xbf16, #tpu.memory_space<vmem>>, vector<128x512xbf16>
    %cst_255 = arith.constant dense<0.000000e+00> : vector<8x512xf32>
    %907 = tpu.matmul %905, %906, %cst_255 {dimension_numbers = #tpu.dot_dimension_numbers<[1], [0], [0], [1], [0, 0, 1, 1], [], []>} : vector<8x128xbf16>, vector<128x512xbf16>, vector<8x512xf32> -> vector<8x512xf32>
    %908 = arith.addf %904, %907 : vector<8x512xf32>
    %909 = vector.extract_strided_slice %908 {offsets = [0, 0], sizes = [8, 128], strides = [1, 1]} : vector<8x512xf32> to vector<8x128xf32>
    %910 = arith.negf %909 : vector<8x128xf32>
    %911 = math.exp %910 : vector<8x128xf32>
    %cst_256 = arith.constant 1.000000e+00 : f32
    %912 = vector.broadcast %cst_256 : f32 to vector<8x128xf32>
    %913 = arith.addf %912, %911 : vector<8x128xf32>
    %914 = arith.divf %912, %913 : vector<8x128xf32>
    %915 = vector.extract_strided_slice %908 {offsets = [0, 128], sizes = [8, 128], strides = [1, 1]} : vector<8x512xf32> to vector<8x128xf32>
    %916 = arith.negf %915 : vector<8x128xf32>
    %917 = math.exp %916 : vector<8x128xf32>
    %cst_257 = arith.constant 1.000000e+00 : f32
    %918 = vector.broadcast %cst_257 : f32 to vector<8x128xf32>
    %919 = arith.addf %918, %917 : vector<8x128xf32>
    %920 = arith.divf %918, %919 : vector<8x128xf32>
    %921 = vector.extract_strided_slice %908 {offsets = [0, 256], sizes = [8, 128], strides = [1, 1]} : vector<8x512xf32> to vector<8x128xf32>
    %922 = math.tanh %921 : vector<8x128xf32>
    %923 = vector.extract_strided_slice %908 {offsets = [0, 384], sizes = [8, 128], strides = [1, 1]} : vector<8x512xf32> to vector<8x128xf32>
    %924 = arith.negf %923 : vector<8x128xf32>
    %925 = math.exp %924 : vector<8x128xf32>
    %cst_258 = arith.constant 1.000000e+00 : f32
    %926 = vector.broadcast %cst_258 : f32 to vector<8x128xf32>
    %927 = arith.addf %926, %925 : vector<8x128xf32>
    %928 = arith.divf %926, %927 : vector<8x128xf32>
    %929 = arith.mulf %920, %894 : vector<8x128xf32>
    %930 = arith.mulf %914, %922 : vector<8x128xf32>
    %931 = arith.addf %929, %930 : vector<8x128xf32>
    %932 = math.tanh %931 : vector<8x128xf32>
    %933 = arith.mulf %928, %932 : vector<8x128xf32>
    %c27 = arith.constant 27 : index
    %c0_259 = arith.constant 0 : index
    %c0_260 = arith.constant 0 : index
    %934 = vector.load %arg1[%c27, %c0_259, %c0_260] : memref<32x8x512xbf16, #tpu.memory_space<vmem>>, vector<1x8x512xbf16>
    %935 = vector.shape_cast %934 : vector<1x8x512xbf16> to vector<8x512xbf16>
    %936 = arith.extf %935 : vector<8x512xbf16> to vector<8x512xf32>
    %937 = arith.truncf %933 : vector<8x128xf32> to vector<8x128xbf16>
    %c0_261 = arith.constant 0 : index
    %c0_262 = arith.constant 0 : index
    %938 = vector.load %arg2[%c0_261, %c0_262] : memref<128x512xbf16, #tpu.memory_space<vmem>>, vector<128x512xbf16>
    %cst_263 = arith.constant dense<0.000000e+00> : vector<8x512xf32>
    %939 = tpu.matmul %937, %938, %cst_263 {dimension_numbers = #tpu.dot_dimension_numbers<[1], [0], [0], [1], [0, 0, 1, 1], [], []>} : vector<8x128xbf16>, vector<128x512xbf16>, vector<8x512xf32> -> vector<8x512xf32>
    %940 = arith.addf %936, %939 : vector<8x512xf32>
    %941 = vector.extract_strided_slice %940 {offsets = [0, 0], sizes = [8, 128], strides = [1, 1]} : vector<8x512xf32> to vector<8x128xf32>
    %942 = arith.negf %941 : vector<8x128xf32>
    %943 = math.exp %942 : vector<8x128xf32>
    %cst_264 = arith.constant 1.000000e+00 : f32
    %944 = vector.broadcast %cst_264 : f32 to vector<8x128xf32>
    %945 = arith.addf %944, %943 : vector<8x128xf32>
    %946 = arith.divf %944, %945 : vector<8x128xf32>
    %947 = vector.extract_strided_slice %940 {offsets = [0, 128], sizes = [8, 128], strides = [1, 1]} : vector<8x512xf32> to vector<8x128xf32>
    %948 = arith.negf %947 : vector<8x128xf32>
    %949 = math.exp %948 : vector<8x128xf32>
    %cst_265 = arith.constant 1.000000e+00 : f32
    %950 = vector.broadcast %cst_265 : f32 to vector<8x128xf32>
    %951 = arith.addf %950, %949 : vector<8x128xf32>
    %952 = arith.divf %950, %951 : vector<8x128xf32>
    %953 = vector.extract_strided_slice %940 {offsets = [0, 256], sizes = [8, 128], strides = [1, 1]} : vector<8x512xf32> to vector<8x128xf32>
    %954 = math.tanh %953 : vector<8x128xf32>
    %955 = vector.extract_strided_slice %940 {offsets = [0, 384], sizes = [8, 128], strides = [1, 1]} : vector<8x512xf32> to vector<8x128xf32>
    %956 = arith.negf %955 : vector<8x128xf32>
    %957 = math.exp %956 : vector<8x128xf32>
    %cst_266 = arith.constant 1.000000e+00 : f32
    %958 = vector.broadcast %cst_266 : f32 to vector<8x128xf32>
    %959 = arith.addf %958, %957 : vector<8x128xf32>
    %960 = arith.divf %958, %959 : vector<8x128xf32>
    %961 = arith.mulf %952, %931 : vector<8x128xf32>
    %962 = arith.mulf %946, %954 : vector<8x128xf32>
    %963 = arith.addf %961, %962 : vector<8x128xf32>
    %964 = math.tanh %963 : vector<8x128xf32>
    %965 = arith.mulf %960, %964 : vector<8x128xf32>
    %966 = vector.shape_cast %933 : vector<8x128xf32> to vector<8x1x128xf32>
    %967 = vector.shape_cast %965 : vector<8x128xf32> to vector<8x1x128xf32>
    %968 = tpu.concatenate %966, %967 in 1 : vector<8x1x128xf32>, vector<8x1x128xf32> -> vector<8x2x128xf32>
    %969 = arith.truncf %968 : vector<8x2x128xf32> to vector<8x2x128xbf16>
    %c0_267 = arith.constant 0 : index
    %c26_268 = arith.constant 26 : index
    %c0_269 = arith.constant 0 : index
    %970 = vector.load %arg5[%c0_267, %c26_268, %c0_269] : memref<8x32x128xbf16, #tpu.memory_space<vmem>>, vector<8x2x128xbf16>
    tpu.vector_store %arg5[%c0_267, %c26_268, %c0_269], %969 {strides = array<i32>} : memref<8x32x128xbf16, #tpu.memory_space<vmem>>, vector<8x2x128xbf16>,
    %c28 = arith.constant 28 : index
    %c0_270 = arith.constant 0 : index
    %c0_271 = arith.constant 0 : index
    %971 = vector.load %arg1[%c28, %c0_270, %c0_271] : memref<32x8x512xbf16, #tpu.memory_space<vmem>>, vector<1x8x512xbf16>
    %972 = vector.shape_cast %971 : vector<1x8x512xbf16> to vector<8x512xbf16>
    %973 = arith.extf %972 : vector<8x512xbf16> to vector<8x512xf32>
    %974 = arith.truncf %965 : vector<8x128xf32> to vector<8x128xbf16>
    %c0_272 = arith.constant 0 : index
    %c0_273 = arith.constant 0 : index
    %975 = vector.load %arg2[%c0_272, %c0_273] : memref<128x512xbf16, #tpu.memory_space<vmem>>, vector<128x512xbf16>
    %cst_274 = arith.constant dense<0.000000e+00> : vector<8x512xf32>
    %976 = tpu.matmul %974, %975, %cst_274 {dimension_numbers = #tpu.dot_dimension_numbers<[1], [0], [0], [1], [0, 0, 1, 1], [], []>} : vector<8x128xbf16>, vector<128x512xbf16>, vector<8x512xf32> -> vector<8x512xf32>
    %977 = arith.addf %973, %976 : vector<8x512xf32>
    %978 = vector.extract_strided_slice %977 {offsets = [0, 0], sizes = [8, 128], strides = [1, 1]} : vector<8x512xf32> to vector<8x128xf32>
    %979 = arith.negf %978 : vector<8x128xf32>
    %980 = math.exp %979 : vector<8x128xf32>
    %cst_275 = arith.constant 1.000000e+00 : f32
    %981 = vector.broadcast %cst_275 : f32 to vector<8x128xf32>
    %982 = arith.addf %981, %980 : vector<8x128xf32>
    %983 = arith.divf %981, %982 : vector<8x128xf32>
    %984 = vector.extract_strided_slice %977 {offsets = [0, 128], sizes = [8, 128], strides = [1, 1]} : vector<8x512xf32> to vector<8x128xf32>
    %985 = arith.negf %984 : vector<8x128xf32>
    %986 = math.exp %985 : vector<8x128xf32>
    %cst_276 = arith.constant 1.000000e+00 : f32
    %987 = vector.broadcast %cst_276 : f32 to vector<8x128xf32>
    %988 = arith.addf %987, %986 : vector<8x128xf32>
    %989 = arith.divf %987, %988 : vector<8x128xf32>
    %990 = vector.extract_strided_slice %977 {offsets = [0, 256], sizes = [8, 128], strides = [1, 1]} : vector<8x512xf32> to vector<8x128xf32>
    %991 = math.tanh %990 : vector<8x128xf32>
    %992 = vector.extract_strided_slice %977 {offsets = [0, 384], sizes = [8, 128], strides = [1, 1]} : vector<8x512xf32> to vector<8x128xf32>
    %993 = arith.negf %992 : vector<8x128xf32>
    %994 = math.exp %993 : vector<8x128xf32>
    %cst_277 = arith.constant 1.000000e+00 : f32
    %995 = vector.broadcast %cst_277 : f32 to vector<8x128xf32>
    %996 = arith.addf %995, %994 : vector<8x128xf32>
    %997 = arith.divf %995, %996 : vector<8x128xf32>
    %998 = arith.mulf %989, %963 : vector<8x128xf32>
    %999 = arith.mulf %983, %991 : vector<8x128xf32>
    %1000 = arith.addf %998, %999 : vector<8x128xf32>
    %1001 = math.tanh %1000 : vector<8x128xf32>
    %1002 = arith.mulf %997, %1001 : vector<8x128xf32>
    %c29 = arith.constant 29 : index
    %c0_278 = arith.constant 0 : index
    %c0_279 = arith.constant 0 : index
    %1003 = vector.load %arg1[%c29, %c0_278, %c0_279] : memref<32x8x512xbf16, #tpu.memory_space<vmem>>, vector<1x8x512xbf16>
    %1004 = vector.shape_cast %1003 : vector<1x8x512xbf16> to vector<8x512xbf16>
    %1005 = arith.extf %1004 : vector<8x512xbf16> to vector<8x512xf32>
    %1006 = arith.truncf %1002 : vector<8x128xf32> to vector<8x128xbf16>
    %c0_280 = arith.constant 0 : index
    %c0_281 = arith.constant 0 : index
    %1007 = vector.load %arg2[%c0_280, %c0_281] : memref<128x512xbf16, #tpu.memory_space<vmem>>, vector<128x512xbf16>
    %cst_282 = arith.constant dense<0.000000e+00> : vector<8x512xf32>
    %1008 = tpu.matmul %1006, %1007, %cst_282 {dimension_numbers = #tpu.dot_dimension_numbers<[1], [0], [0], [1], [0, 0, 1, 1], [], []>} : vector<8x128xbf16>, vector<128x512xbf16>, vector<8x512xf32> -> vector<8x512xf32>
    %1009 = arith.addf %1005, %1008 : vector<8x512xf32>
    %1010 = vector.extract_strided_slice %1009 {offsets = [0, 0], sizes = [8, 128], strides = [1, 1]} : vector<8x512xf32> to vector<8x128xf32>
    %1011 = arith.negf %1010 : vector<8x128xf32>
    %1012 = math.exp %1011 : vector<8x128xf32>
    %cst_283 = arith.constant 1.000000e+00 : f32
    %1013 = vector.broadcast %cst_283 : f32 to vector<8x128xf32>
    %1014 = arith.addf %1013, %1012 : vector<8x128xf32>
    %1015 = arith.divf %1013, %1014 : vector<8x128xf32>
    %1016 = vector.extract_strided_slice %1009 {offsets = [0, 128], sizes = [8, 128], strides = [1, 1]} : vector<8x512xf32> to vector<8x128xf32>
    %1017 = arith.negf %1016 : vector<8x128xf32>
    %1018 = math.exp %1017 : vector<8x128xf32>
    %cst_284 = arith.constant 1.000000e+00 : f32
    %1019 = vector.broadcast %cst_284 : f32 to vector<8x128xf32>
    %1020 = arith.addf %1019, %1018 : vector<8x128xf32>
    %1021 = arith.divf %1019, %1020 : vector<8x128xf32>
    %1022 = vector.extract_strided_slice %1009 {offsets = [0, 256], sizes = [8, 128], strides = [1, 1]} : vector<8x512xf32> to vector<8x128xf32>
    %1023 = math.tanh %1022 : vector<8x128xf32>
    %1024 = vector.extract_strided_slice %1009 {offsets = [0, 384], sizes = [8, 128], strides = [1, 1]} : vector<8x512xf32> to vector<8x128xf32>
    %1025 = arith.negf %1024 : vector<8x128xf32>
    %1026 = math.exp %1025 : vector<8x128xf32>
    %cst_285 = arith.constant 1.000000e+00 : f32
    %1027 = vector.broadcast %cst_285 : f32 to vector<8x128xf32>
    %1028 = arith.addf %1027, %1026 : vector<8x128xf32>
    %1029 = arith.divf %1027, %1028 : vector<8x128xf32>
    %1030 = arith.mulf %1021, %1000 : vector<8x128xf32>
    %1031 = arith.mulf %1015, %1023 : vector<8x128xf32>
    %1032 = arith.addf %1030, %1031 : vector<8x128xf32>
    %1033 = math.tanh %1032 : vector<8x128xf32>
    %1034 = arith.mulf %1029, %1033 : vector<8x128xf32>
    %1035 = vector.shape_cast %1002 : vector<8x128xf32> to vector<8x1x128xf32>
    %1036 = vector.shape_cast %1034 : vector<8x128xf32> to vector<8x1x128xf32>
    %1037 = tpu.concatenate %1035, %1036 in 1 : vector<8x1x128xf32>, vector<8x1x128xf32> -> vector<8x2x128xf32>
    %1038 = arith.truncf %1037 : vector<8x2x128xf32> to vector<8x2x128xbf16>
    %c0_286 = arith.constant 0 : index
    %c28_287 = arith.constant 28 : index
    %c0_288 = arith.constant 0 : index
    %1039 = vector.load %arg5[%c0_286, %c28_287, %c0_288] : memref<8x32x128xbf16, #tpu.memory_space<vmem>>, vector<8x2x128xbf16>
    tpu.vector_store %arg5[%c0_286, %c28_287, %c0_288], %1038 {strides = array<i32>} : memref<8x32x128xbf16, #tpu.memory_space<vmem>>, vector<8x2x128xbf16>,
    %c30 = arith.constant 30 : index
    %c0_289 = arith.constant 0 : index
    %c0_290 = arith.constant 0 : index
    %1040 = vector.load %arg1[%c30, %c0_289, %c0_290] : memref<32x8x512xbf16, #tpu.memory_space<vmem>>, vector<1x8x512xbf16>
    %1041 = vector.shape_cast %1040 : vector<1x8x512xbf16> to vector<8x512xbf16>
    %1042 = arith.extf %1041 : vector<8x512xbf16> to vector<8x512xf32>
    %1043 = arith.truncf %1034 : vector<8x128xf32> to vector<8x128xbf16>
    %c0_291 = arith.constant 0 : index
    %c0_292 = arith.constant 0 : index
    %1044 = vector.load %arg2[%c0_291, %c0_292] : memref<128x512xbf16, #tpu.memory_space<vmem>>, vector<128x512xbf16>
    %cst_293 = arith.constant dense<0.000000e+00> : vector<8x512xf32>
    %1045 = tpu.matmul %1043, %1044, %cst_293 {dimension_numbers = #tpu.dot_dimension_numbers<[1], [0], [0], [1], [0, 0, 1, 1], [], []>} : vector<8x128xbf16>, vector<128x512xbf16>, vector<8x512xf32> -> vector<8x512xf32>
    %1046 = arith.addf %1042, %1045 : vector<8x512xf32>
    %1047 = vector.extract_strided_slice %1046 {offsets = [0, 0], sizes = [8, 128], strides = [1, 1]} : vector<8x512xf32> to vector<8x128xf32>
    %1048 = arith.negf %1047 : vector<8x128xf32>
    %1049 = math.exp %1048 : vector<8x128xf32>
    %cst_294 = arith.constant 1.000000e+00 : f32
    %1050 = vector.broadcast %cst_294 : f32 to vector<8x128xf32>
    %1051 = arith.addf %1050, %1049 : vector<8x128xf32>
    %1052 = arith.divf %1050, %1051 : vector<8x128xf32>
    %1053 = vector.extract_strided_slice %1046 {offsets = [0, 128], sizes = [8, 128], strides = [1, 1]} : vector<8x512xf32> to vector<8x128xf32>
    %1054 = arith.negf %1053 : vector<8x128xf32>
    %1055 = math.exp %1054 : vector<8x128xf32>
    %cst_295 = arith.constant 1.000000e+00 : f32
    %1056 = vector.broadcast %cst_295 : f32 to vector<8x128xf32>
    %1057 = arith.addf %1056, %1055 : vector<8x128xf32>
    %1058 = arith.divf %1056, %1057 : vector<8x128xf32>
    %1059 = vector.extract_strided_slice %1046 {offsets = [0, 256], sizes = [8, 128], strides = [1, 1]} : vector<8x512xf32> to vector<8x128xf32>
    %1060 = math.tanh %1059 : vector<8x128xf32>
    %1061 = vector.extract_strided_slice %1046 {offsets = [0, 384], sizes = [8, 128], strides = [1, 1]} : vector<8x512xf32> to vector<8x128xf32>
    %1062 = arith.negf %1061 : vector<8x128xf32>
    %1063 = math.exp %1062 : vector<8x128xf32>
    %cst_296 = arith.constant 1.000000e+00 : f32
    %1064 = vector.broadcast %cst_296 : f32 to vector<8x128xf32>
    %1065 = arith.addf %1064, %1063 : vector<8x128xf32>
    %1066 = arith.divf %1064, %1065 : vector<8x128xf32>
    %1067 = arith.mulf %1058, %1032 : vector<8x128xf32>
    %1068 = arith.mulf %1052, %1060 : vector<8x128xf32>
    %1069 = arith.addf %1067, %1068 : vector<8x128xf32>
    %1070 = math.tanh %1069 : vector<8x128xf32>
    %1071 = arith.mulf %1066, %1070 : vector<8x128xf32>
    %c31 = arith.constant 31 : index
    %c0_297 = arith.constant 0 : index
    %c0_298 = arith.constant 0 : index
    %1072 = vector.load %arg1[%c31, %c0_297, %c0_298] : memref<32x8x512xbf16, #tpu.memory_space<vmem>>, vector<1x8x512xbf16>
    %1073 = vector.shape_cast %1072 : vector<1x8x512xbf16> to vector<8x512xbf16>
    %1074 = arith.extf %1073 : vector<8x512xbf16> to vector<8x512xf32>
    %1075 = arith.truncf %1071 : vector<8x128xf32> to vector<8x128xbf16>
    %c0_299 = arith.constant 0 : index
    %c0_300 = arith.constant 0 : index
    %1076 = vector.load %arg2[%c0_299, %c0_300] : memref<128x512xbf16, #tpu.memory_space<vmem>>, vector<128x512xbf16>
    %cst_301 = arith.constant dense<0.000000e+00> : vector<8x512xf32>
    %1077 = tpu.matmul %1075, %1076, %cst_301 {dimension_numbers = #tpu.dot_dimension_numbers<[1], [0], [0], [1], [0, 0, 1, 1], [], []>} : vector<8x128xbf16>, vector<128x512xbf16>, vector<8x512xf32> -> vector<8x512xf32>
    %1078 = arith.addf %1074, %1077 : vector<8x512xf32>
    %1079 = vector.extract_strided_slice %1078 {offsets = [0, 0], sizes = [8, 128], strides = [1, 1]} : vector<8x512xf32> to vector<8x128xf32>
    %1080 = arith.negf %1079 : vector<8x128xf32>
    %1081 = math.exp %1080 : vector<8x128xf32>
    %cst_302 = arith.constant 1.000000e+00 : f32
    %1082 = vector.broadcast %cst_302 : f32 to vector<8x128xf32>
    %1083 = arith.addf %1082, %1081 : vector<8x128xf32>
    %1084 = arith.divf %1082, %1083 : vector<8x128xf32>
    %1085 = vector.extract_strided_slice %1078 {offsets = [0, 128], sizes = [8, 128], strides = [1, 1]} : vector<8x512xf32> to vector<8x128xf32>
    %1086 = arith.negf %1085 : vector<8x128xf32>
    %1087 = math.exp %1086 : vector<8x128xf32>
    %cst_303 = arith.constant 1.000000e+00 : f32
    %1088 = vector.broadcast %cst_303 : f32 to vector<8x128xf32>
    %1089 = arith.addf %1088, %1087 : vector<8x128xf32>
    %1090 = arith.divf %1088, %1089 : vector<8x128xf32>
    %1091 = vector.extract_strided_slice %1078 {offsets = [0, 256], sizes = [8, 128], strides = [1, 1]} : vector<8x512xf32> to vector<8x128xf32>
    %1092 = math.tanh %1091 : vector<8x128xf32>
    %1093 = vector.extract_strided_slice %1078 {offsets = [0, 384], sizes = [8, 128], strides = [1, 1]} : vector<8x512xf32> to vector<8x128xf32>
    %1094 = arith.negf %1093 : vector<8x128xf32>
    %1095 = math.exp %1094 : vector<8x128xf32>
    %cst_304 = arith.constant 1.000000e+00 : f32
    %1096 = vector.broadcast %cst_304 : f32 to vector<8x128xf32>
    %1097 = arith.addf %1096, %1095 : vector<8x128xf32>
    %1098 = arith.divf %1096, %1097 : vector<8x128xf32>
    %1099 = arith.mulf %1090, %1069 : vector<8x128xf32>
    %1100 = arith.mulf %1084, %1092 : vector<8x128xf32>
    %1101 = arith.addf %1099, %1100 : vector<8x128xf32>
    %1102 = math.tanh %1101 : vector<8x128xf32>
    %1103 = arith.mulf %1098, %1102 : vector<8x128xf32>
    %1104 = vector.shape_cast %1071 : vector<8x128xf32> to vector<8x1x128xf32>
    %1105 = vector.shape_cast %1103 : vector<8x128xf32> to vector<8x1x128xf32>
    %1106 = tpu.concatenate %1104, %1105 in 1 : vector<8x1x128xf32>, vector<8x1x128xf32> -> vector<8x2x128xf32>
    %1107 = arith.truncf %1106 : vector<8x2x128xf32> to vector<8x2x128xbf16>
    %c0_305 = arith.constant 0 : index
    %c30_306 = arith.constant 30 : index
    %c0_307 = arith.constant 0 : index
    %1108 = vector.load %arg5[%c0_305, %c30_306, %c0_307] : memref<8x32x128xbf16, #tpu.memory_space<vmem>>, vector<8x2x128xbf16>
    tpu.vector_store %arg5[%c0_305, %c30_306, %c0_307], %1107 {strides = array<i32>} : memref<8x32x128xbf16, #tpu.memory_space<vmem>>, vector<8x2x128xbf16>,
    %c0_308 = arith.constant 0 : index
    %c0_309 = arith.constant 0 : index
    %1109 = vector.load %arg8[%c0_308, %c0_309] : memref<8x128xf32, #tpu.memory_space<vmem>>, vector<8x128xf32>
    tpu.vector_store %arg8[%c0_308, %c0_309], %1103 {strides = array<i32>} : memref<8x128xf32, #tpu.memory_space<vmem>>, vector<8x128xf32>,
    %c0_310 = arith.constant 0 : index
    %c0_311 = arith.constant 0 : index
    %1110 = vector.load %arg9[%c0_310, %c0_311] : memref<8x128xf32, #tpu.memory_space<vmem>>, vector<8x128xf32>
    tpu.vector_store %arg9[%c0_310, %c0_311], %1101 {strides = array<i32>} : memref<8x128xf32, #tpu.memory_space<vmem>>, vector<8x128xf32>,
    %c0_312 = arith.constant 0 : index
    %c0_313 = arith.constant 0 : index
    %1111 = vector.load %arg6[%c0_312, %c0_313] : memref<8x128xf32, #tpu.memory_space<vmem>>, vector<8x128xf32>
    tpu.vector_store %arg6[%c0_312, %c0_313], %1103 {strides = array<i32>} : memref<8x128xf32, #tpu.memory_space<vmem>>, vector<8x128xf32>,
    %c0_314 = arith.constant 0 : index
    %c0_315 = arith.constant 0 : index
    %1112 = vector.load %arg7[%c0_314, %c0_315] : memref<8x128xf32, #tpu.memory_space<vmem>>, vector<8x128xf32>
    tpu.vector_store %arg7[%c0_314, %c0_315], %1101 {strides = array<i32>} : memref<8x128xf32, #tpu.memory_space<vmem>>, vector<8x128xf32>,
    return
  }
  func.func @transform_0(%arg0: i32) -> (i32, i32, i32) {
    %c0_i32 = arith.constant 0 : i32
    %c0_i32_0 = arith.constant 0 : i32
    %c0_i32_1 = arith.constant 0 : i32
    return %arg0, %c0_i32, %c0_i32_0 : i32, i32, i32
  }
  func.func @transform_1(%arg0: i32) -> (i32, i32) {
    %c0_i32 = arith.constant 0 : i32
    %c0_i32_0 = arith.constant 0 : i32
    %c0_i32_1 = arith.constant 0 : i32
    return %c0_i32, %c0_i32_0 : i32, i32
  }
  func.func @transform_2(%arg0: i32) -> (i32, i32) {
    %c0_i32 = arith.constant 0 : i32
    %c0_i32_0 = arith.constant 0 : i32
    %c0_i32_1 = arith.constant 0 : i32
    return %c0_i32, %c0_i32_0 : i32, i32
  }
  func.func @transform_3(%arg0: i32) -> (i32, i32) {
    %c0_i32 = arith.constant 0 : i32
    %c0_i32_0 = arith.constant 0 : i32
    %c0_i32_1 = arith.constant 0 : i32
    return %c0_i32, %c0_i32_0 : i32, i32
  }
  func.func @transform_4(%arg0: i32) -> (i32, i32, i32) {
    %c0_i32 = arith.constant 0 : i32
    %c0_i32_0 = arith.constant 0 : i32
    %c0_i32_1 = arith.constant 0 : i32
    return %c0_i32, %arg0, %c0_i32_0 : i32, i32, i32
  }
  func.func @transform_5(%arg0: i32) -> (i32, i32) {
    %c0_i32 = arith.constant 0 : i32
    %c0_i32_0 = arith.constant 0 : i32
    %c0_i32_1 = arith.constant 0 : i32
    return %c0_i32, %c0_i32_0 : i32, i32
  }
  func.func @transform_6(%arg0: i32) -> (i32, i32) {
    %c0_i32 = arith.constant 0 : i32
    %c0_i32_0 = arith.constant 0 : i32
    %c0_i32_1 = arith.constant 0 : i32
    return %c0_i32, %c0_i32_0 : i32, i32
  }
}

</mosaic_0001>

<llo_original>
// kernel: _lambda_.5
$region0: #{_lambda_.5}
  #allocation0 [shape = 'u32[]', space=smem, size = 0x4, offset = 0x4, fixed_abs, tag = 'smem constant byte address 0x4 - core index']
  #allocation1 [shape = 'u32[144,128]{1,0:T(1,128)}', space=vmem, size = 0x12000, scoped, tag = 'internal scratch']
  %s0 = inlined_call_operand.vmem [shape: bf16[64,128], index: 0, kind: input, shape index: {}]
  %s1 = inlined_call_operand.vmem [shape: bf16[128,512], index: 1, kind: input, shape index: {}]
  %s2 = inlined_call_operand.hbm [shape: f32[64,512], index: 2, kind: output, shape index: {}]
  %s3 = sld [smem:[#allocation0]]
  $region18: #{_lambda_.5} parent=0
    _
  %s5 = ssub.s32 1, %s3
  %s6 = scalar_select 0, %s5, %s3
  $region1: #{_lambda_.5} parent=0
    #allocation2 [shape = 'u8[131072]{0}', space=vmem, size = 0x20000, scoped, tag = 'output window, operand 0, single buffered']
    #allocation3 [shape = 's32[1]{0}', space=sflag, size = 0x4, scoped, tag = 'scoped memory for _lambda_.5']
    %7 = vsyncpa [#allocation3], 0
    // Predicated region
    $region2: #{_lambda_.5} parent=1 // pred_check
      _
    $region3: #{_lambda_.5} parent=1 // pred_check_branch
      %9 = sbr.rel (0) target = $region5
    $region4: #{_lambda_.5} parent=1 // pred_region
      _
    $region5: #{_lambda_.5} parent=1 // pred_fallthru
      _
    // Predicated region
    $region6: #{_lambda_.5} parent=1 // pred_check
      _
    $region7: #{_lambda_.5} parent=1 // pred_check_branch
      %11 = sbr.rel (0) target = $region9
    $region8: #{_lambda_.5} parent=1 // pred_region
      _
    $region9: #{_lambda_.5} parent=1 // pred_fallthru
      _
    %v13 = vld [vmem:[%s0] sm:$0xf]
    %v14 = vld [vmem:[%s0 + $0x4] sm:$0xf]
    %v15 = vld [vmem:[%s0 + $0x8] sm:$0xf]
    %v16 = vld [vmem:[%s0 + $0xc] sm:$0xf]
    %v17 = vld [vmem:[%s0 + $0x10] sm:$0xf]
    %v18 = vld [vmem:[%s0 + $0x14] sm:$0xf]
    %v19 = vld [vmem:[%s0 + $0x18] sm:$0xf]
    %v20 = vld [vmem:[%s0 + $0x1c] sm:$0xf]
    %v21 = vld [vmem:[%s1] sm:$0xff]
    %v22 = vld [vmem:[%s1 + $0x8] sm:$0xff]
    %v23 = vld [vmem:[%s1 + $0x10] sm:$0xff]
    %v24 = vld [vmem:[%s1 + $0x18] sm:$0xff]
    %v25 = vld [vmem:[%s1 + $0x20] sm:$0xff]
    %v26 = vld [vmem:[%s1 + $0x28] sm:$0xff]
    %v27 = vld [vmem:[%s1 + $0x30] sm:$0xff]
    %v28 = vld [vmem:[%s1 + $0x38] sm:$0xff]
    %v29 = vld [vmem:[%s1 + $0x40] sm:$0xff]
    %v30 = vld [vmem:[%s1 + $0x48] sm:$0xff]
    %v31 = vld [vmem:[%s1 + $0x50] sm:$0xff]
    %v32 = vld [vmem:[%s1 + $0x58] sm:$0xff]
    %v33 = vld [vmem:[%s1 + $0x60] sm:$0xff]
    %v34 = vld [vmem:[%s1 + $0x68] sm:$0xff]
    %v35 = vld [vmem:[%s1 + $0x70] sm:$0xff]
    %v36 = vld [vmem:[%s1 + $0x78] sm:$0xff]
    %v37 = vld [vmem:[%s1 + $0x80] sm:$0xff]
    %v38 = vld [vmem:[%s1 + $0x88] sm:$0xff]
    %v39 = vld [vmem:[%s1 + $0x90] sm:$0xff]
    %v40 = vld [vmem:[%s1 + $0x98] sm:$0xff]
    %v41 = vld [vmem:[%s1 + $0xa0] sm:$0xff]
    %v42 = vld [vmem:[%s1 + $0xa8] sm:$0xff]
    %v43 = vld [vmem:[%s1 + $0xb0] sm:$0xff]
    %v44 = vld [vmem:[%s1 + $0xb8] sm:$0xff]
    %v45 = vld [vmem:[%s1 + $0xc0] sm:$0xff]
    %v46 = vld [vmem:[%s1 + $0xc8] sm:$0xff]
    %v47 = vld [vmem:[%s1 + $0xd0] sm:$0xff]
    %v48 = vld [vmem:[%s1 + $0xd8] sm:$0xff]
    %v49 = vld [vmem:[%s1 + $0xe0] sm:$0xff]
    %v50 = vld [vmem:[%s1 + $0xe8] sm:$0xff]
    %v51 = vld [vmem:[%s1 + $0xf0] sm:$0xff]
    %v52 = vld [vmem:[%s1 + $0xf8] sm:$0xff]
    %v61 = vunpack.c.l.b16 %v13
    %v62 = vunpack.c.l.b16 %v14
    %v63 = vunpack.c.l.b16 %v15
    %v64 = vunpack.c.l.b16 %v16
    %v65 = vunpack.c.l.b16 %v17
    %v66 = vunpack.c.l.b16 %v18
    %v67 = vunpack.c.l.b16 %v19
    %v68 = vunpack.c.l.b16 %v20
    %v69 = vpack.c.b16 %v62, %v61
    %v70 = vpack.c.b16 %v64, %v63
    %v71 = vpack.c.b16 %v66, %v65
    %v72 = vpack.c.b16 %v68, %v67
    %v109 = vunpack.c.l.b16 %v21
    %v110 = vunpack.c.h.b16 %v21
    %v111 = vunpack.c.l.b16 %v22
    %v112 = vunpack.c.h.b16 %v22
    %v113 = vunpack.c.l.b16 %v23
    %v114 = vunpack.c.h.b16 %v23
    %v115 = vunpack.c.l.b16 %v24
    %v116 = vunpack.c.h.b16 %v24
    %v117 = vunpack.c.l.b16 %v25
    %v118 = vunpack.c.h.b16 %v25
    %v119 = vunpack.c.l.b16 %v26
    %v120 = vunpack.c.h.b16 %v26
    %v121 = vunpack.c.l.b16 %v27
    %v122 = vunpack.c.h.b16 %v27
    %v123 = vunpack.c.l.b16 %v28
    %v124 = vunpack.c.h.b16 %v28
    %v125 = vunpack.c.l.b16 %v29
    %v126 = vunpack.c.h.b16 %v29
    %v127 = vunpack.c.l.b16 %v30
    %v128 = vunpack.c.h.b16 %v30
    %v129 = vunpack.c.l.b16 %v31
    %v130 = vunpack.c.h.b16 %v31
    %v131 = vunpack.c.l.b16 %v32
    %v132 = vunpack.c.h.b16 %v32
    %v133 = vunpack.c.l.b16 %v33
    %v134 = vunpack.c.h.b16 %v33
    %v135 = vunpack.c.l.b16 %v34
    %v136 = vunpack.c.h.b16 %v34
    %v137 = vunpack.c.l.b16 %v35
    %v138 = vunpack.c.h.b16 %v35
    %v139 = vunpack.c.l.b16 %v36
    %v140 = vunpack.c.h.b16 %v36
    %v141 = vunpack.c.l.b16 %v37
    %v142 = vunpack.c.h.b16 %v37
    %v143 = vunpack.c.l.b16 %v38
    %v144 = vunpack.c.h.b16 %v38
    %v145 = vunpack.c.l.b16 %v39
    %v146 = vunpack.c.h.b16 %v39
    %v147 = vunpack.c.l.b16 %v40
    %v148 = vunpack.c.h.b16 %v40
    %v149 = vunpack.c.l.b16 %v41
    %v150 = vunpack.c.h.b16 %v41
    %v151 = vunpack.c.l.b16 %v42
    %v152 = vunpack.c.h.b16 %v42
    %v153 = vunpack.c.l.b16 %v43
    %v154 = vunpack.c.h.b16 %v43
    %v155 = vunpack.c.l.b16 %v44
    %v156 = vunpack.c.h.b16 %v44
    %v157 = vunpack.c.l.b16 %v45
    %v158 = vunpack.c.h.b16 %v45
    %v159 = vunpack.c.l.b16 %v46
    %v160 = vunpack.c.h.b16 %v46
    %v161 = vunpack.c.l.b16 %v47
    %v162 = vunpack.c.h.b16 %v47
    %v163 = vunpack.c.l.b16 %v48
    %v164 = vunpack.c.h.b16 %v48
    %v165 = vunpack.c.l.b16 %v49
    %v166 = vunpack.c.h.b16 %v49
    %v167 = vunpack.c.l.b16 %v50
    %v168 = vunpack.c.h.b16 %v50
    %v169 = vunpack.c.l.b16 %v51
    %v170 = vunpack.c.h.b16 %v51
    %v171 = vunpack.c.l.b16 %v52
    %v172 = vunpack.c.h.b16 %v52
    %v173 = vpack.c.b16 %v113, %v109
    %v174 = vpack.c.b16 %v114, %v110
    %v175 = vpack.c.b16 %v115, %v111
    %v176 = vpack.c.b16 %v116, %v112
    %v177 = vpack.c.b16 %v121, %v117
    %v178 = vpack.c.b16 %v122, %v118
    %v179 = vpack.c.b16 %v123, %v119
    %v180 = vpack.c.b16 %v124, %v120
    %v181 = vpack.c.b16 %v129, %v125
    %v182 = vpack.c.b16 %v130, %v126
    %v183 = vpack.c.b16 %v131, %v127
    %v184 = vpack.c.b16 %v132, %v128
    %v185 = vpack.c.b16 %v137, %v133
    %v186 = vpack.c.b16 %v138, %v134
    %v187 = vpack.c.b16 %v139, %v135
    %v188 = vpack.c.b16 %v140, %v136
    %v189 = vpack.c.b16 %v145, %v141
    %v190 = vpack.c.b16 %v146, %v142
    %v191 = vpack.c.b16 %v147, %v143
    %v192 = vpack.c.b16 %v148, %v144
    %v193 = vpack.c.b16 %v153, %v149
    %v194 = vpack.c.b16 %v154, %v150
    %v195 = vpack.c.b16 %v155, %v151
    %v196 = vpack.c.b16 %v156, %v152
    %v197 = vpack.c.b16 %v161, %v157
    %v198 = vpack.c.b16 %v162, %v158
    %v199 = vpack.c.b16 %v163, %v159
    %v200 = vpack.c.b16 %v164, %v160
    %v201 = vpack.c.b16 %v169, %v165
    %v202 = vpack.c.b16 %v170, %v166
    %v203 = vpack.c.b16 %v171, %v167
    %v204 = vpack.c.b16 %v172, %v168
    %237 = vmatprep.subr.bf16.mxu0 %v202
    %238 = vmatpush1.bf16.msra.mxu0 %v201
    %239 = vmatprep.subr.bf16.mxu0 %v198
    %240 = vmatpush1.bf16.msra.mxu0 %v197
    %241 = vmatprep.subr.bf16.mxu0 %v194
    %242 = vmatpush1.bf16.msra.mxu0 %v193
    %243 = vmatprep.subr.bf16.mxu0 %v190
    %244 = vmatpush1.bf16.msra.mxu0 %v189
    %245 = vmatprep.subr.bf16.mxu0 %v186
    %246 = vmatpush1.bf16.msra.mxu0 %v185
    %247 = vmatprep.subr.bf16.mxu0 %v182
    %248 = vmatpush1.bf16.msra.mxu0 %v181
    %249 = vmatprep.subr.bf16.mxu0 %v178
    %250 = vmatpush1.bf16.msra.mxu0 %v177
    %251 = vmatprep.subr.bf16.mxu0 %v174
    %252 = vmatpush1.bf16.msra.mxu0 %v173
    %253 = vmatprep.subr.bf16.mxu0 0
    %254 = vmatpush2.bf16.msra.mxu0 0
    %255 = vmatprep.subr.bf16.mxu0 0
    %256 = vmatpush2.bf16.msra.mxu0 0
    %257 = vmatprep.subr.bf16.mxu0 0
    %258 = vmatpush2.bf16.msra.mxu0 0
    %259 = vmatprep.subr.bf16.mxu0 0
    %260 = vmatpush2.bf16.msra.mxu0 0
    %261 = vmatprep.subr.bf16.mxu0 0
    %262 = vmatpush2.bf16.msra.mxu0 0
    %263 = vmatprep.subr.bf16.mxu0 0
    %264 = vmatpush2.bf16.msra.mxu0 0
    %265 = vmatprep.subr.bf16.mxu0 0
    %266 = vmatpush2.bf16.msra.mxu0 0
    %267 = vmatprep.subr.bf16.mxu0 0
    %268 = vmatpush2.bf16.msra.mxu0 0
    %269 = vmatprep.mubr.bf16.mxu0 0
    %270 = vmatmul.mubr.bf16.gmra.mxu0 %v69
    %v271 = vpop.f32.mrf.mxu0
    %v272 = vadd.f32 0.0, %v271
    %v273 = vpop.f32.mrf.mxu0
    %v274 = vadd.f32 0.0, %v273
    %v275 = vpop.f32.mrf.mxu0
    %v276 = vadd.f32 0.0, %v275
    %v277 = vpop.f32.mrf.mxu0
    %v278 = vadd.f32 0.0, %v277
    %279 = vmatprep.mubr.bf16.mxu0 0
    %280 = vmatmul.mubr.bf16.gmra.mxu0 %v70
    %v281 = vpop.f32.mrf.mxu0
    %v282 = vadd.f32 0.0, %v281
    %v283 = vpop.f32.mrf.mxu0
    %v284 = vadd.f32 0.0, %v283
    %v285 = vpop.f32.mrf.mxu0
    %v286 = vadd.f32 0.0, %v285
    %v287 = vpop.f32.mrf.mxu0
    %v288 = vadd.f32 0.0, %v287
    %289 = vmatprep.mubr.bf16.mxu0 0
    %290 = vmatmul.mubr.bf16.gmra.mxu0 %v71
    %v291 = vpop.f32.mrf.mxu0
    %v292 = vadd.f32 0.0, %v291
    %v293 = vpop.f32.mrf.mxu0
    %v294 = vadd.f32 0.0, %v293
    %v295 = vpop.f32.mrf.mxu0
    %v296 = vadd.f32 0.0, %v295
    %v297 = vpop.f32.mrf.mxu0
    %v298 = vadd.f32 0.0, %v297
    %299 = vmatprep.mubr.bf16.mxu0 0
    %300 = vmatmul.mubr.bf16.gmra.mxu0 %v72
    %v301 = vpop.f32.mrf.mxu0
    %v302 = vadd.f32 0.0, %v301
    %v303 = vpop.f32.mrf.mxu0
    %v304 = vadd.f32 0.0, %v303
    %v305 = vpop.f32.mrf.mxu0
    %v306 = vadd.f32 0.0, %v305
    %v307 = vpop.f32.mrf.mxu0
    %v308 = vadd.f32 0.0, %v307
    %309 = vdwg.mxu0
    %310 = vmatprep.subr.bf16.mxu0 %v204
    %311 = vmatpush1.bf16.msra.mxu0 %v203
    %312 = vmatprep.subr.bf16.mxu0 %v200
    %313 = vmatpush1.bf16.msra.mxu0 %v199
    %314 = vmatprep.subr.bf16.mxu0 %v196
    %315 = vmatpush1.bf16.msra.mxu0 %v195
    %316 = vmatprep.subr.bf16.mxu0 %v192
    %317 = vmatpush1.bf16.msra.mxu0 %v191
    %318 = vmatprep.subr.bf16.mxu0 %v188
    %319 = vmatpush1.bf16.msra.mxu0 %v187
    %320 = vmatprep.subr.bf16.mxu0 %v184
    %321 = vmatpush1.bf16.msra.mxu0 %v183
    %322 = vmatprep.subr.bf16.mxu0 %v180
    %323 = vmatpush1.bf16.msra.mxu0 %v179
    %324 = vmatprep.subr.bf16.mxu0 %v176
    %325 = vmatpush1.bf16.msra.mxu0 %v175
    %326 = vmatprep.subr.bf16.mxu0 0
    %327 = vmatpush2.bf16.msra.mxu0 0
    %328 = vmatprep.subr.bf16.mxu0 0
    %329 = vmatpush2.bf16.msra.mxu0 0
    %330 = vmatprep.subr.bf16.mxu0 0
    %331 = vmatpush2.bf16.msra.mxu0 0
    %332 = vmatprep.subr.bf16.mxu0 0
    %333 = vmatpush2.bf16.msra.mxu0 0
    %334 = vmatprep.subr.bf16.mxu0 0
    %335 = vmatpush2.bf16.msra.mxu0 0
    %336 = vmatprep.subr.bf16.mxu0 0
    %337 = vmatpush2.bf16.msra.mxu0 0
    %338 = vmatprep.subr.bf16.mxu0 0
    %339 = vmatpush2.bf16.msra.mxu0 0
    %340 = vmatprep.subr.bf16.mxu0 0
    %341 = vmatpush2.bf16.msra.mxu0 0
    %342 = vmatprep.mubr.bf16.mxu0 0
    %343 = vmatmul.mubr.bf16.gmra.mxu0 %v69
    %v344 = vpop.f32.mrf.mxu0
    %v345 = vadd.f32 0.0, %v344
    %v346 = vpop.f32.mrf.mxu0
    %v347 = vadd.f32 0.0, %v346
    %v348 = vpop.f32.mrf.mxu0
    %v349 = vadd.f32 0.0, %v348
    %v350 = vpop.f32.mrf.mxu0
    %v351 = vadd.f32 0.0, %v350
    %352 = vmatprep.mubr.bf16.mxu0 0
    %353 = vmatmul.mubr.bf16.gmra.mxu0 %v70
    %v354 = vpop.f32.mrf.mxu0
    %v355 = vadd.f32 0.0, %v354
    %v356 = vpop.f32.mrf.mxu0
    %v357 = vadd.f32 0.0, %v356
    %v358 = vpop.f32.mrf.mxu0
    %v359 = vadd.f32 0.0, %v358
    %v360 = vpop.f32.mrf.mxu0
    %v361 = vadd.f32 0.0, %v360
    %362 = vmatprep.mubr.bf16.mxu0 0
    %363 = vmatmul.mubr.bf16.gmra.mxu0 %v71
    %v364 = vpop.f32.mrf.mxu0
    %v365 = vadd.f32 0.0, %v364
    %v366 = vpop.f32.mrf.mxu0
    %v367 = vadd.f32 0.0, %v366
    %v368 = vpop.f32.mrf.mxu0
    %v369 = vadd.f32 0.0, %v368
    %v370 = vpop.f32.mrf.mxu0
    %v371 = vadd.f32 0.0, %v370
    %372 = vmatprep.mubr.bf16.mxu0 0
    %373 = vmatmul.mubr.bf16.gmra.mxu0 %v72
    %v374 = vpop.f32.mrf.mxu0
    %v375 = vadd.f32 0.0, %v374
    %v376 = vpop.f32.mrf.mxu0
    %v377 = vadd.f32 0.0, %v376
    %v378 = vpop.f32.mrf.mxu0
    %v379 = vadd.f32 0.0, %v378
    %v380 = vpop.f32.mrf.mxu0
    %v381 = vadd.f32 0.0, %v380
    %382 = vdwg.mxu0
    %383 = vst [vmem:[#allocation2] sm:$0xff] %v272
    %384 = vst [vmem:[#allocation2 + $0x8] sm:$0xff] %v274
    %385 = vst [vmem:[#allocation2 + $0x10] sm:$0xff] %v345
    %386 = vst [vmem:[#allocation2 + $0x18] sm:$0xff] %v347
    %387 = vst [vmem:[#allocation2 + $0x20] sm:$0xff] %v276
    %388 = vst [vmem:[#allocation2 + $0x28] sm:$0xff] %v278
    %389 = vst [vmem:[#allocation2 + $0x30] sm:$0xff] %v349
    %390 = vst [vmem:[#allocation2 + $0x38] sm:$0xff] %v351
    %391 = vst [vmem:[#allocation2 + $0x40] sm:$0xff] %v282
    %392 = vst [vmem:[#allocation2 + $0x48] sm:$0xff] %v284
    %393 = vst [vmem:[#allocation2 + $0x50] sm:$0xff] %v355
    %394 = vst [vmem:[#allocation2 + $0x58] sm:$0xff] %v357
    %395 = vst [vmem:[#allocation2 + $0x60] sm:$0xff] %v286
    %396 = vst [vmem:[#allocation2 + $0x68] sm:$0xff] %v288
    %397 = vst [vmem:[#allocation2 + $0x70] sm:$0xff] %v359
    %398 = vst [vmem:[#allocation2 + $0x78] sm:$0xff] %v361
    %399 = vst [vmem:[#allocation2 + $0x80] sm:$0xff] %v292
    %400 = vst [vmem:[#allocation2 + $0x88] sm:$0xff] %v294
    %401 = vst [vmem:[#allocation2 + $0x90] sm:$0xff] %v365
    %402 = vst [vmem:[#allocation2 + $0x98] sm:$0xff] %v367
    %403 = vst [vmem:[#allocation2 + $0xa0] sm:$0xff] %v296
    %404 = vst [vmem:[#allocation2 + $0xa8] sm:$0xff] %v298
    %405 = vst [vmem:[#allocation2 + $0xb0] sm:$0xff] %v369
    %406 = vst [vmem:[#allocation2 + $0xb8] sm:$0xff] %v371
    %407 = vst [vmem:[#allocation2 + $0xc0] sm:$0xff] %v302
    %408 = vst [vmem:[#allocation2 + $0xc8] sm:$0xff] %v304
    %409 = vst [vmem:[#allocation2 + $0xd0] sm:$0xff] %v375
    %410 = vst [vmem:[#allocation2 + $0xd8] sm:$0xff] %v377
    %411 = vst [vmem:[#allocation2 + $0xe0] sm:$0xff] %v306
    %412 = vst [vmem:[#allocation2 + $0xe8] sm:$0xff] %v308
    %413 = vst [vmem:[#allocation2 + $0xf0] sm:$0xff] %v379
    %414 = vst [vmem:[#allocation2 + $0xf8] sm:$0xff] %v381
    // Predicated region
    $region10: #{_lambda_.5} parent=1 // pred_check
      _
    $region11: #{_lambda_.5} parent=1 // pred_check_branch
      %416 = sbr.rel (0) target = $region13
    $region12: #{_lambda_.5} parent=1 // pred_region
      %s418 = ssub.s32 4096, 4096
      %419 = vsyncadd [#allocation3], %s418
      %s420 = sshll.u32 [#allocation2], 4
      %s421 = int_to_ptr.vmem [resolvable:$true] %s420
      %426 = dma.vmem_to_hbm [thread:$0]  %s421, 4096, %s2, [#allocation3], 512, 512, 32
    $region13: #{_lambda_.5} parent=1 // pred_fallthru
      _
    // Predicated region
    $region14: #{_lambda_.5} parent=1 // pred_check
      _
    $region15: #{_lambda_.5} parent=1 // pred_check_branch
      %428 = sbr.rel (0) target = $region17
    $region16: #{_lambda_.5} parent=1 // pred_region
      %429 = dma.done [#allocation3], 4096
    $region17: #{_lambda_.5} parent=1 // pred_fallthru
      _
    %430 = vsyncpa [#allocation3], 1

// kernel: _lambda_.3
$region0: #{_lambda_.3}
  #allocation0 [shape = 'u32[]', space=smem, size = 0x4, offset = 0x4, fixed_abs, tag = 'smem constant byte address 0x4 - core index']
  #allocation1 [shape = 'u32[144,128]{1,0:T(1,128)}', space=vmem, size = 0x12000, scoped, tag = 'internal scratch']
  %s0 = inlined_call_operand.vmem [shape: bf16[256,128], index: 0, kind: input, shape index: {}]
  %s1 = inlined_call_operand.vmem [shape: bf16[128,512], index: 1, kind: input, shape index: {}]
  %s2 = inlined_call_operand.vmem [shape: f32[1,512], index: 2, kind: input, shape index: {}]
  %s3 = inlined_call_operand.vmem [shape: bf16[256,512], index: 3, kind: output, shape index: {}]
  %s4 = sld [smem:[#allocation0]]
  $region22: #{_lambda_.3} parent=0
    _
  %s6 = ssub.s32 1, %s4
  %s7 = scalar_select 0, %s6, %s4
  // Predicated region
  $region2: #{_lambda_.3} parent=0 // pred_check
    _
  $region3: #{_lambda_.3} parent=0 // pred_check_branch
    %9 = sbr.rel (0) target = $region5
  $region4: #{_lambda_.3} parent=0 // pred_region
    _
  $region5: #{_lambda_.3} parent=0 // pred_fallthru
    _
  // Predicated region
  $region6: #{_lambda_.3} parent=0 // pred_check
    _
  $region7: #{_lambda_.3} parent=0 // pred_check_branch
    %11 = sbr.rel (0) target = $region9
  $region8: #{_lambda_.3} parent=0 // pred_region
    _
  $region9: #{_lambda_.3} parent=0 // pred_fallthru
    _
  // Predicated region
  $region10: #{_lambda_.3} parent=0 // pred_check
    _
  $region11: #{_lambda_.3} parent=0 // pred_check_branch
    %13 = sbr.rel (0) target = $region13
  $region12: #{_lambda_.3} parent=0 // pred_region
    _
  $region13: #{_lambda_.3} parent=0 // pred_fallthru
    _
  %v15 = vld [vmem:[%s0] sm:$0xf]
  %v16 = vld [vmem:[%s0 + $0x4] sm:$0xf]
  %v17 = vld [vmem:[%s0 + $0x8] sm:$0xf]
  %v18 = vld [vmem:[%s0 + $0xc] sm:$0xf]
  %v19 = vld [vmem:[%s0 + $0x10] sm:$0xf]
  %v20 = vld [vmem:[%s0 + $0x14] sm:$0xf]
  %v21 = vld [vmem:[%s0 + $0x18] sm:$0xf]
  %v22 = vld [vmem:[%s0 + $0x1c] sm:$0xf]
  %v23 = vld [vmem:[%s0 + $0x20] sm:$0xf]
  %v24 = vld [vmem:[%s0 + $0x24] sm:$0xf]
  %v25 = vld [vmem:[%s0 + $0x28] sm:$0xf]
  %v26 = vld [vmem:[%s0 + $0x2c] sm:$0xf]
  %v27 = vld [vmem:[%s0 + $0x30] sm:$0xf]
  %v28 = vld [vmem:[%s0 + $0x34] sm:$0xf]
  %v29 = vld [vmem:[%s0 + $0x38] sm:$0xf]
  %v30 = vld [vmem:[%s0 + $0x3c] sm:$0xf]
  %v31 = vld [vmem:[%s0 + $0x40] sm:$0xf]
  %v32 = vld [vmem:[%s0 + $0x44] sm:$0xf]
  %v33 = vld [vmem:[%s0 + $0x48] sm:$0xf]
  %v34 = vld [vmem:[%s0 + $0x4c] sm:$0xf]
  %v35 = vld [vmem:[%s0 + $0x50] sm:$0xf]
  %v36 = vld [vmem:[%s0 + $0x54] sm:$0xf]
  %v37 = vld [vmem:[%s0 + $0x58] sm:$0xf]
  %v38 = vld [vmem:[%s0 + $0x5c] sm:$0xf]
  %v39 = vld [vmem:[%s0 + $0x60] sm:$0xf]
  %v40 = vld [vmem:[%s0 + $0x64] sm:$0xf]
  %v41 = vld [vmem:[%s0 + $0x68] sm:$0xf]
  %v42 = vld [vmem:[%s0 + $0x6c] sm:$0xf]
  %v43 = vld [vmem:[%s0 + $0x70] sm:$0xf]
  %v44 = vld [vmem:[%s0 + $0x74] sm:$0xf]
  %v45 = vld [vmem:[%s0 + $0x78] sm:$0xf]
  %v46 = vld [vmem:[%s0 + $0x7c] sm:$0xf]
  %v47 = vld [vmem:[%s1] sm:$0xff]
  %v48 = vld [vmem:[%s1 + $0x8] sm:$0xff]
  %v49 = vld [vmem:[%s1 + $0x10] sm:$0xff]
  %v50 = vld [vmem:[%s1 + $0x18] sm:$0xff]
  %v51 = vld [vmem:[%s1 + $0x20] sm:$0xff]
  %v52 = vld [vmem:[%s1 + $0x28] sm:$0xff]
  %v53 = vld [vmem:[%s1 + $0x30] sm:$0xff]
  %v54 = vld [vmem:[%s1 + $0x38] sm:$0xff]
  %v55 = vld [vmem:[%s1 + $0x40] sm:$0xff]
  %v56 = vld [vmem:[%s1 + $0x48] sm:$0xff]
  %v57 = vld [vmem:[%s1 + $0x50] sm:$0xff]
  %v58 = vld [vmem:[%s1 + $0x58] sm:$0xff]
  %v59 = vld [vmem:[%s1 + $0x60] sm:$0xff]
  %v60 = vld [vmem:[%s1 + $0x68] sm:$0xff]
  %v61 = vld [vmem:[%s1 + $0x70] sm:$0xff]
  %v62 = vld [vmem:[%s1 + $0x78] sm:$0xff]
  %v63 = vld [vmem:[%s1 + $0x80] sm:$0xff]
  %v64 = vld [vmem:[%s1 + $0x88] sm:$0xff]
  %v65 = vld [vmem:[%s1 + $0x90] sm:$0xff]
  %v66 = vld [vmem:[%s1 + $0x98] sm:$0xff]
  %v67 = vld [vmem:[%s1 + $0xa0] sm:$0xff]
  %v68 = vld [vmem:[%s1 + $0xa8] sm:$0xff]
  %v69 = vld [vmem:[%s1 + $0xb0] sm:$0xff]
  %v70 = vld [vmem:[%s1 + $0xb8] sm:$0xff]
  %v71 = vld [vmem:[%s1 + $0xc0] sm:$0xff]
  %v72 = vld [vmem:[%s1 + $0xc8] sm:$0xff]
  %v73 = vld [vmem:[%s1 + $0xd0] sm:$0xff]
  %v74 = vld [vmem:[%s1 + $0xd8] sm:$0xff]
  %v75 = vld [vmem:[%s1 + $0xe0] sm:$0xff]
  %v76 = vld [vmem:[%s1 + $0xe8] sm:$0xff]
  %v77 = vld [vmem:[%s1 + $0xf0] sm:$0xff]
  %v78 = vld [vmem:[%s1 + $0xf8] sm:$0xff]
  %v79 = vld [vmem:[%s2] sm:$0xf]
  %v81 = vlaneseq
  %v82 = vshrl.u32 %v81, 7
  %v83 = vsub.s32 0, %v82
  %v84 = vrot.slane %v79, %v83
  %v85 = vlaneseq
  %v86 = vshrl.u32 %v85, 7
  %v87 = vsub.s32 1, %v86
  %v88 = vrot.slane %v79, %v87
  %v89 = vlaneseq
  %v90 = vshrl.u32 %v89, 7
  %v91 = vsub.s32 2, %v90
  %v92 = vrot.slane %v79, %v91
  %v93 = vlaneseq
  %v94 = vshrl.u32 %v93, 7
  %v95 = vsub.s32 3, %v94
  %v96 = vrot.slane %v79, %v95
  %v133 = vunpack.c.l.b16 %v15
  %v134 = vunpack.c.l.b16 %v16
  %v135 = vunpack.c.l.b16 %v17
  %v136 = vunpack.c.l.b16 %v18
  %v137 = vunpack.c.l.b16 %v19
  %v138 = vunpack.c.l.b16 %v20
  %v139 = vunpack.c.l.b16 %v21
  %v140 = vunpack.c.l.b16 %v22
  %v141 = vunpack.c.l.b16 %v23
  %v142 = vunpack.c.l.b16 %v24
  %v143 = vunpack.c.l.b16 %v25
  %v144 = vunpack.c.l.b16 %v26
  %v145 = vunpack.c.l.b16 %v27
  %v146 = vunpack.c.l.b16 %v28
  %v147 = vunpack.c.l.b16 %v29
  %v148 = vunpack.c.l.b16 %v30
  %v149 = vunpack.c.l.b16 %v31
  %v150 = vunpack.c.l.b16 %v32
  %v151 = vunpack.c.l.b16 %v33
  %v152 = vunpack.c.l.b16 %v34
  %v153 = vunpack.c.l.b16 %v35
  %v154 = vunpack.c.l.b16 %v36
  %v155 = vunpack.c.l.b16 %v37
  %v156 = vunpack.c.l.b16 %v38
  %v157 = vunpack.c.l.b16 %v39
  %v158 = vunpack.c.l.b16 %v40
  %v159 = vunpack.c.l.b16 %v41
  %v160 = vunpack.c.l.b16 %v42
  %v161 = vunpack.c.l.b16 %v43
  %v162 = vunpack.c.l.b16 %v44
  %v163 = vunpack.c.l.b16 %v45
  %v164 = vunpack.c.l.b16 %v46
  %v165 = vpack.c.b16 %v134, %v133
  %v166 = vpack.c.b16 %v136, %v135
  %v167 = vpack.c.b16 %v138, %v137
  %v168 = vpack.c.b16 %v140, %v139
  %v169 = vpack.c.b16 %v142, %v141
  %v170 = vpack.c.b16 %v144, %v143
  %v171 = vpack.c.b16 %v146, %v145
  %v172 = vpack.c.b16 %v148, %v147
  %v173 = vpack.c.b16 %v150, %v149
  %v174 = vpack.c.b16 %v152, %v151
  %v175 = vpack.c.b16 %v154, %v153
  %v176 = vpack.c.b16 %v156, %v155
  %v177 = vpack.c.b16 %v158, %v157
  %v178 = vpack.c.b16 %v160, %v159
  %v179 = vpack.c.b16 %v162, %v161
  %v180 = vpack.c.b16 %v164, %v163
  %v229 = vunpack.c.l.b16 %v47
  %v230 = vunpack.c.h.b16 %v47
  %v231 = vunpack.c.l.b16 %v48
  %v232 = vunpack.c.h.b16 %v48
  %v233 = vunpack.c.l.b16 %v49
  %v234 = vunpack.c.h.b16 %v49
  %v235 = vunpack.c.l.b16 %v50
  %v236 = vunpack.c.h.b16 %v50
  %v237 = vunpack.c.l.b16 %v51
  %v238 = vunpack.c.h.b16 %v51
  %v239 = vunpack.c.l.b16 %v52
  %v240 = vunpack.c.h.b16 %v52
  %v241 = vunpack.c.l.b16 %v53
  %v242 = vunpack.c.h.b16 %v53
  %v243 = vunpack.c.l.b16 %v54
  %v244 = vunpack.c.h.b16 %v54
  %v245 = vunpack.c.l.b16 %v55
  %v246 = vunpack.c.h.b16 %v55
  %v247 = vunpack.c.l.b16 %v56
  %v248 = vunpack.c.h.b16 %v56
  %v249 = vunpack.c.l.b16 %v57
  %v250 = vunpack.c.h.b16 %v57
  %v251 = vunpack.c.l.b16 %v58
  %v252 = vunpack.c.h.b16 %v58
  %v253 = vunpack.c.l.b16 %v59
  %v254 = vunpack.c.h.b16 %v59
  %v255 = vunpack.c.l.b16 %v60
  %v256 = vunpack.c.h.b16 %v60
  %v257 = vunpack.c.l.b16 %v61
  %v258 = vunpack.c.h.b16 %v61
  %v259 = vunpack.c.l.b16 %v62
  %v260 = vunpack.c.h.b16 %v62
  %v261 = vunpack.c.l.b16 %v63
  %v262 = vunpack.c.h.b16 %v63
  %v263 = vunpack.c.l.b16 %v64
  %v264 = vunpack.c.h.b16 %v64
  %v265 = vunpack.c.l.b16 %v65
  %v266 = vunpack.c.h.b16 %v65
  %v267 = vunpack.c.l.b16 %v66
  %v268 = vunpack.c.h.b16 %v66
  %v269 = vunpack.c.l.b16 %v67
  %v270 = vunpack.c.h.b16 %v67
  %v271 = vunpack.c.l.b16 %v68
  %v272 = vunpack.c.h.b16 %v68
  %v273 = vunpack.c.l.b16 %v69
  %v274 = vunpack.c.h.b16 %v69
  %v275 = vunpack.c.l.b16 %v70
  %v276 = vunpack.c.h.b16 %v70
  %v277 = vunpack.c.l.b16 %v71
  %v278 = vunpack.c.h.b16 %v71
  %v279 = vunpack.c.l.b16 %v72
  %v280 = vunpack.c.h.b16 %v72
  %v281 = vunpack.c.l.b16 %v73
  %v282 = vunpack.c.h.b16 %v73
  %v283 = vunpack.c.l.b16 %v74
  %v284 = vunpack.c.h.b16 %v74
  %v285 = vunpack.c.l.b16 %v75
  %v286 = vunpack.c.h.b16 %v75
  %v287 = vunpack.c.l.b16 %v76
  %v288 = vunpack.c.h.b16 %v76
  %v289 = vunpack.c.l.b16 %v77
  %v290 = vunpack.c.h.b16 %v77
  %v291 = vunpack.c.l.b16 %v78
  %v292 = vunpack.c.h.b16 %v78
  %v293 = vpack.c.b16 %v233, %v229
  %v294 = vpack.c.b16 %v234, %v230
  %v295 = vpack.c.b16 %v235, %v231
  %v296 = vpack.c.b16 %v236, %v232
  %v297 = vpack.c.b16 %v241, %v237
  %v298 = vpack.c.b16 %v242, %v238
  %v299 = vpack.c.b16 %v243, %v239
  %v300 = vpack.c.b16 %v244, %v240
  %v301 = vpack.c.b16 %v249, %v245
  %v302 = vpack.c.b16 %v250, %v246
  %v303 = vpack.c.b16 %v251, %v247
  %v304 = vpack.c.b16 %v252, %v248
  %v305 = vpack.c.b16 %v257, %v253
  %v306 = vpack.c.b16 %v258, %v254
  %v307 = vpack.c.b16 %v259, %v255
  %v308 = vpack.c.b16 %v260, %v256
  %v309 = vpack.c.b16 %v265, %v261
  %v310 = vpack.c.b16 %v266, %v262
  %v311 = vpack.c.b16 %v267, %v263
  %v312 = vpack.c.b16 %v268, %v264
  %v313 = vpack.c.b16 %v273, %v269
  %v314 = vpack.c.b16 %v274, %v270
  %v315 = vpack.c.b16 %v275, %v271
  %v316 = vpack.c.b16 %v276, %v272
  %v317 = vpack.c.b16 %v281, %v277
  %v318 = vpack.c.b16 %v282, %v278
  %v319 = vpack.c.b16 %v283, %v279
  %v320 = vpack.c.b16 %v284, %v280
  %v321 = vpack.c.b16 %v289, %v285
  %v322 = vpack.c.b16 %v290, %v286
  %v323 = vpack.c.b16 %v291, %v287
  %v324 = vpack.c.b16 %v292, %v288
  %357 = vmatprep.subr.bf16.mxu0 %v322
  %358 = vmatpush1.bf16.msra.mxu0 %v321
  %359 = vmatprep.subr.bf16.mxu0 %v318
  %360 = vmatpush1.bf16.msra.mxu0 %v317
  %361 = vmatprep.subr.bf16.mxu0 %v314
  %362 = vmatpush1.bf16.msra.mxu0 %v313
  %363 = vmatprep.subr.bf16.mxu0 %v310
  %364 = vmatpush1.bf16.msra.mxu0 %v309
  %365 = vmatprep.subr.bf16.mxu0 %v306
  %366 = vmatpush1.bf16.msra.mxu0 %v305
  %367 = vmatprep.subr.bf16.mxu0 %v302
  %368 = vmatpush1.bf16.msra.mxu0 %v301
  %369 = vmatprep.subr.bf16.mxu0 %v298
  %370 = vmatpush1.bf16.msra.mxu0 %v297
  %371 = vmatprep.subr.bf16.mxu0 %v294
  %372 = vmatpush1.bf16.msra.mxu0 %v293
  %373 = vmatprep.subr.bf16.mxu0 0
  %374 = vmatpush2.bf16.msra.mxu0 0
  %375 = vmatprep.subr.bf16.mxu0 0
  %376 = vmatpush2.bf16.msra.mxu0 0
  %377 = vmatprep.subr.bf16.mxu0 0
  %378 = vmatpush2.bf16.msra.mxu0 0
  %379 = vmatprep.subr.bf16.mxu0 0
  %380 = vmatpush2.bf16.msra.mxu0 0
  %381 = vmatprep.subr.bf16.mxu0 0
  %382 = vmatpush2.bf16.msra.mxu0 0
  %383 = vmatprep.subr.bf16.mxu0 0
  %384 = vmatpush2.bf16.msra.mxu0 0
  %385 = vmatprep.subr.bf16.mxu0 0
  %386 = vmatpush2.bf16.msra.mxu0 0
  %387 = vmatprep.subr.bf16.mxu0 0
  %388 = vmatpush2.bf16.msra.mxu0 0
  %389 = vmatprep.mubr.bf16.mxu0 0
  %390 = vmatmul.mubr.bf16.gmra.mxu0 %v165
  %v391 = vpop.f32.mrf.mxu0
  %v392 = vadd.f32 %v84, %v391
  %v393 = vpop.f32.mrf.mxu0
  %v394 = vadd.f32 %v88, %v393
  %v395 = vpop.f32.mrf.mxu0
  %v396 = vadd.f32 %v84, %v395
  %v397 = vpop.f32.mrf.mxu0
  %v398 = vadd.f32 %v88, %v397
  %399 = vmatprep.mubr.bf16.mxu0 0
  %400 = vmatmul.mubr.bf16.gmra.mxu0 %v166
  %v401 = vpop.f32.mrf.mxu0
  %v402 = vadd.f32 %v84, %v401
  %v403 = vpop.f32.mrf.mxu0
  %v404 = vadd.f32 %v88, %v403
  %v405 = vpop.f32.mrf.mxu0
  %v406 = vadd.f32 %v84, %v405
  %v407 = vpop.f32.mrf.mxu0
  %v408 = vadd.f32 %v88, %v407
  %409 = vmatprep.mubr.bf16.mxu0 0
  %410 = vmatmul.mubr.bf16.gmra.mxu0 %v167
  %v411 = vpop.f32.mrf.mxu0
  %v412 = vadd.f32 %v84, %v411
  %v413 = vpop.f32.mrf.mxu0
  %v414 = vadd.f32 %v88, %v413
  %v415 = vpop.f32.mrf.mxu0
  %v416 = vadd.f32 %v84, %v415
  %v417 = vpop.f32.mrf.mxu0
  %v418 = vadd.f32 %v88, %v417
  %419 = vmatprep.mubr.bf16.mxu0 0
  %420 = vmatmul.mubr.bf16.gmra.mxu0 %v168
  %v421 = vpop.f32.mrf.mxu0
  %v422 = vadd.f32 %v84, %v421
  %v423 = vpop.f32.mrf.mxu0
  %v424 = vadd.f32 %v88, %v423
  %v425 = vpop.f32.mrf.mxu0
  %v426 = vadd.f32 %v84, %v425
  %v427 = vpop.f32.mrf.mxu0
  %v428 = vadd.f32 %v88, %v427
  %429 = vmatprep.mubr.bf16.mxu0 0
  %430 = vmatmul.mubr.bf16.gmra.mxu0 %v169
  %v431 = vpop.f32.mrf.mxu0
  %v432 = vadd.f32 %v84, %v431
  %v433 = vpop.f32.mrf.mxu0
  %v434 = vadd.f32 %v88, %v433
  %v435 = vpop.f32.mrf.mxu0
  %v436 = vadd.f32 %v84, %v435
  %v437 = vpop.f32.mrf.mxu0
  %v438 = vadd.f32 %v88, %v437
  %439 = vmatprep.mubr.bf16.mxu0 0
  %440 = vmatmul.mubr.bf16.gmra.mxu0 %v170
  %v441 = vpop.f32.mrf.mxu0
  %v442 = vadd.f32 %v84, %v441
  %v443 = vpop.f32.mrf.mxu0
  %v444 = vadd.f32 %v88, %v443
  %v445 = vpop.f32.mrf.mxu0
  %v446 = vadd.f32 %v84, %v445
  %v447 = vpop.f32.mrf.mxu0
  %v448 = vadd.f32 %v88, %v447
  %449 = vmatprep.mubr.bf16.mxu0 0
  %450 = vmatmul.mubr.bf16.gmra.mxu0 %v171
  %v451 = vpop.f32.mrf.mxu0
  %v452 = vadd.f32 %v84, %v451
  %v453 = vpop.f32.mrf.mxu0
  %v454 = vadd.f32 %v88, %v453
  %v455 = vpop.f32.mrf.mxu0
  %v456 = vadd.f32 %v84, %v455
  %v457 = vpop.f32.mrf.mxu0
  %v458 = vadd.f32 %v88, %v457
  %459 = vmatprep.mubr.bf16.mxu0 0
  %460 = vmatmul.mubr.bf16.gmra.mxu0 %v172
  %v461 = vpop.f32.mrf.mxu0
  %v462 = vadd.f32 %v84, %v461
  %v463 = vpop.f32.mrf.mxu0
  %v464 = vadd.f32 %v88, %v463
  %v465 = vpop.f32.mrf.mxu0
  %v466 = vadd.f32 %v84, %v465
  %v467 = vpop.f32.mrf.mxu0
  %v468 = vadd.f32 %v88, %v467
  %469 = vmatprep.mubr.bf16.mxu0 0
  %470 = vmatmul.mubr.bf16.gmra.mxu0 %v173
  %v471 = vpop.f32.mrf.mxu0
  %v472 = vadd.f32 %v84, %v471
  %v473 = vpop.f32.mrf.mxu0
  %v474 = vadd.f32 %v88, %v473
  %v475 = vpop.f32.mrf.mxu0
  %v476 = vadd.f32 %v84, %v475
  %v477 = vpop.f32.mrf.mxu0
  %v478 = vadd.f32 %v88, %v477
  %479 = vmatprep.mubr.bf16.mxu0 0
  %480 = vmatmul.mubr.bf16.gmra.mxu0 %v174
  %v481 = vpop.f32.mrf.mxu0
  %v482 = vadd.f32 %v84, %v481
  %v483 = vpop.f32.mrf.mxu0
  %v484 = vadd.f32 %v88, %v483
  %v485 = vpop.f32.mrf.mxu0
  %v486 = vadd.f32 %v84, %v485
  %v487 = vpop.f32.mrf.mxu0
  %v488 = vadd.f32 %v88, %v487
  %489 = vmatprep.mubr.bf16.mxu0 0
  %490 = vmatmul.mubr.bf16.gmra.mxu0 %v175
  %v491 = vpop.f32.mrf.mxu0
  %v492 = vadd.f32 %v84, %v491
  %v493 = vpop.f32.mrf.mxu0
  %v494 = vadd.f32 %v88, %v493
  %v495 = vpop.f32.mrf.mxu0
  %v496 = vadd.f32 %v84, %v495
  %v497 = vpop.f32.mrf.mxu0
  %v498 = vadd.f32 %v88, %v497
  %499 = vmatprep.mubr.bf16.mxu0 0
  %500 = vmatmul.mubr.bf16.gmra.mxu0 %v176
  %v501 = vpop.f32.mrf.mxu0
  %v502 = vadd.f32 %v84, %v501
  %v503 = vpop.f32.mrf.mxu0
  %v504 = vadd.f32 %v88, %v503
  %v505 = vpop.f32.mrf.mxu0
  %v506 = vadd.f32 %v84, %v505
  %v507 = vpop.f32.mrf.mxu0
  %v508 = vadd.f32 %v88, %v507
  %509 = vmatprep.mubr.bf16.mxu0 0
  %510 = vmatmul.mubr.bf16.gmra.mxu0 %v177
  %v511 = vpop.f32.mrf.mxu0
  %v512 = vadd.f32 %v84, %v511
  %v513 = vpop.f32.mrf.mxu0
  %v514 = vadd.f32 %v88, %v513
  %v515 = vpop.f32.mrf.mxu0
  %v516 = vadd.f32 %v84, %v515
  %v517 = vpop.f32.mrf.mxu0
  %v518 = vadd.f32 %v88, %v517
  %519 = vmatprep.mubr.bf16.mxu0 0
  %520 = vmatmul.mubr.bf16.gmra.mxu0 %v178
  %v521 = vpop.f32.mrf.mxu0
  %v522 = vadd.f32 %v84, %v521
  %v523 = vpop.f32.mrf.mxu0
  %v524 = vadd.f32 %v88, %v523
  %v525 = vpop.f32.mrf.mxu0
  %v526 = vadd.f32 %v84, %v525
  %v527 = vpop.f32.mrf.mxu0
  %v528 = vadd.f32 %v88, %v527
  %529 = vmatprep.mubr.bf16.mxu0 0
  %530 = vmatmul.mubr.bf16.gmra.mxu0 %v179
  %v531 = vpop.f32.mrf.mxu0
  %v532 = vadd.f32 %v84, %v531
  %v533 = vpop.f32.mrf.mxu0
  %v534 = vadd.f32 %v88, %v533
  %v535 = vpop.f32.mrf.mxu0
  %v536 = vadd.f32 %v84, %v535
  %v537 = vpop.f32.mrf.mxu0
  %v538 = vadd.f32 %v88, %v537
  %539 = vmatprep.mubr.bf16.mxu0 0
  %540 = vmatmul.mubr.bf16.gmra.mxu0 %v180
  %v541 = vpop.f32.mrf.mxu0
  %v542 = vadd.f32 %v84, %v541
  %v543 = vpop.f32.mrf.mxu0
  %v544 = vadd.f32 %v88, %v543
  %v545 = vpop.f32.mrf.mxu0
  %v546 = vadd.f32 %v84, %v545
  %v547 = vpop.f32.mrf.mxu0
  %v548 = vadd.f32 %v88, %v547
  %549 = vdwg.mxu0
  %550 = vmatprep.subr.bf16.mxu0 %v324
  %551 = vmatpush1.bf16.msra.mxu0 %v323
  %552 = vmatprep.subr.bf16.mxu0 %v320
  %553 = vmatpush1.bf16.msra.mxu0 %v319
  %554 = vmatprep.subr.bf16.mxu0 %v316
  %555 = vmatpush1.bf16.msra.mxu0 %v315
  %556 = vmatprep.subr.bf16.mxu0 %v312
  %557 = vmatpush1.bf16.msra.mxu0 %v311
  %558 = vmatprep.subr.bf16.mxu0 %v308
  %559 = vmatpush1.bf16.msra.mxu0 %v307
  %560 = vmatprep.subr.bf16.mxu0 %v304
  %561 = vmatpush1.bf16.msra.mxu0 %v303
  %562 = vmatprep.subr.bf16.mxu0 %v300
  %563 = vmatpush1.bf16.msra.mxu0 %v299
  %564 = vmatprep.subr.bf16.mxu0 %v296
  %565 = vmatpush1.bf16.msra.mxu0 %v295
  %566 = vmatprep.subr.bf16.mxu0 0
  %567 = vmatpush2.bf16.msra.mxu0 0
  %568 = vmatprep.subr.bf16.mxu0 0
  %569 = vmatpush2.bf16.msra.mxu0 0
  %570 = vmatprep.subr.bf16.mxu0 0
  %571 = vmatpush2.bf16.msra.mxu0 0
  %572 = vmatprep.subr.bf16.mxu0 0
  %573 = vmatpush2.bf16.msra.mxu0 0
  %574 = vmatprep.subr.bf16.mxu0 0
  %575 = vmatpush2.bf16.msra.mxu0 0
  %576 = vmatprep.subr.bf16.mxu0 0
  %577 = vmatpush2.bf16.msra.mxu0 0
  %578 = vmatprep.subr.bf16.mxu0 0
  %579 = vmatpush2.bf16.msra.mxu0 0
  %580 = vmatprep.subr.bf16.mxu0 0
  %581 = vmatpush2.bf16.msra.mxu0 0
  %582 = vmatprep.mubr.bf16.mxu0 0
  %583 = vmatmul.mubr.bf16.gmra.mxu0 %v165
  %v584 = vpop.f32.mrf.mxu0
  %v585 = vadd.f32 %v92, %v584
  %v586 = vpop.f32.mrf.mxu0
  %v587 = vadd.f32 %v96, %v586
  %v588 = vpop.f32.mrf.mxu0
  %v589 = vadd.f32 %v92, %v588
  %v590 = vpop.f32.mrf.mxu0
  %v591 = vadd.f32 %v96, %v590
  %592 = vmatprep.mubr.bf16.mxu0 0
  %593 = vmatmul.mubr.bf16.gmra.mxu0 %v166
  %v594 = vpop.f32.mrf.mxu0
  %v595 = vadd.f32 %v92, %v594
  %v596 = vpop.f32.mrf.mxu0
  %v597 = vadd.f32 %v96, %v596
  %v598 = vpop.f32.mrf.mxu0
  %v599 = vadd.f32 %v92, %v598
  %v600 = vpop.f32.mrf.mxu0
  %v601 = vadd.f32 %v96, %v600
  %602 = vmatprep.mubr.bf16.mxu0 0
  %603 = vmatmul.mubr.bf16.gmra.mxu0 %v167
  %v604 = vpop.f32.mrf.mxu0
  %v605 = vadd.f32 %v92, %v604
  %v606 = vpop.f32.mrf.mxu0
  %v607 = vadd.f32 %v96, %v606
  %v608 = vpop.f32.mrf.mxu0
  %v609 = vadd.f32 %v92, %v608
  %v610 = vpop.f32.mrf.mxu0
  %v611 = vadd.f32 %v96, %v610
  %612 = vmatprep.mubr.bf16.mxu0 0
  %613 = vmatmul.mubr.bf16.gmra.mxu0 %v168
  %v614 = vpop.f32.mrf.mxu0
  %v615 = vadd.f32 %v92, %v614
  %v616 = vpop.f32.mrf.mxu0
  %v617 = vadd.f32 %v96, %v616
  %v618 = vpop.f32.mrf.mxu0
  %v619 = vadd.f32 %v92, %v618
  %v620 = vpop.f32.mrf.mxu0
  %v621 = vadd.f32 %v96, %v620
  %622 = vmatprep.mubr.bf16.mxu0 0
  %623 = vmatmul.mubr.bf16.gmra.mxu0 %v169
  %v624 = vpop.f32.mrf.mxu0
  %v625 = vadd.f32 %v92, %v624
  %v626 = vpop.f32.mrf.mxu0
  %v627 = vadd.f32 %v96, %v626
  %v628 = vpop.f32.mrf.mxu0
  %v629 = vadd.f32 %v92, %v628
  %v630 = vpop.f32.mrf.mxu0
  %v631 = vadd.f32 %v96, %v630
  %632 = vmatprep.mubr.bf16.mxu0 0
  %633 = vmatmul.mubr.bf16.gmra.mxu0 %v170
  %v634 = vpop.f32.mrf.mxu0
  %v635 = vadd.f32 %v92, %v634
  %v636 = vpop.f32.mrf.mxu0
  %v637 = vadd.f32 %v96, %v636
  %v638 = vpop.f32.mrf.mxu0
  %v639 = vadd.f32 %v92, %v638
  %v640 = vpop.f32.mrf.mxu0
  %v641 = vadd.f32 %v96, %v640
  %642 = vmatprep.mubr.bf16.mxu0 0
  %643 = vmatmul.mubr.bf16.gmra.mxu0 %v171
  %v644 = vpop.f32.mrf.mxu0
  %v645 = vadd.f32 %v92, %v644
  %v646 = vpop.f32.mrf.mxu0
  %v647 = vadd.f32 %v96, %v646
  %v648 = vpop.f32.mrf.mxu0
  %v649 = vadd.f32 %v92, %v648
  %v650 = vpop.f32.mrf.mxu0
  %v651 = vadd.f32 %v96, %v650
  %652 = vmatprep.mubr.bf16.mxu0 0
  %653 = vmatmul.mubr.bf16.gmra.mxu0 %v172
  %v654 = vpop.f32.mrf.mxu0
  %v655 = vadd.f32 %v92, %v654
  %v656 = vpop.f32.mrf.mxu0
  %v657 = vadd.f32 %v96, %v656
  %v658 = vpop.f32.mrf.mxu0
  %v659 = vadd.f32 %v92, %v658
  %v660 = vpop.f32.mrf.mxu0
  %v661 = vadd.f32 %v96, %v660
  %662 = vmatprep.mubr.bf16.mxu0 0
  %663 = vmatmul.mubr.bf16.gmra.mxu0 %v173
  %v664 = vpop.f32.mrf.mxu0
  %v665 = vadd.f32 %v92, %v664
  %v666 = vpop.f32.mrf.mxu0
  %v667 = vadd.f32 %v96, %v666
  %v668 = vpop.f32.mrf.mxu0
  %v669 = vadd.f32 %v92, %v668
  %v670 = vpop.f32.mrf.mxu0
  %v671 = vadd.f32 %v96, %v670
  %672 = vmatprep.mubr.bf16.mxu0 0
  %673 = vmatmul.mubr.bf16.gmra.mxu0 %v174
  %v674 = vpop.f32.mrf.mxu0
  %v675 = vadd.f32 %v92, %v674
  %v676 = vpop.f32.mrf.mxu0
  %v677 = vadd.f32 %v96, %v676
  %v678 = vpop.f32.mrf.mxu0
  %v679 = vadd.f32 %v92, %v678
  %v680 = vpop.f32.mrf.mxu0
  %v681 = vadd.f32 %v96, %v680
  %682 = vmatprep.mubr.bf16.mxu0 0
  %683 = vmatmul.mubr.bf16.gmra.mxu0 %v175
  %v684 = vpop.f32.mrf.mxu0
  %v685 = vadd.f32 %v92, %v684
  %v686 = vpop.f32.mrf.mxu0
  %v687 = vadd.f32 %v96, %v686
  %v688 = vpop.f32.mrf.mxu0
  %v689 = vadd.f32 %v92, %v688
  %v690 = vpop.f32.mrf.mxu0
  %v691 = vadd.f32 %v96, %v690
  %692 = vmatprep.mubr.bf16.mxu0 0
  %693 = vmatmul.mubr.bf16.gmra.mxu0 %v176
  %v694 = vpop.f32.mrf.mxu0
  %v695 = vadd.f32 %v92, %v694
  %v696 = vpop.f32.mrf.mxu0
  %v697 = vadd.f32 %v96, %v696
  %v698 = vpop.f32.mrf.mxu0
  %v699 = vadd.f32 %v92, %v698
  %v700 = vpop.f32.mrf.mxu0
  %v701 = vadd.f32 %v96, %v700
  %702 = vmatprep.mubr.bf16.mxu0 0
  %703 = vmatmul.mubr.bf16.gmra.mxu0 %v177
  %v704 = vpop.f32.mrf.mxu0
  %v705 = vadd.f32 %v92, %v704
  %v706 = vpop.f32.mrf.mxu0
  %v707 = vadd.f32 %v96, %v706
  %v708 = vpop.f32.mrf.mxu0
  %v709 = vadd.f32 %v92, %v708
  %v710 = vpop.f32.mrf.mxu0
  %v711 = vadd.f32 %v96, %v710
  %712 = vmatprep.mubr.bf16.mxu0 0
  %713 = vmatmul.mubr.bf16.gmra.mxu0 %v178
  %v714 = vpop.f32.mrf.mxu0
  %v715 = vadd.f32 %v92, %v714
  %v716 = vpop.f32.mrf.mxu0
  %v717 = vadd.f32 %v96, %v716
  %v718 = vpop.f32.mrf.mxu0
  %v719 = vadd.f32 %v92, %v718
  %v720 = vpop.f32.mrf.mxu0
  %v721 = vadd.f32 %v96, %v720
  %722 = vmatprep.mubr.bf16.mxu0 0
  %723 = vmatmul.mubr.bf16.gmra.mxu0 %v179
  %v724 = vpop.f32.mrf.mxu0
  %v725 = vadd.f32 %v92, %v724
  %v726 = vpop.f32.mrf.mxu0
  %v727 = vadd.f32 %v96, %v726
  %v728 = vpop.f32.mrf.mxu0
  %v729 = vadd.f32 %v92, %v728
  %v730 = vpop.f32.mrf.mxu0
  %v731 = vadd.f32 %v96, %v730
  %732 = vmatprep.mubr.bf16.mxu0 0
  %733 = vmatmul.mubr.bf16.gmra.mxu0 %v180
  %v734 = vpop.f32.mrf.mxu0
  %v735 = vadd.f32 %v92, %v734
  %v736 = vpop.f32.mrf.mxu0
  %v737 = vadd.f32 %v96, %v736
  %v738 = vpop.f32.mrf.mxu0
  %v739 = vadd.f32 %v92, %v738
  %v740 = vpop.f32.mrf.mxu0
  %v741 = vadd.f32 %v96, %v740
  %742 = vdwg.mxu0
  %v743 = vpack.c.bf16 %v396, %v392
  %v744 = vpack.c.bf16 %v398, %v394
  %v745 = vpack.c.bf16 %v589, %v585
  %v746 = vpack.c.bf16 %v591, %v587
  %v747 = vpack.c.bf16 %v406, %v402
  %v748 = vpack.c.bf16 %v408, %v404
  %v749 = vpack.c.bf16 %v599, %v595
  %v750 = vpack.c.bf16 %v601, %v597
  %v751 = vpack.c.bf16 %v416, %v412
  %v752 = vpack.c.bf16 %v418, %v414
  %v753 = vpack.c.bf16 %v609, %v605
  %v754 = vpack.c.bf16 %v611, %v607
  %v755 = vpack.c.bf16 %v426, %v422
  %v756 = vpack.c.bf16 %v428, %v424
  %v757 = vpack.c.bf16 %v619, %v615
  %v758 = vpack.c.bf16 %v621, %v617
  %v759 = vpack.c.bf16 %v436, %v432
  %v760 = vpack.c.bf16 %v438, %v434
  %v761 = vpack.c.bf16 %v629, %v625
  %v762 = vpack.c.bf16 %v631, %v627
  %v763 = vpack.c.bf16 %v446, %v442
  %v764 = vpack.c.bf16 %v448, %v444
  %v765 = vpack.c.bf16 %v639, %v635
  %v766 = vpack.c.bf16 %v641, %v637
  %v767 = vpack.c.bf16 %v456, %v452
  %v768 = vpack.c.bf16 %v458, %v454
  %v769 = vpack.c.bf16 %v649, %v645
  %v770 = vpack.c.bf16 %v651, %v647
  %v771 = vpack.c.bf16 %v466, %v462
  %v772 = vpack.c.bf16 %v468, %v464
  %v773 = vpack.c.bf16 %v659, %v655
  %v774 = vpack.c.bf16 %v661, %v657
  %v775 = vpack.c.bf16 %v476, %v472
  %v776 = vpack.c.bf16 %v478, %v474
  %v777 = vpack.c.bf16 %v669, %v665
  %v778 = vpack.c.bf16 %v671, %v667
  %v779 = vpack.c.bf16 %v486, %v482
  %v780 = vpack.c.bf16 %v488, %v484
  %v781 = vpack.c.bf16 %v679, %v675
  %v782 = vpack.c.bf16 %v681, %v677
  %v783 = vpack.c.bf16 %v496, %v492
  %v784 = vpack.c.bf16 %v498, %v494
  %v785 = vpack.c.bf16 %v689, %v685
  %v786 = vpack.c.bf16 %v691, %v687
  %v787 = vpack.c.bf16 %v506, %v502
  %v788 = vpack.c.bf16 %v508, %v504
  %v789 = vpack.c.bf16 %v699, %v695
  %v790 = vpack.c.bf16 %v701, %v697
  %v791 = vpack.c.bf16 %v516, %v512
  %v792 = vpack.c.bf16 %v518, %v514
  %v793 = vpack.c.bf16 %v709, %v705
  %v794 = vpack.c.bf16 %v711, %v707
  %v795 = vpack.c.bf16 %v526, %v522
  %v796 = vpack.c.bf16 %v528, %v524
  %v797 = vpack.c.bf16 %v719, %v715
  %v798 = vpack.c.bf16 %v721, %v717
  %v799 = vpack.c.bf16 %v536, %v532
  %v800 = vpack.c.bf16 %v538, %v534
  %v801 = vpack.c.bf16 %v729, %v725
  %v802 = vpack.c.bf16 %v731, %v727
  %v803 = vpack.c.bf16 %v546, %v542
  %v804 = vpack.c.bf16 %v548, %v544
  %v805 = vpack.c.bf16 %v739, %v735
  %v806 = vpack.c.bf16 %v741, %v737
  %v871 = vunpack.c.l.b16 %v743
  %v872 = vunpack.c.l.b16 %v744
  %v873 = vunpack.c.l.b16 %v745
  %v874 = vunpack.c.l.b16 %v746
  %v875 = vunpack.c.h.b16 %v743
  %v876 = vunpack.c.h.b16 %v744
  %v877 = vunpack.c.h.b16 %v745
  %v878 = vunpack.c.h.b16 %v746
  %v879 = vunpack.c.l.b16 %v747
  %v880 = vunpack.c.l.b16 %v748
  %v881 = vunpack.c.l.b16 %v749
  %v882 = vunpack.c.l.b16 %v750
  %v883 = vunpack.c.h.b16 %v747
  %v884 = vunpack.c.h.b16 %v748
  %v885 = vunpack.c.h.b16 %v749
  %v886 = vunpack.c.h.b16 %v750
  %v887 = vunpack.c.l.b16 %v751
  %v888 = vunpack.c.l.b16 %v752
  %v889 = vunpack.c.l.b16 %v753
  %v890 = vunpack.c.l.b16 %v754
  %v891 = vunpack.c.h.b16 %v751
  %v892 = vunpack.c.h.b16 %v752
  %v893 = vunpack.c.h.b16 %v753
  %v894 = vunpack.c.h.b16 %v754
  %v895 = vunpack.c.l.b16 %v755
  %v896 = vunpack.c.l.b16 %v756
  %v897 = vunpack.c.l.b16 %v757
  %v898 = vunpack.c.l.b16 %v758
  %v899 = vunpack.c.h.b16 %v755
  %v900 = vunpack.c.h.b16 %v756
  %v901 = vunpack.c.h.b16 %v757
  %v902 = vunpack.c.h.b16 %v758
  %v903 = vunpack.c.l.b16 %v759
  %v904 = vunpack.c.l.b16 %v760
  %v905 = vunpack.c.l.b16 %v761
  %v906 = vunpack.c.l.b16 %v762
  %v907 = vunpack.c.h.b16 %v759
  %v908 = vunpack.c.h.b16 %v760
  %v909 = vunpack.c.h.b16 %v761
  %v910 = vunpack.c.h.b16 %v762
  %v911 = vunpack.c.l.b16 %v763
  %v912 = vunpack.c.l.b16 %v764
  %v913 = vunpack.c.l.b16 %v765
  %v914 = vunpack.c.l.b16 %v766
  %v915 = vunpack.c.h.b16 %v763
  %v916 = vunpack.c.h.b16 %v764
  %v917 = vunpack.c.h.b16 %v765
  %v918 = vunpack.c.h.b16 %v766
  %v919 = vunpack.c.l.b16 %v767
  %v920 = vunpack.c.l.b16 %v768
  %v921 = vunpack.c.l.b16 %v769
  %v922 = vunpack.c.l.b16 %v770
  %v923 = vunpack.c.h.b16 %v767
  %v924 = vunpack.c.h.b16 %v768
  %v925 = vunpack.c.h.b16 %v769
  %v926 = vunpack.c.h.b16 %v770
  %v927 = vunpack.c.l.b16 %v771
  %v928 = vunpack.c.l.b16 %v772
  %v929 = vunpack.c.l.b16 %v773
  %v930 = vunpack.c.l.b16 %v774
  %v931 = vunpack.c.h.b16 %v771
  %v932 = vunpack.c.h.b16 %v772
  %v933 = vunpack.c.h.b16 %v773
  %v934 = vunpack.c.h.b16 %v774
  %v935 = vunpack.c.l.b16 %v775
  %v936 = vunpack.c.l.b16 %v776
  %v937 = vunpack.c.l.b16 %v777
  %v938 = vunpack.c.l.b16 %v778
  %v939 = vunpack.c.h.b16 %v775
  %v940 = vunpack.c.h.b16 %v776
  %v941 = vunpack.c.h.b16 %v777
  %v942 = vunpack.c.h.b16 %v778
  %v943 = vunpack.c.l.b16 %v779
  %v944 = vunpack.c.l.b16 %v780
  %v945 = vunpack.c.l.b16 %v781
  %v946 = vunpack.c.l.b16 %v782
  %v947 = vunpack.c.h.b16 %v779
  %v948 = vunpack.c.h.b16 %v780
  %v949 = vunpack.c.h.b16 %v781
  %v950 = vunpack.c.h.b16 %v782
  %v951 = vunpack.c.l.b16 %v783
  %v952 = vunpack.c.l.b16 %v784
  %v953 = vunpack.c.l.b16 %v785
  %v954 = vunpack.c.l.b16 %v786
  %v955 = vunpack.c.h.b16 %v783
  %v956 = vunpack.c.h.b16 %v784
  %v957 = vunpack.c.h.b16 %v785
  %v958 = vunpack.c.h.b16 %v786
  %v959 = vunpack.c.l.b16 %v787
  %v960 = vunpack.c.l.b16 %v788
  %v961 = vunpack.c.l.b16 %v789
  %v962 = vunpack.c.l.b16 %v790
  %v963 = vunpack.c.h.b16 %v787
  %v964 = vunpack.c.h.b16 %v788
  %v965 = vunpack.c.h.b16 %v789
  %v966 = vunpack.c.h.b16 %v790
  %v967 = vunpack.c.l.b16 %v791
  %v968 = vunpack.c.l.b16 %v792
  %v969 = vunpack.c.l.b16 %v793
  %v970 = vunpack.c.l.b16 %v794
  %v971 = vunpack.c.h.b16 %v791
  %v972 = vunpack.c.h.b16 %v792
  %v973 = vunpack.c.h.b16 %v793
  %v974 = vunpack.c.h.b16 %v794
  %v975 = vunpack.c.l.b16 %v795
  %v976 = vunpack.c.l.b16 %v796
  %v977 = vunpack.c.l.b16 %v797
  %v978 = vunpack.c.l.b16 %v798
  %v979 = vunpack.c.h.b16 %v795
  %v980 = vunpack.c.h.b16 %v796
  %v981 = vunpack.c.h.b16 %v797
  %v982 = vunpack.c.h.b16 %v798
  %v983 = vunpack.c.l.b16 %v799
  %v984 = vunpack.c.l.b16 %v800
  %v985 = vunpack.c.l.b16 %v801
  %v986 = vunpack.c.l.b16 %v802
  %v987 = vunpack.c.h.b16 %v799
  %v988 = vunpack.c.h.b16 %v800
  %v989 = vunpack.c.h.b16 %v801
  %v990 = vunpack.c.h.b16 %v802
  %v991 = vunpack.c.l.b16 %v803
  %v992 = vunpack.c.l.b16 %v804
  %v993 = vunpack.c.l.b16 %v805
  %v994 = vunpack.c.l.b16 %v806
  %v995 = vunpack.c.h.b16 %v803
  %v996 = vunpack.c.h.b16 %v804
  %v997 = vunpack.c.h.b16 %v805
  %v998 = vunpack.c.h.b16 %v806
  %v999 = vpack.c.b16 %v872, %v871
  %v1000 = vpack.c.b16 %v874, %v873
  %v1001 = vpack.c.b16 %v876, %v875
  %v1002 = vpack.c.b16 %v878, %v877
  %v1003 = vpack.c.b16 %v880, %v879
  %v1004 = vpack.c.b16 %v882, %v881
  %v1005 = vpack.c.b16 %v884, %v883
  %v1006 = vpack.c.b16 %v886, %v885
  %v1007 = vpack.c.b16 %v888, %v887
  %v1008 = vpack.c.b16 %v890, %v889
  %v1009 = vpack.c.b16 %v892, %v891
  %v1010 = vpack.c.b16 %v894, %v893
  %v1011 = vpack.c.b16 %v896, %v895
  %v1012 = vpack.c.b16 %v898, %v897
  %v1013 = vpack.c.b16 %v900, %v899
  %v1014 = vpack.c.b16 %v902, %v901
  %v1015 = vpack.c.b16 %v904, %v903
  %v1016 = vpack.c.b16 %v906, %v905
  %v1017 = vpack.c.b16 %v908, %v907
  %v1018 = vpack.c.b16 %v910, %v909
  %v1019 = vpack.c.b16 %v912, %v911
  %v1020 = vpack.c.b16 %v914, %v913
  %v1021 = vpack.c.b16 %v916, %v915
  %v1022 = vpack.c.b16 %v918, %v917
  %v1023 = vpack.c.b16 %v920, %v919
  %v1024 = vpack.c.b16 %v922, %v921
  %v1025 = vpack.c.b16 %v924, %v923
  %v1026 = vpack.c.b16 %v926, %v925
  %v1027 = vpack.c.b16 %v928, %v927
  %v1028 = vpack.c.b16 %v930, %v929
  %v1029 = vpack.c.b16 %v932, %v931
  %v1030 = vpack.c.b16 %v934, %v933
  %v1031 = vpack.c.b16 %v936, %v935
  %v1032 = vpack.c.b16 %v938, %v937
  %v1033 = vpack.c.b16 %v940, %v939
  %v1034 = vpack.c.b16 %v942, %v941
  %v1035 = vpack.c.b16 %v944, %v943
  %v1036 = vpack.c.b16 %v946, %v945
  %v1037 = vpack.c.b16 %v948, %v947
  %v1038 = vpack.c.b16 %v950, %v949
  %v1039 = vpack.c.b16 %v952, %v951
  %v1040 = vpack.c.b16 %v954, %v953
  %v1041 = vpack.c.b16 %v956, %v955
  %v1042 = vpack.c.b16 %v958, %v957
  %v1043 = vpack.c.b16 %v960, %v959
  %v1044 = vpack.c.b16 %v962, %v961
  %v1045 = vpack.c.b16 %v964, %v963
  %v1046 = vpack.c.b16 %v966, %v965
  %v1047 = vpack.c.b16 %v968, %v967
  %v1048 = vpack.c.b16 %v970, %v969
  %v1049 = vpack.c.b16 %v972, %v971
  %v1050 = vpack.c.b16 %v974, %v973
  %v1051 = vpack.c.b16 %v976, %v975
  %v1052 = vpack.c.b16 %v978, %v977
  %v1053 = vpack.c.b16 %v980, %v979
  %v1054 = vpack.c.b16 %v982, %v981
  %v1055 = vpack.c.b16 %v984, %v983
  %v1056 = vpack.c.b16 %v986, %v985
  %v1057 = vpack.c.b16 %v988, %v987
  %v1058 = vpack.c.b16 %v990, %v989
  %v1059 = vpack.c.b16 %v992, %v991
  %v1060 = vpack.c.b16 %v994, %v993
  %v1061 = vpack.c.b16 %v996, %v995
  %v1062 = vpack.c.b16 %v998, %v997
  %1127 = vst [vmem:[%s3] sm:$0xff] %v999
  %1128 = vst [vmem:[%s3 + $0x8] sm:$0xff] %v1000
  %1129 = vst [vmem:[%s3 + $0x10] sm:$0xff] %v1001
  %1130 = vst [vmem:[%s3 + $0x18] sm:$0xff] %v1002
  %1131 = vst [vmem:[%s3 + $0x20] sm:$0xff] %v1003
  %1132 = vst [vmem:[%s3 + $0x28] sm:$0xff] %v1004
  %1133 = vst [vmem:[%s3 + $0x30] sm:$0xff] %v1005
  %1134 = vst [vmem:[%s3 + $0x38] sm:$0xff] %v1006
  %1135 = vst [vmem:[%s3 + $0x40] sm:$0xff] %v1007
  %1136 = vst [vmem:[%s3 + $0x48] sm:$0xff] %v1008
  %1137 = vst [vmem:[%s3 + $0x50] sm:$0xff] %v1009
  %1138 = vst [vmem:[%s3 + $0x58] sm:$0xff] %v1010
  %1139 = vst [vmem:[%s3 + $0x60] sm:$0xff] %v1011
  %1140 = vst [vmem:[%s3 + $0x68] sm:$0xff] %v1012
  %1141 = vst [vmem:[%s3 + $0x70] sm:$0xff] %v1013
  %1142 = vst [vmem:[%s3 + $0x78] sm:$0xff] %v1014
  %1143 = vst [vmem:[%s3 + $0x80] sm:$0xff] %v1015
  %1144 = vst [vmem:[%s3 + $0x88] sm:$0xff] %v1016
  %1145 = vst [vmem:[%s3 + $0x90] sm:$0xff] %v1017
  %1146 = vst [vmem:[%s3 + $0x98] sm:$0xff] %v1018
  %1147 = vst [vmem:[%s3 + $0xa0] sm:$0xff] %v1019
  %1148 = vst [vmem:[%s3 + $0xa8] sm:$0xff] %v1020
  %1149 = vst [vmem:[%s3 + $0xb0] sm:$0xff] %v1021
  %1150 = vst [vmem:[%s3 + $0xb8] sm:$0xff] %v1022
  %1151 = vst [vmem:[%s3 + $0xc0] sm:$0xff] %v1023
  %1152 = vst [vmem:[%s3 + $0xc8] sm:$0xff] %v1024
  %1153 = vst [vmem:[%s3 + $0xd0] sm:$0xff] %v1025
  %1154 = vst [vmem:[%s3 + $0xd8] sm:$0xff] %v1026
  %1155 = vst [vmem:[%s3 + $0xe0] sm:$0xff] %v1027
  %1156 = vst [vmem:[%s3 + $0xe8] sm:$0xff] %v1028
  %1157 = vst [vmem:[%s3 + $0xf0] sm:$0xff] %v1029
  %1158 = vst [vmem:[%s3 + $0xf8] sm:$0xff] %v1030
  %1159 = vst [vmem:[%s3 + $0x100] sm:$0xff] %v1031
  %1160 = vst [vmem:[%s3 + $0x108] sm:$0xff] %v1032
  %1161 = vst [vmem:[%s3 + $0x110] sm:$0xff] %v1033
  %1162 = vst [vmem:[%s3 + $0x118] sm:$0xff] %v1034
  %1163 = vst [vmem:[%s3 + $0x120] sm:$0xff] %v1035
  %1164 = vst [vmem:[%s3 + $0x128] sm:$0xff] %v1036
  %1165 = vst [vmem:[%s3 + $0x130] sm:$0xff] %v1037
  %1166 = vst [vmem:[%s3 + $0x138] sm:$0xff] %v1038
  %1167 = vst [vmem:[%s3 + $0x140] sm:$0xff] %v1039
  %1168 = vst [vmem:[%s3 + $0x148] sm:$0xff] %v1040
  %1169 = vst [vmem:[%s3 + $0x150] sm:$0xff] %v1041
  %1170 = vst [vmem:[%s3 + $0x158] sm:$0xff] %v1042
  %1171 = vst [vmem:[%s3 + $0x160] sm:$0xff] %v1043
  %1172 = vst [vmem:[%s3 + $0x168] sm:$0xff] %v1044
  %1173 = vst [vmem:[%s3 + $0x170] sm:$0xff] %v1045
  %1174 = vst [vmem:[%s3 + $0x178] sm:$0xff] %v1046
  %1175 = vst [vmem:[%s3 + $0x180] sm:$0xff] %v1047
  %1176 = vst [vmem:[%s3 + $0x188] sm:$0xff] %v1048
  %1177 = vst [vmem:[%s3 + $0x190] sm:$0xff] %v1049
  %1178 = vst [vmem:[%s3 + $0x198] sm:$0xff] %v1050
  %1179 = vst [vmem:[%s3 + $0x1a0] sm:$0xff] %v1051
  %1180 = vst [vmem:[%s3 + $0x1a8] sm:$0xff] %v1052
  %1181 = vst [vmem:[%s3 + $0x1b0] sm:$0xff] %v1053
  %1182 = vst [vmem:[%s3 + $0x1b8] sm:$0xff] %v1054
  %1183 = vst [vmem:[%s3 + $0x1c0] sm:$0xff] %v1055
  %1184 = vst [vmem:[%s3 + $0x1c8] sm:$0xff] %v1056
  %1185 = vst [vmem:[%s3 + $0x1d0] sm:$0xff] %v1057
  %1186 = vst [vmem:[%s3 + $0x1d8] sm:$0xff] %v1058
  %1187 = vst [vmem:[%s3 + $0x1e0] sm:$0xff] %v1059
  %1188 = vst [vmem:[%s3 + $0x1e8] sm:$0xff] %v1060
  %1189 = vst [vmem:[%s3 + $0x1f0] sm:$0xff] %v1061
  %1190 = vst [vmem:[%s3 + $0x1f8] sm:$0xff] %v1062
  // Predicated region
  $region14: #{_lambda_.3} parent=0 // pred_check
    _
  $region15: #{_lambda_.3} parent=0 // pred_check_branch
    %1192 = sbr.rel (0) target = $region17
  $region16: #{_lambda_.3} parent=0 // pred_region
    _
  $region17: #{_lambda_.3} parent=0 // pred_fallthru
    _
  // Predicated region
  $region18: #{_lambda_.3} parent=0 // pred_check
    _
  $region19: #{_lambda_.3} parent=0 // pred_check_branch
    %1194 = sbr.rel (0) target = $region21
  $region20: #{_lambda_.3} parent=0 // pred_region
    _
  $region21: #{_lambda_.3} parent=0 // pred_fallthru
    _

// kernel: _lambda_.4
$region0: #{_lambda_.4}
  #allocation0 [shape = 'u32[]', space=smem, size = 0x4, offset = 0x4, fixed_abs, tag = 'smem constant byte address 0x4 - core index']
  #allocation1 [shape = 'u32[144,128]{1,0:T(1,128)}', space=vmem, size = 0x12000, scoped, tag = 'internal scratch']
  #allocation2 [shape = 'f32[8,128]{1,0:T(8,128)}', space=vmem, size = 0x1000, scoped, tag = 'scratch operand']
  #allocation3 [shape = 'f32[8,128]{1,0:T(8,128)}', space=vmem, size = 0x1000, scoped, tag = 'scratch operand']
  %s0 = inlined_call_operand.vmem [shape: bf16[32,8,512], index: 0, kind: input, shape index: {}]
  %s1 = inlined_call_operand.vmem [shape: bf16[128,512], index: 1, kind: input, shape index: {}]
  %s2 = inlined_call_operand.vmem [shape: f32[8,128], index: 2, kind: input, shape index: {}, may-alias: {2,5}]
  %s3 = inlined_call_operand.vmem [shape: f32[8,128], index: 3, kind: input, shape index: {}, may-alias: {3,6}]
  %s4 = inlined_call_operand.vmem [shape: bf16[8,32,128], index: 4, kind: output, shape index: {0}]
  %s5 = inlined_call_operand.vmem [shape: f32[8,128], index: 5, kind: output, shape index: {1}, may-alias: {2,5}]
  %s6 = inlined_call_operand.vmem [shape: f32[8,128], index: 6, kind: output, shape index: {2}, may-alias: {3,6}]
  %7 = xla_tuple %s4, %s5, %s6
  %s8 = sld [smem:[#allocation0]]
  $region46: #{_lambda_.4} parent=0
    _
  %s10 = ssub.s32 1, %s8
  %s11 = scalar_select 0, %s10, %s8
  // Predicated region
  $region2: #{_lambda_.4} parent=0 // pred_check
    _
  $region3: #{_lambda_.4} parent=0 // pred_check_branch
    %13 = sbr.rel (0) target = $region5
  $region4: #{_lambda_.4} parent=0 // pred_region
    _
  $region5: #{_lambda_.4} parent=0 // pred_fallthru
    _
  // Predicated region
  $region6: #{_lambda_.4} parent=0 // pred_check
    _
  $region7: #{_lambda_.4} parent=0 // pred_check_branch
    %15 = sbr.rel (0) target = $region9
  $region8: #{_lambda_.4} parent=0 // pred_region
    _
  $region9: #{_lambda_.4} parent=0 // pred_fallthru
    _
  // Predicated region
  $region10: #{_lambda_.4} parent=0 // pred_check
    _
  $region11: #{_lambda_.4} parent=0 // pred_check_branch
    %17 = sbr.rel (0) target = $region13
  $region12: #{_lambda_.4} parent=0 // pred_region
    _
  $region13: #{_lambda_.4} parent=0 // pred_fallthru
    _
  // Predicated region
  $region14: #{_lambda_.4} parent=0 // pred_check
    _
  $region15: #{_lambda_.4} parent=0 // pred_check_branch
    %19 = sbr.rel (0) target = $region17
  $region16: #{_lambda_.4} parent=0 // pred_region
    _
  $region17: #{_lambda_.4} parent=0 // pred_fallthru
    _
  %p21 = scmp.eq.s32.totalorder 0, 0
  // Predicated region
  $region18: #{_lambda_.4} parent=0 // pred_check
    %p22 = pneg %p21
  $region19: #{_lambda_.4} parent=0 // pred_check_branch
    %24 = sbr.rel (%p22) target = $region21
  $region20: #{_lambda_.4} parent=0 // pred_region
    %v25 = vld [vmem:[%s2] sm:$0xff]
    %26 = vst [vmem:[#allocation2] sm:$0xff] %v25
    %v27 = vld [vmem:[%s3] sm:$0xff]
    %28 = vst [vmem:[#allocation3] sm:$0xff] %v27
  $region21: #{_lambda_.4} parent=0 // pred_fallthru
    _
  %v29 = vld [vmem:[#allocation2] sm:$0xff]
  %v30 = vld [vmem:[#allocation3] sm:$0xff]
  %v31 = vld [vmem:[%s0] sm:$0xff]
  %v32 = vld [vmem:[%s0 + $0x8] sm:$0xff]
  %v33 = vunpack.c.l.bf16 %v31
  %v34 = vunpack.c.h.bf16 %v31
  %v35 = vunpack.c.l.bf16 %v32
  %v36 = vunpack.c.h.bf16 %v32
  %v37 = vpack.c.bf16 %v29, %v29
  %v38 = vld [vmem:[%s1] sm:$0xff]
  %v39 = vld [vmem:[%s1 + $0x8] sm:$0xff]
  %v40 = vld [vmem:[%s1 + $0x10] sm:$0xff]
  %v41 = vld [vmem:[%s1 + $0x18] sm:$0xff]
  %v42 = vld [vmem:[%s1 + $0x20] sm:$0xff]
  %v43 = vld [vmem:[%s1 + $0x28] sm:$0xff]
  %v44 = vld [vmem:[%s1 + $0x30] sm:$0xff]
  %v45 = vld [vmem:[%s1 + $0x38] sm:$0xff]
  %v46 = vld [vmem:[%s1 + $0x40] sm:$0xff]
  %v47 = vld [vmem:[%s1 + $0x48] sm:$0xff]
  %v48 = vld [vmem:[%s1 + $0x50] sm:$0xff]
  %v49 = vld [vmem:[%s1 + $0x58] sm:$0xff]
  %v50 = vld [vmem:[%s1 + $0x60] sm:$0xff]
  %v51 = vld [vmem:[%s1 + $0x68] sm:$0xff]
  %v52 = vld [vmem:[%s1 + $0x70] sm:$0xff]
  %v53 = vld [vmem:[%s1 + $0x78] sm:$0xff]
  %v54 = vld [vmem:[%s1 + $0x80] sm:$0xff]
  %v55 = vld [vmem:[%s1 + $0x88] sm:$0xff]
  %v56 = vld [vmem:[%s1 + $0x90] sm:$0xff]
  %v57 = vld [vmem:[%s1 + $0x98] sm:$0xff]
  %v58 = vld [vmem:[%s1 + $0xa0] sm:$0xff]
  %v59 = vld [vmem:[%s1 + $0xa8] sm:$0xff]
  %v60 = vld [vmem:[%s1 + $0xb0] sm:$0xff]
  %v61 = vld [vmem:[%s1 + $0xb8] sm:$0xff]
  %v62 = vld [vmem:[%s1 + $0xc0] sm:$0xff]
  %v63 = vld [vmem:[%s1 + $0xc8] sm:$0xff]
  %v64 = vld [vmem:[%s1 + $0xd0] sm:$0xff]
  %v65 = vld [vmem:[%s1 + $0xd8] sm:$0xff]
  %v66 = vld [vmem:[%s1 + $0xe0] sm:$0xff]
  %v67 = vld [vmem:[%s1 + $0xe8] sm:$0xff]
  %v68 = vld [vmem:[%s1 + $0xf0] sm:$0xff]
  %v69 = vld [vmem:[%s1 + $0xf8] sm:$0xff]
  %v102 = vunpack.c.l.b16 %v38
  %v103 = vunpack.c.h.b16 %v38
  %v104 = vunpack.c.l.b16 %v39
  %v105 = vunpack.c.h.b16 %v39
  %v106 = vunpack.c.l.b16 %v40
  %v107 = vunpack.c.h.b16 %v40
  %v108 = vunpack.c.l.b16 %v41
  %v109 = vunpack.c.h.b16 %v41
  %v110 = vunpack.c.l.b16 %v42
  %v111 = vunpack.c.h.b16 %v42
  %v112 = vunpack.c.l.b16 %v43
  %v113 = vunpack.c.h.b16 %v43
  %v114 = vunpack.c.l.b16 %v44
  %v115 = vunpack.c.h.b16 %v44
  %v116 = vunpack.c.l.b16 %v45
  %v117 = vunpack.c.h.b16 %v45
  %v118 = vunpack.c.l.b16 %v46
  %v119 = vunpack.c.h.b16 %v46
  %v120 = vunpack.c.l.b16 %v47
  %v121 = vunpack.c.h.b16 %v47
  %v122 = vunpack.c.l.b16 %v48
  %v123 = vunpack.c.h.b16 %v48
  %v124 = vunpack.c.l.b16 %v49
  %v125 = vunpack.c.h.b16 %v49
  %v126 = vunpack.c.l.b16 %v50
  %v127 = vunpack.c.h.b16 %v50
  %v128 = vunpack.c.l.b16 %v51
  %v129 = vunpack.c.h.b16 %v51
  %v130 = vunpack.c.l.b16 %v52
  %v131 = vunpack.c.h.b16 %v52
  %v132 = vunpack.c.l.b16 %v53
  %v133 = vunpack.c.h.b16 %v53
  %v134 = vunpack.c.l.b16 %v54
  %v135 = vunpack.c.h.b16 %v54
  %v136 = vunpack.c.l.b16 %v55
  %v137 = vunpack.c.h.b16 %v55
  %v138 = vunpack.c.l.b16 %v56
  %v139 = vunpack.c.h.b16 %v56
  %v140 = vunpack.c.l.b16 %v57
  %v141 = vunpack.c.h.b16 %v57
  %v142 = vunpack.c.l.b16 %v58
  %v143 = vunpack.c.h.b16 %v58
  %v144 = vunpack.c.l.b16 %v59
  %v145 = vunpack.c.h.b16 %v59
  %v146 = vunpack.c.l.b16 %v60
  %v147 = vunpack.c.h.b16 %v60
  %v148 = vunpack.c.l.b16 %v61
  %v149 = vunpack.c.h.b16 %v61
  %v150 = vunpack.c.l.b16 %v62
  %v151 = vunpack.c.h.b16 %v62
  %v152 = vunpack.c.l.b16 %v63
  %v153 = vunpack.c.h.b16 %v63
  %v154 = vunpack.c.l.b16 %v64
  %v155 = vunpack.c.h.b16 %v64
  %v156 = vunpack.c.l.b16 %v65
  %v157 = vunpack.c.h.b16 %v65
  %v158 = vunpack.c.l.b16 %v66
  %v159 = vunpack.c.h.b16 %v66
  %v160 = vunpack.c.l.b16 %v67
  %v161 = vunpack.c.h.b16 %v67
  %v162 = vunpack.c.l.b16 %v68
  %v163 = vunpack.c.h.b16 %v68
  %v164 = vunpack.c.l.b16 %v69
  %v165 = vunpack.c.h.b16 %v69
  %v166 = vpack.c.b16 %v106, %v102
  %v167 = vpack.c.b16 %v107, %v103
  %v168 = vpack.c.b16 %v108, %v104
  %v169 = vpack.c.b16 %v109, %v105
  %v170 = vpack.c.b16 %v114, %v110
  %v171 = vpack.c.b16 %v115, %v111
  %v172 = vpack.c.b16 %v116, %v112
  %v173 = vpack.c.b16 %v117, %v113
  %v174 = vpack.c.b16 %v122, %v118
  %v175 = vpack.c.b16 %v123, %v119
  %v176 = vpack.c.b16 %v124, %v120
  %v177 = vpack.c.b16 %v125, %v121
  %v178 = vpack.c.b16 %v130, %v126
  %v179 = vpack.c.b16 %v131, %v127
  %v180 = vpack.c.b16 %v132, %v128
  %v181 = vpack.c.b16 %v133, %v129
  %v182 = vpack.c.b16 %v138, %v134
  %v183 = vpack.c.b16 %v139, %v135
  %v184 = vpack.c.b16 %v140, %v136
  %v185 = vpack.c.b16 %v141, %v137
  %v186 = vpack.c.b16 %v146, %v142
  %v187 = vpack.c.b16 %v147, %v143
  %v188 = vpack.c.b16 %v148, %v144
  %v189 = vpack.c.b16 %v149, %v145
  %v190 = vpack.c.b16 %v154, %v150
  %v191 = vpack.c.b16 %v155, %v151
  %v192 = vpack.c.b16 %v156, %v152
  %v193 = vpack.c.b16 %v157, %v153
  %v194 = vpack.c.b16 %v162, %v158
  %v195 = vpack.c.b16 %v163, %v159
  %v196 = vpack.c.b16 %v164, %v160
  %v197 = vpack.c.b16 %v165, %v161
  %230 = vmatprep.subr.bf16.mxu0 %v195
  %231 = vmatpush1.bf16.msra.mxu0 %v194
  %232 = vmatprep.subr.bf16.mxu0 %v191
  %233 = vmatpush1.bf16.msra.mxu0 %v190
  %234 = vmatprep.subr.bf16.mxu0 %v187
  %235 = vmatpush1.bf16.msra.mxu0 %v186
  %236 = vmatprep.subr.bf16.mxu0 %v183
  %237 = vmatpush1.bf16.msra.mxu0 %v182
  %238 = vmatprep.subr.bf16.mxu0 %v179
  %239 = vmatpush1.bf16.msra.mxu0 %v178
  %240 = vmatprep.subr.bf16.mxu0 %v175
  %241 = vmatpush1.bf16.msra.mxu0 %v174
  %242 = vmatprep.subr.bf16.mxu0 %v171
  %243 = vmatpush1.bf16.msra.mxu0 %v170
  %244 = vmatprep.subr.bf16.mxu0 %v167
  %245 = vmatpush1.bf16.msra.mxu0 %v166
  %246 = vmatprep.subr.bf16.mxu0 0
  %247 = vmatpush2.bf16.msra.mxu0 0
  %248 = vmatprep.subr.bf16.mxu0 0
  %249 = vmatpush2.bf16.msra.mxu0 0
  %250 = vmatprep.subr.bf16.mxu0 0
  %251 = vmatpush2.bf16.msra.mxu0 0
  %252 = vmatprep.subr.bf16.mxu0 0
  %253 = vmatpush2.bf16.msra.mxu0 0
  %254 = vmatprep.subr.bf16.mxu0 0
  %255 = vmatpush2.bf16.msra.mxu0 0
  %256 = vmatprep.subr.bf16.mxu0 0
  %257 = vmatpush2.bf16.msra.mxu0 0
  %258 = vmatprep.subr.bf16.mxu0 0
  %259 = vmatpush2.bf16.msra.mxu0 0
  %260 = vmatprep.subr.bf16.mxu0 0
  %261 = vmatpush2.bf16.msra.mxu0 0
  %262 = vmatprep.mubr.bf16.mxu0 0
  %263 = vmatmul.mubr.bf16.gmra.mxu0 %v37
  %v264 = vpop.f32.mrf.mxu0
  %v265 = vadd.f32 0.0, %v264
  %v266 = vpop.f32.mrf.mxu0
  %v267 = vadd.f32 0.0, %v266
  %v268 = vpop.f32.mrf.mxu0
  %v269 = vpop.f32.mrf.mxu0
  %270 = vdwg.mxu0
  %271 = vmatprep.subr.bf16.mxu0 %v197
  %272 = vmatpush1.bf16.msra.mxu0 %v196
  %273 = vmatprep.subr.bf16.mxu0 %v193
  %274 = vmatpush1.bf16.msra.mxu0 %v192
  %275 = vmatprep.subr.bf16.mxu0 %v189
  %276 = vmatpush1.bf16.msra.mxu0 %v188
  %277 = vmatprep.subr.bf16.mxu0 %v185
  %278 = vmatpush1.bf16.msra.mxu0 %v184
  %279 = vmatprep.subr.bf16.mxu0 %v181
  %280 = vmatpush1.bf16.msra.mxu0 %v180
  %281 = vmatprep.subr.bf16.mxu0 %v177
  %282 = vmatpush1.bf16.msra.mxu0 %v176
  %283 = vmatprep.subr.bf16.mxu0 %v173
  %284 = vmatpush1.bf16.msra.mxu0 %v172
  %285 = vmatprep.subr.bf16.mxu0 %v169
  %286 = vmatpush1.bf16.msra.mxu0 %v168
  %287 = vmatprep.subr.bf16.mxu0 0
  %288 = vmatpush2.bf16.msra.mxu0 0
  %289 = vmatprep.subr.bf16.mxu0 0
  %290 = vmatpush2.bf16.msra.mxu0 0
  %291 = vmatprep.subr.bf16.mxu0 0
  %292 = vmatpush2.bf16.msra.mxu0 0
  %293 = vmatprep.subr.bf16.mxu0 0
  %294 = vmatpush2.bf16.msra.mxu0 0
  %295 = vmatprep.subr.bf16.mxu0 0
  %296 = vmatpush2.bf16.msra.mxu0 0
  %297 = vmatprep.subr.bf16.mxu0 0
  %298 = vmatpush2.bf16.msra.mxu0 0
  %299 = vmatprep.subr.bf16.mxu0 0
  %300 = vmatpush2.bf16.msra.mxu0 0
  %301 = vmatprep.subr.bf16.mxu0 0
  %302 = vmatpush2.bf16.msra.mxu0 0
  %303 = vmatprep.mubr.bf16.mxu0 0
  %304 = vmatmul.mubr.bf16.gmra.mxu0 %v37
  %v305 = vpop.f32.mrf.mxu0
  %v306 = vadd.f32 0.0, %v305
  %v307 = vpop.f32.mrf.mxu0
  %v308 = vadd.f32 0.0, %v307
  %v309 = vpop.f32.mrf.mxu0
  %v310 = vpop.f32.mrf.mxu0
  %311 = vdwg.mxu0
  %v312 = vadd.f32 %v33, %v265
  %v313 = vadd.f32 %v34, %v267
  %v314 = vadd.f32 %v35, %v306
  %v315 = vadd.f32 %v36, %v308
  %v316 = vxor.u32 %v312, 2147483648
  %v317 = vmul.f32 %v316, 1.442695
  %v318 = vpow.pop %v317
  %v319 = vadd.f32 %v318, 1.0
  %v320 = vrcp.pop %v319
  %v321 = vmul.f32 1.0, %v320
  %v322 = vxor.u32 %v313, 2147483648
  %v323 = vmul.f32 %v322, 1.442695
  %v324 = vpow.pop %v323
  %v325 = vadd.f32 %v324, 1.0
  %v326 = vrcp.pop %v325
  %v327 = vmul.f32 1.0, %v326
  %v328 = vtanh.pop %v314
  %v329 = vxor.u32 %v315, 2147483648
  %v330 = vmul.f32 %v329, 1.442695
  %v331 = vpow.pop %v330
  %v332 = vadd.f32 %v331, 1.0
  %v333 = vrcp.pop %v332
  %v334 = vmul.f32 1.0, %v333
  %v335 = vmul.f32 %v327, %v30
  %v336 = vmul.f32 %v321, %v328
  %v337 = vadd.f32 %v335, %v336
  %v338 = vtanh.pop %v337
  %v339 = vmul.f32 %v334, %v338
  %s340 = scalar_lea.vmem %s0, 16
  %v341 = vld [vmem:[%s340] sm:$0xff]
  %v342 = vld [vmem:[%s340 + $0x8] sm:$0xff]
  %v343 = vunpack.c.l.bf16 %v341
  %v344 = vunpack.c.h.bf16 %v341
  %v345 = vunpack.c.l.bf16 %v342
  %v346 = vunpack.c.h.bf16 %v342
  %v347 = vpack.c.bf16 %v339, %v339
  %348 = vmatprep.subr.bf16.mxu0 %v195
  %349 = vmatpush1.bf16.msra.mxu0 %v194
  %350 = vmatprep.subr.bf16.mxu0 %v191
  %351 = vmatpush1.bf16.msra.mxu0 %v190
  %352 = vmatprep.subr.bf16.mxu0 %v187
  %353 = vmatpush1.bf16.msra.mxu0 %v186
  %354 = vmatprep.subr.bf16.mxu0 %v183
  %355 = vmatpush1.bf16.msra.mxu0 %v182
  %356 = vmatprep.subr.bf16.mxu0 %v179
  %357 = vmatpush1.bf16.msra.mxu0 %v178
  %358 = vmatprep.subr.bf16.mxu0 %v175
  %359 = vmatpush1.bf16.msra.mxu0 %v174
  %360 = vmatprep.subr.bf16.mxu0 %v171
  %361 = vmatpush1.bf16.msra.mxu0 %v170
  %362 = vmatprep.subr.bf16.mxu0 %v167
  %363 = vmatpush1.bf16.msra.mxu0 %v166
  %364 = vmatprep.subr.bf16.mxu0 0
  %365 = vmatpush2.bf16.msra.mxu0 0
  %366 = vmatprep.subr.bf16.mxu0 0
  %367 = vmatpush2.bf16.msra.mxu0 0
  %368 = vmatprep.subr.bf16.mxu0 0
  %369 = vmatpush2.bf16.msra.mxu0 0
  %370 = vmatprep.subr.bf16.mxu0 0
  %371 = vmatpush2.bf16.msra.mxu0 0
  %372 = vmatprep.subr.bf16.mxu0 0
  %373 = vmatpush2.bf16.msra.mxu0 0
  %374 = vmatprep.subr.bf16.mxu0 0
  %375 = vmatpush2.bf16.msra.mxu0 0
  %376 = vmatprep.subr.bf16.mxu0 0
  %377 = vmatpush2.bf16.msra.mxu0 0
  %378 = vmatprep.subr.bf16.mxu0 0
  %379 = vmatpush2.bf16.msra.mxu0 0
  %380 = vmatprep.mubr.bf16.mxu0 0
  %381 = vmatmul.mubr.bf16.gmra.mxu0 %v347
  %v382 = vpop.f32.mrf.mxu0
  %v383 = vadd.f32 0.0, %v382
  %v384 = vpop.f32.mrf.mxu0
  %v385 = vadd.f32 0.0, %v384
  %v386 = vpop.f32.mrf.mxu0
  %v387 = vpop.f32.mrf.mxu0
  %388 = vdwg.mxu0
  %389 = vmatprep.subr.bf16.mxu0 %v197
  %390 = vmatpush1.bf16.msra.mxu0 %v196
  %391 = vmatprep.subr.bf16.mxu0 %v193
  %392 = vmatpush1.bf16.msra.mxu0 %v192
  %393 = vmatprep.subr.bf16.mxu0 %v189
  %394 = vmatpush1.bf16.msra.mxu0 %v188
  %395 = vmatprep.subr.bf16.mxu0 %v185
  %396 = vmatpush1.bf16.msra.mxu0 %v184
  %397 = vmatprep.subr.bf16.mxu0 %v181
  %398 = vmatpush1.bf16.msra.mxu0 %v180
  %399 = vmatprep.subr.bf16.mxu0 %v177
  %400 = vmatpush1.bf16.msra.mxu0 %v176
  %401 = vmatprep.subr.bf16.mxu0 %v173
  %402 = vmatpush1.bf16.msra.mxu0 %v172
  %403 = vmatprep.subr.bf16.mxu0 %v169
  %404 = vmatpush1.bf16.msra.mxu0 %v168
  %405 = vmatprep.subr.bf16.mxu0 0
  %406 = vmatpush2.bf16.msra.mxu0 0
  %407 = vmatprep.subr.bf16.mxu0 0
  %408 = vmatpush2.bf16.msra.mxu0 0
  %409 = vmatprep.subr.bf16.mxu0 0
  %410 = vmatpush2.bf16.msra.mxu0 0
  %411 = vmatprep.subr.bf16.mxu0 0
  %412 = vmatpush2.bf16.msra.mxu0 0
  %413 = vmatprep.subr.bf16.mxu0 0
  %414 = vmatpush2.bf16.msra.mxu0 0
  %415 = vmatprep.subr.bf16.mxu0 0
  %416 = vmatpush2.bf16.msra.mxu0 0
  %417 = vmatprep.subr.bf16.mxu0 0
  %418 = vmatpush2.bf16.msra.mxu0 0
  %419 = vmatprep.subr.bf16.mxu0 0
  %420 = vmatpush2.bf16.msra.mxu0 0
  %421 = vmatprep.mubr.bf16.mxu0 0
  %422 = vmatmul.mubr.bf16.gmra.mxu0 %v347
  %v423 = vpop.f32.mrf.mxu0
  %v424 = vadd.f32 0.0, %v423
  %v425 = vpop.f32.mrf.mxu0
  %v426 = vadd.f32 0.0, %v425
  %v427 = vpop.f32.mrf.mxu0
  %v428 = vpop.f32.mrf.mxu0
  %429 = vdwg.mxu0
  %v430 = vadd.f32 %v343, %v383
  %v431 = vadd.f32 %v344, %v385
  %v432 = vadd.f32 %v345, %v424
  %v433 = vadd.f32 %v346, %v426
  %v434 = vxor.u32 %v430, 2147483648
  %v435 = vmul.f32 %v434, 1.442695
  %v436 = vpow.pop %v435
  %v437 = vadd.f32 %v436, 1.0
  %v438 = vrcp.pop %v437
  %v439 = vmul.f32 1.0, %v438
  %v440 = vxor.u32 %v431, 2147483648
  %v441 = vmul.f32 %v440, 1.442695
  %v442 = vpow.pop %v441
  %v443 = vadd.f32 %v442, 1.0
  %v444 = vrcp.pop %v443
  %v445 = vmul.f32 1.0, %v444
  %v446 = vtanh.pop %v432
  %v447 = vxor.u32 %v433, 2147483648
  %v448 = vmul.f32 %v447, 1.442695
  %v449 = vpow.pop %v448
  %v450 = vadd.f32 %v449, 1.0
  %v451 = vrcp.pop %v450
  %v452 = vmul.f32 1.0, %v451
  %v453 = vmul.f32 %v445, %v337
  %v454 = vmul.f32 %v439, %v446
  %v455 = vadd.f32 %v453, %v454
  %v456 = vtanh.pop %v455
  %v457 = vmul.f32 %v452, %v456
  %v459 = vcombine.high %v339, %v339
  %v461 = vunpack.c.l.s4 1966171168
  %v462 = vunpack.c.0.s8 %v461
  %v463 = vlaneseq
  %v464 = vshrl.u32 %v463, 7
  %v465 = vsub.s32 %v462, %v464
  %v466 = vrot.slane %v339, %v465
  %v468 = vunpack.c.l.s4 1966171168
  %v469 = vunpack.c.0.s8 %v468
  %v470 = vlaneseq
  %v471 = vshrl.u32 %v470, 7
  %v472 = vsub.s32 %v469, %v471
  %v473 = vrot.slane %v459, %v472
  %v474 = vcombine.high %v466, %v466
  %v475 = vcombine.high %v473, %v473
  %v477 = vunpack.c.l.s4 1966171168
  %v478 = vunpack.c.0.s8 %v477
  %v479 = vlaneseq
  %v480 = vshrl.u32 %v479, 7
  %v481 = vsub.s32 %v478, %v480
  %v482 = vrot.slane %v466, %v481
  %v484 = vunpack.c.l.s4 1966171168
  %v485 = vunpack.c.0.s8 %v484
  %v486 = vlaneseq
  %v487 = vshrl.u32 %v486, 7
  %v488 = vsub.s32 %v485, %v487
  %v489 = vrot.slane %v473, %v488
  %v491 = vunpack.c.l.s4 1966171168
  %v492 = vunpack.c.0.s8 %v491
  %v493 = vlaneseq
  %v494 = vshrl.u32 %v493, 7
  %v495 = vsub.s32 %v492, %v494
  %v496 = vrot.slane %v474, %v495
  %v498 = vunpack.c.l.s4 1966171168
  %v499 = vunpack.c.0.s8 %v498
  %v500 = vlaneseq
  %v501 = vshrl.u32 %v500, 7
  %v502 = vsub.s32 %v499, %v501
  %v503 = vrot.slane %v475, %v502
  %v504 = vcombine.high %v482, %v482
  %v505 = vcombine.high %v489, %v489
  %v506 = vcombine.high %v496, %v496
  %v507 = vcombine.high %v503, %v503
  %v517 = vcombine.high %v457, %v457
  %v519 = vunpack.c.l.s4 1966171168
  %v520 = vunpack.c.0.s8 %v519
  %v521 = vlaneseq
  %v522 = vshrl.u32 %v521, 7
  %v523 = vsub.s32 %v520, %v522
  %v524 = vrot.slane %v457, %v523
  %v526 = vunpack.c.l.s4 1966171168
  %v527 = vunpack.c.0.s8 %v526
  %v528 = vlaneseq
  %v529 = vshrl.u32 %v528, 7
  %v530 = vsub.s32 %v527, %v529
  %v531 = vrot.slane %v517, %v530
  %v532 = vcombine.high %v524, %v524
  %v533 = vcombine.high %v531, %v531
  %v535 = vunpack.c.l.s4 1966171168
  %v536 = vunpack.c.0.s8 %v535
  %v537 = vlaneseq
  %v538 = vshrl.u32 %v537, 7
  %v539 = vsub.s32 %v536, %v538
  %v540 = vrot.slane %v524, %v539
  %v542 = vunpack.c.l.s4 1966171168
  %v543 = vunpack.c.0.s8 %v542
  %v544 = vlaneseq
  %v545 = vshrl.u32 %v544, 7
  %v546 = vsub.s32 %v543, %v545
  %v547 = vrot.slane %v531, %v546
  %v549 = vunpack.c.l.s4 1966171168
  %v550 = vunpack.c.0.s8 %v549
  %v551 = vlaneseq
  %v552 = vshrl.u32 %v551, 7
  %v553 = vsub.s32 %v550, %v552
  %v554 = vrot.slane %v532, %v553
  %v556 = vunpack.c.l.s4 1966171168
  %v557 = vunpack.c.0.s8 %v556
  %v558 = vlaneseq
  %v559 = vshrl.u32 %v558, 7
  %v560 = vsub.s32 %v557, %v559
  %v561 = vrot.slane %v533, %v560
  %v562 = vcombine.high %v540, %v540
  %v563 = vcombine.high %v547, %v547
  %v564 = vcombine.high %v554, %v554
  %v565 = vcombine.high %v561, %v561
  %v566 = vlaneseq
  %v567 = vshrl.u32 %v566, 7
  %v568 = vsub.s32 0, %v567
  %v569 = vrot.slane %v540, %v568
  %v570 = vlaneseq
  %v571 = vshrl.u32 %v570, 7
  %v572 = vsub.s32 0, %v571
  %v573 = vrot.slane %v554, %v572
  %v574 = vlaneseq
  %v575 = vshrl.u32 %v574, 7
  %v576 = vsub.s32 0, %v575
  %v577 = vrot.slane %v562, %v576
  %v578 = vlaneseq
  %v579 = vshrl.u32 %v578, 7
  %v580 = vsub.s32 0, %v579
  %v581 = vrot.slane %v564, %v580
  %v582 = vlaneseq
  %v583 = vshrl.u32 %v582, 7
  %v584 = vsub.s32 0, %v583
  %v585 = vrot.slane %v547, %v584
  %v586 = vlaneseq
  %v587 = vshrl.u32 %v586, 7
  %v588 = vsub.s32 0, %v587
  %v589 = vrot.slane %v561, %v588
  %v590 = vlaneseq
  %v591 = vshrl.u32 %v590, 7
  %v592 = vsub.s32 0, %v591
  %v593 = vrot.slane %v563, %v592
  %v594 = vlaneseq
  %v595 = vshrl.u32 %v594, 7
  %v596 = vsub.s32 0, %v595
  %v597 = vrot.slane %v565, %v596
  %vm606 = vcmask 1040384
  %v607 = vsel %vm606, %v482, %v569
  %v608 = vsel %vm606, %v496, %v573
  %v609 = vsel %vm606, %v504, %v577
  %v610 = vsel %vm606, %v506, %v581
  %v611 = vsel %vm606, %v489, %v585
  %v612 = vsel %vm606, %v503, %v589
  %v613 = vsel %vm606, %v505, %v593
  %v614 = vsel %vm606, %v507, %v597
  %v615 = vpack.c.bf16 %v607, %v607
  %v616 = vpack.c.bf16 %v608, %v608
  %v617 = vpack.c.bf16 %v609, %v609
  %v618 = vpack.c.bf16 %v610, %v610
  %v619 = vpack.c.bf16 %v611, %v611
  %v620 = vpack.c.bf16 %v612, %v612
  %v621 = vpack.c.bf16 %v613, %v613
  %v622 = vpack.c.bf16 %v614, %v614
  %623 = vst [vmem:[%s4] sm:$0x1] %v615
  %624 = vst [vmem:[%s4 + $0x10] sm:$0x1] %v616
  %625 = vst [vmem:[%s4 + $0x20] sm:$0x1] %v617
  %626 = vst [vmem:[%s4 + $0x30] sm:$0x1] %v618
  %627 = vst [vmem:[%s4 + $0x40] sm:$0x1] %v619
  %628 = vst [vmem:[%s4 + $0x50] sm:$0x1] %v620
  %629 = vst [vmem:[%s4 + $0x60] sm:$0x1] %v621
  %630 = vst [vmem:[%s4 + $0x70] sm:$0x1] %v622
  %s631 = scalar_lea.vmem %s0, 32
  %v632 = vld [vmem:[%s631] sm:$0xff]
  %v633 = vld [vmem:[%s631 + $0x8] sm:$0xff]
  %v634 = vunpack.c.l.bf16 %v632
  %v635 = vunpack.c.h.bf16 %v632
  %v636 = vunpack.c.l.bf16 %v633
  %v637 = vunpack.c.h.bf16 %v633
  %v638 = vpack.c.bf16 %v457, %v457
  %v639 = vld [vmem:[%s1] sm:$0xff]
  %v640 = vld [vmem:[%s1 + $0x8] sm:$0xff]
  %v641 = vld [vmem:[%s1 + $0x10] sm:$0xff]
  %v642 = vld [vmem:[%s1 + $0x18] sm:$0xff]
  %v643 = vld [vmem:[%s1 + $0x20] sm:$0xff]
  %v644 = vld [vmem:[%s1 + $0x28] sm:$0xff]
  %v645 = vld [vmem:[%s1 + $0x30] sm:$0xff]
  %v646 = vld [vmem:[%s1 + $0x38] sm:$0xff]
  %v647 = vld [vmem:[%s1 + $0x40] sm:$0xff]
  %v648 = vld [vmem:[%s1 + $0x48] sm:$0xff]
  %v649 = vld [vmem:[%s1 + $0x50] sm:$0xff]
  %v650 = vld [vmem:[%s1 + $0x58] sm:$0xff]
  %v651 = vld [vmem:[%s1 + $0x60] sm:$0xff]
  %v652 = vld [vmem:[%s1 + $0x68] sm:$0xff]
  %v653 = vld [vmem:[%s1 + $0x70] sm:$0xff]
  %v654 = vld [vmem:[%s1 + $0x78] sm:$0xff]
  %v655 = vld [vmem:[%s1 + $0x80] sm:$0xff]
  %v656 = vld [vmem:[%s1 + $0x88] sm:$0xff]
  %v657 = vld [vmem:[%s1 + $0x90] sm:$0xff]
  %v658 = vld [vmem:[%s1 + $0x98] sm:$0xff]
  %v659 = vld [vmem:[%s1 + $0xa0] sm:$0xff]
  %v660 = vld [vmem:[%s1 + $0xa8] sm:$0xff]
  %v661 = vld [vmem:[%s1 + $0xb0] sm:$0xff]
  %v662 = vld [vmem:[%s1 + $0xb8] sm:$0xff]
  %v663 = vld [vmem:[%s1 + $0xc0] sm:$0xff]
  %v664 = vld [vmem:[%s1 + $0xc8] sm:$0xff]
  %v665 = vld [vmem:[%s1 + $0xd0] sm:$0xff]
  %v666 = vld [vmem:[%s1 + $0xd8] sm:$0xff]
  %v667 = vld [vmem:[%s1 + $0xe0] sm:$0xff]
  %v668 = vld [vmem:[%s1 + $0xe8] sm:$0xff]
  %v669 = vld [vmem:[%s1 + $0xf0] sm:$0xff]
  %v670 = vld [vmem:[%s1 + $0xf8] sm:$0xff]
  %v703 = vunpack.c.l.b16 %v639
  %v704 = vunpack.c.h.b16 %v639
  %v705 = vunpack.c.l.b16 %v640
  %v706 = vunpack.c.h.b16 %v640
  %v707 = vunpack.c.l.b16 %v641
  %v708 = vunpack.c.h.b16 %v641
  %v709 = vunpack.c.l.b16 %v642
  %v710 = vunpack.c.h.b16 %v642
  %v711 = vunpack.c.l.b16 %v643
  %v712 = vunpack.c.h.b16 %v643
  %v713 = vunpack.c.l.b16 %v644
  %v714 = vunpack.c.h.b16 %v644
  %v715 = vunpack.c.l.b16 %v645
  %v716 = vunpack.c.h.b16 %v645
  %v717 = vunpack.c.l.b16 %v646
  %v718 = vunpack.c.h.b16 %v646
  %v719 = vunpack.c.l.b16 %v647
  %v720 = vunpack.c.h.b16 %v647
  %v721 = vunpack.c.l.b16 %v648
  %v722 = vunpack.c.h.b16 %v648
  %v723 = vunpack.c.l.b16 %v649
  %v724 = vunpack.c.h.b16 %v649
  %v725 = vunpack.c.l.b16 %v650
  %v726 = vunpack.c.h.b16 %v650
  %v727 = vunpack.c.l.b16 %v651
  %v728 = vunpack.c.h.b16 %v651
  %v729 = vunpack.c.l.b16 %v652
  %v730 = vunpack.c.h.b16 %v652
  %v731 = vunpack.c.l.b16 %v653
  %v732 = vunpack.c.h.b16 %v653
  %v733 = vunpack.c.l.b16 %v654
  %v734 = vunpack.c.h.b16 %v654
  %v735 = vunpack.c.l.b16 %v655
  %v736 = vunpack.c.h.b16 %v655
  %v737 = vunpack.c.l.b16 %v656
  %v738 = vunpack.c.h.b16 %v656
  %v739 = vunpack.c.l.b16 %v657
  %v740 = vunpack.c.h.b16 %v657
  %v741 = vunpack.c.l.b16 %v658
  %v742 = vunpack.c.h.b16 %v658
  %v743 = vunpack.c.l.b16 %v659
  %v744 = vunpack.c.h.b16 %v659
  %v745 = vunpack.c.l.b16 %v660
  %v746 = vunpack.c.h.b16 %v660
  %v747 = vunpack.c.l.b16 %v661
  %v748 = vunpack.c.h.b16 %v661
  %v749 = vunpack.c.l.b16 %v662
  %v750 = vunpack.c.h.b16 %v662
  %v751 = vunpack.c.l.b16 %v663
  %v752 = vunpack.c.h.b16 %v663
  %v753 = vunpack.c.l.b16 %v664
  %v754 = vunpack.c.h.b16 %v664
  %v755 = vunpack.c.l.b16 %v665
  %v756 = vunpack.c.h.b16 %v665
  %v757 = vunpack.c.l.b16 %v666
  %v758 = vunpack.c.h.b16 %v666
  %v759 = vunpack.c.l.b16 %v667
  %v760 = vunpack.c.h.b16 %v667
  %v761 = vunpack.c.l.b16 %v668
  %v762 = vunpack.c.h.b16 %v668
  %v763 = vunpack.c.l.b16 %v669
  %v764 = vunpack.c.h.b16 %v669
  %v765 = vunpack.c.l.b16 %v670
  %v766 = vunpack.c.h.b16 %v670
  %v767 = vpack.c.b16 %v707, %v703
  %v768 = vpack.c.b16 %v708, %v704
  %v769 = vpack.c.b16 %v709, %v705
  %v770 = vpack.c.b16 %v710, %v706
  %v771 = vpack.c.b16 %v715, %v711
  %v772 = vpack.c.b16 %v716, %v712
  %v773 = vpack.c.b16 %v717, %v713
  %v774 = vpack.c.b16 %v718, %v714
  %v775 = vpack.c.b16 %v723, %v719
  %v776 = vpack.c.b16 %v724, %v720
  %v777 = vpack.c.b16 %v725, %v721
  %v778 = vpack.c.b16 %v726, %v722
  %v779 = vpack.c.b16 %v731, %v727
  %v780 = vpack.c.b16 %v732, %v728
  %v781 = vpack.c.b16 %v733, %v729
  %v782 = vpack.c.b16 %v734, %v730
  %v783 = vpack.c.b16 %v739, %v735
  %v784 = vpack.c.b16 %v740, %v736
  %v785 = vpack.c.b16 %v741, %v737
  %v786 = vpack.c.b16 %v742, %v738
  %v787 = vpack.c.b16 %v747, %v743
  %v788 = vpack.c.b16 %v748, %v744
  %v789 = vpack.c.b16 %v749, %v745
  %v790 = vpack.c.b16 %v750, %v746
  %v791 = vpack.c.b16 %v755, %v751
  %v792 = vpack.c.b16 %v756, %v752
  %v793 = vpack.c.b16 %v757, %v753
  %v794 = vpack.c.b16 %v758, %v754
  %v795 = vpack.c.b16 %v763, %v759
  %v796 = vpack.c.b16 %v764, %v760
  %v797 = vpack.c.b16 %v765, %v761
  %v798 = vpack.c.b16 %v766, %v762
  %831 = vmatprep.subr.bf16.mxu0 %v796
  %832 = vmatpush1.bf16.msra.mxu0 %v795
  %833 = vmatprep.subr.bf16.mxu0 %v792
  %834 = vmatpush1.bf16.msra.mxu0 %v791
  %835 = vmatprep.subr.bf16.mxu0 %v788
  %836 = vmatpush1.bf16.msra.mxu0 %v787
  %837 = vmatprep.subr.bf16.mxu0 %v784
  %838 = vmatpush1.bf16.msra.mxu0 %v783
  %839 = vmatprep.subr.bf16.mxu0 %v780
  %840 = vmatpush1.bf16.msra.mxu0 %v779
  %841 = vmatprep.subr.bf16.mxu0 %v776
  %842 = vmatpush1.bf16.msra.mxu0 %v775
  %843 = vmatprep.subr.bf16.mxu0 %v772
  %844 = vmatpush1.bf16.msra.mxu0 %v771
  %845 = vmatprep.subr.bf16.mxu0 %v768
  %846 = vmatpush1.bf16.msra.mxu0 %v767
  %847 = vmatprep.subr.bf16.mxu0 0
  %848 = vmatpush2.bf16.msra.mxu0 0
  %849 = vmatprep.subr.bf16.mxu0 0
  %850 = vmatpush2.bf16.msra.mxu0 0
  %851 = vmatprep.subr.bf16.mxu0 0
  %852 = vmatpush2.bf16.msra.mxu0 0
  %853 = vmatprep.subr.bf16.mxu0 0
  %854 = vmatpush2.bf16.msra.mxu0 0
  %855 = vmatprep.subr.bf16.mxu0 0
  %856 = vmatpush2.bf16.msra.mxu0 0
  %857 = vmatprep.subr.bf16.mxu0 0
  %858 = vmatpush2.bf16.msra.mxu0 0
  %859 = vmatprep.subr.bf16.mxu0 0
  %860 = vmatpush2.bf16.msra.mxu0 0
  %861 = vmatprep.subr.bf16.mxu0 0
  %862 = vmatpush2.bf16.msra.mxu0 0
  %863 = vmatprep.mubr.bf16.mxu0 0
  %864 = vmatmul.mubr.bf16.gmra.mxu0 %v638
  %v865 = vpop.f32.mrf.mxu0
  %v866 = vadd.f32 0.0, %v865
  %v867 = vpop.f32.mrf.mxu0
  %v868 = vadd.f32 0.0, %v867
  %v869 = vpop.f32.mrf.mxu0
  %v870 = vpop.f32.mrf.mxu0
  %871 = vdwg.mxu0
  %872 = vmatprep.subr.bf16.mxu0 %v798
  %873 = vmatpush1.bf16.msra.mxu0 %v797
  %874 = vmatprep.subr.bf16.mxu0 %v794
  %875 = vmatpush1.bf16.msra.mxu0 %v793
  %876 = vmatprep.subr.bf16.mxu0 %v790
  %877 = vmatpush1.bf16.msra.mxu0 %v789
  %878 = vmatprep.subr.bf16.mxu0 %v786
  %879 = vmatpush1.bf16.msra.mxu0 %v785
  %880 = vmatprep.subr.bf16.mxu0 %v782
  %881 = vmatpush1.bf16.msra.mxu0 %v781
  %882 = vmatprep.subr.bf16.mxu0 %v778
  %883 = vmatpush1.bf16.msra.mxu0 %v777
  %884 = vmatprep.subr.bf16.mxu0 %v774
  %885 = vmatpush1.bf16.msra.mxu0 %v773
  %886 = vmatprep.subr.bf16.mxu0 %v770
  %887 = vmatpush1.bf16.msra.mxu0 %v769
  %888 = vmatprep.subr.bf16.mxu0 0
  %889 = vmatpush2.bf16.msra.mxu0 0
  %890 = vmatprep.subr.bf16.mxu0 0
  %891 = vmatpush2.bf16.msra.mxu0 0
  %892 = vmatprep.subr.bf16.mxu0 0
  %893 = vmatpush2.bf16.msra.mxu0 0
  %894 = vmatprep.subr.bf16.mxu0 0
  %895 = vmatpush2.bf16.msra.mxu0 0
  %896 = vmatprep.subr.bf16.mxu0 0
  %897 = vmatpush2.bf16.msra.mxu0 0
  %898 = vmatprep.subr.bf16.mxu0 0
  %899 = vmatpush2.bf16.msra.mxu0 0
  %900 = vmatprep.subr.bf16.mxu0 0
  %901 = vmatpush2.bf16.msra.mxu0 0
  %902 = vmatprep.subr.bf16.mxu0 0
  %903 = vmatpush2.bf16.msra.mxu0 0
  %904 = vmatprep.mubr.bf16.mxu0 0
  %905 = vmatmul.mubr.bf16.gmra.mxu0 %v638
  %v906 = vpop.f32.mrf.mxu0
  %v907 = vadd.f32 0.0, %v906
  %v908 = vpop.f32.mrf.mxu0
  %v909 = vadd.f32 0.0, %v908
  %v910 = vpop.f32.mrf.mxu0
  %v911 = vpop.f32.mrf.mxu0
  %912 = vdwg.mxu0
  %v913 = vadd.f32 %v634, %v866
  %v914 = vadd.f32 %v635, %v868
  %v915 = vadd.f32 %v636, %v907
  %v916 = vadd.f32 %v637, %v909
  %v917 = vxor.u32 %v913, 2147483648
  %v918 = vmul.f32 %v917, 1.442695
  %v919 = vpow.pop %v918
  %v920 = vadd.f32 %v919, 1.0
  %v921 = vrcp.pop %v920
  %v922 = vmul.f32 1.0, %v921
  %v923 = vxor.u32 %v914, 2147483648
  %v924 = vmul.f32 %v923, 1.442695
  %v925 = vpow.pop %v924
  %v926 = vadd.f32 %v925, 1.0
  %v927 = vrcp.pop %v926
  %v928 = vmul.f32 1.0, %v927
  %v929 = vtanh.pop %v915
  %v930 = vxor.u32 %v916, 2147483648
  %v931 = vmul.f32 %v930, 1.442695
  %v932 = vpow.pop %v931
  %v933 = vadd.f32 %v932, 1.0
  %v934 = vrcp.pop %v933
  %v935 = vmul.f32 1.0, %v934
  %v936 = vmul.f32 %v928, %v455
  %v937 = vmul.f32 %v922, %v929
  %v938 = vadd.f32 %v936, %v937
  %v939 = vtanh.pop %v938
  %v940 = vmul.f32 %v935, %v939
  %s941 = scalar_lea.vmem %s0, 48
  %v942 = vld [vmem:[%s941] sm:$0xff]
  %v943 = vld [vmem:[%s941 + $0x8] sm:$0xff]
  %v944 = vunpack.c.l.bf16 %v942
  %v945 = vunpack.c.h.bf16 %v942
  %v946 = vunpack.c.l.bf16 %v943
  %v947 = vunpack.c.h.bf16 %v943
  %v948 = vpack.c.bf16 %v940, %v940
  %949 = vmatprep.subr.bf16.mxu0 %v796
  %950 = vmatpush1.bf16.msra.mxu0 %v795
  %951 = vmatprep.subr.bf16.mxu0 %v792
  %952 = vmatpush1.bf16.msra.mxu0 %v791
  %953 = vmatprep.subr.bf16.mxu0 %v788
  %954 = vmatpush1.bf16.msra.mxu0 %v787
  %955 = vmatprep.subr.bf16.mxu0 %v784
  %956 = vmatpush1.bf16.msra.mxu0 %v783
  %957 = vmatprep.subr.bf16.mxu0 %v780
  %958 = vmatpush1.bf16.msra.mxu0 %v779
  %959 = vmatprep.subr.bf16.mxu0 %v776
  %960 = vmatpush1.bf16.msra.mxu0 %v775
  %961 = vmatprep.subr.bf16.mxu0 %v772
  %962 = vmatpush1.bf16.msra.mxu0 %v771
  %963 = vmatprep.subr.bf16.mxu0 %v768
  %964 = vmatpush1.bf16.msra.mxu0 %v767
  %965 = vmatprep.subr.bf16.mxu0 0
  %966 = vmatpush2.bf16.msra.mxu0 0
  %967 = vmatprep.subr.bf16.mxu0 0
  %968 = vmatpush2.bf16.msra.mxu0 0
  %969 = vmatprep.subr.bf16.mxu0 0
  %970 = vmatpush2.bf16.msra.mxu0 0
  %971 = vmatprep.subr.bf16.mxu0 0
  %972 = vmatpush2.bf16.msra.mxu0 0
  %973 = vmatprep.subr.bf16.mxu0 0
  %974 = vmatpush2.bf16.msra.mxu0 0
  %975 = vmatprep.subr.bf16.mxu0 0
  %976 = vmatpush2.bf16.msra.mxu0 0
  %977 = vmatprep.subr.bf16.mxu0 0
  %978 = vmatpush2.bf16.msra.mxu0 0
  %979 = vmatprep.subr.bf16.mxu0 0
  %980 = vmatpush2.bf16.msra.mxu0 0
  %981 = vmatprep.mubr.bf16.mxu0 0
  %982 = vmatmul.mubr.bf16.gmra.mxu0 %v948
  %v983 = vpop.f32.mrf.mxu0
  %v984 = vadd.f32 0.0, %v983
  %v985 = vpop.f32.mrf.mxu0
  %v986 = vadd.f32 0.0, %v985
  %v987 = vpop.f32.mrf.mxu0
  %v988 = vpop.f32.mrf.mxu0
  %989 = vdwg.mxu0
  %990 = vmatprep.subr.bf16.mxu0 %v798
  %991 = vmatpush1.bf16.msra.mxu0 %v797
  %992 = vmatprep.subr.bf16.mxu0 %v794
  %993 = vmatpush1.bf16.msra.mxu0 %v793
  %994 = vmatprep.subr.bf16.mxu0 %v790
  %995 = vmatpush1.bf16.msra.mxu0 %v789
  %996 = vmatprep.subr.bf16.mxu0 %v786
  %997 = vmatpush1.bf16.msra.mxu0 %v785
  %998 = vmatprep.subr.bf16.mxu0 %v782
  %999 = vmatpush1.bf16.msra.mxu0 %v781
  %1000 = vmatprep.subr.bf16.mxu0 %v778
  %1001 = vmatpush1.bf16.msra.mxu0 %v777
  %1002 = vmatprep.subr.bf16.mxu0 %v774
  %1003 = vmatpush1.bf16.msra.mxu0 %v773
  %1004 = vmatprep.subr.bf16.mxu0 %v770
  %1005 = vmatpush1.bf16.msra.mxu0 %v769
  %1006 = vmatprep.subr.bf16.mxu0 0
  %1007 = vmatpush2.bf16.msra.mxu0 0
  %1008 = vmatprep.subr.bf16.mxu0 0
  %1009 = vmatpush2.bf16.msra.mxu0 0
  %1010 = vmatprep.subr.bf16.mxu0 0
  %1011 = vmatpush2.bf16.msra.mxu0 0
  %1012 = vmatprep.subr.bf16.mxu0 0
  %1013 = vmatpush2.bf16.msra.mxu0 0
  %1014 = vmatprep.subr.bf16.mxu0 0
  %1015 = vmatpush2.bf16.msra.mxu0 0
  %1016 = vmatprep.subr.bf16.mxu0 0
  %1017 = vmatpush2.bf16.msra.mxu0 0
  %1018 = vmatprep.subr.bf16.mxu0 0
  %1019 = vmatpush2.bf16.msra.mxu0 0
  %1020 = vmatprep.subr.bf16.mxu0 0
  %1021 = vmatpush2.bf16.msra.mxu0 0
  %1022 = vmatprep.mubr.bf16.mxu0 0
  %1023 = vmatmul.mubr.bf16.gmra.mxu0 %v948
  %v1024 = vpop.f32.mrf.mxu0
  %v1025 = vadd.f32 0.0, %v1024
  %v1026 = vpop.f32.mrf.mxu0
  %v1027 = vadd.f32 0.0, %v1026
  %v1028 = vpop.f32.mrf.mxu0
  %v1029 = vpop.f32.mrf.mxu0
  %1030 = vdwg.mxu0
  %v1031 = vadd.f32 %v944, %v984
  %v1032 = vadd.f32 %v945, %v986
  %v1033 = vadd.f32 %v946, %v1025
  %v1034 = vadd.f32 %v947, %v1027
  %v1035 = vxor.u32 %v1031, 2147483648
  %v1036 = vmul.f32 %v1035, 1.442695
  %v1037 = vpow.pop %v1036
  %v1038 = vadd.f32 %v1037, 1.0
  %v1039 = vrcp.pop %v1038
  %v1040 = vmul.f32 1.0, %v1039
  %v1041 = vxor.u32 %v1032, 2147483648
  %v1042 = vmul.f32 %v1041, 1.442695
  %v1043 = vpow.pop %v1042
  %v1044 = vadd.f32 %v1043, 1.0
  %v1045 = vrcp.pop %v1044
  %v1046 = vmul.f32 1.0, %v1045
  %v1047 = vtanh.pop %v1033
  %v1048 = vxor.u32 %v1034, 2147483648
  %v1049 = vmul.f32 %v1048, 1.442695
  %v1050 = vpow.pop %v1049
  %v1051 = vadd.f32 %v1050, 1.0
  %v1052 = vrcp.pop %v1051
  %v1053 = vmul.f32 1.0, %v1052
  %v1054 = vmul.f32 %v1046, %v938
  %v1055 = vmul.f32 %v1040, %v1047
  %v1056 = vadd.f32 %v1054, %v1055
  %v1057 = vtanh.pop %v1056
  %v1058 = vmul.f32 %v1053, %v1057
  %v1060 = vcombine.high %v940, %v940
  %v1062 = vunpack.c.l.s4 1966171168
  %v1063 = vunpack.c.0.s8 %v1062
  %v1064 = vlaneseq
  %v1065 = vshrl.u32 %v1064, 7
  %v1066 = vsub.s32 %v1063, %v1065
  %v1067 = vrot.slane %v940, %v1066
  %v1069 = vunpack.c.l.s4 1966171168
  %v1070 = vunpack.c.0.s8 %v1069
  %v1071 = vlaneseq
  %v1072 = vshrl.u32 %v1071, 7
  %v1073 = vsub.s32 %v1070, %v1072
  %v1074 = vrot.slane %v1060, %v1073
  %v1075 = vcombine.high %v1067, %v1067
  %v1076 = vcombine.high %v1074, %v1074
  %v1078 = vunpack.c.l.s4 1966171168
  %v1079 = vunpack.c.0.s8 %v1078
  %v1080 = vlaneseq
  %v1081 = vshrl.u32 %v1080, 7
  %v1082 = vsub.s32 %v1079, %v1081
  %v1083 = vrot.slane %v1067, %v1082
  %v1085 = vunpack.c.l.s4 1966171168
  %v1086 = vunpack.c.0.s8 %v1085
  %v1087 = vlaneseq
  %v1088 = vshrl.u32 %v1087, 7
  %v1089 = vsub.s32 %v1086, %v1088
  %v1090 = vrot.slane %v1074, %v1089
  %v1092 = vunpack.c.l.s4 1966171168
  %v1093 = vunpack.c.0.s8 %v1092
  %v1094 = vlaneseq
  %v1095 = vshrl.u32 %v1094, 7
  %v1096 = vsub.s32 %v1093, %v1095
  %v1097 = vrot.slane %v1075, %v1096
  %v1099 = vunpack.c.l.s4 1966171168
  %v1100 = vunpack.c.0.s8 %v1099
  %v1101 = vlaneseq
  %v1102 = vshrl.u32 %v1101, 7
  %v1103 = vsub.s32 %v1100, %v1102
  %v1104 = vrot.slane %v1076, %v1103
  %v1105 = vcombine.high %v1083, %v1083
  %v1106 = vcombine.high %v1090, %v1090
  %v1107 = vcombine.high %v1097, %v1097
  %v1108 = vcombine.high %v1104, %v1104
  %v1118 = vcombine.high %v1058, %v1058
  %v1120 = vunpack.c.l.s4 1966171168
  %v1121 = vunpack.c.0.s8 %v1120
  %v1122 = vlaneseq
  %v1123 = vshrl.u32 %v1122, 7
  %v1124 = vsub.s32 %v1121, %v1123
  %v1125 = vrot.slane %v1058, %v1124
  %v1127 = vunpack.c.l.s4 1966171168
  %v1128 = vunpack.c.0.s8 %v1127
  %v1129 = vlaneseq
  %v1130 = vshrl.u32 %v1129, 7
  %v1131 = vsub.s32 %v1128, %v1130
  %v1132 = vrot.slane %v1118, %v1131
  %v1133 = vcombine.high %v1125, %v1125
  %v1134 = vcombine.high %v1132, %v1132
  %v1136 = vunpack.c.l.s4 1966171168
  %v1137 = vunpack.c.0.s8 %v1136
  %v1138 = vlaneseq
  %v1139 = vshrl.u32 %v1138, 7
  %v1140 = vsub.s32 %v1137, %v1139
  %v1141 = vrot.slane %v1125, %v1140
  %v1143 = vunpack.c.l.s4 1966171168
  %v1144 = vunpack.c.0.s8 %v1143
  %v1145 = vlaneseq
  %v1146 = vshrl.u32 %v1145, 7
  %v1147 = vsub.s32 %v1144, %v1146
  %v1148 = vrot.slane %v1132, %v1147
  %v1150 = vunpack.c.l.s4 1966171168
  %v1151 = vunpack.c.0.s8 %v1150
  %v1152 = vlaneseq
  %v1153 = vshrl.u32 %v1152, 7
  %v1154 = vsub.s32 %v1151, %v1153
  %v1155 = vrot.slane %v1133, %v1154
  %v1157 = vunpack.c.l.s4 1966171168
  %v1158 = vunpack.c.0.s8 %v1157
  %v1159 = vlaneseq
  %v1160 = vshrl.u32 %v1159, 7
  %v1161 = vsub.s32 %v1158, %v1160
  %v1162 = vrot.slane %v1134, %v1161
  %v1163 = vcombine.high %v1141, %v1141
  %v1164 = vcombine.high %v1148, %v1148
  %v1165 = vcombine.high %v1155, %v1155
  %v1166 = vcombine.high %v1162, %v1162
  %v1167 = vlaneseq
  %v1168 = vshrl.u32 %v1167, 7
  %v1169 = vsub.s32 0, %v1168
  %v1170 = vrot.slane %v1141, %v1169
  %v1171 = vlaneseq
  %v1172 = vshrl.u32 %v1171, 7
  %v1173 = vsub.s32 0, %v1172
  %v1174 = vrot.slane %v1155, %v1173
  %v1175 = vlaneseq
  %v1176 = vshrl.u32 %v1175, 7
  %v1177 = vsub.s32 0, %v1176
  %v1178 = vrot.slane %v1163, %v1177
  %v1179 = vlaneseq
  %v1180 = vshrl.u32 %v1179, 7
  %v1181 = vsub.s32 0, %v1180
  %v1182 = vrot.slane %v1165, %v1181
  %v1183 = vlaneseq
  %v1184 = vshrl.u32 %v1183, 7
  %v1185 = vsub.s32 0, %v1184
  %v1186 = vrot.slane %v1148, %v1185
  %v1187 = vlaneseq
  %v1188 = vshrl.u32 %v1187, 7
  %v1189 = vsub.s32 0, %v1188
  %v1190 = vrot.slane %v1162, %v1189
  %v1191 = vlaneseq
  %v1192 = vshrl.u32 %v1191, 7
  %v1193 = vsub.s32 0, %v1192
  %v1194 = vrot.slane %v1164, %v1193
  %v1195 = vlaneseq
  %v1196 = vshrl.u32 %v1195, 7
  %v1197 = vsub.s32 0, %v1196
  %v1198 = vrot.slane %v1166, %v1197
  %v1207 = vsel %vm606, %v1083, %v1170
  %v1208 = vsel %vm606, %v1097, %v1174
  %v1209 = vsel %vm606, %v1105, %v1178
  %v1210 = vsel %vm606, %v1107, %v1182
  %v1211 = vsel %vm606, %v1090, %v1186
  %v1212 = vsel %vm606, %v1104, %v1190
  %v1213 = vsel %vm606, %v1106, %v1194
  %v1214 = vsel %vm606, %v1108, %v1198
  %v1215 = vpack.c.bf16 %v1207, %v1207
  %v1216 = vpack.c.bf16 %v1208, %v1208
  %v1217 = vpack.c.bf16 %v1209, %v1209
  %v1218 = vpack.c.bf16 %v1210, %v1210
  %v1219 = vpack.c.bf16 %v1211, %v1211
  %v1220 = vpack.c.bf16 %v1212, %v1212
  %v1221 = vpack.c.bf16 %v1213, %v1213
  %v1222 = vpack.c.bf16 %v1214, %v1214
  %v1231 = vunpack.c.l.b16 %v1215
  %v1232 = vunpack.c.l.b16 %v1216
  %v1233 = vunpack.c.l.b16 %v1217
  %v1234 = vunpack.c.l.b16 %v1218
  %v1235 = vunpack.c.l.b16 %v1219
  %v1236 = vunpack.c.l.b16 %v1220
  %v1237 = vunpack.c.l.b16 %v1221
  %v1238 = vunpack.c.l.b16 %v1222
  %v1239 = vpack.c.b16 %v1231, %v1231
  %v1240 = vpack.c.b16 %v1232, %v1232
  %v1241 = vpack.c.b16 %v1233, %v1233
  %v1242 = vpack.c.b16 %v1234, %v1234
  %v1243 = vpack.c.b16 %v1235, %v1235
  %v1244 = vpack.c.b16 %v1236, %v1236
  %v1245 = vpack.c.b16 %v1237, %v1237
  %v1246 = vpack.c.b16 %v1238, %v1238
  %v1247 = vrot.slane %v1239, 7
  %v1248 = vrot.slane %v1240, 7
  %v1249 = vrot.slane %v1241, 7
  %v1250 = vrot.slane %v1242, 7
  %v1251 = vrot.slane %v1243, 7
  %v1252 = vrot.slane %v1244, 7
  %v1253 = vrot.slane %v1245, 7
  %v1254 = vrot.slane %v1246, 7
  %1263 = vst [vmem:[%s4] sm:$0x2] %v1247
  %1264 = vst [vmem:[%s4 + $0x10] sm:$0x2] %v1248
  %1265 = vst [vmem:[%s4 + $0x20] sm:$0x2] %v1249
  %1266 = vst [vmem:[%s4 + $0x30] sm:$0x2] %v1250
  %1267 = vst [vmem:[%s4 + $0x40] sm:$0x2] %v1251
  %1268 = vst [vmem:[%s4 + $0x50] sm:$0x2] %v1252
  %1269 = vst [vmem:[%s4 + $0x60] sm:$0x2] %v1253
  %1270 = vst [vmem:[%s4 + $0x70] sm:$0x2] %v1254
  %s1271 = scalar_lea.vmem %s0, 64
  %v1272 = vld [vmem:[%s1271] sm:$0xff]
  %v1273 = vld [vmem:[%s1271 + $0x8] sm:$0xff]
  %v1274 = vunpack.c.l.bf16 %v1272
  %v1275 = vunpack.c.h.bf16 %v1272
  %v1276 = vunpack.c.l.bf16 %v1273
  %v1277 = vunpack.c.h.bf16 %v1273
  %v1278 = vpack.c.bf16 %v1058, %v1058
  %v1279 = vld [vmem:[%s1] sm:$0xff]
  %v1280 = vld [vmem:[%s1 + $0x8] sm:$0xff]
  %v1281 = vld [vmem:[%s1 + $0x10] sm:$0xff]
  %v1282 = vld [vmem:[%s1 + $0x18] sm:$0xff]
  %v1283 = vld [vmem:[%s1 + $0x20] sm:$0xff]
  %v1284 = vld [vmem:[%s1 + $0x28] sm:$0xff]
  %v1285 = vld [vmem:[%s1 + $0x30] sm:$0xff]
  %v1286 = vld [vmem:[%s1 + $0x38] sm:$0xff]
  %v1287 = vld [vmem:[%s1 + $0x40] sm:$0xff]
  %v1288 = vld [vmem:[%s1 + $0x48] sm:$0xff]
  %v1289 = vld [vmem:[%s1 + $0x50] sm:$0xff]
  %v1290 = vld [vmem:[%s1 + $0x58] sm:$0xff]
  %v1291 = vld [vmem:[%s1 + $0x60] sm:$0xff]
  %v1292 = vld [vmem:[%s1 + $0x68] sm:$0xff]
  %v1293 = vld [vmem:[%s1 + $0x70] sm:$0xff]
  %v1294 = vld [vmem:[%s1 + $0x78] sm:$0xff]
  %v1295 = vld [vmem:[%s1 + $0x80] sm:$0xff]
  %v1296 = vld [vmem:[%s1 + $0x88] sm:$0xff]
  %v1297 = vld [vmem:[%s1 + $0x90] sm:$0xff]
  %v1298 = vld [vmem:[%s1 + $0x98] sm:$0xff]
  %v1299 = vld [vmem:[%s1 + $0xa0] sm:$0xff]
  %v1300 = vld [vmem:[%s1 + $0xa8] sm:$0xff]
  %v1301 = vld [vmem:[%s1 + $0xb0] sm:$0xff]
  %v1302 = vld [vmem:[%s1 + $0xb8] sm:$0xff]
  %v1303 = vld [vmem:[%s1 + $0xc0] sm:$0xff]
  %v1304 = vld [vmem:[%s1 + $0xc8] sm:$0xff]
  %v1305 = vld [vmem:[%s1 + $0xd0] sm:$0xff]
  %v1306 = vld [vmem:[%s1 + $0xd8] sm:$0xff]
  %v1307 = vld [vmem:[%s1 + $0xe0] sm:$0xff]
  %v1308 = vld [vmem:[%s1 + $0xe8] sm:$0xff]
  %v1309 = vld [vmem:[%s1 + $0xf0] sm:$0xff]
  %v1310 = vld [vmem:[%s1 + $0xf8] sm:$0xff]
  %v1343 = vunpack.c.l.b16 %v1279
  %v1344 = vunpack.c.h.b16 %v1279
  %v1345 = vunpack.c.l.b16 %v1280
  %v1346 = vunpack.c.h.b16 %v1280
  %v1347 = vunpack.c.l.b16 %v1281
  %v1348 = vunpack.c.h.b16 %v1281
  %v1349 = vunpack.c.l.b16 %v1282
  %v1350 = vunpack.c.h.b16 %v1282
  %v1351 = vunpack.c.l.b16 %v1283
  %v1352 = vunpack.c.h.b16 %v1283
  %v1353 = vunpack.c.l.b16 %v1284
  %v1354 = vunpack.c.h.b16 %v1284
  %v1355 = vunpack.c.l.b16 %v1285
  %v1356 = vunpack.c.h.b16 %v1285
  %v1357 = vunpack.c.l.b16 %v1286
  %v1358 = vunpack.c.h.b16 %v1286
  %v1359 = vunpack.c.l.b16 %v1287
  %v1360 = vunpack.c.h.b16 %v1287
  %v1361 = vunpack.c.l.b16 %v1288
  %v1362 = vunpack.c.h.b16 %v1288
  %v1363 = vunpack.c.l.b16 %v1289
  %v1364 = vunpack.c.h.b16 %v1289
  %v1365 = vunpack.c.l.b16 %v1290
  %v1366 = vunpack.c.h.b16 %v1290
  %v1367 = vunpack.c.l.b16 %v1291
  %v1368 = vunpack.c.h.b16 %v1291
  %v1369 = vunpack.c.l.b16 %v1292
  %v1370 = vunpack.c.h.b16 %v1292
  %v1371 = vunpack.c.l.b16 %v1293
  %v1372 = vunpack.c.h.b16 %v1293
  %v1373 = vunpack.c.l.b16 %v1294
  %v1374 = vunpack.c.h.b16 %v1294
  %v1375 = vunpack.c.l.b16 %v1295
  %v1376 = vunpack.c.h.b16 %v1295
  %v1377 = vunpack.c.l.b16 %v1296
  %v1378 = vunpack.c.h.b16 %v1296
  %v1379 = vunpack.c.l.b16 %v1297
  %v1380 = vunpack.c.h.b16 %v1297
  %v1381 = vunpack.c.l.b16 %v1298
  %v1382 = vunpack.c.h.b16 %v1298
  %v1383 = vunpack.c.l.b16 %v1299
  %v1384 = vunpack.c.h.b16 %v1299
  %v1385 = vunpack.c.l.b16 %v1300
  %v1386 = vunpack.c.h.b16 %v1300
  %v1387 = vunpack.c.l.b16 %v1301
  %v1388 = vunpack.c.h.b16 %v1301
  %v1389 = vunpack.c.l.b16 %v1302
  %v1390 = vunpack.c.h.b16 %v1302
  %v1391 = vunpack.c.l.b16 %v1303
  %v1392 = vunpack.c.h.b16 %v1303
  %v1393 = vunpack.c.l.b16 %v1304
  %v1394 = vunpack.c.h.b16 %v1304
  %v1395 = vunpack.c.l.b16 %v1305
  %v1396 = vunpack.c.h.b16 %v1305
  %v1397 = vunpack.c.l.b16 %v1306
  %v1398 = vunpack.c.h.b16 %v1306
  %v1399 = vunpack.c.l.b16 %v1307
  %v1400 = vunpack.c.h.b16 %v1307
  %v1401 = vunpack.c.l.b16 %v1308
  %v1402 = vunpack.c.h.b16 %v1308
  %v1403 = vunpack.c.l.b16 %v1309
  %v1404 = vunpack.c.h.b16 %v1309
  %v1405 = vunpack.c.l.b16 %v1310
  %v1406 = vunpack.c.h.b16 %v1310
  %v1407 = vpack.c.b16 %v1347, %v1343
  %v1408 = vpack.c.b16 %v1348, %v1344
  %v1409 = vpack.c.b16 %v1349, %v1345
  %v1410 = vpack.c.b16 %v1350, %v1346
  %v1411 = vpack.c.b16 %v1355, %v1351
  %v1412 = vpack.c.b16 %v1356, %v1352
  %v1413 = vpack.c.b16 %v1357, %v1353
  %v1414 = vpack.c.b16 %v1358, %v1354
  %v1415 = vpack.c.b16 %v1363, %v1359
  %v1416 = vpack.c.b16 %v1364, %v1360
  %v1417 = vpack.c.b16 %v1365, %v1361
  %v1418 = vpack.c.b16 %v1366, %v1362
  %v1419 = vpack.c.b16 %v1371, %v1367
  %v1420 = vpack.c.b16 %v1372, %v1368
  %v1421 = vpack.c.b16 %v1373, %v1369
  %v1422 = vpack.c.b16 %v1374, %v1370
  %v1423 = vpack.c.b16 %v1379, %v1375
  %v1424 = vpack.c.b16 %v1380, %v1376
  %v1425 = vpack.c.b16 %v1381, %v1377
  %v1426 = vpack.c.b16 %v1382, %v1378
  %v1427 = vpack.c.b16 %v1387, %v1383
  %v1428 = vpack.c.b16 %v1388, %v1384
  %v1429 = vpack.c.b16 %v1389, %v1385
  %v1430 = vpack.c.b16 %v1390, %v1386
  %v1431 = vpack.c.b16 %v1395, %v1391
  %v1432 = vpack.c.b16 %v1396, %v1392
  %v1433 = vpack.c.b16 %v1397, %v1393
  %v1434 = vpack.c.b16 %v1398, %v1394
  %v1435 = vpack.c.b16 %v1403, %v1399
  %v1436 = vpack.c.b16 %v1404, %v1400
  %v1437 = vpack.c.b16 %v1405, %v1401
  %v1438 = vpack.c.b16 %v1406, %v1402
  %1471 = vmatprep.subr.bf16.mxu0 %v1436
  %1472 = vmatpush1.bf16.msra.mxu0 %v1435
  %1473 = vmatprep.subr.bf16.mxu0 %v1432
  %1474 = vmatpush1.bf16.msra.mxu0 %v1431
  %1475 = vmatprep.subr.bf16.mxu0 %v1428
  %1476 = vmatpush1.bf16.msra.mxu0 %v1427
  %1477 = vmatprep.subr.bf16.mxu0 %v1424
  %1478 = vmatpush1.bf16.msra.mxu0 %v1423
  %1479 = vmatprep.subr.bf16.mxu0 %v1420
  %1480 = vmatpush1.bf16.msra.mxu0 %v1419
  %1481 = vmatprep.subr.bf16.mxu0 %v1416
  %1482 = vmatpush1.bf16.msra.mxu0 %v1415
  %1483 = vmatprep.subr.bf16.mxu0 %v1412
  %1484 = vmatpush1.bf16.msra.mxu0 %v1411
  %1485 = vmatprep.subr.bf16.mxu0 %v1408
  %1486 = vmatpush1.bf16.msra.mxu0 %v1407
  %1487 = vmatprep.subr.bf16.mxu0 0
  %1488 = vmatpush2.bf16.msra.mxu0 0
  %1489 = vmatprep.subr.bf16.mxu0 0
  %1490 = vmatpush2.bf16.msra.mxu0 0
  %1491 = vmatprep.subr.bf16.mxu0 0
  %1492 = vmatpush2.bf16.msra.mxu0 0
  %1493 = vmatprep.subr.bf16.mxu0 0
  %1494 = vmatpush2.bf16.msra.mxu0 0
  %1495 = vmatprep.subr.bf16.mxu0 0
  %1496 = vmatpush2.bf16.msra.mxu0 0
  %1497 = vmatprep.subr.bf16.mxu0 0
  %1498 = vmatpush2.bf16.msra.mxu0 0
  %1499 = vmatprep.subr.bf16.mxu0 0
  %1500 = vmatpush2.bf16.msra.mxu0 0
  %1501 = vmatprep.subr.bf16.mxu0 0
  %1502 = vmatpush2.bf16.msra.mxu0 0
  %1503 = vmatprep.mubr.bf16.mxu0 0
  %1504 = vmatmul.mubr.bf16.gmra.mxu0 %v1278
  %v1505 = vpop.f32.mrf.mxu0
  %v1506 = vadd.f32 0.0, %v1505
  %v1507 = vpop.f32.mrf.mxu0
  %v1508 = vadd.f32 0.0, %v1507
  %v1509 = vpop.f32.mrf.mxu0
  %v1510 = vpop.f32.mrf.mxu0
  %1511 = vdwg.mxu0
  %1512 = vmatprep.subr.bf16.mxu0 %v1438
  %1513 = vmatpush1.bf16.msra.mxu0 %v1437
  %1514 = vmatprep.subr.bf16.mxu0 %v1434
  %1515 = vmatpush1.bf16.msra.mxu0 %v1433
  %1516 = vmatprep.subr.bf16.mxu0 %v1430
  %1517 = vmatpush1.bf16.msra.mxu0 %v1429
  %1518 = vmatprep.subr.bf16.mxu0 %v1426
  %1519 = vmatpush1.bf16.msra.mxu0 %v1425
  %1520 = vmatprep.subr.bf16.mxu0 %v1422
  %1521 = vmatpush1.bf16.msra.mxu0 %v1421
  %1522 = vmatprep.subr.bf16.mxu0 %v1418
  %1523 = vmatpush1.bf16.msra.mxu0 %v1417
  %1524 = vmatprep.subr.bf16.mxu0 %v1414
  %1525 = vmatpush1.bf16.msra.mxu0 %v1413
  %1526 = vmatprep.subr.bf16.mxu0 %v1410
  %1527 = vmatpush1.bf16.msra.mxu0 %v1409
  %1528 = vmatprep.subr.bf16.mxu0 0
  %1529 = vmatpush2.bf16.msra.mxu0 0
  %1530 = vmatprep.subr.bf16.mxu0 0
  %1531 = vmatpush2.bf16.msra.mxu0 0
  %1532 = vmatprep.subr.bf16.mxu0 0
  %1533 = vmatpush2.bf16.msra.mxu0 0
  %1534 = vmatprep.subr.bf16.mxu0 0
  %1535 = vmatpush2.bf16.msra.mxu0 0
  %1536 = vmatprep.subr.bf16.mxu0 0
  %1537 = vmatpush2.bf16.msra.mxu0 0
  %1538 = vmatprep.subr.bf16.mxu0 0
  %1539 = vmatpush2.bf16.msra.mxu0 0
  %1540 = vmatprep.subr.bf16.mxu0 0
  %1541 = vmatpush2.bf16.msra.mxu0 0
  %1542 = vmatprep.subr.bf16.mxu0 0
  %1543 = vmatpush2.bf16.msra.mxu0 0
  %1544 = vmatprep.mubr.bf16.mxu0 0
  %1545 = vmatmul.mubr.bf16.gmra.mxu0 %v1278
  %v1546 = vpop.f32.mrf.mxu0
  %v1547 = vadd.f32 0.0, %v1546
  %v1548 = vpop.f32.mrf.mxu0
  %v1549 = vadd.f32 0.0, %v1548
  %v1550 = vpop.f32.mrf.mxu0
  %v1551 = vpop.f32.mrf.mxu0
  %1552 = vdwg.mxu0
  %v1553 = vadd.f32 %v1274, %v1506
  %v1554 = vadd.f32 %v1275, %v1508
  %v1555 = vadd.f32 %v1276, %v1547
  %v1556 = vadd.f32 %v1277, %v1549
  %v1557 = vxor.u32 %v1553, 2147483648
  %v1558 = vmul.f32 %v1557, 1.442695
  %v1559 = vpow.pop %v1558
  %v1560 = vadd.f32 %v1559, 1.0
  %v1561 = vrcp.pop %v1560
  %v1562 = vmul.f32 1.0, %v1561
  %v1563 = vxor.u32 %v1554, 2147483648
  %v1564 = vmul.f32 %v1563, 1.442695
  %v1565 = vpow.pop %v1564
  %v1566 = vadd.f32 %v1565, 1.0
  %v1567 = vrcp.pop %v1566
  %v1568 = vmul.f32 1.0, %v1567
  %v1569 = vtanh.pop %v1555
  %v1570 = vxor.u32 %v1556, 2147483648
  %v1571 = vmul.f32 %v1570, 1.442695
  %v1572 = vpow.pop %v1571
  %v1573 = vadd.f32 %v1572, 1.0
  %v1574 = vrcp.pop %v1573
  %v1575 = vmul.f32 1.0, %v1574
  %v1576 = vmul.f32 %v1568, %v1056
  %v1577 = vmul.f32 %v1562, %v1569
  %v1578 = vadd.f32 %v1576, %v1577
  %v1579 = vtanh.pop %v1578
  %v1580 = vmul.f32 %v1575, %v1579
  %s1581 = scalar_lea.vmem %s0, 80
  %v1582 = vld [vmem:[%s1581] sm:$0xff]
  %v1583 = vld [vmem:[%s1581 + $0x8] sm:$0xff]
  %v1584 = vunpack.c.l.bf16 %v1582
  %v1585 = vunpack.c.h.bf16 %v1582
  %v1586 = vunpack.c.l.bf16 %v1583
  %v1587 = vunpack.c.h.bf16 %v1583
  %v1588 = vpack.c.bf16 %v1580, %v1580
  %1589 = vmatprep.subr.bf16.mxu0 %v1436
  %1590 = vmatpush1.bf16.msra.mxu0 %v1435
  %1591 = vmatprep.subr.bf16.mxu0 %v1432
  %1592 = vmatpush1.bf16.msra.mxu0 %v1431
  %1593 = vmatprep.subr.bf16.mxu0 %v1428
  %1594 = vmatpush1.bf16.msra.mxu0 %v1427
  %1595 = vmatprep.subr.bf16.mxu0 %v1424
  %1596 = vmatpush1.bf16.msra.mxu0 %v1423
  %1597 = vmatprep.subr.bf16.mxu0 %v1420
  %1598 = vmatpush1.bf16.msra.mxu0 %v1419
  %1599 = vmatprep.subr.bf16.mxu0 %v1416
  %1600 = vmatpush1.bf16.msra.mxu0 %v1415
  %1601 = vmatprep.subr.bf16.mxu0 %v1412
  %1602 = vmatpush1.bf16.msra.mxu0 %v1411
  %1603 = vmatprep.subr.bf16.mxu0 %v1408
  %1604 = vmatpush1.bf16.msra.mxu0 %v1407
  %1605 = vmatprep.subr.bf16.mxu0 0
  %1606 = vmatpush2.bf16.msra.mxu0 0
  %1607 = vmatprep.subr.bf16.mxu0 0
  %1608 = vmatpush2.bf16.msra.mxu0 0
  %1609 = vmatprep.subr.bf16.mxu0 0
  %1610 = vmatpush2.bf16.msra.mxu0 0
  %1611 = vmatprep.subr.bf16.mxu0 0
  %1612 = vmatpush2.bf16.msra.mxu0 0
  %1613 = vmatprep.subr.bf16.mxu0 0
  %1614 = vmatpush2.bf16.msra.mxu0 0
  %1615 = vmatprep.subr.bf16.mxu0 0
  %1616 = vmatpush2.bf16.msra.mxu0 0
  %1617 = vmatprep.subr.bf16.mxu0 0
  %1618 = vmatpush2.bf16.msra.mxu0 0
  %1619 = vmatprep.subr.bf16.mxu0 0
  %1620 = vmatpush2.bf16.msra.mxu0 0
  %1621 = vmatprep.mubr.bf16.mxu0 0
  %1622 = vmatmul.mubr.bf16.gmra.mxu0 %v1588
  %v1623 = vpop.f32.mrf.mxu0
  %v1624 = vadd.f32 0.0, %v1623
  %v1625 = vpop.f32.mrf.mxu0
  %v1626 = vadd.f32 0.0, %v1625
  %v1627 = vpop.f32.mrf.mxu0
  %v1628 = vpop.f32.mrf.mxu0
  %1629 = vdwg.mxu0
  %1630 = vmatprep.subr.bf16.mxu0 %v1438
  %1631 = vmatpush1.bf16.msra.mxu0 %v1437
  %1632 = vmatprep.subr.bf16.mxu0 %v1434
  %1633 = vmatpush1.bf16.msra.mxu0 %v1433
  %1634 = vmatprep.subr.bf16.mxu0 %v1430
  %1635 = vmatpush1.bf16.msra.mxu0 %v1429
  %1636 = vmatprep.subr.bf16.mxu0 %v1426
  %1637 = vmatpush1.bf16.msra.mxu0 %v1425
  %1638 = vmatprep.subr.bf16.mxu0 %v1422
  %1639 = vmatpush1.bf16.msra.mxu0 %v1421
  %1640 = vmatprep.subr.bf16.mxu0 %v1418
  %1641 = vmatpush1.bf16.msra.mxu0 %v1417
  %1642 = vmatprep.subr.bf16.mxu0 %v1414
  %1643 = vmatpush1.bf16.msra.mxu0 %v1413
  %1644 = vmatprep.subr.bf16.mxu0 %v1410
  %1645 = vmatpush1.bf16.msra.mxu0 %v1409
  %1646 = vmatprep.subr.bf16.mxu0 0
  %1647 = vmatpush2.bf16.msra.mxu0 0
  %1648 = vmatprep.subr.bf16.mxu0 0
  %1649 = vmatpush2.bf16.msra.mxu0 0
  %1650 = vmatprep.subr.bf16.mxu0 0
  %1651 = vmatpush2.bf16.msra.mxu0 0
  %1652 = vmatprep.subr.bf16.mxu0 0
  %1653 = vmatpush2.bf16.msra.mxu0 0
  %1654 = vmatprep.subr.bf16.mxu0 0
  %1655 = vmatpush2.bf16.msra.mxu0 0
  %1656 = vmatprep.subr.bf16.mxu0 0
  %1657 = vmatpush2.bf16.msra.mxu0 0
  %1658 = vmatprep.subr.bf16.mxu0 0
  %1659 = vmatpush2.bf16.msra.mxu0 0
  %1660 = vmatprep.subr.bf16.mxu0 0
  %1661 = vmatpush2.bf16.msra.mxu0 0
  %1662 = vmatprep.mubr.bf16.mxu0 0
  %1663 = vmatmul.mubr.bf16.gmra.mxu0 %v1588
  %v1664 = vpop.f32.mrf.mxu0
  %v1665 = vadd.f32 0.0, %v1664
  %v1666 = vpop.f32.mrf.mxu0
  %v1667 = vadd.f32 0.0, %v1666
  %v1668 = vpop.f32.mrf.mxu0
  %v1669 = vpop.f32.mrf.mxu0
  %1670 = vdwg.mxu0
  %v1671 = vadd.f32 %v1584, %v1624
  %v1672 = vadd.f32 %v1585, %v1626
  %v1673 = vadd.f32 %v1586, %v1665
  %v1674 = vadd.f32 %v1587, %v1667
  %v1675 = vxor.u32 %v1671, 2147483648
  %v1676 = vmul.f32 %v1675, 1.442695
  %v1677 = vpow.pop %v1676
  %v1678 = vadd.f32 %v1677, 1.0
  %v1679 = vrcp.pop %v1678
  %v1680 = vmul.f32 1.0, %v1679
  %v1681 = vxor.u32 %v1672, 2147483648
  %v1682 = vmul.f32 %v1681, 1.442695
  %v1683 = vpow.pop %v1682
  %v1684 = vadd.f32 %v1683, 1.0
  %v1685 = vrcp.pop %v1684
  %v1686 = vmul.f32 1.0, %v1685
  %v1687 = vtanh.pop %v1673
  %v1688 = vxor.u32 %v1674, 2147483648
  %v1689 = vmul.f32 %v1688, 1.442695
  %v1690 = vpow.pop %v1689
  %v1691 = vadd.f32 %v1690, 1.0
  %v1692 = vrcp.pop %v1691
  %v1693 = vmul.f32 1.0, %v1692
  %v1694 = vmul.f32 %v1686, %v1578
  %v1695 = vmul.f32 %v1680, %v1687
  %v1696 = vadd.f32 %v1694, %v1695
  %v1697 = vtanh.pop %v1696
  %v1698 = vmul.f32 %v1693, %v1697
  %v1700 = vcombine.high %v1580, %v1580
  %v1702 = vunpack.c.l.s4 1966171168
  %v1703 = vunpack.c.0.s8 %v1702
  %v1704 = vlaneseq
  %v1705 = vshrl.u32 %v1704, 7
  %v1706 = vsub.s32 %v1703, %v1705
  %v1707 = vrot.slane %v1580, %v1706
  %v1709 = vunpack.c.l.s4 1966171168
  %v1710 = vunpack.c.0.s8 %v1709
  %v1711 = vlaneseq
  %v1712 = vshrl.u32 %v1711, 7
  %v1713 = vsub.s32 %v1710, %v1712
  %v1714 = vrot.slane %v1700, %v1713
  %v1715 = vcombine.high %v1707, %v1707
  %v1716 = vcombine.high %v1714, %v1714
  %v1718 = vunpack.c.l.s4 1966171168
  %v1719 = vunpack.c.0.s8 %v1718
  %v1720 = vlaneseq
  %v1721 = vshrl.u32 %v1720, 7
  %v1722 = vsub.s32 %v1719, %v1721
  %v1723 = vrot.slane %v1707, %v1722
  %v1725 = vunpack.c.l.s4 1966171168
  %v1726 = vunpack.c.0.s8 %v1725
  %v1727 = vlaneseq
  %v1728 = vshrl.u32 %v1727, 7
  %v1729 = vsub.s32 %v1726, %v1728
  %v1730 = vrot.slane %v1714, %v1729
  %v1732 = vunpack.c.l.s4 1966171168
  %v1733 = vunpack.c.0.s8 %v1732
  %v1734 = vlaneseq
  %v1735 = vshrl.u32 %v1734, 7
  %v1736 = vsub.s32 %v1733, %v1735
  %v1737 = vrot.slane %v1715, %v1736
  %v1739 = vunpack.c.l.s4 1966171168
  %v1740 = vunpack.c.0.s8 %v1739
  %v1741 = vlaneseq
  %v1742 = vshrl.u32 %v1741, 7
  %v1743 = vsub.s32 %v1740, %v1742
  %v1744 = vrot.slane %v1716, %v1743
  %v1745 = vcombine.high %v1723, %v1723
  %v1746 = vcombine.high %v1730, %v1730
  %v1747 = vcombine.high %v1737, %v1737
  %v1748 = vcombine.high %v1744, %v1744
  %v1758 = vcombine.high %v1698, %v1698
  %v1760 = vunpack.c.l.s4 1966171168
  %v1761 = vunpack.c.0.s8 %v1760
  %v1762 = vlaneseq
  %v1763 = vshrl.u32 %v1762, 7
  %v1764 = vsub.s32 %v1761, %v1763
  %v1765 = vrot.slane %v1698, %v1764
  %v1767 = vunpack.c.l.s4 1966171168
  %v1768 = vunpack.c.0.s8 %v1767
  %v1769 = vlaneseq
  %v1770 = vshrl.u32 %v1769, 7
  %v1771 = vsub.s32 %v1768, %v1770
  %v1772 = vrot.slane %v1758, %v1771
  %v1773 = vcombine.high %v1765, %v1765
  %v1774 = vcombine.high %v1772, %v1772
  %v1776 = vunpack.c.l.s4 1966171168
  %v1777 = vunpack.c.0.s8 %v1776
  %v1778 = vlaneseq
  %v1779 = vshrl.u32 %v1778, 7
  %v1780 = vsub.s32 %v1777, %v1779
  %v1781 = vrot.slane %v1765, %v1780
  %v1783 = vunpack.c.l.s4 1966171168
  %v1784 = vunpack.c.0.s8 %v1783
  %v1785 = vlaneseq
  %v1786 = vshrl.u32 %v1785, 7
  %v1787 = vsub.s32 %v1784, %v1786
  %v1788 = vrot.slane %v1772, %v1787
  %v1790 = vunpack.c.l.s4 1966171168
  %v1791 = vunpack.c.0.s8 %v1790
  %v1792 = vlaneseq
  %v1793 = vshrl.u32 %v1792, 7
  %v1794 = vsub.s32 %v1791, %v1793
  %v1795 = vrot.slane %v1773, %v1794
  %v1797 = vunpack.c.l.s4 1966171168
  %v1798 = vunpack.c.0.s8 %v1797
  %v1799 = vlaneseq
  %v1800 = vshrl.u32 %v1799, 7
  %v1801 = vsub.s32 %v1798, %v1800
  %v1802 = vrot.slane %v1774, %v1801
  %v1803 = vcombine.high %v1781, %v1781
  %v1804 = vcombine.high %v1788, %v1788
  %v1805 = vcombine.high %v1795, %v1795
  %v1806 = vcombine.high %v1802, %v1802
  %v1807 = vlaneseq
  %v1808 = vshrl.u32 %v1807, 7
  %v1809 = vsub.s32 0, %v1808
  %v1810 = vrot.slane %v1781, %v1809
  %v1811 = vlaneseq
  %v1812 = vshrl.u32 %v1811, 7
  %v1813 = vsub.s32 0, %v1812
  %v1814 = vrot.slane %v1795, %v1813
  %v1815 = vlaneseq
  %v1816 = vshrl.u32 %v1815, 7
  %v1817 = vsub.s32 0, %v1816
  %v1818 = vrot.slane %v1803, %v1817
  %v1819 = vlaneseq
  %v1820 = vshrl.u32 %v1819, 7
  %v1821 = vsub.s32 0, %v1820
  %v1822 = vrot.slane %v1805, %v1821
  %v1823 = vlaneseq
  %v1824 = vshrl.u32 %v1823, 7
  %v1825 = vsub.s32 0, %v1824
  %v1826 = vrot.slane %v1788, %v1825
  %v1827 = vlaneseq
  %v1828 = vshrl.u32 %v1827, 7
  %v1829 = vsub.s32 0, %v1828
  %v1830 = vrot.slane %v1802, %v1829
  %v1831 = vlaneseq
  %v1832 = vshrl.u32 %v1831, 7
  %v1833 = vsub.s32 0, %v1832
  %v1834 = vrot.slane %v1804, %v1833
  %v1835 = vlaneseq
  %v1836 = vshrl.u32 %v1835, 7
  %v1837 = vsub.s32 0, %v1836
  %v1838 = vrot.slane %v1806, %v1837
  %v1847 = vsel %vm606, %v1723, %v1810
  %v1848 = vsel %vm606, %v1737, %v1814
  %v1849 = vsel %vm606, %v1745, %v1818
  %v1850 = vsel %vm606, %v1747, %v1822
  %v1851 = vsel %vm606, %v1730, %v1826
  %v1852 = vsel %vm606, %v1744, %v1830
  %v1853 = vsel %vm606, %v1746, %v1834
  %v1854 = vsel %vm606, %v1748, %v1838
  %v1855 = vpack.c.bf16 %v1847, %v1847
  %v1856 = vpack.c.bf16 %v1848, %v1848
  %v1857 = vpack.c.bf16 %v1849, %v1849
  %v1858 = vpack.c.bf16 %v1850, %v1850
  %v1859 = vpack.c.bf16 %v1851, %v1851
  %v1860 = vpack.c.bf16 %v1852, %v1852
  %v1861 = vpack.c.bf16 %v1853, %v1853
  %v1862 = vpack.c.bf16 %v1854, %v1854
  %v1871 = vunpack.c.l.b16 %v1855
  %v1872 = vunpack.c.l.b16 %v1856
  %v1873 = vunpack.c.l.b16 %v1857
  %v1874 = vunpack.c.l.b16 %v1858
  %v1875 = vunpack.c.l.b16 %v1859
  %v1876 = vunpack.c.l.b16 %v1860
  %v1877 = vunpack.c.l.b16 %v1861
  %v1878 = vunpack.c.l.b16 %v1862
  %v1879 = vpack.c.b16 %v1871, %v1871
  %v1880 = vpack.c.b16 %v1872, %v1872
  %v1881 = vpack.c.b16 %v1873, %v1873
  %v1882 = vpack.c.b16 %v1874, %v1874
  %v1883 = vpack.c.b16 %v1875, %v1875
  %v1884 = vpack.c.b16 %v1876, %v1876
  %v1885 = vpack.c.b16 %v1877, %v1877
  %v1886 = vpack.c.b16 %v1878, %v1878
  %v1887 = vrot.slane %v1879, 6
  %v1888 = vrot.slane %v1880, 6
  %v1889 = vrot.slane %v1881, 6
  %v1890 = vrot.slane %v1882, 6
  %v1891 = vrot.slane %v1883, 6
  %v1892 = vrot.slane %v1884, 6
  %v1893 = vrot.slane %v1885, 6
  %v1894 = vrot.slane %v1886, 6
  %1903 = vst [vmem:[%s4] sm:$0x4] %v1887
  %1904 = vst [vmem:[%s4 + $0x10] sm:$0x4] %v1888
  %1905 = vst [vmem:[%s4 + $0x20] sm:$0x4] %v1889
  %1906 = vst [vmem:[%s4 + $0x30] sm:$0x4] %v1890
  %1907 = vst [vmem:[%s4 + $0x40] sm:$0x4] %v1891
  %1908 = vst [vmem:[%s4 + $0x50] sm:$0x4] %v1892
  %1909 = vst [vmem:[%s4 + $0x60] sm:$0x4] %v1893
  %1910 = vst [vmem:[%s4 + $0x70] sm:$0x4] %v1894
  %s1911 = scalar_lea.vmem %s0, 96
  %v1912 = vld [vmem:[%s1911] sm:$0xff]
  %v1913 = vld [vmem:[%s1911 + $0x8] sm:$0xff]
  %v1914 = vunpack.c.l.bf16 %v1912
  %v1915 = vunpack.c.h.bf16 %v1912
  %v1916 = vunpack.c.l.bf16 %v1913
  %v1917 = vunpack.c.h.bf16 %v1913
  %v1918 = vpack.c.bf16 %v1698, %v1698
  %v1919 = vld [vmem:[%s1] sm:$0xff]
  %v1920 = vld [vmem:[%s1 + $0x8] sm:$0xff]
  %v1921 = vld [vmem:[%s1 + $0x10] sm:$0xff]
  %v1922 = vld [vmem:[%s1 + $0x18] sm:$0xff]
  %v1923 = vld [vmem:[%s1 + $0x20] sm:$0xff]
  %v1924 = vld [vmem:[%s1 + $0x28] sm:$0xff]
  %v1925 = vld [vmem:[%s1 + $0x30] sm:$0xff]
  %v1926 = vld [vmem:[%s1 + $0x38] sm:$0xff]
  %v1927 = vld [vmem:[%s1 + $0x40] sm:$0xff]
  %v1928 = vld [vmem:[%s1 + $0x48] sm:$0xff]
  %v1929 = vld [vmem:[%s1 + $0x50] sm:$0xff]
  %v1930 = vld [vmem:[%s1 + $0x58] sm:$0xff]
  %v1931 = vld [vmem:[%s1 + $0x60] sm:$0xff]
  %v1932 = vld [vmem:[%s1 + $0x68] sm:$0xff]
  %v1933 = vld [vmem:[%s1 + $0x70] sm:$0xff]
  %v1934 = vld [vmem:[%s1 + $0x78] sm:$0xff]
  %v1935 = vld [vmem:[%s1 + $0x80] sm:$0xff]
  %v1936 = vld [vmem:[%s1 + $0x88] sm:$0xff]
  %v1937 = vld [vmem:[%s1 + $0x90] sm:$0xff]
  %v1938 = vld [vmem:[%s1 + $0x98] sm:$0xff]
  %v1939 = vld [vmem:[%s1 + $0xa0] sm:$0xff]
  %v1940 = vld [vmem:[%s1 + $0xa8] sm:$0xff]
  %v1941 = vld [vmem:[%s1 + $0xb0] sm:$0xff]
  %v1942 = vld [vmem:[%s1 + $0xb8] sm:$0xff]
  %v1943 = vld [vmem:[%s1 + $0xc0] sm:$0xff]
  %v1944 = vld [vmem:[%s1 + $0xc8] sm:$0xff]
  %v1945 = vld [vmem:[%s1 + $0xd0] sm:$0xff]
  %v1946 = vld [vmem:[%s1 + $0xd8] sm:$0xff]
  %v1947 = vld [vmem:[%s1 + $0xe0] sm:$0xff]
  %v1948 = vld [vmem:[%s1 + $0xe8] sm:$0xff]
  %v1949 = vld [vmem:[%s1 + $0xf0] sm:$0xff]
  %v1950 = vld [vmem:[%s1 + $0xf8] sm:$0xff]
  %v1983 = vunpack.c.l.b16 %v1919
  %v1984 = vunpack.c.h.b16 %v1919
  %v1985 = vunpack.c.l.b16 %v1920
  %v1986 = vunpack.c.h.b16 %v1920
  %v1987 = vunpack.c.l.b16 %v1921
  %v1988 = vunpack.c.h.b16 %v1921
  %v1989 = vunpack.c.l.b16 %v1922
  %v1990 = vunpack.c.h.b16 %v1922
  %v1991 = vunpack.c.l.b16 %v1923
  %v1992 = vunpack.c.h.b16 %v1923
  %v1993 = vunpack.c.l.b16 %v1924
  %v1994 = vunpack.c.h.b16 %v1924
  %v1995 = vunpack.c.l.b16 %v1925
  %v1996 = vunpack.c.h.b16 %v1925
  %v1997 = vunpack.c.l.b16 %v1926
  %v1998 = vunpack.c.h.b16 %v1926
  %v1999 = vunpack.c.l.b16 %v1927
  %v2000 = vunpack.c.h.b16 %v1927
  %v2001 = vunpack.c.l.b16 %v1928
  %v2002 = vunpack.c.h.b16 %v1928
  %v2003 = vunpack.c.l.b16 %v1929
  %v2004 = vunpack.c.h.b16 %v1929
  %v2005 = vunpack.c.l.b16 %v1930
  %v2006 = vunpack.c.h.b16 %v1930
  %v2007 = vunpack.c.l.b16 %v1931
  %v2008 = vunpack.c.h.b16 %v1931
  %v2009 = vunpack.c.l.b16 %v1932
  %v2010 = vunpack.c.h.b16 %v1932
  %v2011 = vunpack.c.l.b16 %v1933
  %v2012 = vunpack.c.h.b16 %v1933
  %v2013 = vunpack.c.l.b16 %v1934
  %v2014 = vunpack.c.h.b16 %v1934
  %v2015 = vunpack.c.l.b16 %v1935
  %v2016 = vunpack.c.h.b16 %v1935
  %v2017 = vunpack.c.l.b16 %v1936
  %v2018 = vunpack.c.h.b16 %v1936
  %v2019 = vunpack.c.l.b16 %v1937
  %v2020 = vunpack.c.h.b16 %v1937
  %v2021 = vunpack.c.l.b16 %v1938
  %v2022 = vunpack.c.h.b16 %v1938
  %v2023 = vunpack.c.l.b16 %v1939
  %v2024 = vunpack.c.h.b16 %v1939
  %v2025 = vunpack.c.l.b16 %v1940
  %v2026 = vunpack.c.h.b16 %v1940
  %v2027 = vunpack.c.l.b16 %v1941
  %v2028 = vunpack.c.h.b16 %v1941
  %v2029 = vunpack.c.l.b16 %v1942
  %v2030 = vunpack.c.h.b16 %v1942
  %v2031 = vunpack.c.l.b16 %v1943
  %v2032 = vunpack.c.h.b16 %v1943
  %v2033 = vunpack.c.l.b16 %v1944
  %v2034 = vunpack.c.h.b16 %v1944
  %v2035 = vunpack.c.l.b16 %v1945
  %v2036 = vunpack.c.h.b16 %v1945
  %v2037 = vunpack.c.l.b16 %v1946
  %v2038 = vunpack.c.h.b16 %v1946
  %v2039 = vunpack.c.l.b16 %v1947
  %v2040 = vunpack.c.h.b16 %v1947
  %v2041 = vunpack.c.l.b16 %v1948
  %v2042 = vunpack.c.h.b16 %v1948
  %v2043 = vunpack.c.l.b16 %v1949
  %v2044 = vunpack.c.h.b16 %v1949
  %v2045 = vunpack.c.l.b16 %v1950
  %v2046 = vunpack.c.h.b16 %v1950
  %v2047 = vpack.c.b16 %v1987, %v1983
  %v2048 = vpack.c.b16 %v1988, %v1984
  %v2049 = vpack.c.b16 %v1989, %v1985
  %v2050 = vpack.c.b16 %v1990, %v1986
  %v2051 = vpack.c.b16 %v1995, %v1991
  %v2052 = vpack.c.b16 %v1996, %v1992
  %v2053 = vpack.c.b16 %v1997, %v1993
  %v2054 = vpack.c.b16 %v1998, %v1994
  %v2055 = vpack.c.b16 %v2003, %v1999
  %v2056 = vpack.c.b16 %v2004, %v2000
  %v2057 = vpack.c.b16 %v2005, %v2001
  %v2058 = vpack.c.b16 %v2006, %v2002
  %v2059 = vpack.c.b16 %v2011, %v2007
  %v2060 = vpack.c.b16 %v2012, %v2008
  %v2061 = vpack.c.b16 %v2013, %v2009
  %v2062 = vpack.c.b16 %v2014, %v2010
  %v2063 = vpack.c.b16 %v2019, %v2015
  %v2064 = vpack.c.b16 %v2020, %v2016
  %v2065 = vpack.c.b16 %v2021, %v2017
  %v2066 = vpack.c.b16 %v2022, %v2018
  %v2067 = vpack.c.b16 %v2027, %v2023
  %v2068 = vpack.c.b16 %v2028, %v2024
  %v2069 = vpack.c.b16 %v2029, %v2025
  %v2070 = vpack.c.b16 %v2030, %v2026
  %v2071 = vpack.c.b16 %v2035, %v2031
  %v2072 = vpack.c.b16 %v2036, %v2032
  %v2073 = vpack.c.b16 %v2037, %v2033
  %v2074 = vpack.c.b16 %v2038, %v2034
  %v2075 = vpack.c.b16 %v2043, %v2039
  %v2076 = vpack.c.b16 %v2044, %v2040
  %v2077 = vpack.c.b16 %v2045, %v2041
  %v2078 = vpack.c.b16 %v2046, %v2042
  %2111 = vmatprep.subr.bf16.mxu0 %v2076
  %2112 = vmatpush1.bf16.msra.mxu0 %v2075
  %2113 = vmatprep.subr.bf16.mxu0 %v2072
  %2114 = vmatpush1.bf16.msra.mxu0 %v2071
  %2115 = vmatprep.subr.bf16.mxu0 %v2068
  %2116 = vmatpush1.bf16.msra.mxu0 %v2067
  %2117 = vmatprep.subr.bf16.mxu0 %v2064
  %2118 = vmatpush1.bf16.msra.mxu0 %v2063
  %2119 = vmatprep.subr.bf16.mxu0 %v2060
  %2120 = vmatpush1.bf16.msra.mxu0 %v2059
  %2121 = vmatprep.subr.bf16.mxu0 %v2056
  %2122 = vmatpush1.bf16.msra.mxu0 %v2055
  %2123 = vmatprep.subr.bf16.mxu0 %v2052
  %2124 = vmatpush1.bf16.msra.mxu0 %v2051
  %2125 = vmatprep.subr.bf16.mxu0 %v2048
  %2126 = vmatpush1.bf16.msra.mxu0 %v2047
  %2127 = vmatprep.subr.bf16.mxu0 0
  %2128 = vmatpush2.bf16.msra.mxu0 0
  %2129 = vmatprep.subr.bf16.mxu0 0
  %2130 = vmatpush2.bf16.msra.mxu0 0
  %2131 = vmatprep.subr.bf16.mxu0 0
  %2132 = vmatpush2.bf16.msra.mxu0 0
  %2133 = vmatprep.subr.bf16.mxu0 0
  %2134 = vmatpush2.bf16.msra.mxu0 0
  %2135 = vmatprep.subr.bf16.mxu0 0
  %2136 = vmatpush2.bf16.msra.mxu0 0
  %2137 = vmatprep.subr.bf16.mxu0 0
  %2138 = vmatpush2.bf16.msra.mxu0 0
  %2139 = vmatprep.subr.bf16.mxu0 0
  %2140 = vmatpush2.bf16.msra.mxu0 0
  %2141 = vmatprep.subr.bf16.mxu0 0
  %2142 = vmatpush2.bf16.msra.mxu0 0
  %2143 = vmatprep.mubr.bf16.mxu0 0
  %2144 = vmatmul.mubr.bf16.gmra.mxu0 %v1918
  %v2145 = vpop.f32.mrf.mxu0
  %v2146 = vadd.f32 0.0, %v2145
  %v2147 = vpop.f32.mrf.mxu0
  %v2148 = vadd.f32 0.0, %v2147
  %v2149 = vpop.f32.mrf.mxu0
  %v2150 = vpop.f32.mrf.mxu0
  %2151 = vdwg.mxu0
  %2152 = vmatprep.subr.bf16.mxu0 %v2078
  %2153 = vmatpush1.bf16.msra.mxu0 %v2077
  %2154 = vmatprep.subr.bf16.mxu0 %v2074
  %2155 = vmatpush1.bf16.msra.mxu0 %v2073
  %2156 = vmatprep.subr.bf16.mxu0 %v2070
  %2157 = vmatpush1.bf16.msra.mxu0 %v2069
  %2158 = vmatprep.subr.bf16.mxu0 %v2066
  %2159 = vmatpush1.bf16.msra.mxu0 %v2065
  %2160 = vmatprep.subr.bf16.mxu0 %v2062
  %2161 = vmatpush1.bf16.msra.mxu0 %v2061
  %2162 = vmatprep.subr.bf16.mxu0 %v2058
  %2163 = vmatpush1.bf16.msra.mxu0 %v2057
  %2164 = vmatprep.subr.bf16.mxu0 %v2054
  %2165 = vmatpush1.bf16.msra.mxu0 %v2053
  %2166 = vmatprep.subr.bf16.mxu0 %v2050
  %2167 = vmatpush1.bf16.msra.mxu0 %v2049
  %2168 = vmatprep.subr.bf16.mxu0 0
  %2169 = vmatpush2.bf16.msra.mxu0 0
  %2170 = vmatprep.subr.bf16.mxu0 0
  %2171 = vmatpush2.bf16.msra.mxu0 0
  %2172 = vmatprep.subr.bf16.mxu0 0
  %2173 = vmatpush2.bf16.msra.mxu0 0
  %2174 = vmatprep.subr.bf16.mxu0 0
  %2175 = vmatpush2.bf16.msra.mxu0 0
  %2176 = vmatprep.subr.bf16.mxu0 0
  %2177 = vmatpush2.bf16.msra.mxu0 0
  %2178 = vmatprep.subr.bf16.mxu0 0
  %2179 = vmatpush2.bf16.msra.mxu0 0
  %2180 = vmatprep.subr.bf16.mxu0 0
  %2181 = vmatpush2.bf16.msra.mxu0 0
  %2182 = vmatprep.subr.bf16.mxu0 0
  %2183 = vmatpush2.bf16.msra.mxu0 0
  %2184 = vmatprep.mubr.bf16.mxu0 0
  %2185 = vmatmul.mubr.bf16.gmra.mxu0 %v1918
  %v2186 = vpop.f32.mrf.mxu0
  %v2187 = vadd.f32 0.0, %v2186
  %v2188 = vpop.f32.mrf.mxu0
  %v2189 = vadd.f32 0.0, %v2188
  %v2190 = vpop.f32.mrf.mxu0
  %v2191 = vpop.f32.mrf.mxu0
  %2192 = vdwg.mxu0
  %v2193 = vadd.f32 %v1914, %v2146
  %v2194 = vadd.f32 %v1915, %v2148
  %v2195 = vadd.f32 %v1916, %v2187
  %v2196 = vadd.f32 %v1917, %v2189
  %v2197 = vxor.u32 %v2193, 2147483648
  %v2198 = vmul.f32 %v2197, 1.442695
  %v2199 = vpow.pop %v2198
  %v2200 = vadd.f32 %v2199, 1.0
  %v2201 = vrcp.pop %v2200
  %v2202 = vmul.f32 1.0, %v2201
  %v2203 = vxor.u32 %v2194, 2147483648
  %v2204 = vmul.f32 %v2203, 1.442695
  %v2205 = vpow.pop %v2204
  %v2206 = vadd.f32 %v2205, 1.0
  %v2207 = vrcp.pop %v2206
  %v2208 = vmul.f32 1.0, %v2207
  %v2209 = vtanh.pop %v2195
  %v2210 = vxor.u32 %v2196, 2147483648
  %v2211 = vmul.f32 %v2210, 1.442695
  %v2212 = vpow.pop %v2211
  %v2213 = vadd.f32 %v2212, 1.0
  %v2214 = vrcp.pop %v2213
  %v2215 = vmul.f32 1.0, %v2214
  %v2216 = vmul.f32 %v2208, %v1696
  %v2217 = vmul.f32 %v2202, %v2209
  %v2218 = vadd.f32 %v2216, %v2217
  %v2219 = vtanh.pop %v2218
  %v2220 = vmul.f32 %v2215, %v2219
  %s2221 = scalar_lea.vmem %s0, 112
  %v2222 = vld [vmem:[%s2221] sm:$0xff]
  %v2223 = vld [vmem:[%s2221 + $0x8] sm:$0xff]
  %v2224 = vunpack.c.l.bf16 %v2222
  %v2225 = vunpack.c.h.bf16 %v2222
  %v2226 = vunpack.c.l.bf16 %v2223
  %v2227 = vunpack.c.h.bf16 %v2223
  %v2228 = vpack.c.bf16 %v2220, %v2220
  %2229 = vmatprep.subr.bf16.mxu0 %v2076
  %2230 = vmatpush1.bf16.msra.mxu0 %v2075
  %2231 = vmatprep.subr.bf16.mxu0 %v2072
  %2232 = vmatpush1.bf16.msra.mxu0 %v2071
  %2233 = vmatprep.subr.bf16.mxu0 %v2068
  %2234 = vmatpush1.bf16.msra.mxu0 %v2067
  %2235 = vmatprep.subr.bf16.mxu0 %v2064
  %2236 = vmatpush1.bf16.msra.mxu0 %v2063
  %2237 = vmatprep.subr.bf16.mxu0 %v2060
  %2238 = vmatpush1.bf16.msra.mxu0 %v2059
  %2239 = vmatprep.subr.bf16.mxu0 %v2056
  %2240 = vmatpush1.bf16.msra.mxu0 %v2055
  %2241 = vmatprep.subr.bf16.mxu0 %v2052
  %2242 = vmatpush1.bf16.msra.mxu0 %v2051
  %2243 = vmatprep.subr.bf16.mxu0 %v2048
  %2244 = vmatpush1.bf16.msra.mxu0 %v2047
  %2245 = vmatprep.subr.bf16.mxu0 0
  %2246 = vmatpush2.bf16.msra.mxu0 0
  %2247 = vmatprep.subr.bf16.mxu0 0
  %2248 = vmatpush2.bf16.msra.mxu0 0
  %2249 = vmatprep.subr.bf16.mxu0 0
  %2250 = vmatpush2.bf16.msra.mxu0 0
  %2251 = vmatprep.subr.bf16.mxu0 0
  %2252 = vmatpush2.bf16.msra.mxu0 0
  %2253 = vmatprep.subr.bf16.mxu0 0
  %2254 = vmatpush2.bf16.msra.mxu0 0
  %2255 = vmatprep.subr.bf16.mxu0 0
  %2256 = vmatpush2.bf16.msra.mxu0 0
  %2257 = vmatprep.subr.bf16.mxu0 0
  %2258 = vmatpush2.bf16.msra.mxu0 0
  %2259 = vmatprep.subr.bf16.mxu0 0
  %2260 = vmatpush2.bf16.msra.mxu0 0
  %2261 = vmatprep.mubr.bf16.mxu0 0
  %2262 = vmatmul.mubr.bf16.gmra.mxu0 %v2228
  %v2263 = vpop.f32.mrf.mxu0
  %v2264 = vadd.f32 0.0, %v2263
  %v2265 = vpop.f32.mrf.mxu0
  %v2266 = vadd.f32 0.0, %v2265
  %v2267 = vpop.f32.mrf.mxu0
  %v2268 = vpop.f32.mrf.mxu0
  %2269 = vdwg.mxu0
  %2270 = vmatprep.subr.bf16.mxu0 %v2078
  %2271 = vmatpush1.bf16.msra.mxu0 %v2077
  %2272 = vmatprep.subr.bf16.mxu0 %v2074
  %2273 = vmatpush1.bf16.msra.mxu0 %v2073
  %2274 = vmatprep.subr.bf16.mxu0 %v2070
  %2275 = vmatpush1.bf16.msra.mxu0 %v2069
  %2276 = vmatprep.subr.bf16.mxu0 %v2066
  %2277 = vmatpush1.bf16.msra.mxu0 %v2065
  %2278 = vmatprep.subr.bf16.mxu0 %v2062
  %2279 = vmatpush1.bf16.msra.mxu0 %v2061
  %2280 = vmatprep.subr.bf16.mxu0 %v2058
  %2281 = vmatpush1.bf16.msra.mxu0 %v2057
  %2282 = vmatprep.subr.bf16.mxu0 %v2054
  %2283 = vmatpush1.bf16.msra.mxu0 %v2053
  %2284 = vmatprep.subr.bf16.mxu0 %v2050
  %2285 = vmatpush1.bf16.msra.mxu0 %v2049
  %2286 = vmatprep.subr.bf16.mxu0 0
  %2287 = vmatpush2.bf16.msra.mxu0 0
  %2288 = vmatprep.subr.bf16.mxu0 0
  %2289 = vmatpush2.bf16.msra.mxu0 0
  %2290 = vmatprep.subr.bf16.mxu0 0
  %2291 = vmatpush2.bf16.msra.mxu0 0
  %2292 = vmatprep.subr.bf16.mxu0 0
  %2293 = vmatpush2.bf16.msra.mxu0 0
  %2294 = vmatprep.subr.bf16.mxu0 0
  %2295 = vmatpush2.bf16.msra.mxu0 0
  %2296 = vmatprep.subr.bf16.mxu0 0
  %2297 = vmatpush2.bf16.msra.mxu0 0
  %2298 = vmatprep.subr.bf16.mxu0 0
  %2299 = vmatpush2.bf16.msra.mxu0 0
  %2300 = vmatprep.subr.bf16.mxu0 0
  %2301 = vmatpush2.bf16.msra.mxu0 0
  %2302 = vmatprep.mubr.bf16.mxu0 0
  %2303 = vmatmul.mubr.bf16.gmra.mxu0 %v2228
  %v2304 = vpop.f32.mrf.mxu0
  %v2305 = vadd.f32 0.0, %v2304
  %v2306 = vpop.f32.mrf.mxu0
  %v2307 = vadd.f32 0.0, %v2306
  %v2308 = vpop.f32.mrf.mxu0
  %v2309 = vpop.f32.mrf.mxu0
  %2310 = vdwg.mxu0
  %v2311 = vadd.f32 %v2224, %v2264
  %v2312 = vadd.f32 %v2225, %v2266
  %v2313 = vadd.f32 %v2226, %v2305
  %v2314 = vadd.f32 %v2227, %v2307
  %v2315 = vxor.u32 %v2311, 2147483648
  %v2316 = vmul.f32 %v2315, 1.442695
  %v2317 = vpow.pop %v2316
  %v2318 = vadd.f32 %v2317, 1.0
  %v2319 = vrcp.pop %v2318
  %v2320 = vmul.f32 1.0, %v2319
  %v2321 = vxor.u32 %v2312, 2147483648
  %v2322 = vmul.f32 %v2321, 1.442695
  %v2323 = vpow.pop %v2322
  %v2324 = vadd.f32 %v2323, 1.0
  %v2325 = vrcp.pop %v2324
  %v2326 = vmul.f32 1.0, %v2325
  %v2327 = vtanh.pop %v2313
  %v2328 = vxor.u32 %v2314, 2147483648
  %v2329 = vmul.f32 %v2328, 1.442695
  %v2330 = vpow.pop %v2329
  %v2331 = vadd.f32 %v2330, 1.0
  %v2332 = vrcp.pop %v2331
  %v2333 = vmul.f32 1.0, %v2332
  %v2334 = vmul.f32 %v2326, %v2218
  %v2335 = vmul.f32 %v2320, %v2327
  %v2336 = vadd.f32 %v2334, %v2335
  %v2337 = vtanh.pop %v2336
  %v2338 = vmul.f32 %v2333, %v2337
  %v2340 = vcombine.high %v2220, %v2220
  %v2342 = vunpack.c.l.s4 1966171168
  %v2343 = vunpack.c.0.s8 %v2342
  %v2344 = vlaneseq
  %v2345 = vshrl.u32 %v2344, 7
  %v2346 = vsub.s32 %v2343, %v2345
  %v2347 = vrot.slane %v2220, %v2346
  %v2349 = vunpack.c.l.s4 1966171168
  %v2350 = vunpack.c.0.s8 %v2349
  %v2351 = vlaneseq
  %v2352 = vshrl.u32 %v2351, 7
  %v2353 = vsub.s32 %v2350, %v2352
  %v2354 = vrot.slane %v2340, %v2353
  %v2355 = vcombine.high %v2347, %v2347
  %v2356 = vcombine.high %v2354, %v2354
  %v2358 = vunpack.c.l.s4 1966171168
  %v2359 = vunpack.c.0.s8 %v2358
  %v2360 = vlaneseq
  %v2361 = vshrl.u32 %v2360, 7
  %v2362 = vsub.s32 %v2359, %v2361
  %v2363 = vrot.slane %v2347, %v2362
  %v2365 = vunpack.c.l.s4 1966171168
  %v2366 = vunpack.c.0.s8 %v2365
  %v2367 = vlaneseq
  %v2368 = vshrl.u32 %v2367, 7
  %v2369 = vsub.s32 %v2366, %v2368
  %v2370 = vrot.slane %v2354, %v2369
  %v2372 = vunpack.c.l.s4 1966171168
  %v2373 = vunpack.c.0.s8 %v2372
  %v2374 = vlaneseq
  %v2375 = vshrl.u32 %v2374, 7
  %v2376 = vsub.s32 %v2373, %v2375
  %v2377 = vrot.slane %v2355, %v2376
  %v2379 = vunpack.c.l.s4 1966171168
  %v2380 = vunpack.c.0.s8 %v2379
  %v2381 = vlaneseq
  %v2382 = vshrl.u32 %v2381, 7
  %v2383 = vsub.s32 %v2380, %v2382
  %v2384 = vrot.slane %v2356, %v2383
  %v2385 = vcombine.high %v2363, %v2363
  %v2386 = vcombine.high %v2370, %v2370
  %v2387 = vcombine.high %v2377, %v2377
  %v2388 = vcombine.high %v2384, %v2384
  %v2398 = vcombine.high %v2338, %v2338
  %v2400 = vunpack.c.l.s4 1966171168
  %v2401 = vunpack.c.0.s8 %v2400
  %v2402 = vlaneseq
  %v2403 = vshrl.u32 %v2402, 7
  %v2404 = vsub.s32 %v2401, %v2403
  %v2405 = vrot.slane %v2338, %v2404
  %v2407 = vunpack.c.l.s4 1966171168
  %v2408 = vunpack.c.0.s8 %v2407
  %v2409 = vlaneseq
  %v2410 = vshrl.u32 %v2409, 7
  %v2411 = vsub.s32 %v2408, %v2410
  %v2412 = vrot.slane %v2398, %v2411
  %v2413 = vcombine.high %v2405, %v2405
  %v2414 = vcombine.high %v2412, %v2412
  %v2416 = vunpack.c.l.s4 1966171168
  %v2417 = vunpack.c.0.s8 %v2416
  %v2418 = vlaneseq
  %v2419 = vshrl.u32 %v2418, 7
  %v2420 = vsub.s32 %v2417, %v2419
  %v2421 = vrot.slane %v2405, %v2420
  %v2423 = vunpack.c.l.s4 1966171168
  %v2424 = vunpack.c.0.s8 %v2423
  %v2425 = vlaneseq
  %v2426 = vshrl.u32 %v2425, 7
  %v2427 = vsub.s32 %v2424, %v2426
  %v2428 = vrot.slane %v2412, %v2427
  %v2430 = vunpack.c.l.s4 1966171168
  %v2431 = vunpack.c.0.s8 %v2430
  %v2432 = vlaneseq
  %v2433 = vshrl.u32 %v2432, 7
  %v2434 = vsub.s32 %v2431, %v2433
  %v2435 = vrot.slane %v2413, %v2434
  %v2437 = vunpack.c.l.s4 1966171168
  %v2438 = vunpack.c.0.s8 %v2437
  %v2439 = vlaneseq
  %v2440 = vshrl.u32 %v2439, 7
  %v2441 = vsub.s32 %v2438, %v2440
  %v2442 = vrot.slane %v2414, %v2441
  %v2443 = vcombine.high %v2421, %v2421
  %v2444 = vcombine.high %v2428, %v2428
  %v2445 = vcombine.high %v2435, %v2435
  %v2446 = vcombine.high %v2442, %v2442
  %v2447 = vlaneseq
  %v2448 = vshrl.u32 %v2447, 7
  %v2449 = vsub.s32 0, %v2448
  %v2450 = vrot.slane %v2421, %v2449
  %v2451 = vlaneseq
  %v2452 = vshrl.u32 %v2451, 7
  %v2453 = vsub.s32 0, %v2452
  %v2454 = vrot.slane %v2435, %v2453
  %v2455 = vlaneseq
  %v2456 = vshrl.u32 %v2455, 7
  %v2457 = vsub.s32 0, %v2456
  %v2458 = vrot.slane %v2443, %v2457
  %v2459 = vlaneseq
  %v2460 = vshrl.u32 %v2459, 7
  %v2461 = vsub.s32 0, %v2460
  %v2462 = vrot.slane %v2445, %v2461
  %v2463 = vlaneseq
  %v2464 = vshrl.u32 %v2463, 7
  %v2465 = vsub.s32 0, %v2464
  %v2466 = vrot.slane %v2428, %v2465
  %v2467 = vlaneseq
  %v2468 = vshrl.u32 %v2467, 7
  %v2469 = vsub.s32 0, %v2468
  %v2470 = vrot.slane %v2442, %v2469
  %v2471 = vlaneseq
  %v2472 = vshrl.u32 %v2471, 7
  %v2473 = vsub.s32 0, %v2472
  %v2474 = vrot.slane %v2444, %v2473
  %v2475 = vlaneseq
  %v2476 = vshrl.u32 %v2475, 7
  %v2477 = vsub.s32 0, %v2476
  %v2478 = vrot.slane %v2446, %v2477
  %v2487 = vsel %vm606, %v2363, %v2450
  %v2488 = vsel %vm606, %v2377, %v2454
  %v2489 = vsel %vm606, %v2385, %v2458
  %v2490 = vsel %vm606, %v2387, %v2462
  %v2491 = vsel %vm606, %v2370, %v2466
  %v2492 = vsel %vm606, %v2384, %v2470
  %v2493 = vsel %vm606, %v2386, %v2474
  %v2494 = vsel %vm606, %v2388, %v2478
  %v2495 = vpack.c.bf16 %v2487, %v2487
  %v2496 = vpack.c.bf16 %v2488, %v2488
  %v2497 = vpack.c.bf16 %v2489, %v2489
  %v2498 = vpack.c.bf16 %v2490, %v2490
  %v2499 = vpack.c.bf16 %v2491, %v2491
  %v2500 = vpack.c.bf16 %v2492, %v2492
  %v2501 = vpack.c.bf16 %v2493, %v2493
  %v2502 = vpack.c.bf16 %v2494, %v2494
  %v2511 = vunpack.c.l.b16 %v2495
  %v2512 = vunpack.c.l.b16 %v2496
  %v2513 = vunpack.c.l.b16 %v2497
  %v2514 = vunpack.c.l.b16 %v2498
  %v2515 = vunpack.c.l.b16 %v2499
  %v2516 = vunpack.c.l.b16 %v2500
  %v2517 = vunpack.c.l.b16 %v2501
  %v2518 = vunpack.c.l.b16 %v2502
  %v2519 = vpack.c.b16 %v2511, %v2511
  %v2520 = vpack.c.b16 %v2512, %v2512
  %v2521 = vpack.c.b16 %v2513, %v2513
  %v2522 = vpack.c.b16 %v2514, %v2514
  %v2523 = vpack.c.b16 %v2515, %v2515
  %v2524 = vpack.c.b16 %v2516, %v2516
  %v2525 = vpack.c.b16 %v2517, %v2517
  %v2526 = vpack.c.b16 %v2518, %v2518
  %v2527 = vrot.slane %v2519, 5
  %v2528 = vrot.slane %v2520, 5
  %v2529 = vrot.slane %v2521, 5
  %v2530 = vrot.slane %v2522, 5
  %v2531 = vrot.slane %v2523, 5
  %v2532 = vrot.slane %v2524, 5
  %v2533 = vrot.slane %v2525, 5
  %v2534 = vrot.slane %v2526, 5
  %2543 = vst [vmem:[%s4] sm:$0x8] %v2527
  %2544 = vst [vmem:[%s4 + $0x10] sm:$0x8] %v2528
  %2545 = vst [vmem:[%s4 + $0x20] sm:$0x8] %v2529
  %2546 = vst [vmem:[%s4 + $0x30] sm:$0x8] %v2530
  %2547 = vst [vmem:[%s4 + $0x40] sm:$0x8] %v2531
  %2548 = vst [vmem:[%s4 + $0x50] sm:$0x8] %v2532
  %2549 = vst [vmem:[%s4 + $0x60] sm:$0x8] %v2533
  %2550 = vst [vmem:[%s4 + $0x70] sm:$0x8] %v2534
  %s2551 = scalar_lea.vmem %s0, 128
  %v2552 = vld [vmem:[%s2551] sm:$0xff]
  %v2553 = vld [vmem:[%s2551 + $0x8] sm:$0xff]
  %v2554 = vunpack.c.l.bf16 %v2552
  %v2555 = vunpack.c.h.bf16 %v2552
  %v2556 = vunpack.c.l.bf16 %v2553
  %v2557 = vunpack.c.h.bf16 %v2553
  %v2558 = vpack.c.bf16 %v2338, %v2338
  %v2559 = vld [vmem:[%s1] sm:$0xff]
  %v2560 = vld [vmem:[%s1 + $0x8] sm:$0xff]
  %v2561 = vld [vmem:[%s1 + $0x10] sm:$0xff]
  %v2562 = vld [vmem:[%s1 + $0x18] sm:$0xff]
  %v2563 = vld [vmem:[%s1 + $0x20] sm:$0xff]
  %v2564 = vld [vmem:[%s1 + $0x28] sm:$0xff]
  %v2565 = vld [vmem:[%s1 + $0x30] sm:$0xff]
  %v2566 = vld [vmem:[%s1 + $0x38] sm:$0xff]
  %v2567 = vld [vmem:[%s1 + $0x40] sm:$0xff]
  %v2568 = vld [vmem:[%s1 + $0x48] sm:$0xff]
  %v2569 = vld [vmem:[%s1 + $0x50] sm:$0xff]
  %v2570 = vld [vmem:[%s1 + $0x58] sm:$0xff]
  %v2571 = vld [vmem:[%s1 + $0x60] sm:$0xff]
  %v2572 = vld [vmem:[%s1 + $0x68] sm:$0xff]
  %v2573 = vld [vmem:[%s1 + $0x70] sm:$0xff]
  %v2574 = vld [vmem:[%s1 + $0x78] sm:$0xff]
  %v2575 = vld [vmem:[%s1 + $0x80] sm:$0xff]
  %v2576 = vld [vmem:[%s1 + $0x88] sm:$0xff]
  %v2577 = vld [vmem:[%s1 + $0x90] sm:$0xff]
  %v2578 = vld [vmem:[%s1 + $0x98] sm:$0xff]
  %v2579 = vld [vmem:[%s1 + $0xa0] sm:$0xff]
  %v2580 = vld [vmem:[%s1 + $0xa8] sm:$0xff]
  %v2581 = vld [vmem:[%s1 + $0xb0] sm:$0xff]
  %v2582 = vld [vmem:[%s1 + $0xb8] sm:$0xff]
  %v2583 = vld [vmem:[%s1 + $0xc0] sm:$0xff]
  %v2584 = vld [vmem:[%s1 + $0xc8] sm:$0xff]
  %v2585 = vld [vmem:[%s1 + $0xd0] sm:$0xff]
  %v2586 = vld [vmem:[%s1 + $0xd8] sm:$0xff]
  %v2587 = vld [vmem:[%s1 + $0xe0] sm:$0xff]
  %v2588 = vld [vmem:[%s1 + $0xe8] sm:$0xff]
  %v2589 = vld [vmem:[%s1 + $0xf0] sm:$0xff]
  %v2590 = vld [vmem:[%s1 + $0xf8] sm:$0xff]
  %v2623 = vunpack.c.l.b16 %v2559
  %v2624 = vunpack.c.h.b16 %v2559
  %v2625 = vunpack.c.l.b16 %v2560
  %v2626 = vunpack.c.h.b16 %v2560
  %v2627 = vunpack.c.l.b16 %v2561
  %v2628 = vunpack.c.h.b16 %v2561
  %v2629 = vunpack.c.l.b16 %v2562
  %v2630 = vunpack.c.h.b16 %v2562
  %v2631 = vunpack.c.l.b16 %v2563
  %v2632 = vunpack.c.h.b16 %v2563
  %v2633 = vunpack.c.l.b16 %v2564
  %v2634 = vunpack.c.h.b16 %v2564
  %v2635 = vunpack.c.l.b16 %v2565
  %v2636 = vunpack.c.h.b16 %v2565
  %v2637 = vunpack.c.l.b16 %v2566
  %v2638 = vunpack.c.h.b16 %v2566
  %v2639 = vunpack.c.l.b16 %v2567
  %v2640 = vunpack.c.h.b16 %v2567
  %v2641 = vunpack.c.l.b16 %v2568
  %v2642 = vunpack.c.h.b16 %v2568
  %v2643 = vunpack.c.l.b16 %v2569
  %v2644 = vunpack.c.h.b16 %v2569
  %v2645 = vunpack.c.l.b16 %v2570
  %v2646 = vunpack.c.h.b16 %v2570
  %v2647 = vunpack.c.l.b16 %v2571
  %v2648 = vunpack.c.h.b16 %v2571
  %v2649 = vunpack.c.l.b16 %v2572
  %v2650 = vunpack.c.h.b16 %v2572
  %v2651 = vunpack.c.l.b16 %v2573
  %v2652 = vunpack.c.h.b16 %v2573
  %v2653 = vunpack.c.l.b16 %v2574
  %v2654 = vunpack.c.h.b16 %v2574
  %v2655 = vunpack.c.l.b16 %v2575
  %v2656 = vunpack.c.h.b16 %v2575
  %v2657 = vunpack.c.l.b16 %v2576
  %v2658 = vunpack.c.h.b16 %v2576
  %v2659 = vunpack.c.l.b16 %v2577
  %v2660 = vunpack.c.h.b16 %v2577
  %v2661 = vunpack.c.l.b16 %v2578
  %v2662 = vunpack.c.h.b16 %v2578
  %v2663 = vunpack.c.l.b16 %v2579
  %v2664 = vunpack.c.h.b16 %v2579
  %v2665 = vunpack.c.l.b16 %v2580
  %v2666 = vunpack.c.h.b16 %v2580
  %v2667 = vunpack.c.l.b16 %v2581
  %v2668 = vunpack.c.h.b16 %v2581
  %v2669 = vunpack.c.l.b16 %v2582
  %v2670 = vunpack.c.h.b16 %v2582
  %v2671 = vunpack.c.l.b16 %v2583
  %v2672 = vunpack.c.h.b16 %v2583
  %v2673 = vunpack.c.l.b16 %v2584
  %v2674 = vunpack.c.h.b16 %v2584
  %v2675 = vunpack.c.l.b16 %v2585
  %v2676 = vunpack.c.h.b16 %v2585
  %v2677 = vunpack.c.l.b16 %v2586
  %v2678 = vunpack.c.h.b16 %v2586
  %v2679 = vunpack.c.l.b16 %v2587
  %v2680 = vunpack.c.h.b16 %v2587
  %v2681 = vunpack.c.l.b16 %v2588
  %v2682 = vunpack.c.h.b16 %v2588
  %v2683 = vunpack.c.l.b16 %v2589
  %v2684 = vunpack.c.h.b16 %v2589
  %v2685 = vunpack.c.l.b16 %v2590
  %v2686 = vunpack.c.h.b16 %v2590
  %v2687 = vpack.c.b16 %v2627, %v2623
  %v2688 = vpack.c.b16 %v2628, %v2624
  %v2689 = vpack.c.b16 %v2629, %v2625
  %v2690 = vpack.c.b16 %v2630, %v2626
  %v2691 = vpack.c.b16 %v2635, %v2631
  %v2692 = vpack.c.b16 %v2636, %v2632
  %v2693 = vpack.c.b16 %v2637, %v2633
  %v2694 = vpack.c.b16 %v2638, %v2634
  %v2695 = vpack.c.b16 %v2643, %v2639
  %v2696 = vpack.c.b16 %v2644, %v2640
  %v2697 = vpack.c.b16 %v2645, %v2641
  %v2698 = vpack.c.b16 %v2646, %v2642
  %v2699 = vpack.c.b16 %v2651, %v2647
  %v2700 = vpack.c.b16 %v2652, %v2648
  %v2701 = vpack.c.b16 %v2653, %v2649
  %v2702 = vpack.c.b16 %v2654, %v2650
  %v2703 = vpack.c.b16 %v2659, %v2655
  %v2704 = vpack.c.b16 %v2660, %v2656
  %v2705 = vpack.c.b16 %v2661, %v2657
  %v2706 = vpack.c.b16 %v2662, %v2658
  %v2707 = vpack.c.b16 %v2667, %v2663
  %v2708 = vpack.c.b16 %v2668, %v2664
  %v2709 = vpack.c.b16 %v2669, %v2665
  %v2710 = vpack.c.b16 %v2670, %v2666
  %v2711 = vpack.c.b16 %v2675, %v2671
  %v2712 = vpack.c.b16 %v2676, %v2672
  %v2713 = vpack.c.b16 %v2677, %v2673
  %v2714 = vpack.c.b16 %v2678, %v2674
  %v2715 = vpack.c.b16 %v2683, %v2679
  %v2716 = vpack.c.b16 %v2684, %v2680
  %v2717 = vpack.c.b16 %v2685, %v2681
  %v2718 = vpack.c.b16 %v2686, %v2682
  %2751 = vmatprep.subr.bf16.mxu0 %v2716
  %2752 = vmatpush1.bf16.msra.mxu0 %v2715
  %2753 = vmatprep.subr.bf16.mxu0 %v2712
  %2754 = vmatpush1.bf16.msra.mxu0 %v2711
  %2755 = vmatprep.subr.bf16.mxu0 %v2708
  %2756 = vmatpush1.bf16.msra.mxu0 %v2707
  %2757 = vmatprep.subr.bf16.mxu0 %v2704
  %2758 = vmatpush1.bf16.msra.mxu0 %v2703
  %2759 = vmatprep.subr.bf16.mxu0 %v2700
  %2760 = vmatpush1.bf16.msra.mxu0 %v2699
  %2761 = vmatprep.subr.bf16.mxu0 %v2696
  %2762 = vmatpush1.bf16.msra.mxu0 %v2695
  %2763 = vmatprep.subr.bf16.mxu0 %v2692
  %2764 = vmatpush1.bf16.msra.mxu0 %v2691
  %2765 = vmatprep.subr.bf16.mxu0 %v2688
  %2766 = vmatpush1.bf16.msra.mxu0 %v2687
  %2767 = vmatprep.subr.bf16.mxu0 0
  %2768 = vmatpush2.bf16.msra.mxu0 0
  %2769 = vmatprep.subr.bf16.mxu0 0
  %2770 = vmatpush2.bf16.msra.mxu0 0
  %2771 = vmatprep.subr.bf16.mxu0 0
  %2772 = vmatpush2.bf16.msra.mxu0 0
  %2773 = vmatprep.subr.bf16.mxu0 0
  %2774 = vmatpush2.bf16.msra.mxu0 0
  %2775 = vmatprep.subr.bf16.mxu0 0
  %2776 = vmatpush2.bf16.msra.mxu0 0
  %2777 = vmatprep.subr.bf16.mxu0 0
  %2778 = vmatpush2.bf16.msra.mxu0 0
  %2779 = vmatprep.subr.bf16.mxu0 0
  %2780 = vmatpush2.bf16.msra.mxu0 0
  %2781 = vmatprep.subr.bf16.mxu0 0
  %2782 = vmatpush2.bf16.msra.mxu0 0
  %2783 = vmatprep.mubr.bf16.mxu0 0
  %2784 = vmatmul.mubr.bf16.gmra.mxu0 %v2558
  %v2785 = vpop.f32.mrf.mxu0
  %v2786 = vadd.f32 0.0, %v2785
  %v2787 = vpop.f32.mrf.mxu0
  %v2788 = vadd.f32 0.0, %v2787
  %v2789 = vpop.f32.mrf.mxu0
  %v2790 = vpop.f32.mrf.mxu0
  %2791 = vdwg.mxu0
  %2792 = vmatprep.subr.bf16.mxu0 %v2718
  %2793 = vmatpush1.bf16.msra.mxu0 %v2717
  %2794 = vmatprep.subr.bf16.mxu0 %v2714
  %2795 = vmatpush1.bf16.msra.mxu0 %v2713
  %2796 = vmatprep.subr.bf16.mxu0 %v2710
  %2797 = vmatpush1.bf16.msra.mxu0 %v2709
  %2798 = vmatprep.subr.bf16.mxu0 %v2706
  %2799 = vmatpush1.bf16.msra.mxu0 %v2705
  %2800 = vmatprep.subr.bf16.mxu0 %v2702
  %2801 = vmatpush1.bf16.msra.mxu0 %v2701
  %2802 = vmatprep.subr.bf16.mxu0 %v2698
  %2803 = vmatpush1.bf16.msra.mxu0 %v2697
  %2804 = vmatprep.subr.bf16.mxu0 %v2694
  %2805 = vmatpush1.bf16.msra.mxu0 %v2693
  %2806 = vmatprep.subr.bf16.mxu0 %v2690
  %2807 = vmatpush1.bf16.msra.mxu0 %v2689
  %2808 = vmatprep.subr.bf16.mxu0 0
  %2809 = vmatpush2.bf16.msra.mxu0 0
  %2810 = vmatprep.subr.bf16.mxu0 0
  %2811 = vmatpush2.bf16.msra.mxu0 0
  %2812 = vmatprep.subr.bf16.mxu0 0
  %2813 = vmatpush2.bf16.msra.mxu0 0
  %2814 = vmatprep.subr.bf16.mxu0 0
  %2815 = vmatpush2.bf16.msra.mxu0 0
  %2816 = vmatprep.subr.bf16.mxu0 0
  %2817 = vmatpush2.bf16.msra.mxu0 0
  %2818 = vmatprep.subr.bf16.mxu0 0
  %2819 = vmatpush2.bf16.msra.mxu0 0
  %2820 = vmatprep.subr.bf16.mxu0 0
  %2821 = vmatpush2.bf16.msra.mxu0 0
  %2822 = vmatprep.subr.bf16.mxu0 0
  %2823 = vmatpush2.bf16.msra.mxu0 0
  %2824 = vmatprep.mubr.bf16.mxu0 0
  %2825 = vmatmul.mubr.bf16.gmra.mxu0 %v2558
  %v2826 = vpop.f32.mrf.mxu0
  %v2827 = vadd.f32 0.0, %v2826
  %v2828 = vpop.f32.mrf.mxu0
  %v2829 = vadd.f32 0.0, %v2828
  %v2830 = vpop.f32.mrf.mxu0
  %v2831 = vpop.f32.mrf.mxu0
  %2832 = vdwg.mxu0
  %v2833 = vadd.f32 %v2554, %v2786
  %v2834 = vadd.f32 %v2555, %v2788
  %v2835 = vadd.f32 %v2556, %v2827
  %v2836 = vadd.f32 %v2557, %v2829
  %v2837 = vxor.u32 %v2833, 2147483648
  %v2838 = vmul.f32 %v2837, 1.442695
  %v2839 = vpow.pop %v2838
  %v2840 = vadd.f32 %v2839, 1.0
  %v2841 = vrcp.pop %v2840
  %v2842 = vmul.f32 1.0, %v2841
  %v2843 = vxor.u32 %v2834, 2147483648
  %v2844 = vmul.f32 %v2843, 1.442695
  %v2845 = vpow.pop %v2844
  %v2846 = vadd.f32 %v2845, 1.0
  %v2847 = vrcp.pop %v2846
  %v2848 = vmul.f32 1.0, %v2847
  %v2849 = vtanh.pop %v2835
  %v2850 = vxor.u32 %v2836, 2147483648
  %v2851 = vmul.f32 %v2850, 1.442695
  %v2852 = vpow.pop %v2851
  %v2853 = vadd.f32 %v2852, 1.0
  %v2854 = vrcp.pop %v2853
  %v2855 = vmul.f32 1.0, %v2854
  %v2856 = vmul.f32 %v2848, %v2336
  %v2857 = vmul.f32 %v2842, %v2849
  %v2858 = vadd.f32 %v2856, %v2857
  %v2859 = vtanh.pop %v2858
  %v2860 = vmul.f32 %v2855, %v2859
  %s2861 = scalar_lea.vmem %s0, 144
  %v2862 = vld [vmem:[%s2861] sm:$0xff]
  %v2863 = vld [vmem:[%s2861 + $0x8] sm:$0xff]
  %v2864 = vunpack.c.l.bf16 %v2862
  %v2865 = vunpack.c.h.bf16 %v2862
  %v2866 = vunpack.c.l.bf16 %v2863
  %v2867 = vunpack.c.h.bf16 %v2863
  %v2868 = vpack.c.bf16 %v2860, %v2860
  %2869 = vmatprep.subr.bf16.mxu0 %v2716
  %2870 = vmatpush1.bf16.msra.mxu0 %v2715
  %2871 = vmatprep.subr.bf16.mxu0 %v2712
  %2872 = vmatpush1.bf16.msra.mxu0 %v2711
  %2873 = vmatprep.subr.bf16.mxu0 %v2708
  %2874 = vmatpush1.bf16.msra.mxu0 %v2707
  %2875 = vmatprep.subr.bf16.mxu0 %v2704
  %2876 = vmatpush1.bf16.msra.mxu0 %v2703
  %2877 = vmatprep.subr.bf16.mxu0 %v2700
  %2878 = vmatpush1.bf16.msra.mxu0 %v2699
  %2879 = vmatprep.subr.bf16.mxu0 %v2696
  %2880 = vmatpush1.bf16.msra.mxu0 %v2695
  %2881 = vmatprep.subr.bf16.mxu0 %v2692
  %2882 = vmatpush1.bf16.msra.mxu0 %v2691
  %2883 = vmatprep.subr.bf16.mxu0 %v2688
  %2884 = vmatpush1.bf16.msra.mxu0 %v2687
  %2885 = vmatprep.subr.bf16.mxu0 0
  %2886 = vmatpush2.bf16.msra.mxu0 0
  %2887 = vmatprep.subr.bf16.mxu0 0
  %2888 = vmatpush2.bf16.msra.mxu0 0
  %2889 = vmatprep.subr.bf16.mxu0 0
  %2890 = vmatpush2.bf16.msra.mxu0 0
  %2891 = vmatprep.subr.bf16.mxu0 0
  %2892 = vmatpush2.bf16.msra.mxu0 0
  %2893 = vmatprep.subr.bf16.mxu0 0
  %2894 = vmatpush2.bf16.msra.mxu0 0
  %2895 = vmatprep.subr.bf16.mxu0 0
  %2896 = vmatpush2.bf16.msra.mxu0 0
  %2897 = vmatprep.subr.bf16.mxu0 0
  %2898 = vmatpush2.bf16.msra.mxu0 0
  %2899 = vmatprep.subr.bf16.mxu0 0
  %2900 = vmatpush2.bf16.msra.mxu0 0
  %2901 = vmatprep.mubr.bf16.mxu0 0
  %2902 = vmatmul.mubr.bf16.gmra.mxu0 %v2868
  %v2903 = vpop.f32.mrf.mxu0
  %v2904 = vadd.f32 0.0, %v2903
  %v2905 = vpop.f32.mrf.mxu0
  %v2906 = vadd.f32 0.0, %v2905
  %v2907 = vpop.f32.mrf.mxu0
  %v2908 = vpop.f32.mrf.mxu0
  %2909 = vdwg.mxu0
  %2910 = vmatprep.subr.bf16.mxu0 %v2718
  %2911 = vmatpush1.bf16.msra.mxu0 %v2717
  %2912 = vmatprep.subr.bf16.mxu0 %v2714
  %2913 = vmatpush1.bf16.msra.mxu0 %v2713
  %2914 = vmatprep.subr.bf16.mxu0 %v2710
  %2915 = vmatpush1.bf16.msra.mxu0 %v2709
  %2916 = vmatprep.subr.bf16.mxu0 %v2706
  %2917 = vmatpush1.bf16.msra.mxu0 %v2705
  %2918 = vmatprep.subr.bf16.mxu0 %v2702
  %2919 = vmatpush1.bf16.msra.mxu0 %v2701
  %2920 = vmatprep.subr.bf16.mxu0 %v2698
  %2921 = vmatpush1.bf16.msra.mxu0 %v2697
  %2922 = vmatprep.subr.bf16.mxu0 %v2694
  %2923 = vmatpush1.bf16.msra.mxu0 %v2693
  %2924 = vmatprep.subr.bf16.mxu0 %v2690
  %2925 = vmatpush1.bf16.msra.mxu0 %v2689
  %2926 = vmatprep.subr.bf16.mxu0 0
  %2927 = vmatpush2.bf16.msra.mxu0 0
  %2928 = vmatprep.subr.bf16.mxu0 0
  %2929 = vmatpush2.bf16.msra.mxu0 0
  %2930 = vmatprep.subr.bf16.mxu0 0
  %2931 = vmatpush2.bf16.msra.mxu0 0
  %2932 = vmatprep.subr.bf16.mxu0 0
  %2933 = vmatpush2.bf16.msra.mxu0 0
  %2934 = vmatprep.subr.bf16.mxu0 0
  %2935 = vmatpush2.bf16.msra.mxu0 0
  %2936 = vmatprep.subr.bf16.mxu0 0
  %2937 = vmatpush2.bf16.msra.mxu0 0
  %2938 = vmatprep.subr.bf16.mxu0 0
  %2939 = vmatpush2.bf16.msra.mxu0 0
  %2940 = vmatprep.subr.bf16.mxu0 0
  %2941 = vmatpush2.bf16.msra.mxu0 0
  %2942 = vmatprep.mubr.bf16.mxu0 0
  %2943 = vmatmul.mubr.bf16.gmra.mxu0 %v2868
  %v2944 = vpop.f32.mrf.mxu0
  %v2945 = vadd.f32 0.0, %v2944
  %v2946 = vpop.f32.mrf.mxu0
  %v2947 = vadd.f32 0.0, %v2946
  %v2948 = vpop.f32.mrf.mxu0
  %v2949 = vpop.f32.mrf.mxu0
  %2950 = vdwg.mxu0
  %v2951 = vadd.f32 %v2864, %v2904
  %v2952 = vadd.f32 %v2865, %v2906
  %v2953 = vadd.f32 %v2866, %v2945
  %v2954 = vadd.f32 %v2867, %v2947
  %v2955 = vxor.u32 %v2951, 2147483648
  %v2956 = vmul.f32 %v2955, 1.442695
  %v2957 = vpow.pop %v2956
  %v2958 = vadd.f32 %v2957, 1.0
  %v2959 = vrcp.pop %v2958
  %v2960 = vmul.f32 1.0, %v2959
  %v2961 = vxor.u32 %v2952, 2147483648
  %v2962 = vmul.f32 %v2961, 1.442695
  %v2963 = vpow.pop %v2962
  %v2964 = vadd.f32 %v2963, 1.0
  %v2965 = vrcp.pop %v2964
  %v2966 = vmul.f32 1.0, %v2965
  %v2967 = vtanh.pop %v2953
  %v2968 = vxor.u32 %v2954, 2147483648
  %v2969 = vmul.f32 %v2968, 1.442695
  %v2970 = vpow.pop %v2969
  %v2971 = vadd.f32 %v2970, 1.0
  %v2972 = vrcp.pop %v2971
  %v2973 = vmul.f32 1.0, %v2972
  %v2974 = vmul.f32 %v2966, %v2858
  %v2975 = vmul.f32 %v2960, %v2967
  %v2976 = vadd.f32 %v2974, %v2975
  %v2977 = vtanh.pop %v2976
  %v2978 = vmul.f32 %v2973, %v2977
  %v2980 = vcombine.high %v2860, %v2860
  %v2982 = vunpack.c.l.s4 1966171168
  %v2983 = vunpack.c.0.s8 %v2982
  %v2984 = vlaneseq
  %v2985 = vshrl.u32 %v2984, 7
  %v2986 = vsub.s32 %v2983, %v2985
  %v2987 = vrot.slane %v2860, %v2986
  %v2989 = vunpack.c.l.s4 1966171168
  %v2990 = vunpack.c.0.s8 %v2989
  %v2991 = vlaneseq
  %v2992 = vshrl.u32 %v2991, 7
  %v2993 = vsub.s32 %v2990, %v2992
  %v2994 = vrot.slane %v2980, %v2993
  %v2995 = vcombine.high %v2987, %v2987
  %v2996 = vcombine.high %v2994, %v2994
  %v2998 = vunpack.c.l.s4 1966171168
  %v2999 = vunpack.c.0.s8 %v2998
  %v3000 = vlaneseq
  %v3001 = vshrl.u32 %v3000, 7
  %v3002 = vsub.s32 %v2999, %v3001
  %v3003 = vrot.slane %v2987, %v3002
  %v3005 = vunpack.c.l.s4 1966171168
  %v3006 = vunpack.c.0.s8 %v3005
  %v3007 = vlaneseq
  %v3008 = vshrl.u32 %v3007, 7
  %v3009 = vsub.s32 %v3006, %v3008
  %v3010 = vrot.slane %v2994, %v3009
  %v3012 = vunpack.c.l.s4 1966171168
  %v3013 = vunpack.c.0.s8 %v3012
  %v3014 = vlaneseq
  %v3015 = vshrl.u32 %v3014, 7
  %v3016 = vsub.s32 %v3013, %v3015
  %v3017 = vrot.slane %v2995, %v3016
  %v3019 = vunpack.c.l.s4 1966171168
  %v3020 = vunpack.c.0.s8 %v3019
  %v3021 = vlaneseq
  %v3022 = vshrl.u32 %v3021, 7
  %v3023 = vsub.s32 %v3020, %v3022
  %v3024 = vrot.slane %v2996, %v3023
  %v3025 = vcombine.high %v3003, %v3003
  %v3026 = vcombine.high %v3010, %v3010
  %v3027 = vcombine.high %v3017, %v3017
  %v3028 = vcombine.high %v3024, %v3024
  %v3038 = vcombine.high %v2978, %v2978
  %v3040 = vunpack.c.l.s4 1966171168
  %v3041 = vunpack.c.0.s8 %v3040
  %v3042 = vlaneseq
  %v3043 = vshrl.u32 %v3042, 7
  %v3044 = vsub.s32 %v3041, %v3043
  %v3045 = vrot.slane %v2978, %v3044
  %v3047 = vunpack.c.l.s4 1966171168
  %v3048 = vunpack.c.0.s8 %v3047
  %v3049 = vlaneseq
  %v3050 = vshrl.u32 %v3049, 7
  %v3051 = vsub.s32 %v3048, %v3050
  %v3052 = vrot.slane %v3038, %v3051
  %v3053 = vcombine.high %v3045, %v3045
  %v3054 = vcombine.high %v3052, %v3052
  %v3056 = vunpack.c.l.s4 1966171168
  %v3057 = vunpack.c.0.s8 %v3056
  %v3058 = vlaneseq
  %v3059 = vshrl.u32 %v3058, 7
  %v3060 = vsub.s32 %v3057, %v3059
  %v3061 = vrot.slane %v3045, %v3060
  %v3063 = vunpack.c.l.s4 1966171168
  %v3064 = vunpack.c.0.s8 %v3063
  %v3065 = vlaneseq
  %v3066 = vshrl.u32 %v3065, 7
  %v3067 = vsub.s32 %v3064, %v3066
  %v3068 = vrot.slane %v3052, %v3067
  %v3070 = vunpack.c.l.s4 1966171168
  %v3071 = vunpack.c.0.s8 %v3070
  %v3072 = vlaneseq
  %v3073 = vshrl.u32 %v3072, 7
  %v3074 = vsub.s32 %v3071, %v3073
  %v3075 = vrot.slane %v3053, %v3074
  %v3077 = vunpack.c.l.s4 1966171168
  %v3078 = vunpack.c.0.s8 %v3077
  %v3079 = vlaneseq
  %v3080 = vshrl.u32 %v3079, 7
  %v3081 = vsub.s32 %v3078, %v3080
  %v3082 = vrot.slane %v3054, %v3081
  %v3083 = vcombine.high %v3061, %v3061
  %v3084 = vcombine.high %v3068, %v3068
  %v3085 = vcombine.high %v3075, %v3075
  %v3086 = vcombine.high %v3082, %v3082
  %v3087 = vlaneseq
  %v3088 = vshrl.u32 %v3087, 7
  %v3089 = vsub.s32 0, %v3088
  %v3090 = vrot.slane %v3061, %v3089
  %v3091 = vlaneseq
  %v3092 = vshrl.u32 %v3091, 7
  %v3093 = vsub.s32 0, %v3092
  %v3094 = vrot.slane %v3075, %v3093
  %v3095 = vlaneseq
  %v3096 = vshrl.u32 %v3095, 7
  %v3097 = vsub.s32 0, %v3096
  %v3098 = vrot.slane %v3083, %v3097
  %v3099 = vlaneseq
  %v3100 = vshrl.u32 %v3099, 7
  %v3101 = vsub.s32 0, %v3100
  %v3102 = vrot.slane %v3085, %v3101
  %v3103 = vlaneseq
  %v3104 = vshrl.u32 %v3103, 7
  %v3105 = vsub.s32 0, %v3104
  %v3106 = vrot.slane %v3068, %v3105
  %v3107 = vlaneseq
  %v3108 = vshrl.u32 %v3107, 7
  %v3109 = vsub.s32 0, %v3108
  %v3110 = vrot.slane %v3082, %v3109
  %v3111 = vlaneseq
  %v3112 = vshrl.u32 %v3111, 7
  %v3113 = vsub.s32 0, %v3112
  %v3114 = vrot.slane %v3084, %v3113
  %v3115 = vlaneseq
  %v3116 = vshrl.u32 %v3115, 7
  %v3117 = vsub.s32 0, %v3116
  %v3118 = vrot.slane %v3086, %v3117
  %v3127 = vsel %vm606, %v3003, %v3090
  %v3128 = vsel %vm606, %v3017, %v3094
  %v3129 = vsel %vm606, %v3025, %v3098
  %v3130 = vsel %vm606, %v3027, %v3102
  %v3131 = vsel %vm606, %v3010, %v3106
  %v3132 = vsel %vm606, %v3024, %v3110
  %v3133 = vsel %vm606, %v3026, %v3114
  %v3134 = vsel %vm606, %v3028, %v3118
  %v3135 = vpack.c.bf16 %v3127, %v3127
  %v3136 = vpack.c.bf16 %v3128, %v3128
  %v3137 = vpack.c.bf16 %v3129, %v3129
  %v3138 = vpack.c.bf16 %v3130, %v3130
  %v3139 = vpack.c.bf16 %v3131, %v3131
  %v3140 = vpack.c.bf16 %v3132, %v3132
  %v3141 = vpack.c.bf16 %v3133, %v3133
  %v3142 = vpack.c.bf16 %v3134, %v3134
  %3143 = vst [vmem:[%s4 + $0x4] sm:$0x1] %v3135
  %3144 = vst [vmem:[%s4 + $0x14] sm:$0x1] %v3136
  %3145 = vst [vmem:[%s4 + $0x24] sm:$0x1] %v3137
  %3146 = vst [vmem:[%s4 + $0x34] sm:$0x1] %v3138
  %3147 = vst [vmem:[%s4 + $0x44] sm:$0x1] %v3139
  %3148 = vst [vmem:[%s4 + $0x54] sm:$0x1] %v3140
  %3149 = vst [vmem:[%s4 + $0x64] sm:$0x1] %v3141
  %3150 = vst [vmem:[%s4 + $0x74] sm:$0x1] %v3142
  %s3151 = scalar_lea.vmem %s0, 160
  %v3152 = vld [vmem:[%s3151] sm:$0xff]
  %v3153 = vld [vmem:[%s3151 + $0x8] sm:$0xff]
  %v3154 = vunpack.c.l.bf16 %v3152
  %v3155 = vunpack.c.h.bf16 %v3152
  %v3156 = vunpack.c.l.bf16 %v3153
  %v3157 = vunpack.c.h.bf16 %v3153
  %v3158 = vpack.c.bf16 %v2978, %v2978
  %v3159 = vld [vmem:[%s1] sm:$0xff]
  %v3160 = vld [vmem:[%s1 + $0x8] sm:$0xff]
  %v3161 = vld [vmem:[%s1 + $0x10] sm:$0xff]
  %v3162 = vld [vmem:[%s1 + $0x18] sm:$0xff]
  %v3163 = vld [vmem:[%s1 + $0x20] sm:$0xff]
  %v3164 = vld [vmem:[%s1 + $0x28] sm:$0xff]
  %v3165 = vld [vmem:[%s1 + $0x30] sm:$0xff]
  %v3166 = vld [vmem:[%s1 + $0x38] sm:$0xff]
  %v3167 = vld [vmem:[%s1 + $0x40] sm:$0xff]
  %v3168 = vld [vmem:[%s1 + $0x48] sm:$0xff]
  %v3169 = vld [vmem:[%s1 + $0x50] sm:$0xff]
  %v3170 = vld [vmem:[%s1 + $0x58] sm:$0xff]
  %v3171 = vld [vmem:[%s1 + $0x60] sm:$0xff]
  %v3172 = vld [vmem:[%s1 + $0x68] sm:$0xff]
  %v3173 = vld [vmem:[%s1 + $0x70] sm:$0xff]
  %v3174 = vld [vmem:[%s1 + $0x78] sm:$0xff]
  %v3175 = vld [vmem:[%s1 + $0x80] sm:$0xff]
  %v3176 = vld [vmem:[%s1 + $0x88] sm:$0xff]
  %v3177 = vld [vmem:[%s1 + $0x90] sm:$0xff]
  %v3178 = vld [vmem:[%s1 + $0x98] sm:$0xff]
  %v3179 = vld [vmem:[%s1 + $0xa0] sm:$0xff]
  %v3180 = vld [vmem:[%s1 + $0xa8] sm:$0xff]
  %v3181 = vld [vmem:[%s1 + $0xb0] sm:$0xff]
  %v3182 = vld [vmem:[%s1 + $0xb8] sm:$0xff]
  %v3183 = vld [vmem:[%s1 + $0xc0] sm:$0xff]
  %v3184 = vld [vmem:[%s1 + $0xc8] sm:$0xff]
  %v3185 = vld [vmem:[%s1 + $0xd0] sm:$0xff]
  %v3186 = vld [vmem:[%s1 + $0xd8] sm:$0xff]
  %v3187 = vld [vmem:[%s1 + $0xe0] sm:$0xff]
  %v3188 = vld [vmem:[%s1 + $0xe8] sm:$0xff]
  %v3189 = vld [vmem:[%s1 + $0xf0] sm:$0xff]
  %v3190 = vld [vmem:[%s1 + $0xf8] sm:$0xff]
  %v3223 = vunpack.c.l.b16 %v3159
  %v3224 = vunpack.c.h.b16 %v3159
  %v3225 = vunpack.c.l.b16 %v3160
  %v3226 = vunpack.c.h.b16 %v3160
  %v3227 = vunpack.c.l.b16 %v3161
  %v3228 = vunpack.c.h.b16 %v3161
  %v3229 = vunpack.c.l.b16 %v3162
  %v3230 = vunpack.c.h.b16 %v3162
  %v3231 = vunpack.c.l.b16 %v3163
  %v3232 = vunpack.c.h.b16 %v3163
  %v3233 = vunpack.c.l.b16 %v3164
  %v3234 = vunpack.c.h.b16 %v3164
  %v3235 = vunpack.c.l.b16 %v3165
  %v3236 = vunpack.c.h.b16 %v3165
  %v3237 = vunpack.c.l.b16 %v3166
  %v3238 = vunpack.c.h.b16 %v3166
  %v3239 = vunpack.c.l.b16 %v3167
  %v3240 = vunpack.c.h.b16 %v3167
  %v3241 = vunpack.c.l.b16 %v3168
  %v3242 = vunpack.c.h.b16 %v3168
  %v3243 = vunpack.c.l.b16 %v3169
  %v3244 = vunpack.c.h.b16 %v3169
  %v3245 = vunpack.c.l.b16 %v3170
  %v3246 = vunpack.c.h.b16 %v3170
  %v3247 = vunpack.c.l.b16 %v3171
  %v3248 = vunpack.c.h.b16 %v3171
  %v3249 = vunpack.c.l.b16 %v3172
  %v3250 = vunpack.c.h.b16 %v3172
  %v3251 = vunpack.c.l.b16 %v3173
  %v3252 = vunpack.c.h.b16 %v3173
  %v3253 = vunpack.c.l.b16 %v3174
  %v3254 = vunpack.c.h.b16 %v3174
  %v3255 = vunpack.c.l.b16 %v3175
  %v3256 = vunpack.c.h.b16 %v3175
  %v3257 = vunpack.c.l.b16 %v3176
  %v3258 = vunpack.c.h.b16 %v3176
  %v3259 = vunpack.c.l.b16 %v3177
  %v3260 = vunpack.c.h.b16 %v3177
  %v3261 = vunpack.c.l.b16 %v3178
  %v3262 = vunpack.c.h.b16 %v3178
  %v3263 = vunpack.c.l.b16 %v3179
  %v3264 = vunpack.c.h.b16 %v3179
  %v3265 = vunpack.c.l.b16 %v3180
  %v3266 = vunpack.c.h.b16 %v3180
  %v3267 = vunpack.c.l.b16 %v3181
  %v3268 = vunpack.c.h.b16 %v3181
  %v3269 = vunpack.c.l.b16 %v3182
  %v3270 = vunpack.c.h.b16 %v3182
  %v3271 = vunpack.c.l.b16 %v3183
  %v3272 = vunpack.c.h.b16 %v3183
  %v3273 = vunpack.c.l.b16 %v3184
  %v3274 = vunpack.c.h.b16 %v3184
  %v3275 = vunpack.c.l.b16 %v3185
  %v3276 = vunpack.c.h.b16 %v3185
  %v3277 = vunpack.c.l.b16 %v3186
  %v3278 = vunpack.c.h.b16 %v3186
  %v3279 = vunpack.c.l.b16 %v3187
  %v3280 = vunpack.c.h.b16 %v3187
  %v3281 = vunpack.c.l.b16 %v3188
  %v3282 = vunpack.c.h.b16 %v3188
  %v3283 = vunpack.c.l.b16 %v3189
  %v3284 = vunpack.c.h.b16 %v3189
  %v3285 = vunpack.c.l.b16 %v3190
  %v3286 = vunpack.c.h.b16 %v3190
  %v3287 = vpack.c.b16 %v3227, %v3223
  %v3288 = vpack.c.b16 %v3228, %v3224
  %v3289 = vpack.c.b16 %v3229, %v3225
  %v3290 = vpack.c.b16 %v3230, %v3226
  %v3291 = vpack.c.b16 %v3235, %v3231
  %v3292 = vpack.c.b16 %v3236, %v3232
  %v3293 = vpack.c.b16 %v3237, %v3233
  %v3294 = vpack.c.b16 %v3238, %v3234
  %v3295 = vpack.c.b16 %v3243, %v3239
  %v3296 = vpack.c.b16 %v3244, %v3240
  %v3297 = vpack.c.b16 %v3245, %v3241
  %v3298 = vpack.c.b16 %v3246, %v3242
  %v3299 = vpack.c.b16 %v3251, %v3247
  %v3300 = vpack.c.b16 %v3252, %v3248
  %v3301 = vpack.c.b16 %v3253, %v3249
  %v3302 = vpack.c.b16 %v3254, %v3250
  %v3303 = vpack.c.b16 %v3259, %v3255
  %v3304 = vpack.c.b16 %v3260, %v3256
  %v3305 = vpack.c.b16 %v3261, %v3257
  %v3306 = vpack.c.b16 %v3262, %v3258
  %v3307 = vpack.c.b16 %v3267, %v3263
  %v3308 = vpack.c.b16 %v3268, %v3264
  %v3309 = vpack.c.b16 %v3269, %v3265
  %v3310 = vpack.c.b16 %v3270, %v3266
  %v3311 = vpack.c.b16 %v3275, %v3271
  %v3312 = vpack.c.b16 %v3276, %v3272
  %v3313 = vpack.c.b16 %v3277, %v3273
  %v3314 = vpack.c.b16 %v3278, %v3274
  %v3315 = vpack.c.b16 %v3283, %v3279
  %v3316 = vpack.c.b16 %v3284, %v3280
  %v3317 = vpack.c.b16 %v3285, %v3281
  %v3318 = vpack.c.b16 %v3286, %v3282
  %3351 = vmatprep.subr.bf16.mxu0 %v3316
  %3352 = vmatpush1.bf16.msra.mxu0 %v3315
  %3353 = vmatprep.subr.bf16.mxu0 %v3312
  %3354 = vmatpush1.bf16.msra.mxu0 %v3311
  %3355 = vmatprep.subr.bf16.mxu0 %v3308
  %3356 = vmatpush1.bf16.msra.mxu0 %v3307
  %3357 = vmatprep.subr.bf16.mxu0 %v3304
  %3358 = vmatpush1.bf16.msra.mxu0 %v3303
  %3359 = vmatprep.subr.bf16.mxu0 %v3300
  %3360 = vmatpush1.bf16.msra.mxu0 %v3299
  %3361 = vmatprep.subr.bf16.mxu0 %v3296
  %3362 = vmatpush1.bf16.msra.mxu0 %v3295
  %3363 = vmatprep.subr.bf16.mxu0 %v3292
  %3364 = vmatpush1.bf16.msra.mxu0 %v3291
  %3365 = vmatprep.subr.bf16.mxu0 %v3288
  %3366 = vmatpush1.bf16.msra.mxu0 %v3287
  %3367 = vmatprep.subr.bf16.mxu0 0
  %3368 = vmatpush2.bf16.msra.mxu0 0
  %3369 = vmatprep.subr.bf16.mxu0 0
  %3370 = vmatpush2.bf16.msra.mxu0 0
  %3371 = vmatprep.subr.bf16.mxu0 0
  %3372 = vmatpush2.bf16.msra.mxu0 0
  %3373 = vmatprep.subr.bf16.mxu0 0
  %3374 = vmatpush2.bf16.msra.mxu0 0
  %3375 = vmatprep.subr.bf16.mxu0 0
  %3376 = vmatpush2.bf16.msra.mxu0 0
  %3377 = vmatprep.subr.bf16.mxu0 0
  %3378 = vmatpush2.bf16.msra.mxu0 0
  %3379 = vmatprep.subr.bf16.mxu0 0
  %3380 = vmatpush2.bf16.msra.mxu0 0
  %3381 = vmatprep.subr.bf16.mxu0 0
  %3382 = vmatpush2.bf16.msra.mxu0 0
  %3383 = vmatprep.mubr.bf16.mxu0 0
  %3384 = vmatmul.mubr.bf16.gmra.mxu0 %v3158
  %v3385 = vpop.f32.mrf.mxu0
  %v3386 = vadd.f32 0.0, %v3385
  %v3387 = vpop.f32.mrf.mxu0
  %v3388 = vadd.f32 0.0, %v3387
  %v3389 = vpop.f32.mrf.mxu0
  %v3390 = vpop.f32.mrf.mxu0
  %3391 = vdwg.mxu0
  %3392 = vmatprep.subr.bf16.mxu0 %v3318
  %3393 = vmatpush1.bf16.msra.mxu0 %v3317
  %3394 = vmatprep.subr.bf16.mxu0 %v3314
  %3395 = vmatpush1.bf16.msra.mxu0 %v3313
  %3396 = vmatprep.subr.bf16.mxu0 %v3310
  %3397 = vmatpush1.bf16.msra.mxu0 %v3309
  %3398 = vmatprep.subr.bf16.mxu0 %v3306
  %3399 = vmatpush1.bf16.msra.mxu0 %v3305
  %3400 = vmatprep.subr.bf16.mxu0 %v3302
  %3401 = vmatpush1.bf16.msra.mxu0 %v3301
  %3402 = vmatprep.subr.bf16.mxu0 %v3298
  %3403 = vmatpush1.bf16.msra.mxu0 %v3297
  %3404 = vmatprep.subr.bf16.mxu0 %v3294
  %3405 = vmatpush1.bf16.msra.mxu0 %v3293
  %3406 = vmatprep.subr.bf16.mxu0 %v3290
  %3407 = vmatpush1.bf16.msra.mxu0 %v3289
  %3408 = vmatprep.subr.bf16.mxu0 0
  %3409 = vmatpush2.bf16.msra.mxu0 0
  %3410 = vmatprep.subr.bf16.mxu0 0
  %3411 = vmatpush2.bf16.msra.mxu0 0
  %3412 = vmatprep.subr.bf16.mxu0 0
  %3413 = vmatpush2.bf16.msra.mxu0 0
  %3414 = vmatprep.subr.bf16.mxu0 0
  %3415 = vmatpush2.bf16.msra.mxu0 0
  %3416 = vmatprep.subr.bf16.mxu0 0
  %3417 = vmatpush2.bf16.msra.mxu0 0
  %3418 = vmatprep.subr.bf16.mxu0 0
  %3419 = vmatpush2.bf16.msra.mxu0 0
  %3420 = vmatprep.subr.bf16.mxu0 0
  %3421 = vmatpush2.bf16.msra.mxu0 0
  %3422 = vmatprep.subr.bf16.mxu0 0
  %3423 = vmatpush2.bf16.msra.mxu0 0
  %3424 = vmatprep.mubr.bf16.mxu0 0
  %3425 = vmatmul.mubr.bf16.gmra.mxu0 %v3158
  %v3426 = vpop.f32.mrf.mxu0
  %v3427 = vadd.f32 0.0, %v3426
  %v3428 = vpop.f32.mrf.mxu0
  %v3429 = vadd.f32 0.0, %v3428
  %v3430 = vpop.f32.mrf.mxu0
  %v3431 = vpop.f32.mrf.mxu0
  %3432 = vdwg.mxu0
  %v3433 = vadd.f32 %v3154, %v3386
  %v3434 = vadd.f32 %v3155, %v3388
  %v3435 = vadd.f32 %v3156, %v3427
  %v3436 = vadd.f32 %v3157, %v3429
  %v3437 = vxor.u32 %v3433, 2147483648
  %v3438 = vmul.f32 %v3437, 1.442695
  %v3439 = vpow.pop %v3438
  %v3440 = vadd.f32 %v3439, 1.0
  %v3441 = vrcp.pop %v3440
  %v3442 = vmul.f32 1.0, %v3441
  %v3443 = vxor.u32 %v3434, 2147483648
  %v3444 = vmul.f32 %v3443, 1.442695
  %v3445 = vpow.pop %v3444
  %v3446 = vadd.f32 %v3445, 1.0
  %v3447 = vrcp.pop %v3446
  %v3448 = vmul.f32 1.0, %v3447
  %v3449 = vtanh.pop %v3435
  %v3450 = vxor.u32 %v3436, 2147483648
  %v3451 = vmul.f32 %v3450, 1.442695
  %v3452 = vpow.pop %v3451
  %v3453 = vadd.f32 %v3452, 1.0
  %v3454 = vrcp.pop %v3453
  %v3455 = vmul.f32 1.0, %v3454
  %v3456 = vmul.f32 %v3448, %v2976
  %v3457 = vmul.f32 %v3442, %v3449
  %v3458 = vadd.f32 %v3456, %v3457
  %v3459 = vtanh.pop %v3458
  %v3460 = vmul.f32 %v3455, %v3459
  %s3461 = scalar_lea.vmem %s0, 176
  %v3462 = vld [vmem:[%s3461] sm:$0xff]
  %v3463 = vld [vmem:[%s3461 + $0x8] sm:$0xff]
  %v3464 = vunpack.c.l.bf16 %v3462
  %v3465 = vunpack.c.h.bf16 %v3462
  %v3466 = vunpack.c.l.bf16 %v3463
  %v3467 = vunpack.c.h.bf16 %v3463
  %v3468 = vpack.c.bf16 %v3460, %v3460
  %3469 = vmatprep.subr.bf16.mxu0 %v3316
  %3470 = vmatpush1.bf16.msra.mxu0 %v3315
  %3471 = vmatprep.subr.bf16.mxu0 %v3312
  %3472 = vmatpush1.bf16.msra.mxu0 %v3311
  %3473 = vmatprep.subr.bf16.mxu0 %v3308
  %3474 = vmatpush1.bf16.msra.mxu0 %v3307
  %3475 = vmatprep.subr.bf16.mxu0 %v3304
  %3476 = vmatpush1.bf16.msra.mxu0 %v3303
  %3477 = vmatprep.subr.bf16.mxu0 %v3300
  %3478 = vmatpush1.bf16.msra.mxu0 %v3299
  %3479 = vmatprep.subr.bf16.mxu0 %v3296
  %3480 = vmatpush1.bf16.msra.mxu0 %v3295
  %3481 = vmatprep.subr.bf16.mxu0 %v3292
  %3482 = vmatpush1.bf16.msra.mxu0 %v3291
  %3483 = vmatprep.subr.bf16.mxu0 %v3288
  %3484 = vmatpush1.bf16.msra.mxu0 %v3287
  %3485 = vmatprep.subr.bf16.mxu0 0
  %3486 = vmatpush2.bf16.msra.mxu0 0
  %3487 = vmatprep.subr.bf16.mxu0 0
  %3488 = vmatpush2.bf16.msra.mxu0 0
  %3489 = vmatprep.subr.bf16.mxu0 0
  %3490 = vmatpush2.bf16.msra.mxu0 0
  %3491 = vmatprep.subr.bf16.mxu0 0
  %3492 = vmatpush2.bf16.msra.mxu0 0
  %3493 = vmatprep.subr.bf16.mxu0 0
  %3494 = vmatpush2.bf16.msra.mxu0 0
  %3495 = vmatprep.subr.bf16.mxu0 0
  %3496 = vmatpush2.bf16.msra.mxu0 0
  %3497 = vmatprep.subr.bf16.mxu0 0
  %3498 = vmatpush2.bf16.msra.mxu0 0
  %3499 = vmatprep.subr.bf16.mxu0 0
  %3500 = vmatpush2.bf16.msra.mxu0 0
  %3501 = vmatprep.mubr.bf16.mxu0 0
  %3502 = vmatmul.mubr.bf16.gmra.mxu0 %v3468
  %v3503 = vpop.f32.mrf.mxu0
  %v3504 = vadd.f32 0.0, %v3503
  %v3505 = vpop.f32.mrf.mxu0
  %v3506 = vadd.f32 0.0, %v3505
  %v3507 = vpop.f32.mrf.mxu0
  %v3508 = vpop.f32.mrf.mxu0
  %3509 = vdwg.mxu0
  %3510 = vmatprep.subr.bf16.mxu0 %v3318
  %3511 = vmatpush1.bf16.msra.mxu0 %v3317
  %3512 = vmatprep.subr.bf16.mxu0 %v3314
  %3513 = vmatpush1.bf16.msra.mxu0 %v3313
  %3514 = vmatprep.subr.bf16.mxu0 %v3310
  %3515 = vmatpush1.bf16.msra.mxu0 %v3309
  %3516 = vmatprep.subr.bf16.mxu0 %v3306
  %3517 = vmatpush1.bf16.msra.mxu0 %v3305
  %3518 = vmatprep.subr.bf16.mxu0 %v3302
  %3519 = vmatpush1.bf16.msra.mxu0 %v3301
  %3520 = vmatprep.subr.bf16.mxu0 %v3298
  %3521 = vmatpush1.bf16.msra.mxu0 %v3297
  %3522 = vmatprep.subr.bf16.mxu0 %v3294
  %3523 = vmatpush1.bf16.msra.mxu0 %v3293
  %3524 = vmatprep.subr.bf16.mxu0 %v3290
  %3525 = vmatpush1.bf16.msra.mxu0 %v3289
  %3526 = vmatprep.subr.bf16.mxu0 0
  %3527 = vmatpush2.bf16.msra.mxu0 0
  %3528 = vmatprep.subr.bf16.mxu0 0
  %3529 = vmatpush2.bf16.msra.mxu0 0
  %3530 = vmatprep.subr.bf16.mxu0 0
  %3531 = vmatpush2.bf16.msra.mxu0 0
  %3532 = vmatprep.subr.bf16.mxu0 0
  %3533 = vmatpush2.bf16.msra.mxu0 0
  %3534 = vmatprep.subr.bf16.mxu0 0
  %3535 = vmatpush2.bf16.msra.mxu0 0
  %3536 = vmatprep.subr.bf16.mxu0 0
  %3537 = vmatpush2.bf16.msra.mxu0 0
  %3538 = vmatprep.subr.bf16.mxu0 0
  %3539 = vmatpush2.bf16.msra.mxu0 0
  %3540 = vmatprep.subr.bf16.mxu0 0
  %3541 = vmatpush2.bf16.msra.mxu0 0
  %3542 = vmatprep.mubr.bf16.mxu0 0
  %3543 = vmatmul.mubr.bf16.gmra.mxu0 %v3468
  %v3544 = vpop.f32.mrf.mxu0
  %v3545 = vadd.f32 0.0, %v3544
  %v3546 = vpop.f32.mrf.mxu0
  %v3547 = vadd.f32 0.0, %v3546
  %v3548 = vpop.f32.mrf.mxu0
  %v3549 = vpop.f32.mrf.mxu0
  %3550 = vdwg.mxu0
  %v3551 = vadd.f32 %v3464, %v3504
  %v3552 = vadd.f32 %v3465, %v3506
  %v3553 = vadd.f32 %v3466, %v3545
  %v3554 = vadd.f32 %v3467, %v3547
  %v3555 = vxor.u32 %v3551, 2147483648
  %v3556 = vmul.f32 %v3555, 1.442695
  %v3557 = vpow.pop %v3556
  %v3558 = vadd.f32 %v3557, 1.0
  %v3559 = vrcp.pop %v3558
  %v3560 = vmul.f32 1.0, %v3559
  %v3561 = vxor.u32 %v3552, 2147483648
  %v3562 = vmul.f32 %v3561, 1.442695
  %v3563 = vpow.pop %v3562
  %v3564 = vadd.f32 %v3563, 1.0
  %v3565 = vrcp.pop %v3564
  %v3566 = vmul.f32 1.0, %v3565
  %v3567 = vtanh.pop %v3553
  %v3568 = vxor.u32 %v3554, 2147483648
  %v3569 = vmul.f32 %v3568, 1.442695
  %v3570 = vpow.pop %v3569
  %v3571 = vadd.f32 %v3570, 1.0
  %v3572 = vrcp.pop %v3571
  %v3573 = vmul.f32 1.0, %v3572
  %v3574 = vmul.f32 %v3566, %v3458
  %v3575 = vmul.f32 %v3560, %v3567
  %v3576 = vadd.f32 %v3574, %v3575
  %v3577 = vtanh.pop %v3576
  %v3578 = vmul.f32 %v3573, %v3577
  %v3580 = vcombine.high %v3460, %v3460
  %v3582 = vunpack.c.l.s4 1966171168
  %v3583 = vunpack.c.0.s8 %v3582
  %v3584 = vlaneseq
  %v3585 = vshrl.u32 %v3584, 7
  %v3586 = vsub.s32 %v3583, %v3585
  %v3587 = vrot.slane %v3460, %v3586
  %v3589 = vunpack.c.l.s4 1966171168
  %v3590 = vunpack.c.0.s8 %v3589
  %v3591 = vlaneseq
  %v3592 = vshrl.u32 %v3591, 7
  %v3593 = vsub.s32 %v3590, %v3592
  %v3594 = vrot.slane %v3580, %v3593
  %v3595 = vcombine.high %v3587, %v3587
  %v3596 = vcombine.high %v3594, %v3594
  %v3598 = vunpack.c.l.s4 1966171168
  %v3599 = vunpack.c.0.s8 %v3598
  %v3600 = vlaneseq
  %v3601 = vshrl.u32 %v3600, 7
  %v3602 = vsub.s32 %v3599, %v3601
  %v3603 = vrot.slane %v3587, %v3602
  %v3605 = vunpack.c.l.s4 1966171168
  %v3606 = vunpack.c.0.s8 %v3605
  %v3607 = vlaneseq
  %v3608 = vshrl.u32 %v3607, 7
  %v3609 = vsub.s32 %v3606, %v3608
  %v3610 = vrot.slane %v3594, %v3609
  %v3612 = vunpack.c.l.s4 1966171168
  %v3613 = vunpack.c.0.s8 %v3612
  %v3614 = vlaneseq
  %v3615 = vshrl.u32 %v3614, 7
  %v3616 = vsub.s32 %v3613, %v3615
  %v3617 = vrot.slane %v3595, %v3616
  %v3619 = vunpack.c.l.s4 1966171168
  %v3620 = vunpack.c.0.s8 %v3619
  %v3621 = vlaneseq
  %v3622 = vshrl.u32 %v3621, 7
  %v3623 = vsub.s32 %v3620, %v3622
  %v3624 = vrot.slane %v3596, %v3623
  %v3625 = vcombine.high %v3603, %v3603
  %v3626 = vcombine.high %v3610, %v3610
  %v3627 = vcombine.high %v3617, %v3617
  %v3628 = vcombine.high %v3624, %v3624
  %v3638 = vcombine.high %v3578, %v3578
  %v3640 = vunpack.c.l.s4 1966171168
  %v3641 = vunpack.c.0.s8 %v3640
  %v3642 = vlaneseq
  %v3643 = vshrl.u32 %v3642, 7
  %v3644 = vsub.s32 %v3641, %v3643
  %v3645 = vrot.slane %v3578, %v3644
  %v3647 = vunpack.c.l.s4 1966171168
  %v3648 = vunpack.c.0.s8 %v3647
  %v3649 = vlaneseq
  %v3650 = vshrl.u32 %v3649, 7
  %v3651 = vsub.s32 %v3648, %v3650
  %v3652 = vrot.slane %v3638, %v3651
  %v3653 = vcombine.high %v3645, %v3645
  %v3654 = vcombine.high %v3652, %v3652
  %v3656 = vunpack.c.l.s4 1966171168
  %v3657 = vunpack.c.0.s8 %v3656
  %v3658 = vlaneseq
  %v3659 = vshrl.u32 %v3658, 7
  %v3660 = vsub.s32 %v3657, %v3659
  %v3661 = vrot.slane %v3645, %v3660
  %v3663 = vunpack.c.l.s4 1966171168
  %v3664 = vunpack.c.0.s8 %v3663
  %v3665 = vlaneseq
  %v3666 = vshrl.u32 %v3665, 7
  %v3667 = vsub.s32 %v3664, %v3666
  %v3668 = vrot.slane %v3652, %v3667
  %v3670 = vunpack.c.l.s4 1966171168
  %v3671 = vunpack.c.0.s8 %v3670
  %v3672 = vlaneseq
  %v3673 = vshrl.u32 %v3672, 7
  %v3674 = vsub.s32 %v3671, %v3673
  %v3675 = vrot.slane %v3653, %v3674
  %v3677 = vunpack.c.l.s4 1966171168
  %v3678 = vunpack.c.0.s8 %v3677
  %v3679 = vlaneseq
  %v3680 = vshrl.u32 %v3679, 7
  %v3681 = vsub.s32 %v3678, %v3680
  %v3682 = vrot.slane %v3654, %v3681
  %v3683 = vcombine.high %v3661, %v3661
  %v3684 = vcombine.high %v3668, %v3668
  %v3685 = vcombine.high %v3675, %v3675
  %v3686 = vcombine.high %v3682, %v3682
  %v3687 = vlaneseq
  %v3688 = vshrl.u32 %v3687, 7
  %v3689 = vsub.s32 0, %v3688
  %v3690 = vrot.slane %v3661, %v3689
  %v3691 = vlaneseq
  %v3692 = vshrl.u32 %v3691, 7
  %v3693 = vsub.s32 0, %v3692
  %v3694 = vrot.slane %v3675, %v3693
  %v3695 = vlaneseq
  %v3696 = vshrl.u32 %v3695, 7
  %v3697 = vsub.s32 0, %v3696
  %v3698 = vrot.slane %v3683, %v3697
  %v3699 = vlaneseq
  %v3700 = vshrl.u32 %v3699, 7
  %v3701 = vsub.s32 0, %v3700
  %v3702 = vrot.slane %v3685, %v3701
  %v3703 = vlaneseq
  %v3704 = vshrl.u32 %v3703, 7
  %v3705 = vsub.s32 0, %v3704
  %v3706 = vrot.slane %v3668, %v3705
  %v3707 = vlaneseq
  %v3708 = vshrl.u32 %v3707, 7
  %v3709 = vsub.s32 0, %v3708
  %v3710 = vrot.slane %v3682, %v3709
  %v3711 = vlaneseq
  %v3712 = vshrl.u32 %v3711, 7
  %v3713 = vsub.s32 0, %v3712
  %v3714 = vrot.slane %v3684, %v3713
  %v3715 = vlaneseq
  %v3716 = vshrl.u32 %v3715, 7
  %v3717 = vsub.s32 0, %v3716
  %v3718 = vrot.slane %v3686, %v3717
  %v3727 = vsel %vm606, %v3603, %v3690
  %v3728 = vsel %vm606, %v3617, %v3694
  %v3729 = vsel %vm606, %v3625, %v3698
  %v3730 = vsel %vm606, %v3627, %v3702
  %v3731 = vsel %vm606, %v3610, %v3706
  %v3732 = vsel %vm606, %v3624, %v3710
  %v3733 = vsel %vm606, %v3626, %v3714
  %v3734 = vsel %vm606, %v3628, %v3718
  %v3735 = vpack.c.bf16 %v3727, %v3727
  %v3736 = vpack.c.bf16 %v3728, %v3728
  %v3737 = vpack.c.bf16 %v3729, %v3729
  %v3738 = vpack.c.bf16 %v3730, %v3730
  %v3739 = vpack.c.bf16 %v3731, %v3731
  %v3740 = vpack.c.bf16 %v3732, %v3732
  %v3741 = vpack.c.bf16 %v3733, %v3733
  %v3742 = vpack.c.bf16 %v3734, %v3734
  %v3751 = vunpack.c.l.b16 %v3735
  %v3752 = vunpack.c.l.b16 %v3736
  %v3753 = vunpack.c.l.b16 %v3737
  %v3754 = vunpack.c.l.b16 %v3738
  %v3755 = vunpack.c.l.b16 %v3739
  %v3756 = vunpack.c.l.b16 %v3740
  %v3757 = vunpack.c.l.b16 %v3741
  %v3758 = vunpack.c.l.b16 %v3742
  %v3759 = vpack.c.b16 %v3751, %v3751
  %v3760 = vpack.c.b16 %v3752, %v3752
  %v3761 = vpack.c.b16 %v3753, %v3753
  %v3762 = vpack.c.b16 %v3754, %v3754
  %v3763 = vpack.c.b16 %v3755, %v3755
  %v3764 = vpack.c.b16 %v3756, %v3756
  %v3765 = vpack.c.b16 %v3757, %v3757
  %v3766 = vpack.c.b16 %v3758, %v3758
  %v3767 = vrot.slane %v3759, 7
  %v3768 = vrot.slane %v3760, 7
  %v3769 = vrot.slane %v3761, 7
  %v3770 = vrot.slane %v3762, 7
  %v3771 = vrot.slane %v3763, 7
  %v3772 = vrot.slane %v3764, 7
  %v3773 = vrot.slane %v3765, 7
  %v3774 = vrot.slane %v3766, 7
  %3783 = vst [vmem:[%s4 + $0x4] sm:$0x2] %v3767
  %3784 = vst [vmem:[%s4 + $0x14] sm:$0x2] %v3768
  %3785 = vst [vmem:[%s4 + $0x24] sm:$0x2] %v3769
  %3786 = vst [vmem:[%s4 + $0x34] sm:$0x2] %v3770
  %3787 = vst [vmem:[%s4 + $0x44] sm:$0x2] %v3771
  %3788 = vst [vmem:[%s4 + $0x54] sm:$0x2] %v3772
  %3789 = vst [vmem:[%s4 + $0x64] sm:$0x2] %v3773
  %3790 = vst [vmem:[%s4 + $0x74] sm:$0x2] %v3774
  %s3791 = scalar_lea.vmem %s0, 192
  %v3792 = vld [vmem:[%s3791] sm:$0xff]
  %v3793 = vld [vmem:[%s3791 + $0x8] sm:$0xff]
  %v3794 = vunpack.c.l.bf16 %v3792
  %v3795 = vunpack.c.h.bf16 %v3792
  %v3796 = vunpack.c.l.bf16 %v3793
  %v3797 = vunpack.c.h.bf16 %v3793
  %v3798 = vpack.c.bf16 %v3578, %v3578
  %v3799 = vld [vmem:[%s1] sm:$0xff]
  %v3800 = vld [vmem:[%s1 + $0x8] sm:$0xff]
  %v3801 = vld [vmem:[%s1 + $0x10] sm:$0xff]
  %v3802 = vld [vmem:[%s1 + $0x18] sm:$0xff]
  %v3803 = vld [vmem:[%s1 + $0x20] sm:$0xff]
  %v3804 = vld [vmem:[%s1 + $0x28] sm:$0xff]
  %v3805 = vld [vmem:[%s1 + $0x30] sm:$0xff]
  %v3806 = vld [vmem:[%s1 + $0x38] sm:$0xff]
  %v3807 = vld [vmem:[%s1 + $0x40] sm:$0xff]
  %v3808 = vld [vmem:[%s1 + $0x48] sm:$0xff]
  %v3809 = vld [vmem:[%s1 + $0x50] sm:$0xff]
  %v3810 = vld [vmem:[%s1 + $0x58] sm:$0xff]
  %v3811 = vld [vmem:[%s1 + $0x60] sm:$0xff]
  %v3812 = vld [vmem:[%s1 + $0x68] sm:$0xff]
  %v3813 = vld [vmem:[%s1 + $0x70] sm:$0xff]
  %v3814 = vld [vmem:[%s1 + $0x78] sm:$0xff]
  %v3815 = vld [vmem:[%s1 + $0x80] sm:$0xff]
  %v3816 = vld [vmem:[%s1 + $0x88] sm:$0xff]
  %v3817 = vld [vmem:[%s1 + $0x90] sm:$0xff]
  %v3818 = vld [vmem:[%s1 + $0x98] sm:$0xff]
  %v3819 = vld [vmem:[%s1 + $0xa0] sm:$0xff]
  %v3820 = vld [vmem:[%s1 + $0xa8] sm:$0xff]
  %v3821 = vld [vmem:[%s1 + $0xb0] sm:$0xff]
  %v3822 = vld [vmem:[%s1 + $0xb8] sm:$0xff]
  %v3823 = vld [vmem:[%s1 + $0xc0] sm:$0xff]
  %v3824 = vld [vmem:[%s1 + $0xc8] sm:$0xff]
  %v3825 = vld [vmem:[%s1 + $0xd0] sm:$0xff]
  %v3826 = vld [vmem:[%s1 + $0xd8] sm:$0xff]
  %v3827 = vld [vmem:[%s1 + $0xe0] sm:$0xff]
  %v3828 = vld [vmem:[%s1 + $0xe8] sm:$0xff]
  %v3829 = vld [vmem:[%s1 + $0xf0] sm:$0xff]
  %v3830 = vld [vmem:[%s1 + $0xf8] sm:$0xff]
  %v3863 = vunpack.c.l.b16 %v3799
  %v3864 = vunpack.c.h.b16 %v3799
  %v3865 = vunpack.c.l.b16 %v3800
  %v3866 = vunpack.c.h.b16 %v3800
  %v3867 = vunpack.c.l.b16 %v3801
  %v3868 = vunpack.c.h.b16 %v3801
  %v3869 = vunpack.c.l.b16 %v3802
  %v3870 = vunpack.c.h.b16 %v3802
  %v3871 = vunpack.c.l.b16 %v3803
  %v3872 = vunpack.c.h.b16 %v3803
  %v3873 = vunpack.c.l.b16 %v3804
  %v3874 = vunpack.c.h.b16 %v3804
  %v3875 = vunpack.c.l.b16 %v3805
  %v3876 = vunpack.c.h.b16 %v3805
  %v3877 = vunpack.c.l.b16 %v3806
  %v3878 = vunpack.c.h.b16 %v3806
  %v3879 = vunpack.c.l.b16 %v3807
  %v3880 = vunpack.c.h.b16 %v3807
  %v3881 = vunpack.c.l.b16 %v3808
  %v3882 = vunpack.c.h.b16 %v3808
  %v3883 = vunpack.c.l.b16 %v3809
  %v3884 = vunpack.c.h.b16 %v3809
  %v3885 = vunpack.c.l.b16 %v3810
  %v3886 = vunpack.c.h.b16 %v3810
  %v3887 = vunpack.c.l.b16 %v3811
  %v3888 = vunpack.c.h.b16 %v3811
  %v3889 = vunpack.c.l.b16 %v3812
  %v3890 = vunpack.c.h.b16 %v3812
  %v3891 = vunpack.c.l.b16 %v3813
  %v3892 = vunpack.c.h.b16 %v3813
  %v3893 = vunpack.c.l.b16 %v3814
  %v3894 = vunpack.c.h.b16 %v3814
  %v3895 = vunpack.c.l.b16 %v3815
  %v3896 = vunpack.c.h.b16 %v3815
  %v3897 = vunpack.c.l.b16 %v3816
  %v3898 = vunpack.c.h.b16 %v3816
  %v3899 = vunpack.c.l.b16 %v3817
  %v3900 = vunpack.c.h.b16 %v3817
  %v3901 = vunpack.c.l.b16 %v3818
  %v3902 = vunpack.c.h.b16 %v3818
  %v3903 = vunpack.c.l.b16 %v3819
  %v3904 = vunpack.c.h.b16 %v3819
  %v3905 = vunpack.c.l.b16 %v3820
  %v3906 = vunpack.c.h.b16 %v3820
  %v3907 = vunpack.c.l.b16 %v3821
  %v3908 = vunpack.c.h.b16 %v3821
  %v3909 = vunpack.c.l.b16 %v3822
  %v3910 = vunpack.c.h.b16 %v3822
  %v3911 = vunpack.c.l.b16 %v3823
  %v3912 = vunpack.c.h.b16 %v3823
  %v3913 = vunpack.c.l.b16 %v3824
  %v3914 = vunpack.c.h.b16 %v3824
  %v3915 = vunpack.c.l.b16 %v3825
  %v3916 = vunpack.c.h.b16 %v3825
  %v3917 = vunpack.c.l.b16 %v3826
  %v3918 = vunpack.c.h.b16 %v3826
  %v3919 = vunpack.c.l.b16 %v3827
  %v3920 = vunpack.c.h.b16 %v3827
  %v3921 = vunpack.c.l.b16 %v3828
  %v3922 = vunpack.c.h.b16 %v3828
  %v3923 = vunpack.c.l.b16 %v3829
  %v3924 = vunpack.c.h.b16 %v3829
  %v3925 = vunpack.c.l.b16 %v3830
  %v3926 = vunpack.c.h.b16 %v3830
  %v3927 = vpack.c.b16 %v3867, %v3863
  %v3928 = vpack.c.b16 %v3868, %v3864
  %v3929 = vpack.c.b16 %v3869, %v3865
  %v3930 = vpack.c.b16 %v3870, %v3866
  %v3931 = vpack.c.b16 %v3875, %v3871
  %v3932 = vpack.c.b16 %v3876, %v3872
  %v3933 = vpack.c.b16 %v3877, %v3873
  %v3934 = vpack.c.b16 %v3878, %v3874
  %v3935 = vpack.c.b16 %v3883, %v3879
  %v3936 = vpack.c.b16 %v3884, %v3880
  %v3937 = vpack.c.b16 %v3885, %v3881
  %v3938 = vpack.c.b16 %v3886, %v3882
  %v3939 = vpack.c.b16 %v3891, %v3887
  %v3940 = vpack.c.b16 %v3892, %v3888
  %v3941 = vpack.c.b16 %v3893, %v3889
  %v3942 = vpack.c.b16 %v3894, %v3890
  %v3943 = vpack.c.b16 %v3899, %v3895
  %v3944 = vpack.c.b16 %v3900, %v3896
  %v3945 = vpack.c.b16 %v3901, %v3897
  %v3946 = vpack.c.b16 %v3902, %v3898
  %v3947 = vpack.c.b16 %v3907, %v3903
  %v3948 = vpack.c.b16 %v3908, %v3904
  %v3949 = vpack.c.b16 %v3909, %v3905
  %v3950 = vpack.c.b16 %v3910, %v3906
  %v3951 = vpack.c.b16 %v3915, %v3911
  %v3952 = vpack.c.b16 %v3916, %v3912
  %v3953 = vpack.c.b16 %v3917, %v3913
  %v3954 = vpack.c.b16 %v3918, %v3914
  %v3955 = vpack.c.b16 %v3923, %v3919
  %v3956 = vpack.c.b16 %v3924, %v3920
  %v3957 = vpack.c.b16 %v3925, %v3921
  %v3958 = vpack.c.b16 %v3926, %v3922
  %3991 = vmatprep.subr.bf16.mxu0 %v3956
  %3992 = vmatpush1.bf16.msra.mxu0 %v3955
  %3993 = vmatprep.subr.bf16.mxu0 %v3952
  %3994 = vmatpush1.bf16.msra.mxu0 %v3951
  %3995 = vmatprep.subr.bf16.mxu0 %v3948
  %3996 = vmatpush1.bf16.msra.mxu0 %v3947
  %3997 = vmatprep.subr.bf16.mxu0 %v3944
  %3998 = vmatpush1.bf16.msra.mxu0 %v3943
  %3999 = vmatprep.subr.bf16.mxu0 %v3940
  %4000 = vmatpush1.bf16.msra.mxu0 %v3939
  %4001 = vmatprep.subr.bf16.mxu0 %v3936
  %4002 = vmatpush1.bf16.msra.mxu0 %v3935
  %4003 = vmatprep.subr.bf16.mxu0 %v3932
  %4004 = vmatpush1.bf16.msra.mxu0 %v3931
  %4005 = vmatprep.subr.bf16.mxu0 %v3928
  %4006 = vmatpush1.bf16.msra.mxu0 %v3927
  %4007 = vmatprep.subr.bf16.mxu0 0
  %4008 = vmatpush2.bf16.msra.mxu0 0
  %4009 = vmatprep.subr.bf16.mxu0 0
  %4010 = vmatpush2.bf16.msra.mxu0 0
  %4011 = vmatprep.subr.bf16.mxu0 0
  %4012 = vmatpush2.bf16.msra.mxu0 0
  %4013 = vmatprep.subr.bf16.mxu0 0
  %4014 = vmatpush2.bf16.msra.mxu0 0
  %4015 = vmatprep.subr.bf16.mxu0 0
  %4016 = vmatpush2.bf16.msra.mxu0 0
  %4017 = vmatprep.subr.bf16.mxu0 0
  %4018 = vmatpush2.bf16.msra.mxu0 0
  %4019 = vmatprep.subr.bf16.mxu0 0
  %4020 = vmatpush2.bf16.msra.mxu0 0
  %4021 = vmatprep.subr.bf16.mxu0 0
  %4022 = vmatpush2.bf16.msra.mxu0 0
  %4023 = vmatprep.mubr.bf16.mxu0 0
  %4024 = vmatmul.mubr.bf16.gmra.mxu0 %v3798
  %v4025 = vpop.f32.mrf.mxu0
  %v4026 = vadd.f32 0.0, %v4025
  %v4027 = vpop.f32.mrf.mxu0
  %v4028 = vadd.f32 0.0, %v4027
  %v4029 = vpop.f32.mrf.mxu0
  %v4030 = vpop.f32.mrf.mxu0
  %4031 = vdwg.mxu0
  %4032 = vmatprep.subr.bf16.mxu0 %v3958
  %4033 = vmatpush1.bf16.msra.mxu0 %v3957
  %4034 = vmatprep.subr.bf16.mxu0 %v3954
  %4035 = vmatpush1.bf16.msra.mxu0 %v3953
  %4036 = vmatprep.subr.bf16.mxu0 %v3950
  %4037 = vmatpush1.bf16.msra.mxu0 %v3949
  %4038 = vmatprep.subr.bf16.mxu0 %v3946
  %4039 = vmatpush1.bf16.msra.mxu0 %v3945
  %4040 = vmatprep.subr.bf16.mxu0 %v3942
  %4041 = vmatpush1.bf16.msra.mxu0 %v3941
  %4042 = vmatprep.subr.bf16.mxu0 %v3938
  %4043 = vmatpush1.bf16.msra.mxu0 %v3937
  %4044 = vmatprep.subr.bf16.mxu0 %v3934
  %4045 = vmatpush1.bf16.msra.mxu0 %v3933
  %4046 = vmatprep.subr.bf16.mxu0 %v3930
  %4047 = vmatpush1.bf16.msra.mxu0 %v3929
  %4048 = vmatprep.subr.bf16.mxu0 0
  %4049 = vmatpush2.bf16.msra.mxu0 0
  %4050 = vmatprep.subr.bf16.mxu0 0
  %4051 = vmatpush2.bf16.msra.mxu0 0
  %4052 = vmatprep.subr.bf16.mxu0 0
  %4053 = vmatpush2.bf16.msra.mxu0 0
  %4054 = vmatprep.subr.bf16.mxu0 0
  %4055 = vmatpush2.bf16.msra.mxu0 0
  %4056 = vmatprep.subr.bf16.mxu0 0
  %4057 = vmatpush2.bf16.msra.mxu0 0
  %4058 = vmatprep.subr.bf16.mxu0 0
  %4059 = vmatpush2.bf16.msra.mxu0 0
  %4060 = vmatprep.subr.bf16.mxu0 0
  %4061 = vmatpush2.bf16.msra.mxu0 0
  %4062 = vmatprep.subr.bf16.mxu0 0
  %4063 = vmatpush2.bf16.msra.mxu0 0
  %4064 = vmatprep.mubr.bf16.mxu0 0
  %4065 = vmatmul.mubr.bf16.gmra.mxu0 %v3798
  %v4066 = vpop.f32.mrf.mxu0
  %v4067 = vadd.f32 0.0, %v4066
  %v4068 = vpop.f32.mrf.mxu0
  %v4069 = vadd.f32 0.0, %v4068
  %v4070 = vpop.f32.mrf.mxu0
  %v4071 = vpop.f32.mrf.mxu0
  %4072 = vdwg.mxu0
  %v4073 = vadd.f32 %v3794, %v4026
  %v4074 = vadd.f32 %v3795, %v4028
  %v4075 = vadd.f32 %v3796, %v4067
  %v4076 = vadd.f32 %v3797, %v4069
  %v4077 = vxor.u32 %v4073, 2147483648
  %v4078 = vmul.f32 %v4077, 1.442695
  %v4079 = vpow.pop %v4078
  %v4080 = vadd.f32 %v4079, 1.0
  %v4081 = vrcp.pop %v4080
  %v4082 = vmul.f32 1.0, %v4081
  %v4083 = vxor.u32 %v4074, 2147483648
  %v4084 = vmul.f32 %v4083, 1.442695
  %v4085 = vpow.pop %v4084
  %v4086 = vadd.f32 %v4085, 1.0
  %v4087 = vrcp.pop %v4086
  %v4088 = vmul.f32 1.0, %v4087
  %v4089 = vtanh.pop %v4075
  %v4090 = vxor.u32 %v4076, 2147483648
  %v4091 = vmul.f32 %v4090, 1.442695
  %v4092 = vpow.pop %v4091
  %v4093 = vadd.f32 %v4092, 1.0
  %v4094 = vrcp.pop %v4093
  %v4095 = vmul.f32 1.0, %v4094
  %v4096 = vmul.f32 %v4088, %v3576
  %v4097 = vmul.f32 %v4082, %v4089
  %v4098 = vadd.f32 %v4096, %v4097
  %v4099 = vtanh.pop %v4098
  %v4100 = vmul.f32 %v4095, %v4099
  %s4101 = scalar_lea.vmem %s0, 208
  %v4102 = vld [vmem:[%s4101] sm:$0xff]
  %v4103 = vld [vmem:[%s4101 + $0x8] sm:$0xff]
  %v4104 = vunpack.c.l.bf16 %v4102
  %v4105 = vunpack.c.h.bf16 %v4102
  %v4106 = vunpack.c.l.bf16 %v4103
  %v4107 = vunpack.c.h.bf16 %v4103
  %v4108 = vpack.c.bf16 %v4100, %v4100
  %4109 = vmatprep.subr.bf16.mxu0 %v3956
  %4110 = vmatpush1.bf16.msra.mxu0 %v3955
  %4111 = vmatprep.subr.bf16.mxu0 %v3952
  %4112 = vmatpush1.bf16.msra.mxu0 %v3951
  %4113 = vmatprep.subr.bf16.mxu0 %v3948
  %4114 = vmatpush1.bf16.msra.mxu0 %v3947
  %4115 = vmatprep.subr.bf16.mxu0 %v3944
  %4116 = vmatpush1.bf16.msra.mxu0 %v3943
  %4117 = vmatprep.subr.bf16.mxu0 %v3940
  %4118 = vmatpush1.bf16.msra.mxu0 %v3939
  %4119 = vmatprep.subr.bf16.mxu0 %v3936
  %4120 = vmatpush1.bf16.msra.mxu0 %v3935
  %4121 = vmatprep.subr.bf16.mxu0 %v3932
  %4122 = vmatpush1.bf16.msra.mxu0 %v3931
  %4123 = vmatprep.subr.bf16.mxu0 %v3928
  %4124 = vmatpush1.bf16.msra.mxu0 %v3927
  %4125 = vmatprep.subr.bf16.mxu0 0
  %4126 = vmatpush2.bf16.msra.mxu0 0
  %4127 = vmatprep.subr.bf16.mxu0 0
  %4128 = vmatpush2.bf16.msra.mxu0 0
  %4129 = vmatprep.subr.bf16.mxu0 0
  %4130 = vmatpush2.bf16.msra.mxu0 0
  %4131 = vmatprep.subr.bf16.mxu0 0
  %4132 = vmatpush2.bf16.msra.mxu0 0
  %4133 = vmatprep.subr.bf16.mxu0 0
  %4134 = vmatpush2.bf16.msra.mxu0 0
  %4135 = vmatprep.subr.bf16.mxu0 0
  %4136 = vmatpush2.bf16.msra.mxu0 0
  %4137 = vmatprep.subr.bf16.mxu0 0
  %4138 = vmatpush2.bf16.msra.mxu0 0
  %4139 = vmatprep.subr.bf16.mxu0 0
  %4140 = vmatpush2.bf16.msra.mxu0 0
  %4141 = vmatprep.mubr.bf16.mxu0 0
  %4142 = vmatmul.mubr.bf16.gmra.mxu0 %v4108
  %v4143 = vpop.f32.mrf.mxu0
  %v4144 = vadd.f32 0.0, %v4143
  %v4145 = vpop.f32.mrf.mxu0
  %v4146 = vadd.f32 0.0, %v4145
  %v4147 = vpop.f32.mrf.mxu0
  %v4148 = vpop.f32.mrf.mxu0
  %4149 = vdwg.mxu0
  %4150 = vmatprep.subr.bf16.mxu0 %v3958
  %4151 = vmatpush1.bf16.msra.mxu0 %v3957
  %4152 = vmatprep.subr.bf16.mxu0 %v3954
  %4153 = vmatpush1.bf16.msra.mxu0 %v3953
  %4154 = vmatprep.subr.bf16.mxu0 %v3950
  %4155 = vmatpush1.bf16.msra.mxu0 %v3949
  %4156 = vmatprep.subr.bf16.mxu0 %v3946
  %4157 = vmatpush1.bf16.msra.mxu0 %v3945
  %4158 = vmatprep.subr.bf16.mxu0 %v3942
  %4159 = vmatpush1.bf16.msra.mxu0 %v3941
  %4160 = vmatprep.subr.bf16.mxu0 %v3938
  %4161 = vmatpush1.bf16.msra.mxu0 %v3937
  %4162 = vmatprep.subr.bf16.mxu0 %v3934
  %4163 = vmatpush1.bf16.msra.mxu0 %v3933
  %4164 = vmatprep.subr.bf16.mxu0 %v3930
  %4165 = vmatpush1.bf16.msra.mxu0 %v3929
  %4166 = vmatprep.subr.bf16.mxu0 0
  %4167 = vmatpush2.bf16.msra.mxu0 0
  %4168 = vmatprep.subr.bf16.mxu0 0
  %4169 = vmatpush2.bf16.msra.mxu0 0
  %4170 = vmatprep.subr.bf16.mxu0 0
  %4171 = vmatpush2.bf16.msra.mxu0 0
  %4172 = vmatprep.subr.bf16.mxu0 0
  %4173 = vmatpush2.bf16.msra.mxu0 0
  %4174 = vmatprep.subr.bf16.mxu0 0
  %4175 = vmatpush2.bf16.msra.mxu0 0
  %4176 = vmatprep.subr.bf16.mxu0 0
  %4177 = vmatpush2.bf16.msra.mxu0 0
  %4178 = vmatprep.subr.bf16.mxu0 0
  %4179 = vmatpush2.bf16.msra.mxu0 0
  %4180 = vmatprep.subr.bf16.mxu0 0
  %4181 = vmatpush2.bf16.msra.mxu0 0
  %4182 = vmatprep.mubr.bf16.mxu0 0
  %4183 = vmatmul.mubr.bf16.gmra.mxu0 %v4108
  %v4184 = vpop.f32.mrf.mxu0
  %v4185 = vadd.f32 0.0, %v4184
  %v4186 = vpop.f32.mrf.mxu0
  %v4187 = vadd.f32 0.0, %v4186
  %v4188 = vpop.f32.mrf.mxu0
  %v4189 = vpop.f32.mrf.mxu0
  %4190 = vdwg.mxu0
  %v4191 = vadd.f32 %v4104, %v4144
  %v4192 = vadd.f32 %v4105, %v4146
  %v4193 = vadd.f32 %v4106, %v4185
  %v4194 = vadd.f32 %v4107, %v4187
  %v4195 = vxor.u32 %v4191, 2147483648
  %v4196 = vmul.f32 %v4195, 1.442695
  %v4197 = vpow.pop %v4196
  %v4198 = vadd.f32 %v4197, 1.0
  %v4199 = vrcp.pop %v4198
  %v4200 = vmul.f32 1.0, %v4199
  %v4201 = vxor.u32 %v4192, 2147483648
  %v4202 = vmul.f32 %v4201, 1.442695
  %v4203 = vpow.pop %v4202
  %v4204 = vadd.f32 %v4203, 1.0
  %v4205 = vrcp.pop %v4204
  %v4206 = vmul.f32 1.0, %v4205
  %v4207 = vtanh.pop %v4193
  %v4208 = vxor.u32 %v4194, 2147483648
  %v4209 = vmul.f32 %v4208, 1.442695
  %v4210 = vpow.pop %v4209
  %v4211 = vadd.f32 %v4210, 1.0
  %v4212 = vrcp.pop %v4211
  %v4213 = vmul.f32 1.0, %v4212
  %v4214 = vmul.f32 %v4206, %v4098
  %v4215 = vmul.f32 %v4200, %v4207
  %v4216 = vadd.f32 %v4214, %v4215
  %v4217 = vtanh.pop %v4216
  %v4218 = vmul.f32 %v4213, %v4217
  %v4220 = vcombine.high %v4100, %v4100
  %v4222 = vunpack.c.l.s4 1966171168
  %v4223 = vunpack.c.0.s8 %v4222
  %v4224 = vlaneseq
  %v4225 = vshrl.u32 %v4224, 7
  %v4226 = vsub.s32 %v4223, %v4225
  %v4227 = vrot.slane %v4100, %v4226
  %v4229 = vunpack.c.l.s4 1966171168
  %v4230 = vunpack.c.0.s8 %v4229
  %v4231 = vlaneseq
  %v4232 = vshrl.u32 %v4231, 7
  %v4233 = vsub.s32 %v4230, %v4232
  %v4234 = vrot.slane %v4220, %v4233
  %v4235 = vcombine.high %v4227, %v4227
  %v4236 = vcombine.high %v4234, %v4234
  %v4238 = vunpack.c.l.s4 1966171168
  %v4239 = vunpack.c.0.s8 %v4238
  %v4240 = vlaneseq
  %v4241 = vshrl.u32 %v4240, 7
  %v4242 = vsub.s32 %v4239, %v4241
  %v4243 = vrot.slane %v4227, %v4242
  %v4245 = vunpack.c.l.s4 1966171168
  %v4246 = vunpack.c.0.s8 %v4245
  %v4247 = vlaneseq
  %v4248 = vshrl.u32 %v4247, 7
  %v4249 = vsub.s32 %v4246, %v4248
  %v4250 = vrot.slane %v4234, %v4249
  %v4252 = vunpack.c.l.s4 1966171168
  %v4253 = vunpack.c.0.s8 %v4252
  %v4254 = vlaneseq
  %v4255 = vshrl.u32 %v4254, 7
  %v4256 = vsub.s32 %v4253, %v4255
  %v4257 = vrot.slane %v4235, %v4256
  %v4259 = vunpack.c.l.s4 1966171168
  %v4260 = vunpack.c.0.s8 %v4259
  %v4261 = vlaneseq
  %v4262 = vshrl.u32 %v4261, 7
  %v4263 = vsub.s32 %v4260, %v4262
  %v4264 = vrot.slane %v4236, %v4263
  %v4265 = vcombine.high %v4243, %v4243
  %v4266 = vcombine.high %v4250, %v4250
  %v4267 = vcombine.high %v4257, %v4257
  %v4268 = vcombine.high %v4264, %v4264
  %v4278 = vcombine.high %v4218, %v4218
  %v4280 = vunpack.c.l.s4 1966171168
  %v4281 = vunpack.c.0.s8 %v4280
  %v4282 = vlaneseq
  %v4283 = vshrl.u32 %v4282, 7
  %v4284 = vsub.s32 %v4281, %v4283
  %v4285 = vrot.slane %v4218, %v4284
  %v4287 = vunpack.c.l.s4 1966171168
  %v4288 = vunpack.c.0.s8 %v4287
  %v4289 = vlaneseq
  %v4290 = vshrl.u32 %v4289, 7
  %v4291 = vsub.s32 %v4288, %v4290
  %v4292 = vrot.slane %v4278, %v4291
  %v4293 = vcombine.high %v4285, %v4285
  %v4294 = vcombine.high %v4292, %v4292
  %v4296 = vunpack.c.l.s4 1966171168
  %v4297 = vunpack.c.0.s8 %v4296
  %v4298 = vlaneseq
  %v4299 = vshrl.u32 %v4298, 7
  %v4300 = vsub.s32 %v4297, %v4299
  %v4301 = vrot.slane %v4285, %v4300
  %v4303 = vunpack.c.l.s4 1966171168
  %v4304 = vunpack.c.0.s8 %v4303
  %v4305 = vlaneseq
  %v4306 = vshrl.u32 %v4305, 7
  %v4307 = vsub.s32 %v4304, %v4306
  %v4308 = vrot.slane %v4292, %v4307
  %v4310 = vunpack.c.l.s4 1966171168
  %v4311 = vunpack.c.0.s8 %v4310
  %v4312 = vlaneseq
  %v4313 = vshrl.u32 %v4312, 7
  %v4314 = vsub.s32 %v4311, %v4313
  %v4315 = vrot.slane %v4293, %v4314
  %v4317 = vunpack.c.l.s4 1966171168
  %v4318 = vunpack.c.0.s8 %v4317
  %v4319 = vlaneseq
  %v4320 = vshrl.u32 %v4319, 7
  %v4321 = vsub.s32 %v4318, %v4320
  %v4322 = vrot.slane %v4294, %v4321
  %v4323 = vcombine.high %v4301, %v4301
  %v4324 = vcombine.high %v4308, %v4308
  %v4325 = vcombine.high %v4315, %v4315
  %v4326 = vcombine.high %v4322, %v4322
  %v4327 = vlaneseq
  %v4328 = vshrl.u32 %v4327, 7
  %v4329 = vsub.s32 0, %v4328
  %v4330 = vrot.slane %v4301, %v4329
  %v4331 = vlaneseq
  %v4332 = vshrl.u32 %v4331, 7
  %v4333 = vsub.s32 0, %v4332
  %v4334 = vrot.slane %v4315, %v4333
  %v4335 = vlaneseq
  %v4336 = vshrl.u32 %v4335, 7
  %v4337 = vsub.s32 0, %v4336
  %v4338 = vrot.slane %v4323, %v4337
  %v4339 = vlaneseq
  %v4340 = vshrl.u32 %v4339, 7
  %v4341 = vsub.s32 0, %v4340
  %v4342 = vrot.slane %v4325, %v4341
  %v4343 = vlaneseq
  %v4344 = vshrl.u32 %v4343, 7
  %v4345 = vsub.s32 0, %v4344
  %v4346 = vrot.slane %v4308, %v4345
  %v4347 = vlaneseq
  %v4348 = vshrl.u32 %v4347, 7
  %v4349 = vsub.s32 0, %v4348
  %v4350 = vrot.slane %v4322, %v4349
  %v4351 = vlaneseq
  %v4352 = vshrl.u32 %v4351, 7
  %v4353 = vsub.s32 0, %v4352
  %v4354 = vrot.slane %v4324, %v4353
  %v4355 = vlaneseq
  %v4356 = vshrl.u32 %v4355, 7
  %v4357 = vsub.s32 0, %v4356
  %v4358 = vrot.slane %v4326, %v4357
  %v4367 = vsel %vm606, %v4243, %v4330
  %v4368 = vsel %vm606, %v4257, %v4334
  %v4369 = vsel %vm606, %v4265, %v4338
  %v4370 = vsel %vm606, %v4267, %v4342
  %v4371 = vsel %vm606, %v4250, %v4346
  %v4372 = vsel %vm606, %v4264, %v4350
  %v4373 = vsel %vm606, %v4266, %v4354
  %v4374 = vsel %vm606, %v4268, %v4358
  %v4375 = vpack.c.bf16 %v4367, %v4367
  %v4376 = vpack.c.bf16 %v4368, %v4368
  %v4377 = vpack.c.bf16 %v4369, %v4369
  %v4378 = vpack.c.bf16 %v4370, %v4370
  %v4379 = vpack.c.bf16 %v4371, %v4371
  %v4380 = vpack.c.bf16 %v4372, %v4372
  %v4381 = vpack.c.bf16 %v4373, %v4373
  %v4382 = vpack.c.bf16 %v4374, %v4374
  %v4391 = vunpack.c.l.b16 %v4375
  %v4392 = vunpack.c.l.b16 %v4376
  %v4393 = vunpack.c.l.b16 %v4377
  %v4394 = vunpack.c.l.b16 %v4378
  %v4395 = vunpack.c.l.b16 %v4379
  %v4396 = vunpack.c.l.b16 %v4380
  %v4397 = vunpack.c.l.b16 %v4381
  %v4398 = vunpack.c.l.b16 %v4382
  %v4399 = vpack.c.b16 %v4391, %v4391
  %v4400 = vpack.c.b16 %v4392, %v4392
  %v4401 = vpack.c.b16 %v4393, %v4393
  %v4402 = vpack.c.b16 %v4394, %v4394
  %v4403 = vpack.c.b16 %v4395, %v4395
  %v4404 = vpack.c.b16 %v4396, %v4396
  %v4405 = vpack.c.b16 %v4397, %v4397
  %v4406 = vpack.c.b16 %v4398, %v4398
  %v4407 = vrot.slane %v4399, 6
  %v4408 = vrot.slane %v4400, 6
  %v4409 = vrot.slane %v4401, 6
  %v4410 = vrot.slane %v4402, 6
  %v4411 = vrot.slane %v4403, 6
  %v4412 = vrot.slane %v4404, 6
  %v4413 = vrot.slane %v4405, 6
  %v4414 = vrot.slane %v4406, 6
  %4423 = vst [vmem:[%s4 + $0x4] sm:$0x4] %v4407
  %4424 = vst [vmem:[%s4 + $0x14] sm:$0x4] %v4408
  %4425 = vst [vmem:[%s4 + $0x24] sm:$0x4] %v4409
  %4426 = vst [vmem:[%s4 + $0x34] sm:$0x4] %v4410
  %4427 = vst [vmem:[%s4 + $0x44] sm:$0x4] %v4411
  %4428 = vst [vmem:[%s4 + $0x54] sm:$0x4] %v4412
  %4429 = vst [vmem:[%s4 + $0x64] sm:$0x4] %v4413
  %4430 = vst [vmem:[%s4 + $0x74] sm:$0x4] %v4414
  %s4431 = scalar_lea.vmem %s0, 224
  %v4432 = vld [vmem:[%s4431] sm:$0xff]
  %v4433 = vld [vmem:[%s4431 + $0x8] sm:$0xff]
  %v4434 = vunpack.c.l.bf16 %v4432
  %v4435 = vunpack.c.h.bf16 %v4432
  %v4436 = vunpack.c.l.bf16 %v4433
  %v4437 = vunpack.c.h.bf16 %v4433
  %v4438 = vpack.c.bf16 %v4218, %v4218
  %v4439 = vld [vmem:[%s1] sm:$0xff]
  %v4440 = vld [vmem:[%s1 + $0x8] sm:$0xff]
  %v4441 = vld [vmem:[%s1 + $0x10] sm:$0xff]
  %v4442 = vld [vmem:[%s1 + $0x18] sm:$0xff]
  %v4443 = vld [vmem:[%s1 + $0x20] sm:$0xff]
  %v4444 = vld [vmem:[%s1 + $0x28] sm:$0xff]
  %v4445 = vld [vmem:[%s1 + $0x30] sm:$0xff]
  %v4446 = vld [vmem:[%s1 + $0x38] sm:$0xff]
  %v4447 = vld [vmem:[%s1 + $0x40] sm:$0xff]
  %v4448 = vld [vmem:[%s1 + $0x48] sm:$0xff]
  %v4449 = vld [vmem:[%s1 + $0x50] sm:$0xff]
  %v4450 = vld [vmem:[%s1 + $0x58] sm:$0xff]
  %v4451 = vld [vmem:[%s1 + $0x60] sm:$0xff]
  %v4452 = vld [vmem:[%s1 + $0x68] sm:$0xff]
  %v4453 = vld [vmem:[%s1 + $0x70] sm:$0xff]
  %v4454 = vld [vmem:[%s1 + $0x78] sm:$0xff]
  %v4455 = vld [vmem:[%s1 + $0x80] sm:$0xff]
  %v4456 = vld [vmem:[%s1 + $0x88] sm:$0xff]
  %v4457 = vld [vmem:[%s1 + $0x90] sm:$0xff]
  %v4458 = vld [vmem:[%s1 + $0x98] sm:$0xff]
  %v4459 = vld [vmem:[%s1 + $0xa0] sm:$0xff]
  %v4460 = vld [vmem:[%s1 + $0xa8] sm:$0xff]
  %v4461 = vld [vmem:[%s1 + $0xb0] sm:$0xff]
  %v4462 = vld [vmem:[%s1 + $0xb8] sm:$0xff]
  %v4463 = vld [vmem:[%s1 + $0xc0] sm:$0xff]
  %v4464 = vld [vmem:[%s1 + $0xc8] sm:$0xff]
  %v4465 = vld [vmem:[%s1 + $0xd0] sm:$0xff]
  %v4466 = vld [vmem:[%s1 + $0xd8] sm:$0xff]
  %v4467 = vld [vmem:[%s1 + $0xe0] sm:$0xff]
  %v4468 = vld [vmem:[%s1 + $0xe8] sm:$0xff]
  %v4469 = vld [vmem:[%s1 + $0xf0] sm:$0xff]
  %v4470 = vld [vmem:[%s1 + $0xf8] sm:$0xff]
  %v4503 = vunpack.c.l.b16 %v4439
  %v4504 = vunpack.c.h.b16 %v4439
  %v4505 = vunpack.c.l.b16 %v4440
  %v4506 = vunpack.c.h.b16 %v4440
  %v4507 = vunpack.c.l.b16 %v4441
  %v4508 = vunpack.c.h.b16 %v4441
  %v4509 = vunpack.c.l.b16 %v4442
  %v4510 = vunpack.c.h.b16 %v4442
  %v4511 = vunpack.c.l.b16 %v4443
  %v4512 = vunpack.c.h.b16 %v4443
  %v4513 = vunpack.c.l.b16 %v4444
  %v4514 = vunpack.c.h.b16 %v4444
  %v4515 = vunpack.c.l.b16 %v4445
  %v4516 = vunpack.c.h.b16 %v4445
  %v4517 = vunpack.c.l.b16 %v4446
  %v4518 = vunpack.c.h.b16 %v4446
  %v4519 = vunpack.c.l.b16 %v4447
  %v4520 = vunpack.c.h.b16 %v4447
  %v4521 = vunpack.c.l.b16 %v4448
  %v4522 = vunpack.c.h.b16 %v4448
  %v4523 = vunpack.c.l.b16 %v4449
  %v4524 = vunpack.c.h.b16 %v4449
  %v4525 = vunpack.c.l.b16 %v4450
  %v4526 = vunpack.c.h.b16 %v4450
  %v4527 = vunpack.c.l.b16 %v4451
  %v4528 = vunpack.c.h.b16 %v4451
  %v4529 = vunpack.c.l.b16 %v4452
  %v4530 = vunpack.c.h.b16 %v4452
  %v4531 = vunpack.c.l.b16 %v4453
  %v4532 = vunpack.c.h.b16 %v4453
  %v4533 = vunpack.c.l.b16 %v4454
  %v4534 = vunpack.c.h.b16 %v4454
  %v4535 = vunpack.c.l.b16 %v4455
  %v4536 = vunpack.c.h.b16 %v4455
  %v4537 = vunpack.c.l.b16 %v4456
  %v4538 = vunpack.c.h.b16 %v4456
  %v4539 = vunpack.c.l.b16 %v4457
  %v4540 = vunpack.c.h.b16 %v4457
  %v4541 = vunpack.c.l.b16 %v4458
  %v4542 = vunpack.c.h.b16 %v4458
  %v4543 = vunpack.c.l.b16 %v4459
  %v4544 = vunpack.c.h.b16 %v4459
  %v4545 = vunpack.c.l.b16 %v4460
  %v4546 = vunpack.c.h.b16 %v4460
  %v4547 = vunpack.c.l.b16 %v4461
  %v4548 = vunpack.c.h.b16 %v4461
  %v4549 = vunpack.c.l.b16 %v4462
  %v4550 = vunpack.c.h.b16 %v4462
  %v4551 = vunpack.c.l.b16 %v4463
  %v4552 = vunpack.c.h.b16 %v4463
  %v4553 = vunpack.c.l.b16 %v4464
  %v4554 = vunpack.c.h.b16 %v4464
  %v4555 = vunpack.c.l.b16 %v4465
  %v4556 = vunpack.c.h.b16 %v4465
  %v4557 = vunpack.c.l.b16 %v4466
  %v4558 = vunpack.c.h.b16 %v4466
  %v4559 = vunpack.c.l.b16 %v4467
  %v4560 = vunpack.c.h.b16 %v4467
  %v4561 = vunpack.c.l.b16 %v4468
  %v4562 = vunpack.c.h.b16 %v4468
  %v4563 = vunpack.c.l.b16 %v4469
  %v4564 = vunpack.c.h.b16 %v4469
  %v4565 = vunpack.c.l.b16 %v4470
  %v4566 = vunpack.c.h.b16 %v4470
  %v4567 = vpack.c.b16 %v4507, %v4503
  %v4568 = vpack.c.b16 %v4508, %v4504
  %v4569 = vpack.c.b16 %v4509, %v4505
  %v4570 = vpack.c.b16 %v4510, %v4506
  %v4571 = vpack.c.b16 %v4515, %v4511
  %v4572 = vpack.c.b16 %v4516, %v4512
  %v4573 = vpack.c.b16 %v4517, %v4513
  %v4574 = vpack.c.b16 %v4518, %v4514
  %v4575 = vpack.c.b16 %v4523, %v4519
  %v4576 = vpack.c.b16 %v4524, %v4520
  %v4577 = vpack.c.b16 %v4525, %v4521
  %v4578 = vpack.c.b16 %v4526, %v4522
  %v4579 = vpack.c.b16 %v4531, %v4527
  %v4580 = vpack.c.b16 %v4532, %v4528
  %v4581 = vpack.c.b16 %v4533, %v4529
  %v4582 = vpack.c.b16 %v4534, %v4530
  %v4583 = vpack.c.b16 %v4539, %v4535
  %v4584 = vpack.c.b16 %v4540, %v4536
  %v4585 = vpack.c.b16 %v4541, %v4537
  %v4586 = vpack.c.b16 %v4542, %v4538
  %v4587 = vpack.c.b16 %v4547, %v4543
  %v4588 = vpack.c.b16 %v4548, %v4544
  %v4589 = vpack.c.b16 %v4549, %v4545
  %v4590 = vpack.c.b16 %v4550, %v4546
  %v4591 = vpack.c.b16 %v4555, %v4551
  %v4592 = vpack.c.b16 %v4556, %v4552
  %v4593 = vpack.c.b16 %v4557, %v4553
  %v4594 = vpack.c.b16 %v4558, %v4554
  %v4595 = vpack.c.b16 %v4563, %v4559
  %v4596 = vpack.c.b16 %v4564, %v4560
  %v4597 = vpack.c.b16 %v4565, %v4561
  %v4598 = vpack.c.b16 %v4566, %v4562
  %4631 = vmatprep.subr.bf16.mxu0 %v4596
  %4632 = vmatpush1.bf16.msra.mxu0 %v4595
  %4633 = vmatprep.subr.bf16.mxu0 %v4592
  %4634 = vmatpush1.bf16.msra.mxu0 %v4591
  %4635 = vmatprep.subr.bf16.mxu0 %v4588
  %4636 = vmatpush1.bf16.msra.mxu0 %v4587
  %4637 = vmatprep.subr.bf16.mxu0 %v4584
  %4638 = vmatpush1.bf16.msra.mxu0 %v4583
  %4639 = vmatprep.subr.bf16.mxu0 %v4580
  %4640 = vmatpush1.bf16.msra.mxu0 %v4579
  %4641 = vmatprep.subr.bf16.mxu0 %v4576
  %4642 = vmatpush1.bf16.msra.mxu0 %v4575
  %4643 = vmatprep.subr.bf16.mxu0 %v4572
  %4644 = vmatpush1.bf16.msra.mxu0 %v4571
  %4645 = vmatprep.subr.bf16.mxu0 %v4568
  %4646 = vmatpush1.bf16.msra.mxu0 %v4567
  %4647 = vmatprep.subr.bf16.mxu0 0
  %4648 = vmatpush2.bf16.msra.mxu0 0
  %4649 = vmatprep.subr.bf16.mxu0 0
  %4650 = vmatpush2.bf16.msra.mxu0 0
  %4651 = vmatprep.subr.bf16.mxu0 0
  %4652 = vmatpush2.bf16.msra.mxu0 0
  %4653 = vmatprep.subr.bf16.mxu0 0
  %4654 = vmatpush2.bf16.msra.mxu0 0
  %4655 = vmatprep.subr.bf16.mxu0 0
  %4656 = vmatpush2.bf16.msra.mxu0 0
  %4657 = vmatprep.subr.bf16.mxu0 0
  %4658 = vmatpush2.bf16.msra.mxu0 0
  %4659 = vmatprep.subr.bf16.mxu0 0
  %4660 = vmatpush2.bf16.msra.mxu0 0
  %4661 = vmatprep.subr.bf16.mxu0 0
  %4662 = vmatpush2.bf16.msra.mxu0 0
  %4663 = vmatprep.mubr.bf16.mxu0 0
  %4664 = vmatmul.mubr.bf16.gmra.mxu0 %v4438
  %v4665 = vpop.f32.mrf.mxu0
  %v4666 = vadd.f32 0.0, %v4665
  %v4667 = vpop.f32.mrf.mxu0
  %v4668 = vadd.f32 0.0, %v4667
  %v4669 = vpop.f32.mrf.mxu0
  %v4670 = vpop.f32.mrf.mxu0
  %4671 = vdwg.mxu0
  %4672 = vmatprep.subr.bf16.mxu0 %v4598
  %4673 = vmatpush1.bf16.msra.mxu0 %v4597
  %4674 = vmatprep.subr.bf16.mxu0 %v4594
  %4675 = vmatpush1.bf16.msra.mxu0 %v4593
  %4676 = vmatprep.subr.bf16.mxu0 %v4590
  %4677 = vmatpush1.bf16.msra.mxu0 %v4589
  %4678 = vmatprep.subr.bf16.mxu0 %v4586
  %4679 = vmatpush1.bf16.msra.mxu0 %v4585
  %4680 = vmatprep.subr.bf16.mxu0 %v4582
  %4681 = vmatpush1.bf16.msra.mxu0 %v4581
  %4682 = vmatprep.subr.bf16.mxu0 %v4578
  %4683 = vmatpush1.bf16.msra.mxu0 %v4577
  %4684 = vmatprep.subr.bf16.mxu0 %v4574
  %4685 = vmatpush1.bf16.msra.mxu0 %v4573
  %4686 = vmatprep.subr.bf16.mxu0 %v4570
  %4687 = vmatpush1.bf16.msra.mxu0 %v4569
  %4688 = vmatprep.subr.bf16.mxu0 0
  %4689 = vmatpush2.bf16.msra.mxu0 0
  %4690 = vmatprep.subr.bf16.mxu0 0
  %4691 = vmatpush2.bf16.msra.mxu0 0
  %4692 = vmatprep.subr.bf16.mxu0 0
  %4693 = vmatpush2.bf16.msra.mxu0 0
  %4694 = vmatprep.subr.bf16.mxu0 0
  %4695 = vmatpush2.bf16.msra.mxu0 0
  %4696 = vmatprep.subr.bf16.mxu0 0
  %4697 = vmatpush2.bf16.msra.mxu0 0
  %4698 = vmatprep.subr.bf16.mxu0 0
  %4699 = vmatpush2.bf16.msra.mxu0 0
  %4700 = vmatprep.subr.bf16.mxu0 0
  %4701 = vmatpush2.bf16.msra.mxu0 0
  %4702 = vmatprep.subr.bf16.mxu0 0
  %4703 = vmatpush2.bf16.msra.mxu0 0
  %4704 = vmatprep.mubr.bf16.mxu0 0
  %4705 = vmatmul.mubr.bf16.gmra.mxu0 %v4438
  %v4706 = vpop.f32.mrf.mxu0
  %v4707 = vadd.f32 0.0, %v4706
  %v4708 = vpop.f32.mrf.mxu0
  %v4709 = vadd.f32 0.0, %v4708
  %v4710 = vpop.f32.mrf.mxu0
  %v4711 = vpop.f32.mrf.mxu0
  %4712 = vdwg.mxu0
  %v4713 = vadd.f32 %v4434, %v4666
  %v4714 = vadd.f32 %v4435, %v4668
  %v4715 = vadd.f32 %v4436, %v4707
  %v4716 = vadd.f32 %v4437, %v4709
  %v4717 = vxor.u32 %v4713, 2147483648
  %v4718 = vmul.f32 %v4717, 1.442695
  %v4719 = vpow.pop %v4718
  %v4720 = vadd.f32 %v4719, 1.0
  %v4721 = vrcp.pop %v4720
  %v4722 = vmul.f32 1.0, %v4721
  %v4723 = vxor.u32 %v4714, 2147483648
  %v4724 = vmul.f32 %v4723, 1.442695
  %v4725 = vpow.pop %v4724
  %v4726 = vadd.f32 %v4725, 1.0
  %v4727 = vrcp.pop %v4726
  %v4728 = vmul.f32 1.0, %v4727
  %v4729 = vtanh.pop %v4715
  %v4730 = vxor.u32 %v4716, 2147483648
  %v4731 = vmul.f32 %v4730, 1.442695
  %v4732 = vpow.pop %v4731
  %v4733 = vadd.f32 %v4732, 1.0
  %v4734 = vrcp.pop %v4733
  %v4735 = vmul.f32 1.0, %v4734
  %v4736 = vmul.f32 %v4728, %v4216
  %v4737 = vmul.f32 %v4722, %v4729
  %v4738 = vadd.f32 %v4736, %v4737
  %v4739 = vtanh.pop %v4738
  %v4740 = vmul.f32 %v4735, %v4739
  %s4741 = scalar_lea.vmem %s0, 240
  %v4742 = vld [vmem:[%s4741] sm:$0xff]
  %v4743 = vld [vmem:[%s4741 + $0x8] sm:$0xff]
  %v4744 = vunpack.c.l.bf16 %v4742
  %v4745 = vunpack.c.h.bf16 %v4742
  %v4746 = vunpack.c.l.bf16 %v4743
  %v4747 = vunpack.c.h.bf16 %v4743
  %v4748 = vpack.c.bf16 %v4740, %v4740
  %4749 = vmatprep.subr.bf16.mxu0 %v4596
  %4750 = vmatpush1.bf16.msra.mxu0 %v4595
  %4751 = vmatprep.subr.bf16.mxu0 %v4592
  %4752 = vmatpush1.bf16.msra.mxu0 %v4591
  %4753 = vmatprep.subr.bf16.mxu0 %v4588
  %4754 = vmatpush1.bf16.msra.mxu0 %v4587
  %4755 = vmatprep.subr.bf16.mxu0 %v4584
  %4756 = vmatpush1.bf16.msra.mxu0 %v4583
  %4757 = vmatprep.subr.bf16.mxu0 %v4580
  %4758 = vmatpush1.bf16.msra.mxu0 %v4579
  %4759 = vmatprep.subr.bf16.mxu0 %v4576
  %4760 = vmatpush1.bf16.msra.mxu0 %v4575
  %4761 = vmatprep.subr.bf16.mxu0 %v4572
  %4762 = vmatpush1.bf16.msra.mxu0 %v4571
  %4763 = vmatprep.subr.bf16.mxu0 %v4568
  %4764 = vmatpush1.bf16.msra.mxu0 %v4567
  %4765 = vmatprep.subr.bf16.mxu0 0
  %4766 = vmatpush2.bf16.msra.mxu0 0
  %4767 = vmatprep.subr.bf16.mxu0 0
  %4768 = vmatpush2.bf16.msra.mxu0 0
  %4769 = vmatprep.subr.bf16.mxu0 0
  %4770 = vmatpush2.bf16.msra.mxu0 0
  %4771 = vmatprep.subr.bf16.mxu0 0
  %4772 = vmatpush2.bf16.msra.mxu0 0
  %4773 = vmatprep.subr.bf16.mxu0 0
  %4774 = vmatpush2.bf16.msra.mxu0 0
  %4775 = vmatprep.subr.bf16.mxu0 0
  %4776 = vmatpush2.bf16.msra.mxu0 0
  %4777 = vmatprep.subr.bf16.mxu0 0
  %4778 = vmatpush2.bf16.msra.mxu0 0
  %4779 = vmatprep.subr.bf16.mxu0 0
  %4780 = vmatpush2.bf16.msra.mxu0 0
  %4781 = vmatprep.mubr.bf16.mxu0 0
  %4782 = vmatmul.mubr.bf16.gmra.mxu0 %v4748
  %v4783 = vpop.f32.mrf.mxu0
  %v4784 = vadd.f32 0.0, %v4783
  %v4785 = vpop.f32.mrf.mxu0
  %v4786 = vadd.f32 0.0, %v4785
  %v4787 = vpop.f32.mrf.mxu0
  %v4788 = vpop.f32.mrf.mxu0
  %4789 = vdwg.mxu0
  %4790 = vmatprep.subr.bf16.mxu0 %v4598
  %4791 = vmatpush1.bf16.msra.mxu0 %v4597
  %4792 = vmatprep.subr.bf16.mxu0 %v4594
  %4793 = vmatpush1.bf16.msra.mxu0 %v4593
  %4794 = vmatprep.subr.bf16.mxu0 %v4590
  %4795 = vmatpush1.bf16.msra.mxu0 %v4589
  %4796 = vmatprep.subr.bf16.mxu0 %v4586
  %4797 = vmatpush1.bf16.msra.mxu0 %v4585
  %4798 = vmatprep.subr.bf16.mxu0 %v4582
  %4799 = vmatpush1.bf16.msra.mxu0 %v4581
  %4800 = vmatprep.subr.bf16.mxu0 %v4578
  %4801 = vmatpush1.bf16.msra.mxu0 %v4577
  %4802 = vmatprep.subr.bf16.mxu0 %v4574
  %4803 = vmatpush1.bf16.msra.mxu0 %v4573
  %4804 = vmatprep.subr.bf16.mxu0 %v4570
  %4805 = vmatpush1.bf16.msra.mxu0 %v4569
  %4806 = vmatprep.subr.bf16.mxu0 0
  %4807 = vmatpush2.bf16.msra.mxu0 0
  %4808 = vmatprep.subr.bf16.mxu0 0
  %4809 = vmatpush2.bf16.msra.mxu0 0
  %4810 = vmatprep.subr.bf16.mxu0 0
  %4811 = vmatpush2.bf16.msra.mxu0 0
  %4812 = vmatprep.subr.bf16.mxu0 0
  %4813 = vmatpush2.bf16.msra.mxu0 0
  %4814 = vmatprep.subr.bf16.mxu0 0
  %4815 = vmatpush2.bf16.msra.mxu0 0
  %4816 = vmatprep.subr.bf16.mxu0 0
  %4817 = vmatpush2.bf16.msra.mxu0 0
  %4818 = vmatprep.subr.bf16.mxu0 0
  %4819 = vmatpush2.bf16.msra.mxu0 0
  %4820 = vmatprep.subr.bf16.mxu0 0
  %4821 = vmatpush2.bf16.msra.mxu0 0
  %4822 = vmatprep.mubr.bf16.mxu0 0
  %4823 = vmatmul.mubr.bf16.gmra.mxu0 %v4748
  %v4824 = vpop.f32.mrf.mxu0
  %v4825 = vadd.f32 0.0, %v4824
  %v4826 = vpop.f32.mrf.mxu0
  %v4827 = vadd.f32 0.0, %v4826
  %v4828 = vpop.f32.mrf.mxu0
  %v4829 = vpop.f32.mrf.mxu0
  %4830 = vdwg.mxu0
  %v4831 = vadd.f32 %v4744, %v4784
  %v4832 = vadd.f32 %v4745, %v4786
  %v4833 = vadd.f32 %v4746, %v4825
  %v4834 = vadd.f32 %v4747, %v4827
  %v4835 = vxor.u32 %v4831, 2147483648
  %v4836 = vmul.f32 %v4835, 1.442695
  %v4837 = vpow.pop %v4836
  %v4838 = vadd.f32 %v4837, 1.0
  %v4839 = vrcp.pop %v4838
  %v4840 = vmul.f32 1.0, %v4839
  %v4841 = vxor.u32 %v4832, 2147483648
  %v4842 = vmul.f32 %v4841, 1.442695
  %v4843 = vpow.pop %v4842
  %v4844 = vadd.f32 %v4843, 1.0
  %v4845 = vrcp.pop %v4844
  %v4846 = vmul.f32 1.0, %v4845
  %v4847 = vtanh.pop %v4833
  %v4848 = vxor.u32 %v4834, 2147483648
  %v4849 = vmul.f32 %v4848, 1.442695
  %v4850 = vpow.pop %v4849
  %v4851 = vadd.f32 %v4850, 1.0
  %v4852 = vrcp.pop %v4851
  %v4853 = vmul.f32 1.0, %v4852
  %v4854 = vmul.f32 %v4846, %v4738
  %v4855 = vmul.f32 %v4840, %v4847
  %v4856 = vadd.f32 %v4854, %v4855
  %v4857 = vtanh.pop %v4856
  %v4858 = vmul.f32 %v4853, %v4857
  %v4860 = vcombine.high %v4740, %v4740
  %v4862 = vunpack.c.l.s4 1966171168
  %v4863 = vunpack.c.0.s8 %v4862
  %v4864 = vlaneseq
  %v4865 = vshrl.u32 %v4864, 7
  %v4866 = vsub.s32 %v4863, %v4865
  %v4867 = vrot.slane %v4740, %v4866
  %v4869 = vunpack.c.l.s4 1966171168
  %v4870 = vunpack.c.0.s8 %v4869
  %v4871 = vlaneseq
  %v4872 = vshrl.u32 %v4871, 7
  %v4873 = vsub.s32 %v4870, %v4872
  %v4874 = vrot.slane %v4860, %v4873
  %v4875 = vcombine.high %v4867, %v4867
  %v4876 = vcombine.high %v4874, %v4874
  %v4878 = vunpack.c.l.s4 1966171168
  %v4879 = vunpack.c.0.s8 %v4878
  %v4880 = vlaneseq
  %v4881 = vshrl.u32 %v4880, 7
  %v4882 = vsub.s32 %v4879, %v4881
  %v4883 = vrot.slane %v4867, %v4882
  %v4885 = vunpack.c.l.s4 1966171168
  %v4886 = vunpack.c.0.s8 %v4885
  %v4887 = vlaneseq
  %v4888 = vshrl.u32 %v4887, 7
  %v4889 = vsub.s32 %v4886, %v4888
  %v4890 = vrot.slane %v4874, %v4889
  %v4892 = vunpack.c.l.s4 1966171168
  %v4893 = vunpack.c.0.s8 %v4892
  %v4894 = vlaneseq
  %v4895 = vshrl.u32 %v4894, 7
  %v4896 = vsub.s32 %v4893, %v4895
  %v4897 = vrot.slane %v4875, %v4896
  %v4899 = vunpack.c.l.s4 1966171168
  %v4900 = vunpack.c.0.s8 %v4899
  %v4901 = vlaneseq
  %v4902 = vshrl.u32 %v4901, 7
  %v4903 = vsub.s32 %v4900, %v4902
  %v4904 = vrot.slane %v4876, %v4903
  %v4905 = vcombine.high %v4883, %v4883
  %v4906 = vcombine.high %v4890, %v4890
  %v4907 = vcombine.high %v4897, %v4897
  %v4908 = vcombine.high %v4904, %v4904
  %v4918 = vcombine.high %v4858, %v4858
  %v4920 = vunpack.c.l.s4 1966171168
  %v4921 = vunpack.c.0.s8 %v4920
  %v4922 = vlaneseq
  %v4923 = vshrl.u32 %v4922, 7
  %v4924 = vsub.s32 %v4921, %v4923
  %v4925 = vrot.slane %v4858, %v4924
  %v4927 = vunpack.c.l.s4 1966171168
  %v4928 = vunpack.c.0.s8 %v4927
  %v4929 = vlaneseq
  %v4930 = vshrl.u32 %v4929, 7
  %v4931 = vsub.s32 %v4928, %v4930
  %v4932 = vrot.slane %v4918, %v4931
  %v4933 = vcombine.high %v4925, %v4925
  %v4934 = vcombine.high %v4932, %v4932
  %v4936 = vunpack.c.l.s4 1966171168
  %v4937 = vunpack.c.0.s8 %v4936
  %v4938 = vlaneseq
  %v4939 = vshrl.u32 %v4938, 7
  %v4940 = vsub.s32 %v4937, %v4939
  %v4941 = vrot.slane %v4925, %v4940
  %v4943 = vunpack.c.l.s4 1966171168
  %v4944 = vunpack.c.0.s8 %v4943
  %v4945 = vlaneseq
  %v4946 = vshrl.u32 %v4945, 7
  %v4947 = vsub.s32 %v4944, %v4946
  %v4948 = vrot.slane %v4932, %v4947
  %v4950 = vunpack.c.l.s4 1966171168
  %v4951 = vunpack.c.0.s8 %v4950
  %v4952 = vlaneseq
  %v4953 = vshrl.u32 %v4952, 7
  %v4954 = vsub.s32 %v4951, %v4953
  %v4955 = vrot.slane %v4933, %v4954
  %v4957 = vunpack.c.l.s4 1966171168
  %v4958 = vunpack.c.0.s8 %v4957
  %v4959 = vlaneseq
  %v4960 = vshrl.u32 %v4959, 7
  %v4961 = vsub.s32 %v4958, %v4960
  %v4962 = vrot.slane %v4934, %v4961
  %v4963 = vcombine.high %v4941, %v4941
  %v4964 = vcombine.high %v4948, %v4948
  %v4965 = vcombine.high %v4955, %v4955
  %v4966 = vcombine.high %v4962, %v4962
  %v4967 = vlaneseq
  %v4968 = vshrl.u32 %v4967, 7
  %v4969 = vsub.s32 0, %v4968
  %v4970 = vrot.slane %v4941, %v4969
  %v4971 = vlaneseq
  %v4972 = vshrl.u32 %v4971, 7
  %v4973 = vsub.s32 0, %v4972
  %v4974 = vrot.slane %v4955, %v4973
  %v4975 = vlaneseq
  %v4976 = vshrl.u32 %v4975, 7
  %v4977 = vsub.s32 0, %v4976
  %v4978 = vrot.slane %v4963, %v4977
  %v4979 = vlaneseq
  %v4980 = vshrl.u32 %v4979, 7
  %v4981 = vsub.s32 0, %v4980
  %v4982 = vrot.slane %v4965, %v4981
  %v4983 = vlaneseq
  %v4984 = vshrl.u32 %v4983, 7
  %v4985 = vsub.s32 0, %v4984
  %v4986 = vrot.slane %v4948, %v4985
  %v4987 = vlaneseq
  %v4988 = vshrl.u32 %v4987, 7
  %v4989 = vsub.s32 0, %v4988
  %v4990 = vrot.slane %v4962, %v4989
  %v4991 = vlaneseq
  %v4992 = vshrl.u32 %v4991, 7
  %v4993 = vsub.s32 0, %v4992
  %v4994 = vrot.slane %v4964, %v4993
  %v4995 = vlaneseq
  %v4996 = vshrl.u32 %v4995, 7
  %v4997 = vsub.s32 0, %v4996
  %v4998 = vrot.slane %v4966, %v4997
  %v5007 = vsel %vm606, %v4883, %v4970
  %v5008 = vsel %vm606, %v4897, %v4974
  %v5009 = vsel %vm606, %v4905, %v4978
  %v5010 = vsel %vm606, %v4907, %v4982
  %v5011 = vsel %vm606, %v4890, %v4986
  %v5012 = vsel %vm606, %v4904, %v4990
  %v5013 = vsel %vm606, %v4906, %v4994
  %v5014 = vsel %vm606, %v4908, %v4998
  %v5015 = vpack.c.bf16 %v5007, %v5007
  %v5016 = vpack.c.bf16 %v5008, %v5008
  %v5017 = vpack.c.bf16 %v5009, %v5009
  %v5018 = vpack.c.bf16 %v5010, %v5010
  %v5019 = vpack.c.bf16 %v5011, %v5011
  %v5020 = vpack.c.bf16 %v5012, %v5012
  %v5021 = vpack.c.bf16 %v5013, %v5013
  %v5022 = vpack.c.bf16 %v5014, %v5014
  %v5031 = vunpack.c.l.b16 %v5015
  %v5032 = vunpack.c.l.b16 %v5016
  %v5033 = vunpack.c.l.b16 %v5017
  %v5034 = vunpack.c.l.b16 %v5018
  %v5035 = vunpack.c.l.b16 %v5019
  %v5036 = vunpack.c.l.b16 %v5020
  %v5037 = vunpack.c.l.b16 %v5021
  %v5038 = vunpack.c.l.b16 %v5022
  %v5039 = vpack.c.b16 %v5031, %v5031
  %v5040 = vpack.c.b16 %v5032, %v5032
  %v5041 = vpack.c.b16 %v5033, %v5033
  %v5042 = vpack.c.b16 %v5034, %v5034
  %v5043 = vpack.c.b16 %v5035, %v5035
  %v5044 = vpack.c.b16 %v5036, %v5036
  %v5045 = vpack.c.b16 %v5037, %v5037
  %v5046 = vpack.c.b16 %v5038, %v5038
  %v5047 = vrot.slane %v5039, 5
  %v5048 = vrot.slane %v5040, 5
  %v5049 = vrot.slane %v5041, 5
  %v5050 = vrot.slane %v5042, 5
  %v5051 = vrot.slane %v5043, 5
  %v5052 = vrot.slane %v5044, 5
  %v5053 = vrot.slane %v5045, 5
  %v5054 = vrot.slane %v5046, 5
  %5063 = vst [vmem:[%s4 + $0x4] sm:$0x8] %v5047
  %5064 = vst [vmem:[%s4 + $0x14] sm:$0x8] %v5048
  %5065 = vst [vmem:[%s4 + $0x24] sm:$0x8] %v5049
  %5066 = vst [vmem:[%s4 + $0x34] sm:$0x8] %v5050
  %5067 = vst [vmem:[%s4 + $0x44] sm:$0x8] %v5051
  %5068 = vst [vmem:[%s4 + $0x54] sm:$0x8] %v5052
  %5069 = vst [vmem:[%s4 + $0x64] sm:$0x8] %v5053
  %5070 = vst [vmem:[%s4 + $0x74] sm:$0x8] %v5054
  %s5071 = scalar_lea.vmem %s0, 256
  %v5072 = vld [vmem:[%s5071] sm:$0xff]
  %v5073 = vld [vmem:[%s5071 + $0x8] sm:$0xff]
  %v5074 = vunpack.c.l.bf16 %v5072
  %v5075 = vunpack.c.h.bf16 %v5072
  %v5076 = vunpack.c.l.bf16 %v5073
  %v5077 = vunpack.c.h.bf16 %v5073
  %v5078 = vpack.c.bf16 %v4858, %v4858
  %v5079 = vld [vmem:[%s1] sm:$0xff]
  %v5080 = vld [vmem:[%s1 + $0x8] sm:$0xff]
  %v5081 = vld [vmem:[%s1 + $0x10] sm:$0xff]
  %v5082 = vld [vmem:[%s1 + $0x18] sm:$0xff]
  %v5083 = vld [vmem:[%s1 + $0x20] sm:$0xff]
  %v5084 = vld [vmem:[%s1 + $0x28] sm:$0xff]
  %v5085 = vld [vmem:[%s1 + $0x30] sm:$0xff]
  %v5086 = vld [vmem:[%s1 + $0x38] sm:$0xff]
  %v5087 = vld [vmem:[%s1 + $0x40] sm:$0xff]
  %v5088 = vld [vmem:[%s1 + $0x48] sm:$0xff]
  %v5089 = vld [vmem:[%s1 + $0x50] sm:$0xff]
  %v5090 = vld [vmem:[%s1 + $0x58] sm:$0xff]
  %v5091 = vld [vmem:[%s1 + $0x60] sm:$0xff]
  %v5092 = vld [vmem:[%s1 + $0x68] sm:$0xff]
  %v5093 = vld [vmem:[%s1 + $0x70] sm:$0xff]
  %v5094 = vld [vmem:[%s1 + $0x78] sm:$0xff]
  %v5095 = vld [vmem:[%s1 + $0x80] sm:$0xff]
  %v5096 = vld [vmem:[%s1 + $0x88] sm:$0xff]
  %v5097 = vld [vmem:[%s1 + $0x90] sm:$0xff]
  %v5098 = vld [vmem:[%s1 + $0x98] sm:$0xff]
  %v5099 = vld [vmem:[%s1 + $0xa0] sm:$0xff]
  %v5100 = vld [vmem:[%s1 + $0xa8] sm:$0xff]
  %v5101 = vld [vmem:[%s1 + $0xb0] sm:$0xff]
  %v5102 = vld [vmem:[%s1 + $0xb8] sm:$0xff]
  %v5103 = vld [vmem:[%s1 + $0xc0] sm:$0xff]
  %v5104 = vld [vmem:[%s1 + $0xc8] sm:$0xff]
  %v5105 = vld [vmem:[%s1 + $0xd0] sm:$0xff]
  %v5106 = vld [vmem:[%s1 + $0xd8] sm:$0xff]
  %v5107 = vld [vmem:[%s1 + $0xe0] sm:$0xff]
  %v5108 = vld [vmem:[%s1 + $0xe8] sm:$0xff]
  %v5109 = vld [vmem:[%s1 + $0xf0] sm:$0xff]
  %v5110 = vld [vmem:[%s1 + $0xf8] sm:$0xff]
  %v5143 = vunpack.c.l.b16 %v5079
  %v5144 = vunpack.c.h.b16 %v5079
  %v5145 = vunpack.c.l.b16 %v5080
  %v5146 = vunpack.c.h.b16 %v5080
  %v5147 = vunpack.c.l.b16 %v5081
  %v5148 = vunpack.c.h.b16 %v5081
  %v5149 = vunpack.c.l.b16 %v5082
  %v5150 = vunpack.c.h.b16 %v5082
  %v5151 = vunpack.c.l.b16 %v5083
  %v5152 = vunpack.c.h.b16 %v5083
  %v5153 = vunpack.c.l.b16 %v5084
  %v5154 = vunpack.c.h.b16 %v5084
  %v5155 = vunpack.c.l.b16 %v5085
  %v5156 = vunpack.c.h.b16 %v5085
  %v5157 = vunpack.c.l.b16 %v5086
  %v5158 = vunpack.c.h.b16 %v5086
  %v5159 = vunpack.c.l.b16 %v5087
  %v5160 = vunpack.c.h.b16 %v5087
  %v5161 = vunpack.c.l.b16 %v5088
  %v5162 = vunpack.c.h.b16 %v5088
  %v5163 = vunpack.c.l.b16 %v5089
  %v5164 = vunpack.c.h.b16 %v5089
  %v5165 = vunpack.c.l.b16 %v5090
  %v5166 = vunpack.c.h.b16 %v5090
  %v5167 = vunpack.c.l.b16 %v5091
  %v5168 = vunpack.c.h.b16 %v5091
  %v5169 = vunpack.c.l.b16 %v5092
  %v5170 = vunpack.c.h.b16 %v5092
  %v5171 = vunpack.c.l.b16 %v5093
  %v5172 = vunpack.c.h.b16 %v5093
  %v5173 = vunpack.c.l.b16 %v5094
  %v5174 = vunpack.c.h.b16 %v5094
  %v5175 = vunpack.c.l.b16 %v5095
  %v5176 = vunpack.c.h.b16 %v5095
  %v5177 = vunpack.c.l.b16 %v5096
  %v5178 = vunpack.c.h.b16 %v5096
  %v5179 = vunpack.c.l.b16 %v5097
  %v5180 = vunpack.c.h.b16 %v5097
  %v5181 = vunpack.c.l.b16 %v5098
  %v5182 = vunpack.c.h.b16 %v5098
  %v5183 = vunpack.c.l.b16 %v5099
  %v5184 = vunpack.c.h.b16 %v5099
  %v5185 = vunpack.c.l.b16 %v5100
  %v5186 = vunpack.c.h.b16 %v5100
  %v5187 = vunpack.c.l.b16 %v5101
  %v5188 = vunpack.c.h.b16 %v5101
  %v5189 = vunpack.c.l.b16 %v5102
  %v5190 = vunpack.c.h.b16 %v5102
  %v5191 = vunpack.c.l.b16 %v5103
  %v5192 = vunpack.c.h.b16 %v5103
  %v5193 = vunpack.c.l.b16 %v5104
  %v5194 = vunpack.c.h.b16 %v5104
  %v5195 = vunpack.c.l.b16 %v5105
  %v5196 = vunpack.c.h.b16 %v5105
  %v5197 = vunpack.c.l.b16 %v5106
  %v5198 = vunpack.c.h.b16 %v5106
  %v5199 = vunpack.c.l.b16 %v5107
  %v5200 = vunpack.c.h.b16 %v5107
  %v5201 = vunpack.c.l.b16 %v5108
  %v5202 = vunpack.c.h.b16 %v5108
  %v5203 = vunpack.c.l.b16 %v5109
  %v5204 = vunpack.c.h.b16 %v5109
  %v5205 = vunpack.c.l.b16 %v5110
  %v5206 = vunpack.c.h.b16 %v5110
  %v5207 = vpack.c.b16 %v5147, %v5143
  %v5208 = vpack.c.b16 %v5148, %v5144
  %v5209 = vpack.c.b16 %v5149, %v5145
  %v5210 = vpack.c.b16 %v5150, %v5146
  %v5211 = vpack.c.b16 %v5155, %v5151
  %v5212 = vpack.c.b16 %v5156, %v5152
  %v5213 = vpack.c.b16 %v5157, %v5153
  %v5214 = vpack.c.b16 %v5158, %v5154
  %v5215 = vpack.c.b16 %v5163, %v5159
  %v5216 = vpack.c.b16 %v5164, %v5160
  %v5217 = vpack.c.b16 %v5165, %v5161
  %v5218 = vpack.c.b16 %v5166, %v5162
  %v5219 = vpack.c.b16 %v5171, %v5167
  %v5220 = vpack.c.b16 %v5172, %v5168
  %v5221 = vpack.c.b16 %v5173, %v5169
  %v5222 = vpack.c.b16 %v5174, %v5170
  %v5223 = vpack.c.b16 %v5179, %v5175
  %v5224 = vpack.c.b16 %v5180, %v5176
  %v5225 = vpack.c.b16 %v5181, %v5177
  %v5226 = vpack.c.b16 %v5182, %v5178
  %v5227 = vpack.c.b16 %v5187, %v5183
  %v5228 = vpack.c.b16 %v5188, %v5184
  %v5229 = vpack.c.b16 %v5189, %v5185
  %v5230 = vpack.c.b16 %v5190, %v5186
  %v5231 = vpack.c.b16 %v5195, %v5191
  %v5232 = vpack.c.b16 %v5196, %v5192
  %v5233 = vpack.c.b16 %v5197, %v5193
  %v5234 = vpack.c.b16 %v5198, %v5194
  %v5235 = vpack.c.b16 %v5203, %v5199
  %v5236 = vpack.c.b16 %v5204, %v5200
  %v5237 = vpack.c.b16 %v5205, %v5201
  %v5238 = vpack.c.b16 %v5206, %v5202
  %5271 = vmatprep.subr.bf16.mxu0 %v5236
  %5272 = vmatpush1.bf16.msra.mxu0 %v5235
  %5273 = vmatprep.subr.bf16.mxu0 %v5232
  %5274 = vmatpush1.bf16.msra.mxu0 %v5231
  %5275 = vmatprep.subr.bf16.mxu0 %v5228
  %5276 = vmatpush1.bf16.msra.mxu0 %v5227
  %5277 = vmatprep.subr.bf16.mxu0 %v5224
  %5278 = vmatpush1.bf16.msra.mxu0 %v5223
  %5279 = vmatprep.subr.bf16.mxu0 %v5220
  %5280 = vmatpush1.bf16.msra.mxu0 %v5219
  %5281 = vmatprep.subr.bf16.mxu0 %v5216
  %5282 = vmatpush1.bf16.msra.mxu0 %v5215
  %5283 = vmatprep.subr.bf16.mxu0 %v5212
  %5284 = vmatpush1.bf16.msra.mxu0 %v5211
  %5285 = vmatprep.subr.bf16.mxu0 %v5208
  %5286 = vmatpush1.bf16.msra.mxu0 %v5207
  %5287 = vmatprep.subr.bf16.mxu0 0
  %5288 = vmatpush2.bf16.msra.mxu0 0
  %5289 = vmatprep.subr.bf16.mxu0 0
  %5290 = vmatpush2.bf16.msra.mxu0 0
  %5291 = vmatprep.subr.bf16.mxu0 0
  %5292 = vmatpush2.bf16.msra.mxu0 0
  %5293 = vmatprep.subr.bf16.mxu0 0
  %5294 = vmatpush2.bf16.msra.mxu0 0
  %5295 = vmatprep.subr.bf16.mxu0 0
  %5296 = vmatpush2.bf16.msra.mxu0 0
  %5297 = vmatprep.subr.bf16.mxu0 0
  %5298 = vmatpush2.bf16.msra.mxu0 0
  %5299 = vmatprep.subr.bf16.mxu0 0
  %5300 = vmatpush2.bf16.msra.mxu0 0
  %5301 = vmatprep.subr.bf16.mxu0 0
  %5302 = vmatpush2.bf16.msra.mxu0 0
  %5303 = vmatprep.mubr.bf16.mxu0 0
  %5304 = vmatmul.mubr.bf16.gmra.mxu0 %v5078
  %v5305 = vpop.f32.mrf.mxu0
  %v5306 = vadd.f32 0.0, %v5305
  %v5307 = vpop.f32.mrf.mxu0
  %v5308 = vadd.f32 0.0, %v5307
  %v5309 = vpop.f32.mrf.mxu0
  %v5310 = vpop.f32.mrf.mxu0
  %5311 = vdwg.mxu0
  %5312 = vmatprep.subr.bf16.mxu0 %v5238
  %5313 = vmatpush1.bf16.msra.mxu0 %v5237
  %5314 = vmatprep.subr.bf16.mxu0 %v5234
  %5315 = vmatpush1.bf16.msra.mxu0 %v5233
  %5316 = vmatprep.subr.bf16.mxu0 %v5230
  %5317 = vmatpush1.bf16.msra.mxu0 %v5229
  %5318 = vmatprep.subr.bf16.mxu0 %v5226
  %5319 = vmatpush1.bf16.msra.mxu0 %v5225
  %5320 = vmatprep.subr.bf16.mxu0 %v5222
  %5321 = vmatpush1.bf16.msra.mxu0 %v5221
  %5322 = vmatprep.subr.bf16.mxu0 %v5218
  %5323 = vmatpush1.bf16.msra.mxu0 %v5217
  %5324 = vmatprep.subr.bf16.mxu0 %v5214
  %5325 = vmatpush1.bf16.msra.mxu0 %v5213
  %5326 = vmatprep.subr.bf16.mxu0 %v5210
  %5327 = vmatpush1.bf16.msra.mxu0 %v5209
  %5328 = vmatprep.subr.bf16.mxu0 0
  %5329 = vmatpush2.bf16.msra.mxu0 0
  %5330 = vmatprep.subr.bf16.mxu0 0
  %5331 = vmatpush2.bf16.msra.mxu0 0
  %5332 = vmatprep.subr.bf16.mxu0 0
  %5333 = vmatpush2.bf16.msra.mxu0 0
  %5334 = vmatprep.subr.bf16.mxu0 0
  %5335 = vmatpush2.bf16.msra.mxu0 0
  %5336 = vmatprep.subr.bf16.mxu0 0
  %5337 = vmatpush2.bf16.msra.mxu0 0
  %5338 = vmatprep.subr.bf16.mxu0 0
  %5339 = vmatpush2.bf16.msra.mxu0 0
  %5340 = vmatprep.subr.bf16.mxu0 0
  %5341 = vmatpush2.bf16.msra.mxu0 0
  %5342 = vmatprep.subr.bf16.mxu0 0
  %5343 = vmatpush2.bf16.msra.mxu0 0
  %5344 = vmatprep.mubr.bf16.mxu0 0
  %5345 = vmatmul.mubr.bf16.gmra.mxu0 %v5078
  %v5346 = vpop.f32.mrf.mxu0
  %v5347 = vadd.f32 0.0, %v5346
  %v5348 = vpop.f32.mrf.mxu0
  %v5349 = vadd.f32 0.0, %v5348
  %v5350 = vpop.f32.mrf.mxu0
  %v5351 = vpop.f32.mrf.mxu0
  %5352 = vdwg.mxu0
  %v5353 = vadd.f32 %v5074, %v5306
  %v5354 = vadd.f32 %v5075, %v5308
  %v5355 = vadd.f32 %v5076, %v5347
  %v5356 = vadd.f32 %v5077, %v5349
  %v5357 = vxor.u32 %v5353, 2147483648
  %v5358 = vmul.f32 %v5357, 1.442695
  %v5359 = vpow.pop %v5358
  %v5360 = vadd.f32 %v5359, 1.0
  %v5361 = vrcp.pop %v5360
  %v5362 = vmul.f32 1.0, %v5361
  %v5363 = vxor.u32 %v5354, 2147483648
  %v5364 = vmul.f32 %v5363, 1.442695
  %v5365 = vpow.pop %v5364
  %v5366 = vadd.f32 %v5365, 1.0
  %v5367 = vrcp.pop %v5366
  %v5368 = vmul.f32 1.0, %v5367
  %v5369 = vtanh.pop %v5355
  %v5370 = vxor.u32 %v5356, 2147483648
  %v5371 = vmul.f32 %v5370, 1.442695
  %v5372 = vpow.pop %v5371
  %v5373 = vadd.f32 %v5372, 1.0
  %v5374 = vrcp.pop %v5373
  %v5375 = vmul.f32 1.0, %v5374
  %v5376 = vmul.f32 %v5368, %v4856
  %v5377 = vmul.f32 %v5362, %v5369
  %v5378 = vadd.f32 %v5376, %v5377
  %v5379 = vtanh.pop %v5378
  %v5380 = vmul.f32 %v5375, %v5379
  %s5381 = scalar_lea.vmem %s0, 272
  %v5382 = vld [vmem:[%s5381] sm:$0xff]
  %v5383 = vld [vmem:[%s5381 + $0x8] sm:$0xff]
  %v5384 = vunpack.c.l.bf16 %v5382
  %v5385 = vunpack.c.h.bf16 %v5382
  %v5386 = vunpack.c.l.bf16 %v5383
  %v5387 = vunpack.c.h.bf16 %v5383
  %v5388 = vpack.c.bf16 %v5380, %v5380
  %5389 = vmatprep.subr.bf16.mxu0 %v5236
  %5390 = vmatpush1.bf16.msra.mxu0 %v5235
  %5391 = vmatprep.subr.bf16.mxu0 %v5232
  %5392 = vmatpush1.bf16.msra.mxu0 %v5231
  %5393 = vmatprep.subr.bf16.mxu0 %v5228
  %5394 = vmatpush1.bf16.msra.mxu0 %v5227
  %5395 = vmatprep.subr.bf16.mxu0 %v5224
  %5396 = vmatpush1.bf16.msra.mxu0 %v5223
  %5397 = vmatprep.subr.bf16.mxu0 %v5220
  %5398 = vmatpush1.bf16.msra.mxu0 %v5219
  %5399 = vmatprep.subr.bf16.mxu0 %v5216
  %5400 = vmatpush1.bf16.msra.mxu0 %v5215
  %5401 = vmatprep.subr.bf16.mxu0 %v5212
  %5402 = vmatpush1.bf16.msra.mxu0 %v5211
  %5403 = vmatprep.subr.bf16.mxu0 %v5208
  %5404 = vmatpush1.bf16.msra.mxu0 %v5207
  %5405 = vmatprep.subr.bf16.mxu0 0
  %5406 = vmatpush2.bf16.msra.mxu0 0
  %5407 = vmatprep.subr.bf16.mxu0 0
  %5408 = vmatpush2.bf16.msra.mxu0 0
  %5409 = vmatprep.subr.bf16.mxu0 0
  %5410 = vmatpush2.bf16.msra.mxu0 0
  %5411 = vmatprep.subr.bf16.mxu0 0
  %5412 = vmatpush2.bf16.msra.mxu0 0
  %5413 = vmatprep.subr.bf16.mxu0 0
  %5414 = vmatpush2.bf16.msra.mxu0 0
  %5415 = vmatprep.subr.bf16.mxu0 0
  %5416 = vmatpush2.bf16.msra.mxu0 0
  %5417 = vmatprep.subr.bf16.mxu0 0
  %5418 = vmatpush2.bf16.msra.mxu0 0
  %5419 = vmatprep.subr.bf16.mxu0 0
  %5420 = vmatpush2.bf16.msra.mxu0 0
  %5421 = vmatprep.mubr.bf16.mxu0 0
  %5422 = vmatmul.mubr.bf16.gmra.mxu0 %v5388
  %v5423 = vpop.f32.mrf.mxu0
  %v5424 = vadd.f32 0.0, %v5423
  %v5425 = vpop.f32.mrf.mxu0
  %v5426 = vadd.f32 0.0, %v5425
  %v5427 = vpop.f32.mrf.mxu0
  %v5428 = vpop.f32.mrf.mxu0
  %5429 = vdwg.mxu0
  %5430 = vmatprep.subr.bf16.mxu0 %v5238
  %5431 = vmatpush1.bf16.msra.mxu0 %v5237
  %5432 = vmatprep.subr.bf16.mxu0 %v5234
  %5433 = vmatpush1.bf16.msra.mxu0 %v5233
  %5434 = vmatprep.subr.bf16.mxu0 %v5230
  %5435 = vmatpush1.bf16.msra.mxu0 %v5229
  %5436 = vmatprep.subr.bf16.mxu0 %v5226
  %5437 = vmatpush1.bf16.msra.mxu0 %v5225
  %5438 = vmatprep.subr.bf16.mxu0 %v5222
  %5439 = vmatpush1.bf16.msra.mxu0 %v5221
  %5440 = vmatprep.subr.bf16.mxu0 %v5218
  %5441 = vmatpush1.bf16.msra.mxu0 %v5217
  %5442 = vmatprep.subr.bf16.mxu0 %v5214
  %5443 = vmatpush1.bf16.msra.mxu0 %v5213
  %5444 = vmatprep.subr.bf16.mxu0 %v5210
  %5445 = vmatpush1.bf16.msra.mxu0 %v5209
  %5446 = vmatprep.subr.bf16.mxu0 0
  %5447 = vmatpush2.bf16.msra.mxu0 0
  %5448 = vmatprep.subr.bf16.mxu0 0
  %5449 = vmatpush2.bf16.msra.mxu0 0
  %5450 = vmatprep.subr.bf16.mxu0 0
  %5451 = vmatpush2.bf16.msra.mxu0 0
  %5452 = vmatprep.subr.bf16.mxu0 0
  %5453 = vmatpush2.bf16.msra.mxu0 0
  %5454 = vmatprep.subr.bf16.mxu0 0
  %5455 = vmatpush2.bf16.msra.mxu0 0
  %5456 = vmatprep.subr.bf16.mxu0 0
  %5457 = vmatpush2.bf16.msra.mxu0 0
  %5458 = vmatprep.subr.bf16.mxu0 0
  %5459 = vmatpush2.bf16.msra.mxu0 0
  %5460 = vmatprep.subr.bf16.mxu0 0
  %5461 = vmatpush2.bf16.msra.mxu0 0
  %5462 = vmatprep.mubr.bf16.mxu0 0
  %5463 = vmatmul.mubr.bf16.gmra.mxu0 %v5388
  %v5464 = vpop.f32.mrf.mxu0
  %v5465 = vadd.f32 0.0, %v5464
  %v5466 = vpop.f32.mrf.mxu0
  %v5467 = vadd.f32 0.0, %v5466
  %v5468 = vpop.f32.mrf.mxu0
  %v5469 = vpop.f32.mrf.mxu0
  %5470 = vdwg.mxu0
  %v5471 = vadd.f32 %v5384, %v5424
  %v5472 = vadd.f32 %v5385, %v5426
  %v5473 = vadd.f32 %v5386, %v5465
  %v5474 = vadd.f32 %v5387, %v5467
  %v5475 = vxor.u32 %v5471, 2147483648
  %v5476 = vmul.f32 %v5475, 1.442695
  %v5477 = vpow.pop %v5476
  %v5478 = vadd.f32 %v5477, 1.0
  %v5479 = vrcp.pop %v5478
  %v5480 = vmul.f32 1.0, %v5479
  %v5481 = vxor.u32 %v5472, 2147483648
  %v5482 = vmul.f32 %v5481, 1.442695
  %v5483 = vpow.pop %v5482
  %v5484 = vadd.f32 %v5483, 1.0
  %v5485 = vrcp.pop %v5484
  %v5486 = vmul.f32 1.0, %v5485
  %v5487 = vtanh.pop %v5473
  %v5488 = vxor.u32 %v5474, 2147483648
  %v5489 = vmul.f32 %v5488, 1.442695
  %v5490 = vpow.pop %v5489
  %v5491 = vadd.f32 %v5490, 1.0
  %v5492 = vrcp.pop %v5491
  %v5493 = vmul.f32 1.0, %v5492
  %v5494 = vmul.f32 %v5486, %v5378
  %v5495 = vmul.f32 %v5480, %v5487
  %v5496 = vadd.f32 %v5494, %v5495
  %v5497 = vtanh.pop %v5496
  %v5498 = vmul.f32 %v5493, %v5497
  %v5500 = vcombine.high %v5380, %v5380
  %v5502 = vunpack.c.l.s4 1966171168
  %v5503 = vunpack.c.0.s8 %v5502
  %v5504 = vlaneseq
  %v5505 = vshrl.u32 %v5504, 7
  %v5506 = vsub.s32 %v5503, %v5505
  %v5507 = vrot.slane %v5380, %v5506
  %v5509 = vunpack.c.l.s4 1966171168
  %v5510 = vunpack.c.0.s8 %v5509
  %v5511 = vlaneseq
  %v5512 = vshrl.u32 %v5511, 7
  %v5513 = vsub.s32 %v5510, %v5512
  %v5514 = vrot.slane %v5500, %v5513
  %v5515 = vcombine.high %v5507, %v5507
  %v5516 = vcombine.high %v5514, %v5514
  %v5518 = vunpack.c.l.s4 1966171168
  %v5519 = vunpack.c.0.s8 %v5518
  %v5520 = vlaneseq
  %v5521 = vshrl.u32 %v5520, 7
  %v5522 = vsub.s32 %v5519, %v5521
  %v5523 = vrot.slane %v5507, %v5522
  %v5525 = vunpack.c.l.s4 1966171168
  %v5526 = vunpack.c.0.s8 %v5525
  %v5527 = vlaneseq
  %v5528 = vshrl.u32 %v5527, 7
  %v5529 = vsub.s32 %v5526, %v5528
  %v5530 = vrot.slane %v5514, %v5529
  %v5532 = vunpack.c.l.s4 1966171168
  %v5533 = vunpack.c.0.s8 %v5532
  %v5534 = vlaneseq
  %v5535 = vshrl.u32 %v5534, 7
  %v5536 = vsub.s32 %v5533, %v5535
  %v5537 = vrot.slane %v5515, %v5536
  %v5539 = vunpack.c.l.s4 1966171168
  %v5540 = vunpack.c.0.s8 %v5539
  %v5541 = vlaneseq
  %v5542 = vshrl.u32 %v5541, 7
  %v5543 = vsub.s32 %v5540, %v5542
  %v5544 = vrot.slane %v5516, %v5543
  %v5545 = vcombine.high %v5523, %v5523
  %v5546 = vcombine.high %v5530, %v5530
  %v5547 = vcombine.high %v5537, %v5537
  %v5548 = vcombine.high %v5544, %v5544
  %v5558 = vcombine.high %v5498, %v5498
  %v5560 = vunpack.c.l.s4 1966171168
  %v5561 = vunpack.c.0.s8 %v5560
  %v5562 = vlaneseq
  %v5563 = vshrl.u32 %v5562, 7
  %v5564 = vsub.s32 %v5561, %v5563
  %v5565 = vrot.slane %v5498, %v5564
  %v5567 = vunpack.c.l.s4 1966171168
  %v5568 = vunpack.c.0.s8 %v5567
  %v5569 = vlaneseq
  %v5570 = vshrl.u32 %v5569, 7
  %v5571 = vsub.s32 %v5568, %v5570
  %v5572 = vrot.slane %v5558, %v5571
  %v5573 = vcombine.high %v5565, %v5565
  %v5574 = vcombine.high %v5572, %v5572
  %v5576 = vunpack.c.l.s4 1966171168
  %v5577 = vunpack.c.0.s8 %v5576
  %v5578 = vlaneseq
  %v5579 = vshrl.u32 %v5578, 7
  %v5580 = vsub.s32 %v5577, %v5579
  %v5581 = vrot.slane %v5565, %v5580
  %v5583 = vunpack.c.l.s4 1966171168
  %v5584 = vunpack.c.0.s8 %v5583
  %v5585 = vlaneseq
  %v5586 = vshrl.u32 %v5585, 7
  %v5587 = vsub.s32 %v5584, %v5586
  %v5588 = vrot.slane %v5572, %v5587
  %v5590 = vunpack.c.l.s4 1966171168
  %v5591 = vunpack.c.0.s8 %v5590
  %v5592 = vlaneseq
  %v5593 = vshrl.u32 %v5592, 7
  %v5594 = vsub.s32 %v5591, %v5593
  %v5595 = vrot.slane %v5573, %v5594
  %v5597 = vunpack.c.l.s4 1966171168
  %v5598 = vunpack.c.0.s8 %v5597
  %v5599 = vlaneseq
  %v5600 = vshrl.u32 %v5599, 7
  %v5601 = vsub.s32 %v5598, %v5600
  %v5602 = vrot.slane %v5574, %v5601
  %v5603 = vcombine.high %v5581, %v5581
  %v5604 = vcombine.high %v5588, %v5588
  %v5605 = vcombine.high %v5595, %v5595
  %v5606 = vcombine.high %v5602, %v5602
  %v5607 = vlaneseq
  %v5608 = vshrl.u32 %v5607, 7
  %v5609 = vsub.s32 0, %v5608
  %v5610 = vrot.slane %v5581, %v5609
  %v5611 = vlaneseq
  %v5612 = vshrl.u32 %v5611, 7
  %v5613 = vsub.s32 0, %v5612
  %v5614 = vrot.slane %v5595, %v5613
  %v5615 = vlaneseq
  %v5616 = vshrl.u32 %v5615, 7
  %v5617 = vsub.s32 0, %v5616
  %v5618 = vrot.slane %v5603, %v5617
  %v5619 = vlaneseq
  %v5620 = vshrl.u32 %v5619, 7
  %v5621 = vsub.s32 0, %v5620
  %v5622 = vrot.slane %v5605, %v5621
  %v5623 = vlaneseq
  %v5624 = vshrl.u32 %v5623, 7
  %v5625 = vsub.s32 0, %v5624
  %v5626 = vrot.slane %v5588, %v5625
  %v5627 = vlaneseq
  %v5628 = vshrl.u32 %v5627, 7
  %v5629 = vsub.s32 0, %v5628
  %v5630 = vrot.slane %v5602, %v5629
  %v5631 = vlaneseq
  %v5632 = vshrl.u32 %v5631, 7
  %v5633 = vsub.s32 0, %v5632
  %v5634 = vrot.slane %v5604, %v5633
  %v5635 = vlaneseq
  %v5636 = vshrl.u32 %v5635, 7
  %v5637 = vsub.s32 0, %v5636
  %v5638 = vrot.slane %v5606, %v5637
  %v5647 = vsel %vm606, %v5523, %v5610
  %v5648 = vsel %vm606, %v5537, %v5614
  %v5649 = vsel %vm606, %v5545, %v5618
  %v5650 = vsel %vm606, %v5547, %v5622
  %v5651 = vsel %vm606, %v5530, %v5626
  %v5652 = vsel %vm606, %v5544, %v5630
  %v5653 = vsel %vm606, %v5546, %v5634
  %v5654 = vsel %vm606, %v5548, %v5638
  %v5655 = vpack.c.bf16 %v5647, %v5647
  %v5656 = vpack.c.bf16 %v5648, %v5648
  %v5657 = vpack.c.bf16 %v5649, %v5649
  %v5658 = vpack.c.bf16 %v5650, %v5650
  %v5659 = vpack.c.bf16 %v5651, %v5651
  %v5660 = vpack.c.bf16 %v5652, %v5652
  %v5661 = vpack.c.bf16 %v5653, %v5653
  %v5662 = vpack.c.bf16 %v5654, %v5654
  %5663 = vst [vmem:[%s4 + $0x8] sm:$0x1] %v5655
  %5664 = vst [vmem:[%s4 + $0x18] sm:$0x1] %v5656
  %5665 = vst [vmem:[%s4 + $0x28] sm:$0x1] %v5657
  %5666 = vst [vmem:[%s4 + $0x38] sm:$0x1] %v5658
  %5667 = vst [vmem:[%s4 + $0x48] sm:$0x1] %v5659
  %5668 = vst [vmem:[%s4 + $0x58] sm:$0x1] %v5660
  %5669 = vst [vmem:[%s4 + $0x68] sm:$0x1] %v5661
  %5670 = vst [vmem:[%s4 + $0x78] sm:$0x1] %v5662
  %s5671 = scalar_lea.vmem %s0, 288
  %v5672 = vld [vmem:[%s5671] sm:$0xff]
  %v5673 = vld [vmem:[%s5671 + $0x8] sm:$0xff]
  %v5674 = vunpack.c.l.bf16 %v5672
  %v5675 = vunpack.c.h.bf16 %v5672
  %v5676 = vunpack.c.l.bf16 %v5673
  %v5677 = vunpack.c.h.bf16 %v5673
  %v5678 = vpack.c.bf16 %v5498, %v5498
  %v5679 = vld [vmem:[%s1] sm:$0xff]
  %v5680 = vld [vmem:[%s1 + $0x8] sm:$0xff]
  %v5681 = vld [vmem:[%s1 + $0x10] sm:$0xff]
  %v5682 = vld [vmem:[%s1 + $0x18] sm:$0xff]
  %v5683 = vld [vmem:[%s1 + $0x20] sm:$0xff]
  %v5684 = vld [vmem:[%s1 + $0x28] sm:$0xff]
  %v5685 = vld [vmem:[%s1 + $0x30] sm:$0xff]
  %v5686 = vld [vmem:[%s1 + $0x38] sm:$0xff]
  %v5687 = vld [vmem:[%s1 + $0x40] sm:$0xff]
  %v5688 = vld [vmem:[%s1 + $0x48] sm:$0xff]
  %v5689 = vld [vmem:[%s1 + $0x50] sm:$0xff]
  %v5690 = vld [vmem:[%s1 + $0x58] sm:$0xff]
  %v5691 = vld [vmem:[%s1 + $0x60] sm:$0xff]
  %v5692 = vld [vmem:[%s1 + $0x68] sm:$0xff]
  %v5693 = vld [vmem:[%s1 + $0x70] sm:$0xff]
  %v5694 = vld [vmem:[%s1 + $0x78] sm:$0xff]
  %v5695 = vld [vmem:[%s1 + $0x80] sm:$0xff]
  %v5696 = vld [vmem:[%s1 + $0x88] sm:$0xff]
  %v5697 = vld [vmem:[%s1 + $0x90] sm:$0xff]
  %v5698 = vld [vmem:[%s1 + $0x98] sm:$0xff]
  %v5699 = vld [vmem:[%s1 + $0xa0] sm:$0xff]
  %v5700 = vld [vmem:[%s1 + $0xa8] sm:$0xff]
  %v5701 = vld [vmem:[%s1 + $0xb0] sm:$0xff]
  %v5702 = vld [vmem:[%s1 + $0xb8] sm:$0xff]
  %v5703 = vld [vmem:[%s1 + $0xc0] sm:$0xff]
  %v5704 = vld [vmem:[%s1 + $0xc8] sm:$0xff]
  %v5705 = vld [vmem:[%s1 + $0xd0] sm:$0xff]
  %v5706 = vld [vmem:[%s1 + $0xd8] sm:$0xff]
  %v5707 = vld [vmem:[%s1 + $0xe0] sm:$0xff]
  %v5708 = vld [vmem:[%s1 + $0xe8] sm:$0xff]
  %v5709 = vld [vmem:[%s1 + $0xf0] sm:$0xff]
  %v5710 = vld [vmem:[%s1 + $0xf8] sm:$0xff]
  %v5743 = vunpack.c.l.b16 %v5679
  %v5744 = vunpack.c.h.b16 %v5679
  %v5745 = vunpack.c.l.b16 %v5680
  %v5746 = vunpack.c.h.b16 %v5680
  %v5747 = vunpack.c.l.b16 %v5681
  %v5748 = vunpack.c.h.b16 %v5681
  %v5749 = vunpack.c.l.b16 %v5682
  %v5750 = vunpack.c.h.b16 %v5682
  %v5751 = vunpack.c.l.b16 %v5683
  %v5752 = vunpack.c.h.b16 %v5683
  %v5753 = vunpack.c.l.b16 %v5684
  %v5754 = vunpack.c.h.b16 %v5684
  %v5755 = vunpack.c.l.b16 %v5685
  %v5756 = vunpack.c.h.b16 %v5685
  %v5757 = vunpack.c.l.b16 %v5686
  %v5758 = vunpack.c.h.b16 %v5686
  %v5759 = vunpack.c.l.b16 %v5687
  %v5760 = vunpack.c.h.b16 %v5687
  %v5761 = vunpack.c.l.b16 %v5688
  %v5762 = vunpack.c.h.b16 %v5688
  %v5763 = vunpack.c.l.b16 %v5689
  %v5764 = vunpack.c.h.b16 %v5689
  %v5765 = vunpack.c.l.b16 %v5690
  %v5766 = vunpack.c.h.b16 %v5690
  %v5767 = vunpack.c.l.b16 %v5691
  %v5768 = vunpack.c.h.b16 %v5691
  %v5769 = vunpack.c.l.b16 %v5692
  %v5770 = vunpack.c.h.b16 %v5692
  %v5771 = vunpack.c.l.b16 %v5693
  %v5772 = vunpack.c.h.b16 %v5693
  %v5773 = vunpack.c.l.b16 %v5694
  %v5774 = vunpack.c.h.b16 %v5694
  %v5775 = vunpack.c.l.b16 %v5695
  %v5776 = vunpack.c.h.b16 %v5695
  %v5777 = vunpack.c.l.b16 %v5696
  %v5778 = vunpack.c.h.b16 %v5696
  %v5779 = vunpack.c.l.b16 %v5697
  %v5780 = vunpack.c.h.b16 %v5697
  %v5781 = vunpack.c.l.b16 %v5698
  %v5782 = vunpack.c.h.b16 %v5698
  %v5783 = vunpack.c.l.b16 %v5699
  %v5784 = vunpack.c.h.b16 %v5699
  %v5785 = vunpack.c.l.b16 %v5700
  %v5786 = vunpack.c.h.b16 %v5700
  %v5787 = vunpack.c.l.b16 %v5701
  %v5788 = vunpack.c.h.b16 %v5701
  %v5789 = vunpack.c.l.b16 %v5702
  %v5790 = vunpack.c.h.b16 %v5702
  %v5791 = vunpack.c.l.b16 %v5703
  %v5792 = vunpack.c.h.b16 %v5703
  %v5793 = vunpack.c.l.b16 %v5704
  %v5794 = vunpack.c.h.b16 %v5704
  %v5795 = vunpack.c.l.b16 %v5705
  %v5796 = vunpack.c.h.b16 %v5705
  %v5797 = vunpack.c.l.b16 %v5706
  %v5798 = vunpack.c.h.b16 %v5706
  %v5799 = vunpack.c.l.b16 %v5707
  %v5800 = vunpack.c.h.b16 %v5707
  %v5801 = vunpack.c.l.b16 %v5708
  %v5802 = vunpack.c.h.b16 %v5708
  %v5803 = vunpack.c.l.b16 %v5709
  %v5804 = vunpack.c.h.b16 %v5709
  %v5805 = vunpack.c.l.b16 %v5710
  %v5806 = vunpack.c.h.b16 %v5710
  %v5807 = vpack.c.b16 %v5747, %v5743
  %v5808 = vpack.c.b16 %v5748, %v5744
  %v5809 = vpack.c.b16 %v5749, %v5745
  %v5810 = vpack.c.b16 %v5750, %v5746
  %v5811 = vpack.c.b16 %v5755, %v5751
  %v5812 = vpack.c.b16 %v5756, %v5752
  %v5813 = vpack.c.b16 %v5757, %v5753
  %v5814 = vpack.c.b16 %v5758, %v5754
  %v5815 = vpack.c.b16 %v5763, %v5759
  %v5816 = vpack.c.b16 %v5764, %v5760
  %v5817 = vpack.c.b16 %v5765, %v5761
  %v5818 = vpack.c.b16 %v5766, %v5762
  %v5819 = vpack.c.b16 %v5771, %v5767
  %v5820 = vpack.c.b16 %v5772, %v5768
  %v5821 = vpack.c.b16 %v5773, %v5769
  %v5822 = vpack.c.b16 %v5774, %v5770
  %v5823 = vpack.c.b16 %v5779, %v5775
  %v5824 = vpack.c.b16 %v5780, %v5776
  %v5825 = vpack.c.b16 %v5781, %v5777
  %v5826 = vpack.c.b16 %v5782, %v5778
  %v5827 = vpack.c.b16 %v5787, %v5783
  %v5828 = vpack.c.b16 %v5788, %v5784
  %v5829 = vpack.c.b16 %v5789, %v5785
  %v5830 = vpack.c.b16 %v5790, %v5786
  %v5831 = vpack.c.b16 %v5795, %v5791
  %v5832 = vpack.c.b16 %v5796, %v5792
  %v5833 = vpack.c.b16 %v5797, %v5793
  %v5834 = vpack.c.b16 %v5798, %v5794
  %v5835 = vpack.c.b16 %v5803, %v5799
  %v5836 = vpack.c.b16 %v5804, %v5800
  %v5837 = vpack.c.b16 %v5805, %v5801
  %v5838 = vpack.c.b16 %v5806, %v5802
  %5871 = vmatprep.subr.bf16.mxu0 %v5836
  %5872 = vmatpush1.bf16.msra.mxu0 %v5835
  %5873 = vmatprep.subr.bf16.mxu0 %v5832
  %5874 = vmatpush1.bf16.msra.mxu0 %v5831
  %5875 = vmatprep.subr.bf16.mxu0 %v5828
  %5876 = vmatpush1.bf16.msra.mxu0 %v5827
  %5877 = vmatprep.subr.bf16.mxu0 %v5824
  %5878 = vmatpush1.bf16.msra.mxu0 %v5823
  %5879 = vmatprep.subr.bf16.mxu0 %v5820
  %5880 = vmatpush1.bf16.msra.mxu0 %v5819
  %5881 = vmatprep.subr.bf16.mxu0 %v5816
  %5882 = vmatpush1.bf16.msra.mxu0 %v5815
  %5883 = vmatprep.subr.bf16.mxu0 %v5812
  %5884 = vmatpush1.bf16.msra.mxu0 %v5811
  %5885 = vmatprep.subr.bf16.mxu0 %v5808
  %5886 = vmatpush1.bf16.msra.mxu0 %v5807
  %5887 = vmatprep.subr.bf16.mxu0 0
  %5888 = vmatpush2.bf16.msra.mxu0 0
  %5889 = vmatprep.subr.bf16.mxu0 0
  %5890 = vmatpush2.bf16.msra.mxu0 0
  %5891 = vmatprep.subr.bf16.mxu0 0
  %5892 = vmatpush2.bf16.msra.mxu0 0
  %5893 = vmatprep.subr.bf16.mxu0 0
  %5894 = vmatpush2.bf16.msra.mxu0 0
  %5895 = vmatprep.subr.bf16.mxu0 0
  %5896 = vmatpush2.bf16.msra.mxu0 0
  %5897 = vmatprep.subr.bf16.mxu0 0
  %5898 = vmatpush2.bf16.msra.mxu0 0
  %5899 = vmatprep.subr.bf16.mxu0 0
  %5900 = vmatpush2.bf16.msra.mxu0 0
  %5901 = vmatprep.subr.bf16.mxu0 0
  %5902 = vmatpush2.bf16.msra.mxu0 0
  %5903 = vmatprep.mubr.bf16.mxu0 0
  %5904 = vmatmul.mubr.bf16.gmra.mxu0 %v5678
  %v5905 = vpop.f32.mrf.mxu0
  %v5906 = vadd.f32 0.0, %v5905
  %v5907 = vpop.f32.mrf.mxu0
  %v5908 = vadd.f32 0.0, %v5907
  %v5909 = vpop.f32.mrf.mxu0
  %v5910 = vpop.f32.mrf.mxu0
  %5911 = vdwg.mxu0
  %5912 = vmatprep.subr.bf16.mxu0 %v5838
  %5913 = vmatpush1.bf16.msra.mxu0 %v5837
  %5914 = vmatprep.subr.bf16.mxu0 %v5834
  %5915 = vmatpush1.bf16.msra.mxu0 %v5833
  %5916 = vmatprep.subr.bf16.mxu0 %v5830
  %5917 = vmatpush1.bf16.msra.mxu0 %v5829
  %5918 = vmatprep.subr.bf16.mxu0 %v5826
  %5919 = vmatpush1.bf16.msra.mxu0 %v5825
  %5920 = vmatprep.subr.bf16.mxu0 %v5822
  %5921 = vmatpush1.bf16.msra.mxu0 %v5821
  %5922 = vmatprep.subr.bf16.mxu0 %v5818
  %5923 = vmatpush1.bf16.msra.mxu0 %v5817
  %5924 = vmatprep.subr.bf16.mxu0 %v5814
  %5925 = vmatpush1.bf16.msra.mxu0 %v5813
  %5926 = vmatprep.subr.bf16.mxu0 %v5810
  %5927 = vmatpush1.bf16.msra.mxu0 %v5809
  %5928 = vmatprep.subr.bf16.mxu0 0
  %5929 = vmatpush2.bf16.msra.mxu0 0
  %5930 = vmatprep.subr.bf16.mxu0 0
  %5931 = vmatpush2.bf16.msra.mxu0 0
  %5932 = vmatprep.subr.bf16.mxu0 0
  %5933 = vmatpush2.bf16.msra.mxu0 0
  %5934 = vmatprep.subr.bf16.mxu0 0
  %5935 = vmatpush2.bf16.msra.mxu0 0
  %5936 = vmatprep.subr.bf16.mxu0 0
  %5937 = vmatpush2.bf16.msra.mxu0 0
  %5938 = vmatprep.subr.bf16.mxu0 0
  %5939 = vmatpush2.bf16.msra.mxu0 0
  %5940 = vmatprep.subr.bf16.mxu0 0
  %5941 = vmatpush2.bf16.msra.mxu0 0
  %5942 = vmatprep.subr.bf16.mxu0 0
  %5943 = vmatpush2.bf16.msra.mxu0 0
  %5944 = vmatprep.mubr.bf16.mxu0 0
  %5945 = vmatmul.mubr.bf16.gmra.mxu0 %v5678
  %v5946 = vpop.f32.mrf.mxu0
  %v5947 = vadd.f32 0.0, %v5946
  %v5948 = vpop.f32.mrf.mxu0
  %v5949 = vadd.f32 0.0, %v5948
  %v5950 = vpop.f32.mrf.mxu0
  %v5951 = vpop.f32.mrf.mxu0
  %5952 = vdwg.mxu0
  %v5953 = vadd.f32 %v5674, %v5906
  %v5954 = vadd.f32 %v5675, %v5908
  %v5955 = vadd.f32 %v5676, %v5947
  %v5956 = vadd.f32 %v5677, %v5949
  %v5957 = vxor.u32 %v5953, 2147483648
  %v5958 = vmul.f32 %v5957, 1.442695
  %v5959 = vpow.pop %v5958
  %v5960 = vadd.f32 %v5959, 1.0
  %v5961 = vrcp.pop %v5960
  %v5962 = vmul.f32 1.0, %v5961
  %v5963 = vxor.u32 %v5954, 2147483648
  %v5964 = vmul.f32 %v5963, 1.442695
  %v5965 = vpow.pop %v5964
  %v5966 = vadd.f32 %v5965, 1.0
  %v5967 = vrcp.pop %v5966
  %v5968 = vmul.f32 1.0, %v5967
  %v5969 = vtanh.pop %v5955
  %v5970 = vxor.u32 %v5956, 2147483648
  %v5971 = vmul.f32 %v5970, 1.442695
  %v5972 = vpow.pop %v5971
  %v5973 = vadd.f32 %v5972, 1.0
  %v5974 = vrcp.pop %v5973
  %v5975 = vmul.f32 1.0, %v5974
  %v5976 = vmul.f32 %v5968, %v5496
  %v5977 = vmul.f32 %v5962, %v5969
  %v5978 = vadd.f32 %v5976, %v5977
  %v5979 = vtanh.pop %v5978
  %v5980 = vmul.f32 %v5975, %v5979
  %s5981 = scalar_lea.vmem %s0, 304
  %v5982 = vld [vmem:[%s5981] sm:$0xff]
  %v5983 = vld [vmem:[%s5981 + $0x8] sm:$0xff]
  %v5984 = vunpack.c.l.bf16 %v5982
  %v5985 = vunpack.c.h.bf16 %v5982
  %v5986 = vunpack.c.l.bf16 %v5983
  %v5987 = vunpack.c.h.bf16 %v5983
  %v5988 = vpack.c.bf16 %v5980, %v5980
  %5989 = vmatprep.subr.bf16.mxu0 %v5836
  %5990 = vmatpush1.bf16.msra.mxu0 %v5835
  %5991 = vmatprep.subr.bf16.mxu0 %v5832
  %5992 = vmatpush1.bf16.msra.mxu0 %v5831
  %5993 = vmatprep.subr.bf16.mxu0 %v5828
  %5994 = vmatpush1.bf16.msra.mxu0 %v5827
  %5995 = vmatprep.subr.bf16.mxu0 %v5824
  %5996 = vmatpush1.bf16.msra.mxu0 %v5823
  %5997 = vmatprep.subr.bf16.mxu0 %v5820
  %5998 = vmatpush1.bf16.msra.mxu0 %v5819
  %5999 = vmatprep.subr.bf16.mxu0 %v5816
  %6000 = vmatpush1.bf16.msra.mxu0 %v5815
  %6001 = vmatprep.subr.bf16.mxu0 %v5812
  %6002 = vmatpush1.bf16.msra.mxu0 %v5811
  %6003 = vmatprep.subr.bf16.mxu0 %v5808
  %6004 = vmatpush1.bf16.msra.mxu0 %v5807
  %6005 = vmatprep.subr.bf16.mxu0 0
  %6006 = vmatpush2.bf16.msra.mxu0 0
  %6007 = vmatprep.subr.bf16.mxu0 0
  %6008 = vmatpush2.bf16.msra.mxu0 0
  %6009 = vmatprep.subr.bf16.mxu0 0
  %6010 = vmatpush2.bf16.msra.mxu0 0
  %6011 = vmatprep.subr.bf16.mxu0 0
  %6012 = vmatpush2.bf16.msra.mxu0 0
  %6013 = vmatprep.subr.bf16.mxu0 0
  %6014 = vmatpush2.bf16.msra.mxu0 0
  %6015 = vmatprep.subr.bf16.mxu0 0
  %6016 = vmatpush2.bf16.msra.mxu0 0
  %6017 = vmatprep.subr.bf16.mxu0 0
  %6018 = vmatpush2.bf16.msra.mxu0 0
  %6019 = vmatprep.subr.bf16.mxu0 0
  %6020 = vmatpush2.bf16.msra.mxu0 0
  %6021 = vmatprep.mubr.bf16.mxu0 0
  %6022 = vmatmul.mubr.bf16.gmra.mxu0 %v5988
  %v6023 = vpop.f32.mrf.mxu0
  %v6024 = vadd.f32 0.0, %v6023
  %v6025 = vpop.f32.mrf.mxu0
  %v6026 = vadd.f32 0.0, %v6025
  %v6027 = vpop.f32.mrf.mxu0
  %v6028 = vpop.f32.mrf.mxu0
  %6029 = vdwg.mxu0
  %6030 = vmatprep.subr.bf16.mxu0 %v5838
  %6031 = vmatpush1.bf16.msra.mxu0 %v5837
  %6032 = vmatprep.subr.bf16.mxu0 %v5834
  %6033 = vmatpush1.bf16.msra.mxu0 %v5833
  %6034 = vmatprep.subr.bf16.mxu0 %v5830
  %6035 = vmatpush1.bf16.msra.mxu0 %v5829
  %6036 = vmatprep.subr.bf16.mxu0 %v5826
  %6037 = vmatpush1.bf16.msra.mxu0 %v5825
  %6038 = vmatprep.subr.bf16.mxu0 %v5822
  %6039 = vmatpush1.bf16.msra.mxu0 %v5821
  %6040 = vmatprep.subr.bf16.mxu0 %v5818
  %6041 = vmatpush1.bf16.msra.mxu0 %v5817
  %6042 = vmatprep.subr.bf16.mxu0 %v5814
  %6043 = vmatpush1.bf16.msra.mxu0 %v5813
  %6044 = vmatprep.subr.bf16.mxu0 %v5810
  %6045 = vmatpush1.bf16.msra.mxu0 %v5809
  %6046 = vmatprep.subr.bf16.mxu0 0
  %6047 = vmatpush2.bf16.msra.mxu0 0
  %6048 = vmatprep.subr.bf16.mxu0 0
  %6049 = vmatpush2.bf16.msra.mxu0 0
  %6050 = vmatprep.subr.bf16.mxu0 0
  %6051 = vmatpush2.bf16.msra.mxu0 0
  %6052 = vmatprep.subr.bf16.mxu0 0
  %6053 = vmatpush2.bf16.msra.mxu0 0
  %6054 = vmatprep.subr.bf16.mxu0 0
  %6055 = vmatpush2.bf16.msra.mxu0 0
  %6056 = vmatprep.subr.bf16.mxu0 0
  %6057 = vmatpush2.bf16.msra.mxu0 0
  %6058 = vmatprep.subr.bf16.mxu0 0
  %6059 = vmatpush2.bf16.msra.mxu0 0
  %6060 = vmatprep.subr.bf16.mxu0 0
  %6061 = vmatpush2.bf16.msra.mxu0 0
  %6062 = vmatprep.mubr.bf16.mxu0 0
  %6063 = vmatmul.mubr.bf16.gmra.mxu0 %v5988
  %v6064 = vpop.f32.mrf.mxu0
  %v6065 = vadd.f32 0.0, %v6064
  %v6066 = vpop.f32.mrf.mxu0
  %v6067 = vadd.f32 0.0, %v6066
  %v6068 = vpop.f32.mrf.mxu0
  %v6069 = vpop.f32.mrf.mxu0
  %6070 = vdwg.mxu0
  %v6071 = vadd.f32 %v5984, %v6024
  %v6072 = vadd.f32 %v5985, %v6026
  %v6073 = vadd.f32 %v5986, %v6065
  %v6074 = vadd.f32 %v5987, %v6067
  %v6075 = vxor.u32 %v6071, 2147483648
  %v6076 = vmul.f32 %v6075, 1.442695
  %v6077 = vpow.pop %v6076
  %v6078 = vadd.f32 %v6077, 1.0
  %v6079 = vrcp.pop %v6078
  %v6080 = vmul.f32 1.0, %v6079
  %v6081 = vxor.u32 %v6072, 2147483648
  %v6082 = vmul.f32 %v6081, 1.442695
  %v6083 = vpow.pop %v6082
  %v6084 = vadd.f32 %v6083, 1.0
  %v6085 = vrcp.pop %v6084
  %v6086 = vmul.f32 1.0, %v6085
  %v6087 = vtanh.pop %v6073
  %v6088 = vxor.u32 %v6074, 2147483648
  %v6089 = vmul.f32 %v6088, 1.442695
  %v6090 = vpow.pop %v6089
  %v6091 = vadd.f32 %v6090, 1.0
  %v6092 = vrcp.pop %v6091
  %v6093 = vmul.f32 1.0, %v6092
  %v6094 = vmul.f32 %v6086, %v5978
  %v6095 = vmul.f32 %v6080, %v6087
  %v6096 = vadd.f32 %v6094, %v6095
  %v6097 = vtanh.pop %v6096
  %v6098 = vmul.f32 %v6093, %v6097
  %v6100 = vcombine.high %v5980, %v5980
  %v6102 = vunpack.c.l.s4 1966171168
  %v6103 = vunpack.c.0.s8 %v6102
  %v6104 = vlaneseq
  %v6105 = vshrl.u32 %v6104, 7
  %v6106 = vsub.s32 %v6103, %v6105
  %v6107 = vrot.slane %v5980, %v6106
  %v6109 = vunpack.c.l.s4 1966171168
  %v6110 = vunpack.c.0.s8 %v6109
  %v6111 = vlaneseq
  %v6112 = vshrl.u32 %v6111, 7
  %v6113 = vsub.s32 %v6110, %v6112
  %v6114 = vrot.slane %v6100, %v6113
  %v6115 = vcombine.high %v6107, %v6107
  %v6116 = vcombine.high %v6114, %v6114
  %v6118 = vunpack.c.l.s4 1966171168
  %v6119 = vunpack.c.0.s8 %v6118
  %v6120 = vlaneseq
  %v6121 = vshrl.u32 %v6120, 7
  %v6122 = vsub.s32 %v6119, %v6121
  %v6123 = vrot.slane %v6107, %v6122
  %v6125 = vunpack.c.l.s4 1966171168
  %v6126 = vunpack.c.0.s8 %v6125
  %v6127 = vlaneseq
  %v6128 = vshrl.u32 %v6127, 7
  %v6129 = vsub.s32 %v6126, %v6128
  %v6130 = vrot.slane %v6114, %v6129
  %v6132 = vunpack.c.l.s4 1966171168
  %v6133 = vunpack.c.0.s8 %v6132
  %v6134 = vlaneseq
  %v6135 = vshrl.u32 %v6134, 7
  %v6136 = vsub.s32 %v6133, %v6135
  %v6137 = vrot.slane %v6115, %v6136
  %v6139 = vunpack.c.l.s4 1966171168
  %v6140 = vunpack.c.0.s8 %v6139
  %v6141 = vlaneseq
  %v6142 = vshrl.u32 %v6141, 7
  %v6143 = vsub.s32 %v6140, %v6142
  %v6144 = vrot.slane %v6116, %v6143
  %v6145 = vcombine.high %v6123, %v6123
  %v6146 = vcombine.high %v6130, %v6130
  %v6147 = vcombine.high %v6137, %v6137
  %v6148 = vcombine.high %v6144, %v6144
  %v6158 = vcombine.high %v6098, %v6098
  %v6160 = vunpack.c.l.s4 1966171168
  %v6161 = vunpack.c.0.s8 %v6160
  %v6162 = vlaneseq
  %v6163 = vshrl.u32 %v6162, 7
  %v6164 = vsub.s32 %v6161, %v6163
  %v6165 = vrot.slane %v6098, %v6164
  %v6167 = vunpack.c.l.s4 1966171168
  %v6168 = vunpack.c.0.s8 %v6167
  %v6169 = vlaneseq
  %v6170 = vshrl.u32 %v6169, 7
  %v6171 = vsub.s32 %v6168, %v6170
  %v6172 = vrot.slane %v6158, %v6171
  %v6173 = vcombine.high %v6165, %v6165
  %v6174 = vcombine.high %v6172, %v6172
  %v6176 = vunpack.c.l.s4 1966171168
  %v6177 = vunpack.c.0.s8 %v6176
  %v6178 = vlaneseq
  %v6179 = vshrl.u32 %v6178, 7
  %v6180 = vsub.s32 %v6177, %v6179
  %v6181 = vrot.slane %v6165, %v6180
  %v6183 = vunpack.c.l.s4 1966171168
  %v6184 = vunpack.c.0.s8 %v6183
  %v6185 = vlaneseq
  %v6186 = vshrl.u32 %v6185, 7
  %v6187 = vsub.s32 %v6184, %v6186
  %v6188 = vrot.slane %v6172, %v6187
  %v6190 = vunpack.c.l.s4 1966171168
  %v6191 = vunpack.c.0.s8 %v6190
  %v6192 = vlaneseq
  %v6193 = vshrl.u32 %v6192, 7
  %v6194 = vsub.s32 %v6191, %v6193
  %v6195 = vrot.slane %v6173, %v6194
  %v6197 = vunpack.c.l.s4 1966171168
  %v6198 = vunpack.c.0.s8 %v6197
  %v6199 = vlaneseq
  %v6200 = vshrl.u32 %v6199, 7
  %v6201 = vsub.s32 %v6198, %v6200
  %v6202 = vrot.slane %v6174, %v6201
  %v6203 = vcombine.high %v6181, %v6181
  %v6204 = vcombine.high %v6188, %v6188
  %v6205 = vcombine.high %v6195, %v6195
  %v6206 = vcombine.high %v6202, %v6202
  %v6207 = vlaneseq
  %v6208 = vshrl.u32 %v6207, 7
  %v6209 = vsub.s32 0, %v6208
  %v6210 = vrot.slane %v6181, %v6209
  %v6211 = vlaneseq
  %v6212 = vshrl.u32 %v6211, 7
  %v6213 = vsub.s32 0, %v6212
  %v6214 = vrot.slane %v6195, %v6213
  %v6215 = vlaneseq
  %v6216 = vshrl.u32 %v6215, 7
  %v6217 = vsub.s32 0, %v6216
  %v6218 = vrot.slane %v6203, %v6217
  %v6219 = vlaneseq
  %v6220 = vshrl.u32 %v6219, 7
  %v6221 = vsub.s32 0, %v6220
  %v6222 = vrot.slane %v6205, %v6221
  %v6223 = vlaneseq
  %v6224 = vshrl.u32 %v6223, 7
  %v6225 = vsub.s32 0, %v6224
  %v6226 = vrot.slane %v6188, %v6225
  %v6227 = vlaneseq
  %v6228 = vshrl.u32 %v6227, 7
  %v6229 = vsub.s32 0, %v6228
  %v6230 = vrot.slane %v6202, %v6229
  %v6231 = vlaneseq
  %v6232 = vshrl.u32 %v6231, 7
  %v6233 = vsub.s32 0, %v6232
  %v6234 = vrot.slane %v6204, %v6233
  %v6235 = vlaneseq
  %v6236 = vshrl.u32 %v6235, 7
  %v6237 = vsub.s32 0, %v6236
  %v6238 = vrot.slane %v6206, %v6237
  %v6247 = vsel %vm606, %v6123, %v6210
  %v6248 = vsel %vm606, %v6137, %v6214
  %v6249 = vsel %vm606, %v6145, %v6218
  %v6250 = vsel %vm606, %v6147, %v6222
  %v6251 = vsel %vm606, %v6130, %v6226
  %v6252 = vsel %vm606, %v6144, %v6230
  %v6253 = vsel %vm606, %v6146, %v6234
  %v6254 = vsel %vm606, %v6148, %v6238
  %v6255 = vpack.c.bf16 %v6247, %v6247
  %v6256 = vpack.c.bf16 %v6248, %v6248
  %v6257 = vpack.c.bf16 %v6249, %v6249
  %v6258 = vpack.c.bf16 %v6250, %v6250
  %v6259 = vpack.c.bf16 %v6251, %v6251
  %v6260 = vpack.c.bf16 %v6252, %v6252
  %v6261 = vpack.c.bf16 %v6253, %v6253
  %v6262 = vpack.c.bf16 %v6254, %v6254
  %v6271 = vunpack.c.l.b16 %v6255
  %v6272 = vunpack.c.l.b16 %v6256
  %v6273 = vunpack.c.l.b16 %v6257
  %v6274 = vunpack.c.l.b16 %v6258
  %v6275 = vunpack.c.l.b16 %v6259
  %v6276 = vunpack.c.l.b16 %v6260
  %v6277 = vunpack.c.l.b16 %v6261
  %v6278 = vunpack.c.l.b16 %v6262
  %v6279 = vpack.c.b16 %v6271, %v6271
  %v6280 = vpack.c.b16 %v6272, %v6272
  %v6281 = vpack.c.b16 %v6273, %v6273
  %v6282 = vpack.c.b16 %v6274, %v6274
  %v6283 = vpack.c.b16 %v6275, %v6275
  %v6284 = vpack.c.b16 %v6276, %v6276
  %v6285 = vpack.c.b16 %v6277, %v6277
  %v6286 = vpack.c.b16 %v6278, %v6278
  %v6287 = vrot.slane %v6279, 7
  %v6288 = vrot.slane %v6280, 7
  %v6289 = vrot.slane %v6281, 7
  %v6290 = vrot.slane %v6282, 7
  %v6291 = vrot.slane %v6283, 7
  %v6292 = vrot.slane %v6284, 7
  %v6293 = vrot.slane %v6285, 7
  %v6294 = vrot.slane %v6286, 7
  %6303 = vst [vmem:[%s4 + $0x8] sm:$0x2] %v6287
  %6304 = vst [vmem:[%s4 + $0x18] sm:$0x2] %v6288
  %6305 = vst [vmem:[%s4 + $0x28] sm:$0x2] %v6289
  %6306 = vst [vmem:[%s4 + $0x38] sm:$0x2] %v6290
  %6307 = vst [vmem:[%s4 + $0x48] sm:$0x2] %v6291
  %6308 = vst [vmem:[%s4 + $0x58] sm:$0x2] %v6292
  %6309 = vst [vmem:[%s4 + $0x68] sm:$0x2] %v6293
  %6310 = vst [vmem:[%s4 + $0x78] sm:$0x2] %v6294
  %s6311 = scalar_lea.vmem %s0, 320
  %v6312 = vld [vmem:[%s6311] sm:$0xff]
  %v6313 = vld [vmem:[%s6311 + $0x8] sm:$0xff]
  %v6314 = vunpack.c.l.bf16 %v6312
  %v6315 = vunpack.c.h.bf16 %v6312
  %v6316 = vunpack.c.l.bf16 %v6313
  %v6317 = vunpack.c.h.bf16 %v6313
  %v6318 = vpack.c.bf16 %v6098, %v6098
  %v6319 = vld [vmem:[%s1] sm:$0xff]
  %v6320 = vld [vmem:[%s1 + $0x8] sm:$0xff]
  %v6321 = vld [vmem:[%s1 + $0x10] sm:$0xff]
  %v6322 = vld [vmem:[%s1 + $0x18] sm:$0xff]
  %v6323 = vld [vmem:[%s1 + $0x20] sm:$0xff]
  %v6324 = vld [vmem:[%s1 + $0x28] sm:$0xff]
  %v6325 = vld [vmem:[%s1 + $0x30] sm:$0xff]
  %v6326 = vld [vmem:[%s1 + $0x38] sm:$0xff]
  %v6327 = vld [vmem:[%s1 + $0x40] sm:$0xff]
  %v6328 = vld [vmem:[%s1 + $0x48] sm:$0xff]
  %v6329 = vld [vmem:[%s1 + $0x50] sm:$0xff]
  %v6330 = vld [vmem:[%s1 + $0x58] sm:$0xff]
  %v6331 = vld [vmem:[%s1 + $0x60] sm:$0xff]
  %v6332 = vld [vmem:[%s1 + $0x68] sm:$0xff]
  %v6333 = vld [vmem:[%s1 + $0x70] sm:$0xff]
  %v6334 = vld [vmem:[%s1 + $0x78] sm:$0xff]
  %v6335 = vld [vmem:[%s1 + $0x80] sm:$0xff]
  %v6336 = vld [vmem:[%s1 + $0x88] sm:$0xff]
  %v6337 = vld [vmem:[%s1 + $0x90] sm:$0xff]
  %v6338 = vld [vmem:[%s1 + $0x98] sm:$0xff]
  %v6339 = vld [vmem:[%s1 + $0xa0] sm:$0xff]
  %v6340 = vld [vmem:[%s1 + $0xa8] sm:$0xff]
  %v6341 = vld [vmem:[%s1 + $0xb0] sm:$0xff]
  %v6342 = vld [vmem:[%s1 + $0xb8] sm:$0xff]
  %v6343 = vld [vmem:[%s1 + $0xc0] sm:$0xff]
  %v6344 = vld [vmem:[%s1 + $0xc8] sm:$0xff]
  %v6345 = vld [vmem:[%s1 + $0xd0] sm:$0xff]
  %v6346 = vld [vmem:[%s1 + $0xd8] sm:$0xff]
  %v6347 = vld [vmem:[%s1 + $0xe0] sm:$0xff]
  %v6348 = vld [vmem:[%s1 + $0xe8] sm:$0xff]
  %v6349 = vld [vmem:[%s1 + $0xf0] sm:$0xff]
  %v6350 = vld [vmem:[%s1 + $0xf8] sm:$0xff]
  %v6383 = vunpack.c.l.b16 %v6319
  %v6384 = vunpack.c.h.b16 %v6319
  %v6385 = vunpack.c.l.b16 %v6320
  %v6386 = vunpack.c.h.b16 %v6320
  %v6387 = vunpack.c.l.b16 %v6321
  %v6388 = vunpack.c.h.b16 %v6321
  %v6389 = vunpack.c.l.b16 %v6322
  %v6390 = vunpack.c.h.b16 %v6322
  %v6391 = vunpack.c.l.b16 %v6323
  %v6392 = vunpack.c.h.b16 %v6323
  %v6393 = vunpack.c.l.b16 %v6324
  %v6394 = vunpack.c.h.b16 %v6324
  %v6395 = vunpack.c.l.b16 %v6325
  %v6396 = vunpack.c.h.b16 %v6325
  %v6397 = vunpack.c.l.b16 %v6326
  %v6398 = vunpack.c.h.b16 %v6326
  %v6399 = vunpack.c.l.b16 %v6327
  %v6400 = vunpack.c.h.b16 %v6327
  %v6401 = vunpack.c.l.b16 %v6328
  %v6402 = vunpack.c.h.b16 %v6328
  %v6403 = vunpack.c.l.b16 %v6329
  %v6404 = vunpack.c.h.b16 %v6329
  %v6405 = vunpack.c.l.b16 %v6330
  %v6406 = vunpack.c.h.b16 %v6330
  %v6407 = vunpack.c.l.b16 %v6331
  %v6408 = vunpack.c.h.b16 %v6331
  %v6409 = vunpack.c.l.b16 %v6332
  %v6410 = vunpack.c.h.b16 %v6332
  %v6411 = vunpack.c.l.b16 %v6333
  %v6412 = vunpack.c.h.b16 %v6333
  %v6413 = vunpack.c.l.b16 %v6334
  %v6414 = vunpack.c.h.b16 %v6334
  %v6415 = vunpack.c.l.b16 %v6335
  %v6416 = vunpack.c.h.b16 %v6335
  %v6417 = vunpack.c.l.b16 %v6336
  %v6418 = vunpack.c.h.b16 %v6336
  %v6419 = vunpack.c.l.b16 %v6337
  %v6420 = vunpack.c.h.b16 %v6337
  %v6421 = vunpack.c.l.b16 %v6338
  %v6422 = vunpack.c.h.b16 %v6338
  %v6423 = vunpack.c.l.b16 %v6339
  %v6424 = vunpack.c.h.b16 %v6339
  %v6425 = vunpack.c.l.b16 %v6340
  %v6426 = vunpack.c.h.b16 %v6340
  %v6427 = vunpack.c.l.b16 %v6341
  %v6428 = vunpack.c.h.b16 %v6341
  %v6429 = vunpack.c.l.b16 %v6342
  %v6430 = vunpack.c.h.b16 %v6342
  %v6431 = vunpack.c.l.b16 %v6343
  %v6432 = vunpack.c.h.b16 %v6343
  %v6433 = vunpack.c.l.b16 %v6344
  %v6434 = vunpack.c.h.b16 %v6344
  %v6435 = vunpack.c.l.b16 %v6345
  %v6436 = vunpack.c.h.b16 %v6345
  %v6437 = vunpack.c.l.b16 %v6346
  %v6438 = vunpack.c.h.b16 %v6346
  %v6439 = vunpack.c.l.b16 %v6347
  %v6440 = vunpack.c.h.b16 %v6347
  %v6441 = vunpack.c.l.b16 %v6348
  %v6442 = vunpack.c.h.b16 %v6348
  %v6443 = vunpack.c.l.b16 %v6349
  %v6444 = vunpack.c.h.b16 %v6349
  %v6445 = vunpack.c.l.b16 %v6350
  %v6446 = vunpack.c.h.b16 %v6350
  %v6447 = vpack.c.b16 %v6387, %v6383
  %v6448 = vpack.c.b16 %v6388, %v6384
  %v6449 = vpack.c.b16 %v6389, %v6385
  %v6450 = vpack.c.b16 %v6390, %v6386
  %v6451 = vpack.c.b16 %v6395, %v6391
  %v6452 = vpack.c.b16 %v6396, %v6392
  %v6453 = vpack.c.b16 %v6397, %v6393
  %v6454 = vpack.c.b16 %v6398, %v6394
  %v6455 = vpack.c.b16 %v6403, %v6399
  %v6456 = vpack.c.b16 %v6404, %v6400
  %v6457 = vpack.c.b16 %v6405, %v6401
  %v6458 = vpack.c.b16 %v6406, %v6402
  %v6459 = vpack.c.b16 %v6411, %v6407
  %v6460 = vpack.c.b16 %v6412, %v6408
  %v6461 = vpack.c.b16 %v6413, %v6409
  %v6462 = vpack.c.b16 %v6414, %v6410
  %v6463 = vpack.c.b16 %v6419, %v6415
  %v6464 = vpack.c.b16 %v6420, %v6416
  %v6465 = vpack.c.b16 %v6421, %v6417
  %v6466 = vpack.c.b16 %v6422, %v6418
  %v6467 = vpack.c.b16 %v6427, %v6423
  %v6468 = vpack.c.b16 %v6428, %v6424
  %v6469 = vpack.c.b16 %v6429, %v6425
  %v6470 = vpack.c.b16 %v6430, %v6426
  %v6471 = vpack.c.b16 %v6435, %v6431
  %v6472 = vpack.c.b16 %v6436, %v6432
  %v6473 = vpack.c.b16 %v6437, %v6433
  %v6474 = vpack.c.b16 %v6438, %v6434
  %v6475 = vpack.c.b16 %v6443, %v6439
  %v6476 = vpack.c.b16 %v6444, %v6440
  %v6477 = vpack.c.b16 %v6445, %v6441
  %v6478 = vpack.c.b16 %v6446, %v6442
  %6511 = vmatprep.subr.bf16.mxu0 %v6476
  %6512 = vmatpush1.bf16.msra.mxu0 %v6475
  %6513 = vmatprep.subr.bf16.mxu0 %v6472
  %6514 = vmatpush1.bf16.msra.mxu0 %v6471
  %6515 = vmatprep.subr.bf16.mxu0 %v6468
  %6516 = vmatpush1.bf16.msra.mxu0 %v6467
  %6517 = vmatprep.subr.bf16.mxu0 %v6464
  %6518 = vmatpush1.bf16.msra.mxu0 %v6463
  %6519 = vmatprep.subr.bf16.mxu0 %v6460
  %6520 = vmatpush1.bf16.msra.mxu0 %v6459
  %6521 = vmatprep.subr.bf16.mxu0 %v6456
  %6522 = vmatpush1.bf16.msra.mxu0 %v6455
  %6523 = vmatprep.subr.bf16.mxu0 %v6452
  %6524 = vmatpush1.bf16.msra.mxu0 %v6451
  %6525 = vmatprep.subr.bf16.mxu0 %v6448
  %6526 = vmatpush1.bf16.msra.mxu0 %v6447
  %6527 = vmatprep.subr.bf16.mxu0 0
  %6528 = vmatpush2.bf16.msra.mxu0 0
  %6529 = vmatprep.subr.bf16.mxu0 0
  %6530 = vmatpush2.bf16.msra.mxu0 0
  %6531 = vmatprep.subr.bf16.mxu0 0
  %6532 = vmatpush2.bf16.msra.mxu0 0
  %6533 = vmatprep.subr.bf16.mxu0 0
  %6534 = vmatpush2.bf16.msra.mxu0 0
  %6535 = vmatprep.subr.bf16.mxu0 0
  %6536 = vmatpush2.bf16.msra.mxu0 0
  %6537 = vmatprep.subr.bf16.mxu0 0
  %6538 = vmatpush2.bf16.msra.mxu0 0
  %6539 = vmatprep.subr.bf16.mxu0 0
  %6540 = vmatpush2.bf16.msra.mxu0 0
  %6541 = vmatprep.subr.bf16.mxu0 0
  %6542 = vmatpush2.bf16.msra.mxu0 0
  %6543 = vmatprep.mubr.bf16.mxu0 0
  %6544 = vmatmul.mubr.bf16.gmra.mxu0 %v6318
  %v6545 = vpop.f32.mrf.mxu0
  %v6546 = vadd.f32 0.0, %v6545
  %v6547 = vpop.f32.mrf.mxu0
  %v6548 = vadd.f32 0.0, %v6547
  %v6549 = vpop.f32.mrf.mxu0
  %v6550 = vpop.f32.mrf.mxu0
  %6551 = vdwg.mxu0
  %6552 = vmatprep.subr.bf16.mxu0 %v6478
  %6553 = vmatpush1.bf16.msra.mxu0 %v6477
  %6554 = vmatprep.subr.bf16.mxu0 %v6474
  %6555 = vmatpush1.bf16.msra.mxu0 %v6473
  %6556 = vmatprep.subr.bf16.mxu0 %v6470
  %6557 = vmatpush1.bf16.msra.mxu0 %v6469
  %6558 = vmatprep.subr.bf16.mxu0 %v6466
  %6559 = vmatpush1.bf16.msra.mxu0 %v6465
  %6560 = vmatprep.subr.bf16.mxu0 %v6462
  %6561 = vmatpush1.bf16.msra.mxu0 %v6461
  %6562 = vmatprep.subr.bf16.mxu0 %v6458
  %6563 = vmatpush1.bf16.msra.mxu0 %v6457
  %6564 = vmatprep.subr.bf16.mxu0 %v6454
  %6565 = vmatpush1.bf16.msra.mxu0 %v6453
  %6566 = vmatprep.subr.bf16.mxu0 %v6450
  %6567 = vmatpush1.bf16.msra.mxu0 %v6449
  %6568 = vmatprep.subr.bf16.mxu0 0
  %6569 = vmatpush2.bf16.msra.mxu0 0
  %6570 = vmatprep.subr.bf16.mxu0 0
  %6571 = vmatpush2.bf16.msra.mxu0 0
  %6572 = vmatprep.subr.bf16.mxu0 0
  %6573 = vmatpush2.bf16.msra.mxu0 0
  %6574 = vmatprep.subr.bf16.mxu0 0
  %6575 = vmatpush2.bf16.msra.mxu0 0
  %6576 = vmatprep.subr.bf16.mxu0 0
  %6577 = vmatpush2.bf16.msra.mxu0 0
  %6578 = vmatprep.subr.bf16.mxu0 0
  %6579 = vmatpush2.bf16.msra.mxu0 0
  %6580 = vmatprep.subr.bf16.mxu0 0
  %6581 = vmatpush2.bf16.msra.mxu0 0
  %6582 = vmatprep.subr.bf16.mxu0 0
  %6583 = vmatpush2.bf16.msra.mxu0 0
  %6584 = vmatprep.mubr.bf16.mxu0 0
  %6585 = vmatmul.mubr.bf16.gmra.mxu0 %v6318
  %v6586 = vpop.f32.mrf.mxu0
  %v6587 = vadd.f32 0.0, %v6586
  %v6588 = vpop.f32.mrf.mxu0
  %v6589 = vadd.f32 0.0, %v6588
  %v6590 = vpop.f32.mrf.mxu0
  %v6591 = vpop.f32.mrf.mxu0
  %6592 = vdwg.mxu0
  %v6593 = vadd.f32 %v6314, %v6546
  %v6594 = vadd.f32 %v6315, %v6548
  %v6595 = vadd.f32 %v6316, %v6587
  %v6596 = vadd.f32 %v6317, %v6589
  %v6597 = vxor.u32 %v6593, 2147483648
  %v6598 = vmul.f32 %v6597, 1.442695
  %v6599 = vpow.pop %v6598
  %v6600 = vadd.f32 %v6599, 1.0
  %v6601 = vrcp.pop %v6600
  %v6602 = vmul.f32 1.0, %v6601
  %v6603 = vxor.u32 %v6594, 2147483648
  %v6604 = vmul.f32 %v6603, 1.442695
  %v6605 = vpow.pop %v6604
  %v6606 = vadd.f32 %v6605, 1.0
  %v6607 = vrcp.pop %v6606
  %v6608 = vmul.f32 1.0, %v6607
  %v6609 = vtanh.pop %v6595
  %v6610 = vxor.u32 %v6596, 2147483648
  %v6611 = vmul.f32 %v6610, 1.442695
  %v6612 = vpow.pop %v6611
  %v6613 = vadd.f32 %v6612, 1.0
  %v6614 = vrcp.pop %v6613
  %v6615 = vmul.f32 1.0, %v6614
  %v6616 = vmul.f32 %v6608, %v6096
  %v6617 = vmul.f32 %v6602, %v6609
  %v6618 = vadd.f32 %v6616, %v6617
  %v6619 = vtanh.pop %v6618
  %v6620 = vmul.f32 %v6615, %v6619
  %s6621 = scalar_lea.vmem %s0, 336
  %v6622 = vld [vmem:[%s6621] sm:$0xff]
  %v6623 = vld [vmem:[%s6621 + $0x8] sm:$0xff]
  %v6624 = vunpack.c.l.bf16 %v6622
  %v6625 = vunpack.c.h.bf16 %v6622
  %v6626 = vunpack.c.l.bf16 %v6623
  %v6627 = vunpack.c.h.bf16 %v6623
  %v6628 = vpack.c.bf16 %v6620, %v6620
  %6629 = vmatprep.subr.bf16.mxu0 %v6476
  %6630 = vmatpush1.bf16.msra.mxu0 %v6475
  %6631 = vmatprep.subr.bf16.mxu0 %v6472
  %6632 = vmatpush1.bf16.msra.mxu0 %v6471
  %6633 = vmatprep.subr.bf16.mxu0 %v6468
  %6634 = vmatpush1.bf16.msra.mxu0 %v6467
  %6635 = vmatprep.subr.bf16.mxu0 %v6464
  %6636 = vmatpush1.bf16.msra.mxu0 %v6463
  %6637 = vmatprep.subr.bf16.mxu0 %v6460
  %6638 = vmatpush1.bf16.msra.mxu0 %v6459
  %6639 = vmatprep.subr.bf16.mxu0 %v6456
  %6640 = vmatpush1.bf16.msra.mxu0 %v6455
  %6641 = vmatprep.subr.bf16.mxu0 %v6452
  %6642 = vmatpush1.bf16.msra.mxu0 %v6451
  %6643 = vmatprep.subr.bf16.mxu0 %v6448
  %6644 = vmatpush1.bf16.msra.mxu0 %v6447
  %6645 = vmatprep.subr.bf16.mxu0 0
  %6646 = vmatpush2.bf16.msra.mxu0 0
  %6647 = vmatprep.subr.bf16.mxu0 0
  %6648 = vmatpush2.bf16.msra.mxu0 0
  %6649 = vmatprep.subr.bf16.mxu0 0
  %6650 = vmatpush2.bf16.msra.mxu0 0
  %6651 = vmatprep.subr.bf16.mxu0 0
  %6652 = vmatpush2.bf16.msra.mxu0 0
  %6653 = vmatprep.subr.bf16.mxu0 0
  %6654 = vmatpush2.bf16.msra.mxu0 0
  %6655 = vmatprep.subr.bf16.mxu0 0
  %6656 = vmatpush2.bf16.msra.mxu0 0
  %6657 = vmatprep.subr.bf16.mxu0 0
  %6658 = vmatpush2.bf16.msra.mxu0 0
  %6659 = vmatprep.subr.bf16.mxu0 0
  %6660 = vmatpush2.bf16.msra.mxu0 0
  %6661 = vmatprep.mubr.bf16.mxu0 0
  %6662 = vmatmul.mubr.bf16.gmra.mxu0 %v6628
  %v6663 = vpop.f32.mrf.mxu0
  %v6664 = vadd.f32 0.0, %v6663
  %v6665 = vpop.f32.mrf.mxu0
  %v6666 = vadd.f32 0.0, %v6665
  %v6667 = vpop.f32.mrf.mxu0
  %v6668 = vpop.f32.mrf.mxu0
  %6669 = vdwg.mxu0
  %6670 = vmatprep.subr.bf16.mxu0 %v6478
  %6671 = vmatpush1.bf16.msra.mxu0 %v6477
  %6672 = vmatprep.subr.bf16.mxu0 %v6474
  %6673 = vmatpush1.bf16.msra.mxu0 %v6473
  %6674 = vmatprep.subr.bf16.mxu0 %v6470
  %6675 = vmatpush1.bf16.msra.mxu0 %v6469
  %6676 = vmatprep.subr.bf16.mxu0 %v6466
  %6677 = vmatpush1.bf16.msra.mxu0 %v6465
  %6678 = vmatprep.subr.bf16.mxu0 %v6462
  %6679 = vmatpush1.bf16.msra.mxu0 %v6461
  %6680 = vmatprep.subr.bf16.mxu0 %v6458
  %6681 = vmatpush1.bf16.msra.mxu0 %v6457
  %6682 = vmatprep.subr.bf16.mxu0 %v6454
  %6683 = vmatpush1.bf16.msra.mxu0 %v6453
  %6684 = vmatprep.subr.bf16.mxu0 %v6450
  %6685 = vmatpush1.bf16.msra.mxu0 %v6449
  %6686 = vmatprep.subr.bf16.mxu0 0
  %6687 = vmatpush2.bf16.msra.mxu0 0
  %6688 = vmatprep.subr.bf16.mxu0 0
  %6689 = vmatpush2.bf16.msra.mxu0 0
  %6690 = vmatprep.subr.bf16.mxu0 0
  %6691 = vmatpush2.bf16.msra.mxu0 0
  %6692 = vmatprep.subr.bf16.mxu0 0
  %6693 = vmatpush2.bf16.msra.mxu0 0
  %6694 = vmatprep.subr.bf16.mxu0 0
  %6695 = vmatpush2.bf16.msra.mxu0 0
  %6696 = vmatprep.subr.bf16.mxu0 0
  %6697 = vmatpush2.bf16.msra.mxu0 0
  %6698 = vmatprep.subr.bf16.mxu0 0
  %6699 = vmatpush2.bf16.msra.mxu0 0
  %6700 = vmatprep.subr.bf16.mxu0 0
  %6701 = vmatpush2.bf16.msra.mxu0 0
  %6702 = vmatprep.mubr.bf16.mxu0 0
  %6703 = vmatmul.mubr.bf16.gmra.mxu0 %v6628
  %v6704 = vpop.f32.mrf.mxu0
  %v6705 = vadd.f32 0.0, %v6704
  %v6706 = vpop.f32.mrf.mxu0
  %v6707 = vadd.f32 0.0, %v6706
  %v6708 = vpop.f32.mrf.mxu0
  %v6709 = vpop.f32.mrf.mxu0
  %6710 = vdwg.mxu0
  %v6711 = vadd.f32 %v6624, %v6664
  %v6712 = vadd.f32 %v6625, %v6666
  %v6713 = vadd.f32 %v6626, %v6705
  %v6714 = vadd.f32 %v6627, %v6707
  %v6715 = vxor.u32 %v6711, 2147483648
  %v6716 = vmul.f32 %v6715, 1.442695
  %v6717 = vpow.pop %v6716
  %v6718 = vadd.f32 %v6717, 1.0
  %v6719 = vrcp.pop %v6718
  %v6720 = vmul.f32 1.0, %v6719
  %v6721 = vxor.u32 %v6712, 2147483648
  %v6722 = vmul.f32 %v6721, 1.442695
  %v6723 = vpow.pop %v6722
  %v6724 = vadd.f32 %v6723, 1.0
  %v6725 = vrcp.pop %v6724
  %v6726 = vmul.f32 1.0, %v6725
  %v6727 = vtanh.pop %v6713
  %v6728 = vxor.u32 %v6714, 2147483648
  %v6729 = vmul.f32 %v6728, 1.442695
  %v6730 = vpow.pop %v6729
  %v6731 = vadd.f32 %v6730, 1.0
  %v6732 = vrcp.pop %v6731
  %v6733 = vmul.f32 1.0, %v6732
  %v6734 = vmul.f32 %v6726, %v6618
  %v6735 = vmul.f32 %v6720, %v6727
  %v6736 = vadd.f32 %v6734, %v6735
  %v6737 = vtanh.pop %v6736
  %v6738 = vmul.f32 %v6733, %v6737
  %v6740 = vcombine.high %v6620, %v6620
  %v6742 = vunpack.c.l.s4 1966171168
  %v6743 = vunpack.c.0.s8 %v6742
  %v6744 = vlaneseq
  %v6745 = vshrl.u32 %v6744, 7
  %v6746 = vsub.s32 %v6743, %v6745
  %v6747 = vrot.slane %v6620, %v6746
  %v6749 = vunpack.c.l.s4 1966171168
  %v6750 = vunpack.c.0.s8 %v6749
  %v6751 = vlaneseq
  %v6752 = vshrl.u32 %v6751, 7
  %v6753 = vsub.s32 %v6750, %v6752
  %v6754 = vrot.slane %v6740, %v6753
  %v6755 = vcombine.high %v6747, %v6747
  %v6756 = vcombine.high %v6754, %v6754
  %v6758 = vunpack.c.l.s4 1966171168
  %v6759 = vunpack.c.0.s8 %v6758
  %v6760 = vlaneseq
  %v6761 = vshrl.u32 %v6760, 7
  %v6762 = vsub.s32 %v6759, %v6761
  %v6763 = vrot.slane %v6747, %v6762
  %v6765 = vunpack.c.l.s4 1966171168
  %v6766 = vunpack.c.0.s8 %v6765
  %v6767 = vlaneseq
  %v6768 = vshrl.u32 %v6767, 7
  %v6769 = vsub.s32 %v6766, %v6768
  %v6770 = vrot.slane %v6754, %v6769
  %v6772 = vunpack.c.l.s4 1966171168
  %v6773 = vunpack.c.0.s8 %v6772
  %v6774 = vlaneseq
  %v6775 = vshrl.u32 %v6774, 7
  %v6776 = vsub.s32 %v6773, %v6775
  %v6777 = vrot.slane %v6755, %v6776
  %v6779 = vunpack.c.l.s4 1966171168
  %v6780 = vunpack.c.0.s8 %v6779
  %v6781 = vlaneseq
  %v6782 = vshrl.u32 %v6781, 7
  %v6783 = vsub.s32 %v6780, %v6782
  %v6784 = vrot.slane %v6756, %v6783
  %v6785 = vcombine.high %v6763, %v6763
  %v6786 = vcombine.high %v6770, %v6770
  %v6787 = vcombine.high %v6777, %v6777
  %v6788 = vcombine.high %v6784, %v6784
  %v6798 = vcombine.high %v6738, %v6738
  %v6800 = vunpack.c.l.s4 1966171168
  %v6801 = vunpack.c.0.s8 %v6800
  %v6802 = vlaneseq
  %v6803 = vshrl.u32 %v6802, 7
  %v6804 = vsub.s32 %v6801, %v6803
  %v6805 = vrot.slane %v6738, %v6804
  %v6807 = vunpack.c.l.s4 1966171168
  %v6808 = vunpack.c.0.s8 %v6807
  %v6809 = vlaneseq
  %v6810 = vshrl.u32 %v6809, 7
  %v6811 = vsub.s32 %v6808, %v6810
  %v6812 = vrot.slane %v6798, %v6811
  %v6813 = vcombine.high %v6805, %v6805
  %v6814 = vcombine.high %v6812, %v6812
  %v6816 = vunpack.c.l.s4 1966171168
  %v6817 = vunpack.c.0.s8 %v6816
  %v6818 = vlaneseq
  %v6819 = vshrl.u32 %v6818, 7
  %v6820 = vsub.s32 %v6817, %v6819
  %v6821 = vrot.slane %v6805, %v6820
  %v6823 = vunpack.c.l.s4 1966171168
  %v6824 = vunpack.c.0.s8 %v6823
  %v6825 = vlaneseq
  %v6826 = vshrl.u32 %v6825, 7
  %v6827 = vsub.s32 %v6824, %v6826
  %v6828 = vrot.slane %v6812, %v6827
  %v6830 = vunpack.c.l.s4 1966171168
  %v6831 = vunpack.c.0.s8 %v6830
  %v6832 = vlaneseq
  %v6833 = vshrl.u32 %v6832, 7
  %v6834 = vsub.s32 %v6831, %v6833
  %v6835 = vrot.slane %v6813, %v6834
  %v6837 = vunpack.c.l.s4 1966171168
  %v6838 = vunpack.c.0.s8 %v6837
  %v6839 = vlaneseq
  %v6840 = vshrl.u32 %v6839, 7
  %v6841 = vsub.s32 %v6838, %v6840
  %v6842 = vrot.slane %v6814, %v6841
  %v6843 = vcombine.high %v6821, %v6821
  %v6844 = vcombine.high %v6828, %v6828
  %v6845 = vcombine.high %v6835, %v6835
  %v6846 = vcombine.high %v6842, %v6842
  %v6847 = vlaneseq
  %v6848 = vshrl.u32 %v6847, 7
  %v6849 = vsub.s32 0, %v6848
  %v6850 = vrot.slane %v6821, %v6849
  %v6851 = vlaneseq
  %v6852 = vshrl.u32 %v6851, 7
  %v6853 = vsub.s32 0, %v6852
  %v6854 = vrot.slane %v6835, %v6853
  %v6855 = vlaneseq
  %v6856 = vshrl.u32 %v6855, 7
  %v6857 = vsub.s32 0, %v6856
  %v6858 = vrot.slane %v6843, %v6857
  %v6859 = vlaneseq
  %v6860 = vshrl.u32 %v6859, 7
  %v6861 = vsub.s32 0, %v6860
  %v6862 = vrot.slane %v6845, %v6861
  %v6863 = vlaneseq
  %v6864 = vshrl.u32 %v6863, 7
  %v6865 = vsub.s32 0, %v6864
  %v6866 = vrot.slane %v6828, %v6865
  %v6867 = vlaneseq
  %v6868 = vshrl.u32 %v6867, 7
  %v6869 = vsub.s32 0, %v6868
  %v6870 = vrot.slane %v6842, %v6869
  %v6871 = vlaneseq
  %v6872 = vshrl.u32 %v6871, 7
  %v6873 = vsub.s32 0, %v6872
  %v6874 = vrot.slane %v6844, %v6873
  %v6875 = vlaneseq
  %v6876 = vshrl.u32 %v6875, 7
  %v6877 = vsub.s32 0, %v6876
  %v6878 = vrot.slane %v6846, %v6877
  %v6887 = vsel %vm606, %v6763, %v6850
  %v6888 = vsel %vm606, %v6777, %v6854
  %v6889 = vsel %vm606, %v6785, %v6858
  %v6890 = vsel %vm606, %v6787, %v6862
  %v6891 = vsel %vm606, %v6770, %v6866
  %v6892 = vsel %vm606, %v6784, %v6870
  %v6893 = vsel %vm606, %v6786, %v6874
  %v6894 = vsel %vm606, %v6788, %v6878
  %v6895 = vpack.c.bf16 %v6887, %v6887
  %v6896 = vpack.c.bf16 %v6888, %v6888
  %v6897 = vpack.c.bf16 %v6889, %v6889
  %v6898 = vpack.c.bf16 %v6890, %v6890
  %v6899 = vpack.c.bf16 %v6891, %v6891
  %v6900 = vpack.c.bf16 %v6892, %v6892
  %v6901 = vpack.c.bf16 %v6893, %v6893
  %v6902 = vpack.c.bf16 %v6894, %v6894
  %v6911 = vunpack.c.l.b16 %v6895
  %v6912 = vunpack.c.l.b16 %v6896
  %v6913 = vunpack.c.l.b16 %v6897
  %v6914 = vunpack.c.l.b16 %v6898
  %v6915 = vunpack.c.l.b16 %v6899
  %v6916 = vunpack.c.l.b16 %v6900
  %v6917 = vunpack.c.l.b16 %v6901
  %v6918 = vunpack.c.l.b16 %v6902
  %v6919 = vpack.c.b16 %v6911, %v6911
  %v6920 = vpack.c.b16 %v6912, %v6912
  %v6921 = vpack.c.b16 %v6913, %v6913
  %v6922 = vpack.c.b16 %v6914, %v6914
  %v6923 = vpack.c.b16 %v6915, %v6915
  %v6924 = vpack.c.b16 %v6916, %v6916
  %v6925 = vpack.c.b16 %v6917, %v6917
  %v6926 = vpack.c.b16 %v6918, %v6918
  %v6927 = vrot.slane %v6919, 6
  %v6928 = vrot.slane %v6920, 6
  %v6929 = vrot.slane %v6921, 6
  %v6930 = vrot.slane %v6922, 6
  %v6931 = vrot.slane %v6923, 6
  %v6932 = vrot.slane %v6924, 6
  %v6933 = vrot.slane %v6925, 6
  %v6934 = vrot.slane %v6926, 6
  %6943 = vst [vmem:[%s4 + $0x8] sm:$0x4] %v6927
  %6944 = vst [vmem:[%s4 + $0x18] sm:$0x4] %v6928
  %6945 = vst [vmem:[%s4 + $0x28] sm:$0x4] %v6929
  %6946 = vst [vmem:[%s4 + $0x38] sm:$0x4] %v6930
  %6947 = vst [vmem:[%s4 + $0x48] sm:$0x4] %v6931
  %6948 = vst [vmem:[%s4 + $0x58] sm:$0x4] %v6932
  %6949 = vst [vmem:[%s4 + $0x68] sm:$0x4] %v6933
  %6950 = vst [vmem:[%s4 + $0x78] sm:$0x4] %v6934
  %s6951 = scalar_lea.vmem %s0, 352
  %v6952 = vld [vmem:[%s6951] sm:$0xff]
  %v6953 = vld [vmem:[%s6951 + $0x8] sm:$0xff]
  %v6954 = vunpack.c.l.bf16 %v6952
  %v6955 = vunpack.c.h.bf16 %v6952
  %v6956 = vunpack.c.l.bf16 %v6953
  %v6957 = vunpack.c.h.bf16 %v6953
  %v6958 = vpack.c.bf16 %v6738, %v6738
  %v6959 = vld [vmem:[%s1] sm:$0xff]
  %v6960 = vld [vmem:[%s1 + $0x8] sm:$0xff]
  %v6961 = vld [vmem:[%s1 + $0x10] sm:$0xff]
  %v6962 = vld [vmem:[%s1 + $0x18] sm:$0xff]
  %v6963 = vld [vmem:[%s1 + $0x20] sm:$0xff]
  %v6964 = vld [vmem:[%s1 + $0x28] sm:$0xff]
  %v6965 = vld [vmem:[%s1 + $0x30] sm:$0xff]
  %v6966 = vld [vmem:[%s1 + $0x38] sm:$0xff]
  %v6967 = vld [vmem:[%s1 + $0x40] sm:$0xff]
  %v6968 = vld [vmem:[%s1 + $0x48] sm:$0xff]
  %v6969 = vld [vmem:[%s1 + $0x50] sm:$0xff]
  %v6970 = vld [vmem:[%s1 + $0x58] sm:$0xff]
  %v6971 = vld [vmem:[%s1 + $0x60] sm:$0xff]
  %v6972 = vld [vmem:[%s1 + $0x68] sm:$0xff]
  %v6973 = vld [vmem:[%s1 + $0x70] sm:$0xff]
  %v6974 = vld [vmem:[%s1 + $0x78] sm:$0xff]
  %v6975 = vld [vmem:[%s1 + $0x80] sm:$0xff]
  %v6976 = vld [vmem:[%s1 + $0x88] sm:$0xff]
  %v6977 = vld [vmem:[%s1 + $0x90] sm:$0xff]
  %v6978 = vld [vmem:[%s1 + $0x98] sm:$0xff]
  %v6979 = vld [vmem:[%s1 + $0xa0] sm:$0xff]
  %v6980 = vld [vmem:[%s1 + $0xa8] sm:$0xff]
  %v6981 = vld [vmem:[%s1 + $0xb0] sm:$0xff]
  %v6982 = vld [vmem:[%s1 + $0xb8] sm:$0xff]
  %v6983 = vld [vmem:[%s1 + $0xc0] sm:$0xff]
  %v6984 = vld [vmem:[%s1 + $0xc8] sm:$0xff]
  %v6985 = vld [vmem:[%s1 + $0xd0] sm:$0xff]
  %v6986 = vld [vmem:[%s1 + $0xd8] sm:$0xff]
  %v6987 = vld [vmem:[%s1 + $0xe0] sm:$0xff]
  %v6988 = vld [vmem:[%s1 + $0xe8] sm:$0xff]
  %v6989 = vld [vmem:[%s1 + $0xf0] sm:$0xff]
  %v6990 = vld [vmem:[%s1 + $0xf8] sm:$0xff]
  %v7023 = vunpack.c.l.b16 %v6959
  %v7024 = vunpack.c.h.b16 %v6959
  %v7025 = vunpack.c.l.b16 %v6960
  %v7026 = vunpack.c.h.b16 %v6960
  %v7027 = vunpack.c.l.b16 %v6961
  %v7028 = vunpack.c.h.b16 %v6961
  %v7029 = vunpack.c.l.b16 %v6962
  %v7030 = vunpack.c.h.b16 %v6962
  %v7031 = vunpack.c.l.b16 %v6963
  %v7032 = vunpack.c.h.b16 %v6963
  %v7033 = vunpack.c.l.b16 %v6964
  %v7034 = vunpack.c.h.b16 %v6964
  %v7035 = vunpack.c.l.b16 %v6965
  %v7036 = vunpack.c.h.b16 %v6965
  %v7037 = vunpack.c.l.b16 %v6966
  %v7038 = vunpack.c.h.b16 %v6966
  %v7039 = vunpack.c.l.b16 %v6967
  %v7040 = vunpack.c.h.b16 %v6967
  %v7041 = vunpack.c.l.b16 %v6968
  %v7042 = vunpack.c.h.b16 %v6968
  %v7043 = vunpack.c.l.b16 %v6969
  %v7044 = vunpack.c.h.b16 %v6969
  %v7045 = vunpack.c.l.b16 %v6970
  %v7046 = vunpack.c.h.b16 %v6970
  %v7047 = vunpack.c.l.b16 %v6971
  %v7048 = vunpack.c.h.b16 %v6971
  %v7049 = vunpack.c.l.b16 %v6972
  %v7050 = vunpack.c.h.b16 %v6972
  %v7051 = vunpack.c.l.b16 %v6973
  %v7052 = vunpack.c.h.b16 %v6973
  %v7053 = vunpack.c.l.b16 %v6974
  %v7054 = vunpack.c.h.b16 %v6974
  %v7055 = vunpack.c.l.b16 %v6975
  %v7056 = vunpack.c.h.b16 %v6975
  %v7057 = vunpack.c.l.b16 %v6976
  %v7058 = vunpack.c.h.b16 %v6976
  %v7059 = vunpack.c.l.b16 %v6977
  %v7060 = vunpack.c.h.b16 %v6977
  %v7061 = vunpack.c.l.b16 %v6978
  %v7062 = vunpack.c.h.b16 %v6978
  %v7063 = vunpack.c.l.b16 %v6979
  %v7064 = vunpack.c.h.b16 %v6979
  %v7065 = vunpack.c.l.b16 %v6980
  %v7066 = vunpack.c.h.b16 %v6980
  %v7067 = vunpack.c.l.b16 %v6981
  %v7068 = vunpack.c.h.b16 %v6981
  %v7069 = vunpack.c.l.b16 %v6982
  %v7070 = vunpack.c.h.b16 %v6982
  %v7071 = vunpack.c.l.b16 %v6983
  %v7072 = vunpack.c.h.b16 %v6983
  %v7073 = vunpack.c.l.b16 %v6984
  %v7074 = vunpack.c.h.b16 %v6984
  %v7075 = vunpack.c.l.b16 %v6985
  %v7076 = vunpack.c.h.b16 %v6985
  %v7077 = vunpack.c.l.b16 %v6986
  %v7078 = vunpack.c.h.b16 %v6986
  %v7079 = vunpack.c.l.b16 %v6987
  %v7080 = vunpack.c.h.b16 %v6987
  %v7081 = vunpack.c.l.b16 %v6988
  %v7082 = vunpack.c.h.b16 %v6988
  %v7083 = vunpack.c.l.b16 %v6989
  %v7084 = vunpack.c.h.b16 %v6989
  %v7085 = vunpack.c.l.b16 %v6990
  %v7086 = vunpack.c.h.b16 %v6990
  %v7087 = vpack.c.b16 %v7027, %v7023
  %v7088 = vpack.c.b16 %v7028, %v7024
  %v7089 = vpack.c.b16 %v7029, %v7025
  %v7090 = vpack.c.b16 %v7030, %v7026
  %v7091 = vpack.c.b16 %v7035, %v7031
  %v7092 = vpack.c.b16 %v7036, %v7032
  %v7093 = vpack.c.b16 %v7037, %v7033
  %v7094 = vpack.c.b16 %v7038, %v7034
  %v7095 = vpack.c.b16 %v7043, %v7039
  %v7096 = vpack.c.b16 %v7044, %v7040
  %v7097 = vpack.c.b16 %v7045, %v7041
  %v7098 = vpack.c.b16 %v7046, %v7042
  %v7099 = vpack.c.b16 %v7051, %v7047
  %v7100 = vpack.c.b16 %v7052, %v7048
  %v7101 = vpack.c.b16 %v7053, %v7049
  %v7102 = vpack.c.b16 %v7054, %v7050
  %v7103 = vpack.c.b16 %v7059, %v7055
  %v7104 = vpack.c.b16 %v7060, %v7056
  %v7105 = vpack.c.b16 %v7061, %v7057
  %v7106 = vpack.c.b16 %v7062, %v7058
  %v7107 = vpack.c.b16 %v7067, %v7063
  %v7108 = vpack.c.b16 %v7068, %v7064
  %v7109 = vpack.c.b16 %v7069, %v7065
  %v7110 = vpack.c.b16 %v7070, %v7066
  %v7111 = vpack.c.b16 %v7075, %v7071
  %v7112 = vpack.c.b16 %v7076, %v7072
  %v7113 = vpack.c.b16 %v7077, %v7073
  %v7114 = vpack.c.b16 %v7078, %v7074
  %v7115 = vpack.c.b16 %v7083, %v7079
  %v7116 = vpack.c.b16 %v7084, %v7080
  %v7117 = vpack.c.b16 %v7085, %v7081
  %v7118 = vpack.c.b16 %v7086, %v7082
  %7151 = vmatprep.subr.bf16.mxu0 %v7116
  %7152 = vmatpush1.bf16.msra.mxu0 %v7115
  %7153 = vmatprep.subr.bf16.mxu0 %v7112
  %7154 = vmatpush1.bf16.msra.mxu0 %v7111
  %7155 = vmatprep.subr.bf16.mxu0 %v7108
  %7156 = vmatpush1.bf16.msra.mxu0 %v7107
  %7157 = vmatprep.subr.bf16.mxu0 %v7104
  %7158 = vmatpush1.bf16.msra.mxu0 %v7103
  %7159 = vmatprep.subr.bf16.mxu0 %v7100
  %7160 = vmatpush1.bf16.msra.mxu0 %v7099
  %7161 = vmatprep.subr.bf16.mxu0 %v7096
  %7162 = vmatpush1.bf16.msra.mxu0 %v7095
  %7163 = vmatprep.subr.bf16.mxu0 %v7092
  %7164 = vmatpush1.bf16.msra.mxu0 %v7091
  %7165 = vmatprep.subr.bf16.mxu0 %v7088
  %7166 = vmatpush1.bf16.msra.mxu0 %v7087
  %7167 = vmatprep.subr.bf16.mxu0 0
  %7168 = vmatpush2.bf16.msra.mxu0 0
  %7169 = vmatprep.subr.bf16.mxu0 0
  %7170 = vmatpush2.bf16.msra.mxu0 0
  %7171 = vmatprep.subr.bf16.mxu0 0
  %7172 = vmatpush2.bf16.msra.mxu0 0
  %7173 = vmatprep.subr.bf16.mxu0 0
  %7174 = vmatpush2.bf16.msra.mxu0 0
  %7175 = vmatprep.subr.bf16.mxu0 0
  %7176 = vmatpush2.bf16.msra.mxu0 0
  %7177 = vmatprep.subr.bf16.mxu0 0
  %7178 = vmatpush2.bf16.msra.mxu0 0
  %7179 = vmatprep.subr.bf16.mxu0 0
  %7180 = vmatpush2.bf16.msra.mxu0 0
  %7181 = vmatprep.subr.bf16.mxu0 0
  %7182 = vmatpush2.bf16.msra.mxu0 0
  %7183 = vmatprep.mubr.bf16.mxu0 0
  %7184 = vmatmul.mubr.bf16.gmra.mxu0 %v6958
  %v7185 = vpop.f32.mrf.mxu0
  %v7186 = vadd.f32 0.0, %v7185
  %v7187 = vpop.f32.mrf.mxu0
  %v7188 = vadd.f32 0.0, %v7187
  %v7189 = vpop.f32.mrf.mxu0
  %v7190 = vpop.f32.mrf.mxu0
  %7191 = vdwg.mxu0
  %7192 = vmatprep.subr.bf16.mxu0 %v7118
  %7193 = vmatpush1.bf16.msra.mxu0 %v7117
  %7194 = vmatprep.subr.bf16.mxu0 %v7114
  %7195 = vmatpush1.bf16.msra.mxu0 %v7113
  %7196 = vmatprep.subr.bf16.mxu0 %v7110
  %7197 = vmatpush1.bf16.msra.mxu0 %v7109
  %7198 = vmatprep.subr.bf16.mxu0 %v7106
  %7199 = vmatpush1.bf16.msra.mxu0 %v7105
  %7200 = vmatprep.subr.bf16.mxu0 %v7102
  %7201 = vmatpush1.bf16.msra.mxu0 %v7101
  %7202 = vmatprep.subr.bf16.mxu0 %v7098
  %7203 = vmatpush1.bf16.msra.mxu0 %v7097
  %7204 = vmatprep.subr.bf16.mxu0 %v7094
  %7205 = vmatpush1.bf16.msra.mxu0 %v7093
  %7206 = vmatprep.subr.bf16.mxu0 %v7090
  %7207 = vmatpush1.bf16.msra.mxu0 %v7089
  %7208 = vmatprep.subr.bf16.mxu0 0
  %7209 = vmatpush2.bf16.msra.mxu0 0
  %7210 = vmatprep.subr.bf16.mxu0 0
  %7211 = vmatpush2.bf16.msra.mxu0 0
  %7212 = vmatprep.subr.bf16.mxu0 0
  %7213 = vmatpush2.bf16.msra.mxu0 0
  %7214 = vmatprep.subr.bf16.mxu0 0
  %7215 = vmatpush2.bf16.msra.mxu0 0
  %7216 = vmatprep.subr.bf16.mxu0 0
  %7217 = vmatpush2.bf16.msra.mxu0 0
  %7218 = vmatprep.subr.bf16.mxu0 0
  %7219 = vmatpush2.bf16.msra.mxu0 0
  %7220 = vmatprep.subr.bf16.mxu0 0
  %7221 = vmatpush2.bf16.msra.mxu0 0
  %7222 = vmatprep.subr.bf16.mxu0 0
  %7223 = vmatpush2.bf16.msra.mxu0 0
  %7224 = vmatprep.mubr.bf16.mxu0 0
  %7225 = vmatmul.mubr.bf16.gmra.mxu0 %v6958
  %v7226 = vpop.f32.mrf.mxu0
  %v7227 = vadd.f32 0.0, %v7226
  %v7228 = vpop.f32.mrf.mxu0
  %v7229 = vadd.f32 0.0, %v7228
  %v7230 = vpop.f32.mrf.mxu0
  %v7231 = vpop.f32.mrf.mxu0
  %7232 = vdwg.mxu0
  %v7233 = vadd.f32 %v6954, %v7186
  %v7234 = vadd.f32 %v6955, %v7188
  %v7235 = vadd.f32 %v6956, %v7227
  %v7236 = vadd.f32 %v6957, %v7229
  %v7237 = vxor.u32 %v7233, 2147483648
  %v7238 = vmul.f32 %v7237, 1.442695
  %v7239 = vpow.pop %v7238
  %v7240 = vadd.f32 %v7239, 1.0
  %v7241 = vrcp.pop %v7240
  %v7242 = vmul.f32 1.0, %v7241
  %v7243 = vxor.u32 %v7234, 2147483648
  %v7244 = vmul.f32 %v7243, 1.442695
  %v7245 = vpow.pop %v7244
  %v7246 = vadd.f32 %v7245, 1.0
  %v7247 = vrcp.pop %v7246
  %v7248 = vmul.f32 1.0, %v7247
  %v7249 = vtanh.pop %v7235
  %v7250 = vxor.u32 %v7236, 2147483648
  %v7251 = vmul.f32 %v7250, 1.442695
  %v7252 = vpow.pop %v7251
  %v7253 = vadd.f32 %v7252, 1.0
  %v7254 = vrcp.pop %v7253
  %v7255 = vmul.f32 1.0, %v7254
  %v7256 = vmul.f32 %v7248, %v6736
  %v7257 = vmul.f32 %v7242, %v7249
  %v7258 = vadd.f32 %v7256, %v7257
  %v7259 = vtanh.pop %v7258
  %v7260 = vmul.f32 %v7255, %v7259
  %s7261 = scalar_lea.vmem %s0, 368
  %v7262 = vld [vmem:[%s7261] sm:$0xff]
  %v7263 = vld [vmem:[%s7261 + $0x8] sm:$0xff]
  %v7264 = vunpack.c.l.bf16 %v7262
  %v7265 = vunpack.c.h.bf16 %v7262
  %v7266 = vunpack.c.l.bf16 %v7263
  %v7267 = vunpack.c.h.bf16 %v7263
  %v7268 = vpack.c.bf16 %v7260, %v7260
  %7269 = vmatprep.subr.bf16.mxu0 %v7116
  %7270 = vmatpush1.bf16.msra.mxu0 %v7115
  %7271 = vmatprep.subr.bf16.mxu0 %v7112
  %7272 = vmatpush1.bf16.msra.mxu0 %v7111
  %7273 = vmatprep.subr.bf16.mxu0 %v7108
  %7274 = vmatpush1.bf16.msra.mxu0 %v7107
  %7275 = vmatprep.subr.bf16.mxu0 %v7104
  %7276 = vmatpush1.bf16.msra.mxu0 %v7103
  %7277 = vmatprep.subr.bf16.mxu0 %v7100
  %7278 = vmatpush1.bf16.msra.mxu0 %v7099
  %7279 = vmatprep.subr.bf16.mxu0 %v7096
  %7280 = vmatpush1.bf16.msra.mxu0 %v7095
  %7281 = vmatprep.subr.bf16.mxu0 %v7092
  %7282 = vmatpush1.bf16.msra.mxu0 %v7091
  %7283 = vmatprep.subr.bf16.mxu0 %v7088
  %7284 = vmatpush1.bf16.msra.mxu0 %v7087
  %7285 = vmatprep.subr.bf16.mxu0 0
  %7286 = vmatpush2.bf16.msra.mxu0 0
  %7287 = vmatprep.subr.bf16.mxu0 0
  %7288 = vmatpush2.bf16.msra.mxu0 0
  %7289 = vmatprep.subr.bf16.mxu0 0
  %7290 = vmatpush2.bf16.msra.mxu0 0
  %7291 = vmatprep.subr.bf16.mxu0 0
  %7292 = vmatpush2.bf16.msra.mxu0 0
  %7293 = vmatprep.subr.bf16.mxu0 0
  %7294 = vmatpush2.bf16.msra.mxu0 0
  %7295 = vmatprep.subr.bf16.mxu0 0
  %7296 = vmatpush2.bf16.msra.mxu0 0
  %7297 = vmatprep.subr.bf16.mxu0 0
  %7298 = vmatpush2.bf16.msra.mxu0 0
  %7299 = vmatprep.subr.bf16.mxu0 0
  %7300 = vmatpush2.bf16.msra.mxu0 0
  %7301 = vmatprep.mubr.bf16.mxu0 0
  %7302 = vmatmul.mubr.bf16.gmra.mxu0 %v7268
  %v7303 = vpop.f32.mrf.mxu0
  %v7304 = vadd.f32 0.0, %v7303
  %v7305 = vpop.f32.mrf.mxu0
  %v7306 = vadd.f32 0.0, %v7305
  %v7307 = vpop.f32.mrf.mxu0
  %v7308 = vpop.f32.mrf.mxu0
  %7309 = vdwg.mxu0
  %7310 = vmatprep.subr.bf16.mxu0 %v7118
  %7311 = vmatpush1.bf16.msra.mxu0 %v7117
  %7312 = vmatprep.subr.bf16.mxu0 %v7114
  %7313 = vmatpush1.bf16.msra.mxu0 %v7113
  %7314 = vmatprep.subr.bf16.mxu0 %v7110
  %7315 = vmatpush1.bf16.msra.mxu0 %v7109
  %7316 = vmatprep.subr.bf16.mxu0 %v7106
  %7317 = vmatpush1.bf16.msra.mxu0 %v7105
  %7318 = vmatprep.subr.bf16.mxu0 %v7102
  %7319 = vmatpush1.bf16.msra.mxu0 %v7101
  %7320 = vmatprep.subr.bf16.mxu0 %v7098
  %7321 = vmatpush1.bf16.msra.mxu0 %v7097
  %7322 = vmatprep.subr.bf16.mxu0 %v7094
  %7323 = vmatpush1.bf16.msra.mxu0 %v7093
  %7324 = vmatprep.subr.bf16.mxu0 %v7090
  %7325 = vmatpush1.bf16.msra.mxu0 %v7089
  %7326 = vmatprep.subr.bf16.mxu0 0
  %7327 = vmatpush2.bf16.msra.mxu0 0
  %7328 = vmatprep.subr.bf16.mxu0 0
  %7329 = vmatpush2.bf16.msra.mxu0 0
  %7330 = vmatprep.subr.bf16.mxu0 0
  %7331 = vmatpush2.bf16.msra.mxu0 0
  %7332 = vmatprep.subr.bf16.mxu0 0
  %7333 = vmatpush2.bf16.msra.mxu0 0
  %7334 = vmatprep.subr.bf16.mxu0 0
  %7335 = vmatpush2.bf16.msra.mxu0 0
  %7336 = vmatprep.subr.bf16.mxu0 0
  %7337 = vmatpush2.bf16.msra.mxu0 0
  %7338 = vmatprep.subr.bf16.mxu0 0
  %7339 = vmatpush2.bf16.msra.mxu0 0
  %7340 = vmatprep.subr.bf16.mxu0 0
  %7341 = vmatpush2.bf16.msra.mxu0 0
  %7342 = vmatprep.mubr.bf16.mxu0 0
  %7343 = vmatmul.mubr.bf16.gmra.mxu0 %v7268
  %v7344 = vpop.f32.mrf.mxu0
  %v7345 = vadd.f32 0.0, %v7344
  %v7346 = vpop.f32.mrf.mxu0
  %v7347 = vadd.f32 0.0, %v7346
  %v7348 = vpop.f32.mrf.mxu0
  %v7349 = vpop.f32.mrf.mxu0
  %7350 = vdwg.mxu0
  %v7351 = vadd.f32 %v7264, %v7304
  %v7352 = vadd.f32 %v7265, %v7306
  %v7353 = vadd.f32 %v7266, %v7345
  %v7354 = vadd.f32 %v7267, %v7347
  %v7355 = vxor.u32 %v7351, 2147483648
  %v7356 = vmul.f32 %v7355, 1.442695
  %v7357 = vpow.pop %v7356
  %v7358 = vadd.f32 %v7357, 1.0
  %v7359 = vrcp.pop %v7358
  %v7360 = vmul.f32 1.0, %v7359
  %v7361 = vxor.u32 %v7352, 2147483648
  %v7362 = vmul.f32 %v7361, 1.442695
  %v7363 = vpow.pop %v7362
  %v7364 = vadd.f32 %v7363, 1.0
  %v7365 = vrcp.pop %v7364
  %v7366 = vmul.f32 1.0, %v7365
  %v7367 = vtanh.pop %v7353
  %v7368 = vxor.u32 %v7354, 2147483648
  %v7369 = vmul.f32 %v7368, 1.442695
  %v7370 = vpow.pop %v7369
  %v7371 = vadd.f32 %v7370, 1.0
  %v7372 = vrcp.pop %v7371
  %v7373 = vmul.f32 1.0, %v7372
  %v7374 = vmul.f32 %v7366, %v7258
  %v7375 = vmul.f32 %v7360, %v7367
  %v7376 = vadd.f32 %v7374, %v7375
  %v7377 = vtanh.pop %v7376
  %v7378 = vmul.f32 %v7373, %v7377
  %v7380 = vcombine.high %v7260, %v7260
  %v7382 = vunpack.c.l.s4 1966171168
  %v7383 = vunpack.c.0.s8 %v7382
  %v7384 = vlaneseq
  %v7385 = vshrl.u32 %v7384, 7
  %v7386 = vsub.s32 %v7383, %v7385
  %v7387 = vrot.slane %v7260, %v7386
  %v7389 = vunpack.c.l.s4 1966171168
  %v7390 = vunpack.c.0.s8 %v7389
  %v7391 = vlaneseq
  %v7392 = vshrl.u32 %v7391, 7
  %v7393 = vsub.s32 %v7390, %v7392
  %v7394 = vrot.slane %v7380, %v7393
  %v7395 = vcombine.high %v7387, %v7387
  %v7396 = vcombine.high %v7394, %v7394
  %v7398 = vunpack.c.l.s4 1966171168
  %v7399 = vunpack.c.0.s8 %v7398
  %v7400 = vlaneseq
  %v7401 = vshrl.u32 %v7400, 7
  %v7402 = vsub.s32 %v7399, %v7401
  %v7403 = vrot.slane %v7387, %v7402
  %v7405 = vunpack.c.l.s4 1966171168
  %v7406 = vunpack.c.0.s8 %v7405
  %v7407 = vlaneseq
  %v7408 = vshrl.u32 %v7407, 7
  %v7409 = vsub.s32 %v7406, %v7408
  %v7410 = vrot.slane %v7394, %v7409
  %v7412 = vunpack.c.l.s4 1966171168
  %v7413 = vunpack.c.0.s8 %v7412
  %v7414 = vlaneseq
  %v7415 = vshrl.u32 %v7414, 7
  %v7416 = vsub.s32 %v7413, %v7415
  %v7417 = vrot.slane %v7395, %v7416
  %v7419 = vunpack.c.l.s4 1966171168
  %v7420 = vunpack.c.0.s8 %v7419
  %v7421 = vlaneseq
  %v7422 = vshrl.u32 %v7421, 7
  %v7423 = vsub.s32 %v7420, %v7422
  %v7424 = vrot.slane %v7396, %v7423
  %v7425 = vcombine.high %v7403, %v7403
  %v7426 = vcombine.high %v7410, %v7410
  %v7427 = vcombine.high %v7417, %v7417
  %v7428 = vcombine.high %v7424, %v7424
  %v7438 = vcombine.high %v7378, %v7378
  %v7440 = vunpack.c.l.s4 1966171168
  %v7441 = vunpack.c.0.s8 %v7440
  %v7442 = vlaneseq
  %v7443 = vshrl.u32 %v7442, 7
  %v7444 = vsub.s32 %v7441, %v7443
  %v7445 = vrot.slane %v7378, %v7444
  %v7447 = vunpack.c.l.s4 1966171168
  %v7448 = vunpack.c.0.s8 %v7447
  %v7449 = vlaneseq
  %v7450 = vshrl.u32 %v7449, 7
  %v7451 = vsub.s32 %v7448, %v7450
  %v7452 = vrot.slane %v7438, %v7451
  %v7453 = vcombine.high %v7445, %v7445
  %v7454 = vcombine.high %v7452, %v7452
  %v7456 = vunpack.c.l.s4 1966171168
  %v7457 = vunpack.c.0.s8 %v7456
  %v7458 = vlaneseq
  %v7459 = vshrl.u32 %v7458, 7
  %v7460 = vsub.s32 %v7457, %v7459
  %v7461 = vrot.slane %v7445, %v7460
  %v7463 = vunpack.c.l.s4 1966171168
  %v7464 = vunpack.c.0.s8 %v7463
  %v7465 = vlaneseq
  %v7466 = vshrl.u32 %v7465, 7
  %v7467 = vsub.s32 %v7464, %v7466
  %v7468 = vrot.slane %v7452, %v7467
  %v7470 = vunpack.c.l.s4 1966171168
  %v7471 = vunpack.c.0.s8 %v7470
  %v7472 = vlaneseq
  %v7473 = vshrl.u32 %v7472, 7
  %v7474 = vsub.s32 %v7471, %v7473
  %v7475 = vrot.slane %v7453, %v7474
  %v7477 = vunpack.c.l.s4 1966171168
  %v7478 = vunpack.c.0.s8 %v7477
  %v7479 = vlaneseq
  %v7480 = vshrl.u32 %v7479, 7
  %v7481 = vsub.s32 %v7478, %v7480
  %v7482 = vrot.slane %v7454, %v7481
  %v7483 = vcombine.high %v7461, %v7461
  %v7484 = vcombine.high %v7468, %v7468
  %v7485 = vcombine.high %v7475, %v7475
  %v7486 = vcombine.high %v7482, %v7482
  %v7487 = vlaneseq
  %v7488 = vshrl.u32 %v7487, 7
  %v7489 = vsub.s32 0, %v7488
  %v7490 = vrot.slane %v7461, %v7489
  %v7491 = vlaneseq
  %v7492 = vshrl.u32 %v7491, 7
  %v7493 = vsub.s32 0, %v7492
  %v7494 = vrot.slane %v7475, %v7493
  %v7495 = vlaneseq
  %v7496 = vshrl.u32 %v7495, 7
  %v7497 = vsub.s32 0, %v7496
  %v7498 = vrot.slane %v7483, %v7497
  %v7499 = vlaneseq
  %v7500 = vshrl.u32 %v7499, 7
  %v7501 = vsub.s32 0, %v7500
  %v7502 = vrot.slane %v7485, %v7501
  %v7503 = vlaneseq
  %v7504 = vshrl.u32 %v7503, 7
  %v7505 = vsub.s32 0, %v7504
  %v7506 = vrot.slane %v7468, %v7505
  %v7507 = vlaneseq
  %v7508 = vshrl.u32 %v7507, 7
  %v7509 = vsub.s32 0, %v7508
  %v7510 = vrot.slane %v7482, %v7509
  %v7511 = vlaneseq
  %v7512 = vshrl.u32 %v7511, 7
  %v7513 = vsub.s32 0, %v7512
  %v7514 = vrot.slane %v7484, %v7513
  %v7515 = vlaneseq
  %v7516 = vshrl.u32 %v7515, 7
  %v7517 = vsub.s32 0, %v7516
  %v7518 = vrot.slane %v7486, %v7517
  %v7527 = vsel %vm606, %v7403, %v7490
  %v7528 = vsel %vm606, %v7417, %v7494
  %v7529 = vsel %vm606, %v7425, %v7498
  %v7530 = vsel %vm606, %v7427, %v7502
  %v7531 = vsel %vm606, %v7410, %v7506
  %v7532 = vsel %vm606, %v7424, %v7510
  %v7533 = vsel %vm606, %v7426, %v7514
  %v7534 = vsel %vm606, %v7428, %v7518
  %v7535 = vpack.c.bf16 %v7527, %v7527
  %v7536 = vpack.c.bf16 %v7528, %v7528
  %v7537 = vpack.c.bf16 %v7529, %v7529
  %v7538 = vpack.c.bf16 %v7530, %v7530
  %v7539 = vpack.c.bf16 %v7531, %v7531
  %v7540 = vpack.c.bf16 %v7532, %v7532
  %v7541 = vpack.c.bf16 %v7533, %v7533
  %v7542 = vpack.c.bf16 %v7534, %v7534
  %v7551 = vunpack.c.l.b16 %v7535
  %v7552 = vunpack.c.l.b16 %v7536
  %v7553 = vunpack.c.l.b16 %v7537
  %v7554 = vunpack.c.l.b16 %v7538
  %v7555 = vunpack.c.l.b16 %v7539
  %v7556 = vunpack.c.l.b16 %v7540
  %v7557 = vunpack.c.l.b16 %v7541
  %v7558 = vunpack.c.l.b16 %v7542
  %v7559 = vpack.c.b16 %v7551, %v7551
  %v7560 = vpack.c.b16 %v7552, %v7552
  %v7561 = vpack.c.b16 %v7553, %v7553
  %v7562 = vpack.c.b16 %v7554, %v7554
  %v7563 = vpack.c.b16 %v7555, %v7555
  %v7564 = vpack.c.b16 %v7556, %v7556
  %v7565 = vpack.c.b16 %v7557, %v7557
  %v7566 = vpack.c.b16 %v7558, %v7558
  %v7567 = vrot.slane %v7559, 5
  %v7568 = vrot.slane %v7560, 5
  %v7569 = vrot.slane %v7561, 5
  %v7570 = vrot.slane %v7562, 5
  %v7571 = vrot.slane %v7563, 5
  %v7572 = vrot.slane %v7564, 5
  %v7573 = vrot.slane %v7565, 5
  %v7574 = vrot.slane %v7566, 5
  %7583 = vst [vmem:[%s4 + $0x8] sm:$0x8] %v7567
  %7584 = vst [vmem:[%s4 + $0x18] sm:$0x8] %v7568
  %7585 = vst [vmem:[%s4 + $0x28] sm:$0x8] %v7569
  %7586 = vst [vmem:[%s4 + $0x38] sm:$0x8] %v7570
  %7587 = vst [vmem:[%s4 + $0x48] sm:$0x8] %v7571
  %7588 = vst [vmem:[%s4 + $0x58] sm:$0x8] %v7572
  %7589 = vst [vmem:[%s4 + $0x68] sm:$0x8] %v7573
  %7590 = vst [vmem:[%s4 + $0x78] sm:$0x8] %v7574
  %s7591 = scalar_lea.vmem %s0, 384
  %v7592 = vld [vmem:[%s7591] sm:$0xff]
  %v7593 = vld [vmem:[%s7591 + $0x8] sm:$0xff]
  %v7594 = vunpack.c.l.bf16 %v7592
  %v7595 = vunpack.c.h.bf16 %v7592
  %v7596 = vunpack.c.l.bf16 %v7593
  %v7597 = vunpack.c.h.bf16 %v7593
  %v7598 = vpack.c.bf16 %v7378, %v7378
  %v7599 = vld [vmem:[%s1] sm:$0xff]
  %v7600 = vld [vmem:[%s1 + $0x8] sm:$0xff]
  %v7601 = vld [vmem:[%s1 + $0x10] sm:$0xff]
  %v7602 = vld [vmem:[%s1 + $0x18] sm:$0xff]
  %v7603 = vld [vmem:[%s1 + $0x20] sm:$0xff]
  %v7604 = vld [vmem:[%s1 + $0x28] sm:$0xff]
  %v7605 = vld [vmem:[%s1 + $0x30] sm:$0xff]
  %v7606 = vld [vmem:[%s1 + $0x38] sm:$0xff]
  %v7607 = vld [vmem:[%s1 + $0x40] sm:$0xff]
  %v7608 = vld [vmem:[%s1 + $0x48] sm:$0xff]
  %v7609 = vld [vmem:[%s1 + $0x50] sm:$0xff]
  %v7610 = vld [vmem:[%s1 + $0x58] sm:$0xff]
  %v7611 = vld [vmem:[%s1 + $0x60] sm:$0xff]
  %v7612 = vld [vmem:[%s1 + $0x68] sm:$0xff]
  %v7613 = vld [vmem:[%s1 + $0x70] sm:$0xff]
  %v7614 = vld [vmem:[%s1 + $0x78] sm:$0xff]
  %v7615 = vld [vmem:[%s1 + $0x80] sm:$0xff]
  %v7616 = vld [vmem:[%s1 + $0x88] sm:$0xff]
  %v7617 = vld [vmem:[%s1 + $0x90] sm:$0xff]
  %v7618 = vld [vmem:[%s1 + $0x98] sm:$0xff]
  %v7619 = vld [vmem:[%s1 + $0xa0] sm:$0xff]
  %v7620 = vld [vmem:[%s1 + $0xa8] sm:$0xff]
  %v7621 = vld [vmem:[%s1 + $0xb0] sm:$0xff]
  %v7622 = vld [vmem:[%s1 + $0xb8] sm:$0xff]
  %v7623 = vld [vmem:[%s1 + $0xc0] sm:$0xff]
  %v7624 = vld [vmem:[%s1 + $0xc8] sm:$0xff]
  %v7625 = vld [vmem:[%s1 + $0xd0] sm:$0xff]
  %v7626 = vld [vmem:[%s1 + $0xd8] sm:$0xff]
  %v7627 = vld [vmem:[%s1 + $0xe0] sm:$0xff]
  %v7628 = vld [vmem:[%s1 + $0xe8] sm:$0xff]
  %v7629 = vld [vmem:[%s1 + $0xf0] sm:$0xff]
  %v7630 = vld [vmem:[%s1 + $0xf8] sm:$0xff]
  %v7663 = vunpack.c.l.b16 %v7599
  %v7664 = vunpack.c.h.b16 %v7599
  %v7665 = vunpack.c.l.b16 %v7600
  %v7666 = vunpack.c.h.b16 %v7600
  %v7667 = vunpack.c.l.b16 %v7601
  %v7668 = vunpack.c.h.b16 %v7601
  %v7669 = vunpack.c.l.b16 %v7602
  %v7670 = vunpack.c.h.b16 %v7602
  %v7671 = vunpack.c.l.b16 %v7603
  %v7672 = vunpack.c.h.b16 %v7603
  %v7673 = vunpack.c.l.b16 %v7604
  %v7674 = vunpack.c.h.b16 %v7604
  %v7675 = vunpack.c.l.b16 %v7605
  %v7676 = vunpack.c.h.b16 %v7605
  %v7677 = vunpack.c.l.b16 %v7606
  %v7678 = vunpack.c.h.b16 %v7606
  %v7679 = vunpack.c.l.b16 %v7607
  %v7680 = vunpack.c.h.b16 %v7607
  %v7681 = vunpack.c.l.b16 %v7608
  %v7682 = vunpack.c.h.b16 %v7608
  %v7683 = vunpack.c.l.b16 %v7609
  %v7684 = vunpack.c.h.b16 %v7609
  %v7685 = vunpack.c.l.b16 %v7610
  %v7686 = vunpack.c.h.b16 %v7610
  %v7687 = vunpack.c.l.b16 %v7611
  %v7688 = vunpack.c.h.b16 %v7611
  %v7689 = vunpack.c.l.b16 %v7612
  %v7690 = vunpack.c.h.b16 %v7612
  %v7691 = vunpack.c.l.b16 %v7613
  %v7692 = vunpack.c.h.b16 %v7613
  %v7693 = vunpack.c.l.b16 %v7614
  %v7694 = vunpack.c.h.b16 %v7614
  %v7695 = vunpack.c.l.b16 %v7615
  %v7696 = vunpack.c.h.b16 %v7615
  %v7697 = vunpack.c.l.b16 %v7616
  %v7698 = vunpack.c.h.b16 %v7616
  %v7699 = vunpack.c.l.b16 %v7617
  %v7700 = vunpack.c.h.b16 %v7617
  %v7701 = vunpack.c.l.b16 %v7618
  %v7702 = vunpack.c.h.b16 %v7618
  %v7703 = vunpack.c.l.b16 %v7619
  %v7704 = vunpack.c.h.b16 %v7619
  %v7705 = vunpack.c.l.b16 %v7620
  %v7706 = vunpack.c.h.b16 %v7620
  %v7707 = vunpack.c.l.b16 %v7621
  %v7708 = vunpack.c.h.b16 %v7621
  %v7709 = vunpack.c.l.b16 %v7622
  %v7710 = vunpack.c.h.b16 %v7622
  %v7711 = vunpack.c.l.b16 %v7623
  %v7712 = vunpack.c.h.b16 %v7623
  %v7713 = vunpack.c.l.b16 %v7624
  %v7714 = vunpack.c.h.b16 %v7624
  %v7715 = vunpack.c.l.b16 %v7625
  %v7716 = vunpack.c.h.b16 %v7625
  %v7717 = vunpack.c.l.b16 %v7626
  %v7718 = vunpack.c.h.b16 %v7626
  %v7719 = vunpack.c.l.b16 %v7627
  %v7720 = vunpack.c.h.b16 %v7627
  %v7721 = vunpack.c.l.b16 %v7628
  %v7722 = vunpack.c.h.b16 %v7628
  %v7723 = vunpack.c.l.b16 %v7629
  %v7724 = vunpack.c.h.b16 %v7629
  %v7725 = vunpack.c.l.b16 %v7630
  %v7726 = vunpack.c.h.b16 %v7630
  %v7727 = vpack.c.b16 %v7667, %v7663
  %v7728 = vpack.c.b16 %v7668, %v7664
  %v7729 = vpack.c.b16 %v7669, %v7665
  %v7730 = vpack.c.b16 %v7670, %v7666
  %v7731 = vpack.c.b16 %v7675, %v7671
  %v7732 = vpack.c.b16 %v7676, %v7672
  %v7733 = vpack.c.b16 %v7677, %v7673
  %v7734 = vpack.c.b16 %v7678, %v7674
  %v7735 = vpack.c.b16 %v7683, %v7679
  %v7736 = vpack.c.b16 %v7684, %v7680
  %v7737 = vpack.c.b16 %v7685, %v7681
  %v7738 = vpack.c.b16 %v7686, %v7682
  %v7739 = vpack.c.b16 %v7691, %v7687
  %v7740 = vpack.c.b16 %v7692, %v7688
  %v7741 = vpack.c.b16 %v7693, %v7689
  %v7742 = vpack.c.b16 %v7694, %v7690
  %v7743 = vpack.c.b16 %v7699, %v7695
  %v7744 = vpack.c.b16 %v7700, %v7696
  %v7745 = vpack.c.b16 %v7701, %v7697
  %v7746 = vpack.c.b16 %v7702, %v7698
  %v7747 = vpack.c.b16 %v7707, %v7703
  %v7748 = vpack.c.b16 %v7708, %v7704
  %v7749 = vpack.c.b16 %v7709, %v7705
  %v7750 = vpack.c.b16 %v7710, %v7706
  %v7751 = vpack.c.b16 %v7715, %v7711
  %v7752 = vpack.c.b16 %v7716, %v7712
  %v7753 = vpack.c.b16 %v7717, %v7713
  %v7754 = vpack.c.b16 %v7718, %v7714
  %v7755 = vpack.c.b16 %v7723, %v7719
  %v7756 = vpack.c.b16 %v7724, %v7720
  %v7757 = vpack.c.b16 %v7725, %v7721
  %v7758 = vpack.c.b16 %v7726, %v7722
  %7791 = vmatprep.subr.bf16.mxu0 %v7756
  %7792 = vmatpush1.bf16.msra.mxu0 %v7755
  %7793 = vmatprep.subr.bf16.mxu0 %v7752
  %7794 = vmatpush1.bf16.msra.mxu0 %v7751
  %7795 = vmatprep.subr.bf16.mxu0 %v7748
  %7796 = vmatpush1.bf16.msra.mxu0 %v7747
  %7797 = vmatprep.subr.bf16.mxu0 %v7744
  %7798 = vmatpush1.bf16.msra.mxu0 %v7743
  %7799 = vmatprep.subr.bf16.mxu0 %v7740
  %7800 = vmatpush1.bf16.msra.mxu0 %v7739
  %7801 = vmatprep.subr.bf16.mxu0 %v7736
  %7802 = vmatpush1.bf16.msra.mxu0 %v7735
  %7803 = vmatprep.subr.bf16.mxu0 %v7732
  %7804 = vmatpush1.bf16.msra.mxu0 %v7731
  %7805 = vmatprep.subr.bf16.mxu0 %v7728
  %7806 = vmatpush1.bf16.msra.mxu0 %v7727
  %7807 = vmatprep.subr.bf16.mxu0 0
  %7808 = vmatpush2.bf16.msra.mxu0 0
  %7809 = vmatprep.subr.bf16.mxu0 0
  %7810 = vmatpush2.bf16.msra.mxu0 0
  %7811 = vmatprep.subr.bf16.mxu0 0
  %7812 = vmatpush2.bf16.msra.mxu0 0
  %7813 = vmatprep.subr.bf16.mxu0 0
  %7814 = vmatpush2.bf16.msra.mxu0 0
  %7815 = vmatprep.subr.bf16.mxu0 0
  %7816 = vmatpush2.bf16.msra.mxu0 0
  %7817 = vmatprep.subr.bf16.mxu0 0
  %7818 = vmatpush2.bf16.msra.mxu0 0
  %7819 = vmatprep.subr.bf16.mxu0 0
  %7820 = vmatpush2.bf16.msra.mxu0 0
  %7821 = vmatprep.subr.bf16.mxu0 0
  %7822 = vmatpush2.bf16.msra.mxu0 0
  %7823 = vmatprep.mubr.bf16.mxu0 0
  %7824 = vmatmul.mubr.bf16.gmra.mxu0 %v7598
  %v7825 = vpop.f32.mrf.mxu0
  %v7826 = vadd.f32 0.0, %v7825
  %v7827 = vpop.f32.mrf.mxu0
  %v7828 = vadd.f32 0.0, %v7827
  %v7829 = vpop.f32.mrf.mxu0
  %v7830 = vpop.f32.mrf.mxu0
  %7831 = vdwg.mxu0
  %7832 = vmatprep.subr.bf16.mxu0 %v7758
  %7833 = vmatpush1.bf16.msra.mxu0 %v7757
  %7834 = vmatprep.subr.bf16.mxu0 %v7754
  %7835 = vmatpush1.bf16.msra.mxu0 %v7753
  %7836 = vmatprep.subr.bf16.mxu0 %v7750
  %7837 = vmatpush1.bf16.msra.mxu0 %v7749
  %7838 = vmatprep.subr.bf16.mxu0 %v7746
  %7839 = vmatpush1.bf16.msra.mxu0 %v7745
  %7840 = vmatprep.subr.bf16.mxu0 %v7742
  %7841 = vmatpush1.bf16.msra.mxu0 %v7741
  %7842 = vmatprep.subr.bf16.mxu0 %v7738
  %7843 = vmatpush1.bf16.msra.mxu0 %v7737
  %7844 = vmatprep.subr.bf16.mxu0 %v7734
  %7845 = vmatpush1.bf16.msra.mxu0 %v7733
  %7846 = vmatprep.subr.bf16.mxu0 %v7730
  %7847 = vmatpush1.bf16.msra.mxu0 %v7729
  %7848 = vmatprep.subr.bf16.mxu0 0
  %7849 = vmatpush2.bf16.msra.mxu0 0
  %7850 = vmatprep.subr.bf16.mxu0 0
  %7851 = vmatpush2.bf16.msra.mxu0 0
  %7852 = vmatprep.subr.bf16.mxu0 0
  %7853 = vmatpush2.bf16.msra.mxu0 0
  %7854 = vmatprep.subr.bf16.mxu0 0
  %7855 = vmatpush2.bf16.msra.mxu0 0
  %7856 = vmatprep.subr.bf16.mxu0 0
  %7857 = vmatpush2.bf16.msra.mxu0 0
  %7858 = vmatprep.subr.bf16.mxu0 0
  %7859 = vmatpush2.bf16.msra.mxu0 0
  %7860 = vmatprep.subr.bf16.mxu0 0
  %7861 = vmatpush2.bf16.msra.mxu0 0
  %7862 = vmatprep.subr.bf16.mxu0 0
  %7863 = vmatpush2.bf16.msra.mxu0 0
  %7864 = vmatprep.mubr.bf16.mxu0 0
  %7865 = vmatmul.mubr.bf16.gmra.mxu0 %v7598
  %v7866 = vpop.f32.mrf.mxu0
  %v7867 = vadd.f32 0.0, %v7866
  %v7868 = vpop.f32.mrf.mxu0
  %v7869 = vadd.f32 0.0, %v7868
  %v7870 = vpop.f32.mrf.mxu0
  %v7871 = vpop.f32.mrf.mxu0
  %7872 = vdwg.mxu0
  %v7873 = vadd.f32 %v7594, %v7826
  %v7874 = vadd.f32 %v7595, %v7828
  %v7875 = vadd.f32 %v7596, %v7867
  %v7876 = vadd.f32 %v7597, %v7869
  %v7877 = vxor.u32 %v7873, 2147483648
  %v7878 = vmul.f32 %v7877, 1.442695
  %v7879 = vpow.pop %v7878
  %v7880 = vadd.f32 %v7879, 1.0
  %v7881 = vrcp.pop %v7880
  %v7882 = vmul.f32 1.0, %v7881
  %v7883 = vxor.u32 %v7874, 2147483648
  %v7884 = vmul.f32 %v7883, 1.442695
  %v7885 = vpow.pop %v7884
  %v7886 = vadd.f32 %v7885, 1.0
  %v7887 = vrcp.pop %v7886
  %v7888 = vmul.f32 1.0, %v7887
  %v7889 = vtanh.pop %v7875
  %v7890 = vxor.u32 %v7876, 2147483648
  %v7891 = vmul.f32 %v7890, 1.442695
  %v7892 = vpow.pop %v7891
  %v7893 = vadd.f32 %v7892, 1.0
  %v7894 = vrcp.pop %v7893
  %v7895 = vmul.f32 1.0, %v7894
  %v7896 = vmul.f32 %v7888, %v7376
  %v7897 = vmul.f32 %v7882, %v7889
  %v7898 = vadd.f32 %v7896, %v7897
  %v7899 = vtanh.pop %v7898
  %v7900 = vmul.f32 %v7895, %v7899
  %s7901 = scalar_lea.vmem %s0, 400
  %v7902 = vld [vmem:[%s7901] sm:$0xff]
  %v7903 = vld [vmem:[%s7901 + $0x8] sm:$0xff]
  %v7904 = vunpack.c.l.bf16 %v7902
  %v7905 = vunpack.c.h.bf16 %v7902
  %v7906 = vunpack.c.l.bf16 %v7903
  %v7907 = vunpack.c.h.bf16 %v7903
  %v7908 = vpack.c.bf16 %v7900, %v7900
  %7909 = vmatprep.subr.bf16.mxu0 %v7756
  %7910 = vmatpush1.bf16.msra.mxu0 %v7755
  %7911 = vmatprep.subr.bf16.mxu0 %v7752
  %7912 = vmatpush1.bf16.msra.mxu0 %v7751
  %7913 = vmatprep.subr.bf16.mxu0 %v7748
  %7914 = vmatpush1.bf16.msra.mxu0 %v7747
  %7915 = vmatprep.subr.bf16.mxu0 %v7744
  %7916 = vmatpush1.bf16.msra.mxu0 %v7743
  %7917 = vmatprep.subr.bf16.mxu0 %v7740
  %7918 = vmatpush1.bf16.msra.mxu0 %v7739
  %7919 = vmatprep.subr.bf16.mxu0 %v7736
  %7920 = vmatpush1.bf16.msra.mxu0 %v7735
  %7921 = vmatprep.subr.bf16.mxu0 %v7732
  %7922 = vmatpush1.bf16.msra.mxu0 %v7731
  %7923 = vmatprep.subr.bf16.mxu0 %v7728
  %7924 = vmatpush1.bf16.msra.mxu0 %v7727
  %7925 = vmatprep.subr.bf16.mxu0 0
  %7926 = vmatpush2.bf16.msra.mxu0 0
  %7927 = vmatprep.subr.bf16.mxu0 0
  %7928 = vmatpush2.bf16.msra.mxu0 0
  %7929 = vmatprep.subr.bf16.mxu0 0
  %7930 = vmatpush2.bf16.msra.mxu0 0
  %7931 = vmatprep.subr.bf16.mxu0 0
  %7932 = vmatpush2.bf16.msra.mxu0 0
  %7933 = vmatprep.subr.bf16.mxu0 0
  %7934 = vmatpush2.bf16.msra.mxu0 0
  %7935 = vmatprep.subr.bf16.mxu0 0
  %7936 = vmatpush2.bf16.msra.mxu0 0
  %7937 = vmatprep.subr.bf16.mxu0 0
  %7938 = vmatpush2.bf16.msra.mxu0 0
  %7939 = vmatprep.subr.bf16.mxu0 0
  %7940 = vmatpush2.bf16.msra.mxu0 0
  %7941 = vmatprep.mubr.bf16.mxu0 0
  %7942 = vmatmul.mubr.bf16.gmra.mxu0 %v7908
  %v7943 = vpop.f32.mrf.mxu0
  %v7944 = vadd.f32 0.0, %v7943
  %v7945 = vpop.f32.mrf.mxu0
  %v7946 = vadd.f32 0.0, %v7945
  %v7947 = vpop.f32.mrf.mxu0
  %v7948 = vpop.f32.mrf.mxu0
  %7949 = vdwg.mxu0
  %7950 = vmatprep.subr.bf16.mxu0 %v7758
  %7951 = vmatpush1.bf16.msra.mxu0 %v7757
  %7952 = vmatprep.subr.bf16.mxu0 %v7754
  %7953 = vmatpush1.bf16.msra.mxu0 %v7753
  %7954 = vmatprep.subr.bf16.mxu0 %v7750
  %7955 = vmatpush1.bf16.msra.mxu0 %v7749
  %7956 = vmatprep.subr.bf16.mxu0 %v7746
  %7957 = vmatpush1.bf16.msra.mxu0 %v7745
  %7958 = vmatprep.subr.bf16.mxu0 %v7742
  %7959 = vmatpush1.bf16.msra.mxu0 %v7741
  %7960 = vmatprep.subr.bf16.mxu0 %v7738
  %7961 = vmatpush1.bf16.msra.mxu0 %v7737
  %7962 = vmatprep.subr.bf16.mxu0 %v7734
  %7963 = vmatpush1.bf16.msra.mxu0 %v7733
  %7964 = vmatprep.subr.bf16.mxu0 %v7730
  %7965 = vmatpush1.bf16.msra.mxu0 %v7729
  %7966 = vmatprep.subr.bf16.mxu0 0
  %7967 = vmatpush2.bf16.msra.mxu0 0
  %7968 = vmatprep.subr.bf16.mxu0 0
  %7969 = vmatpush2.bf16.msra.mxu0 0
  %7970 = vmatprep.subr.bf16.mxu0 0
  %7971 = vmatpush2.bf16.msra.mxu0 0
  %7972 = vmatprep.subr.bf16.mxu0 0
  %7973 = vmatpush2.bf16.msra.mxu0 0
  %7974 = vmatprep.subr.bf16.mxu0 0
  %7975 = vmatpush2.bf16.msra.mxu0 0
  %7976 = vmatprep.subr.bf16.mxu0 0
  %7977 = vmatpush2.bf16.msra.mxu0 0
  %7978 = vmatprep.subr.bf16.mxu0 0
  %7979 = vmatpush2.bf16.msra.mxu0 0
  %7980 = vmatprep.subr.bf16.mxu0 0
  %7981 = vmatpush2.bf16.msra.mxu0 0
  %7982 = vmatprep.mubr.bf16.mxu0 0
  %7983 = vmatmul.mubr.bf16.gmra.mxu0 %v7908
  %v7984 = vpop.f32.mrf.mxu0
  %v7985 = vadd.f32 0.0, %v7984
  %v7986 = vpop.f32.mrf.mxu0
  %v7987 = vadd.f32 0.0, %v7986
  %v7988 = vpop.f32.mrf.mxu0
  %v7989 = vpop.f32.mrf.mxu0
  %7990 = vdwg.mxu0
  %v7991 = vadd.f32 %v7904, %v7944
  %v7992 = vadd.f32 %v7905, %v7946
  %v7993 = vadd.f32 %v7906, %v7985
  %v7994 = vadd.f32 %v7907, %v7987
  %v7995 = vxor.u32 %v7991, 2147483648
  %v7996 = vmul.f32 %v7995, 1.442695
  %v7997 = vpow.pop %v7996
  %v7998 = vadd.f32 %v7997, 1.0
  %v7999 = vrcp.pop %v7998
  %v8000 = vmul.f32 1.0, %v7999
  %v8001 = vxor.u32 %v7992, 2147483648
  %v8002 = vmul.f32 %v8001, 1.442695
  %v8003 = vpow.pop %v8002
  %v8004 = vadd.f32 %v8003, 1.0
  %v8005 = vrcp.pop %v8004
  %v8006 = vmul.f32 1.0, %v8005
  %v8007 = vtanh.pop %v7993
  %v8008 = vxor.u32 %v7994, 2147483648
  %v8009 = vmul.f32 %v8008, 1.442695
  %v8010 = vpow.pop %v8009
  %v8011 = vadd.f32 %v8010, 1.0
  %v8012 = vrcp.pop %v8011
  %v8013 = vmul.f32 1.0, %v8012
  %v8014 = vmul.f32 %v8006, %v7898
  %v8015 = vmul.f32 %v8000, %v8007
  %v8016 = vadd.f32 %v8014, %v8015
  %v8017 = vtanh.pop %v8016
  %v8018 = vmul.f32 %v8013, %v8017
  %v8020 = vcombine.high %v7900, %v7900
  %v8022 = vunpack.c.l.s4 1966171168
  %v8023 = vunpack.c.0.s8 %v8022
  %v8024 = vlaneseq
  %v8025 = vshrl.u32 %v8024, 7
  %v8026 = vsub.s32 %v8023, %v8025
  %v8027 = vrot.slane %v7900, %v8026
  %v8029 = vunpack.c.l.s4 1966171168
  %v8030 = vunpack.c.0.s8 %v8029
  %v8031 = vlaneseq
  %v8032 = vshrl.u32 %v8031, 7
  %v8033 = vsub.s32 %v8030, %v8032
  %v8034 = vrot.slane %v8020, %v8033
  %v8035 = vcombine.high %v8027, %v8027
  %v8036 = vcombine.high %v8034, %v8034
  %v8038 = vunpack.c.l.s4 1966171168
  %v8039 = vunpack.c.0.s8 %v8038
  %v8040 = vlaneseq
  %v8041 = vshrl.u32 %v8040, 7
  %v8042 = vsub.s32 %v8039, %v8041
  %v8043 = vrot.slane %v8027, %v8042
  %v8045 = vunpack.c.l.s4 1966171168
  %v8046 = vunpack.c.0.s8 %v8045
  %v8047 = vlaneseq
  %v8048 = vshrl.u32 %v8047, 7
  %v8049 = vsub.s32 %v8046, %v8048
  %v8050 = vrot.slane %v8034, %v8049
  %v8052 = vunpack.c.l.s4 1966171168
  %v8053 = vunpack.c.0.s8 %v8052
  %v8054 = vlaneseq
  %v8055 = vshrl.u32 %v8054, 7
  %v8056 = vsub.s32 %v8053, %v8055
  %v8057 = vrot.slane %v8035, %v8056
  %v8059 = vunpack.c.l.s4 1966171168
  %v8060 = vunpack.c.0.s8 %v8059
  %v8061 = vlaneseq
  %v8062 = vshrl.u32 %v8061, 7
  %v8063 = vsub.s32 %v8060, %v8062
  %v8064 = vrot.slane %v8036, %v8063
  %v8065 = vcombine.high %v8043, %v8043
  %v8066 = vcombine.high %v8050, %v8050
  %v8067 = vcombine.high %v8057, %v8057
  %v8068 = vcombine.high %v8064, %v8064
  %v8078 = vcombine.high %v8018, %v8018
  %v8080 = vunpack.c.l.s4 1966171168
  %v8081 = vunpack.c.0.s8 %v8080
  %v8082 = vlaneseq
  %v8083 = vshrl.u32 %v8082, 7
  %v8084 = vsub.s32 %v8081, %v8083
  %v8085 = vrot.slane %v8018, %v8084
  %v8087 = vunpack.c.l.s4 1966171168
  %v8088 = vunpack.c.0.s8 %v8087
  %v8089 = vlaneseq
  %v8090 = vshrl.u32 %v8089, 7
  %v8091 = vsub.s32 %v8088, %v8090
  %v8092 = vrot.slane %v8078, %v8091
  %v8093 = vcombine.high %v8085, %v8085
  %v8094 = vcombine.high %v8092, %v8092
  %v8096 = vunpack.c.l.s4 1966171168
  %v8097 = vunpack.c.0.s8 %v8096
  %v8098 = vlaneseq
  %v8099 = vshrl.u32 %v8098, 7
  %v8100 = vsub.s32 %v8097, %v8099
  %v8101 = vrot.slane %v8085, %v8100
  %v8103 = vunpack.c.l.s4 1966171168
  %v8104 = vunpack.c.0.s8 %v8103
  %v8105 = vlaneseq
  %v8106 = vshrl.u32 %v8105, 7
  %v8107 = vsub.s32 %v8104, %v8106
  %v8108 = vrot.slane %v8092, %v8107
  %v8110 = vunpack.c.l.s4 1966171168
  %v8111 = vunpack.c.0.s8 %v8110
  %v8112 = vlaneseq
  %v8113 = vshrl.u32 %v8112, 7
  %v8114 = vsub.s32 %v8111, %v8113
  %v8115 = vrot.slane %v8093, %v8114
  %v8117 = vunpack.c.l.s4 1966171168
  %v8118 = vunpack.c.0.s8 %v8117
  %v8119 = vlaneseq
  %v8120 = vshrl.u32 %v8119, 7
  %v8121 = vsub.s32 %v8118, %v8120
  %v8122 = vrot.slane %v8094, %v8121
  %v8123 = vcombine.high %v8101, %v8101
  %v8124 = vcombine.high %v8108, %v8108
  %v8125 = vcombine.high %v8115, %v8115
  %v8126 = vcombine.high %v8122, %v8122
  %v8127 = vlaneseq
  %v8128 = vshrl.u32 %v8127, 7
  %v8129 = vsub.s32 0, %v8128
  %v8130 = vrot.slane %v8101, %v8129
  %v8131 = vlaneseq
  %v8132 = vshrl.u32 %v8131, 7
  %v8133 = vsub.s32 0, %v8132
  %v8134 = vrot.slane %v8115, %v8133
  %v8135 = vlaneseq
  %v8136 = vshrl.u32 %v8135, 7
  %v8137 = vsub.s32 0, %v8136
  %v8138 = vrot.slane %v8123, %v8137
  %v8139 = vlaneseq
  %v8140 = vshrl.u32 %v8139, 7
  %v8141 = vsub.s32 0, %v8140
  %v8142 = vrot.slane %v8125, %v8141
  %v8143 = vlaneseq
  %v8144 = vshrl.u32 %v8143, 7
  %v8145 = vsub.s32 0, %v8144
  %v8146 = vrot.slane %v8108, %v8145
  %v8147 = vlaneseq
  %v8148 = vshrl.u32 %v8147, 7
  %v8149 = vsub.s32 0, %v8148
  %v8150 = vrot.slane %v8122, %v8149
  %v8151 = vlaneseq
  %v8152 = vshrl.u32 %v8151, 7
  %v8153 = vsub.s32 0, %v8152
  %v8154 = vrot.slane %v8124, %v8153
  %v8155 = vlaneseq
  %v8156 = vshrl.u32 %v8155, 7
  %v8157 = vsub.s32 0, %v8156
  %v8158 = vrot.slane %v8126, %v8157
  %v8167 = vsel %vm606, %v8043, %v8130
  %v8168 = vsel %vm606, %v8057, %v8134
  %v8169 = vsel %vm606, %v8065, %v8138
  %v8170 = vsel %vm606, %v8067, %v8142
  %v8171 = vsel %vm606, %v8050, %v8146
  %v8172 = vsel %vm606, %v8064, %v8150
  %v8173 = vsel %vm606, %v8066, %v8154
  %v8174 = vsel %vm606, %v8068, %v8158
  %v8175 = vpack.c.bf16 %v8167, %v8167
  %v8176 = vpack.c.bf16 %v8168, %v8168
  %v8177 = vpack.c.bf16 %v8169, %v8169
  %v8178 = vpack.c.bf16 %v8170, %v8170
  %v8179 = vpack.c.bf16 %v8171, %v8171
  %v8180 = vpack.c.bf16 %v8172, %v8172
  %v8181 = vpack.c.bf16 %v8173, %v8173
  %v8182 = vpack.c.bf16 %v8174, %v8174
  %8183 = vst [vmem:[%s4 + $0xc] sm:$0x1] %v8175
  %8184 = vst [vmem:[%s4 + $0x1c] sm:$0x1] %v8176
  %8185 = vst [vmem:[%s4 + $0x2c] sm:$0x1] %v8177
  %8186 = vst [vmem:[%s4 + $0x3c] sm:$0x1] %v8178
  %8187 = vst [vmem:[%s4 + $0x4c] sm:$0x1] %v8179
  %8188 = vst [vmem:[%s4 + $0x5c] sm:$0x1] %v8180
  %8189 = vst [vmem:[%s4 + $0x6c] sm:$0x1] %v8181
  %8190 = vst [vmem:[%s4 + $0x7c] sm:$0x1] %v8182
  %s8191 = scalar_lea.vmem %s0, 416
  %v8192 = vld [vmem:[%s8191] sm:$0xff]
  %v8193 = vld [vmem:[%s8191 + $0x8] sm:$0xff]
  %v8194 = vunpack.c.l.bf16 %v8192
  %v8195 = vunpack.c.h.bf16 %v8192
  %v8196 = vunpack.c.l.bf16 %v8193
  %v8197 = vunpack.c.h.bf16 %v8193
  %v8198 = vpack.c.bf16 %v8018, %v8018
  %v8199 = vld [vmem:[%s1] sm:$0xff]
  %v8200 = vld [vmem:[%s1 + $0x8] sm:$0xff]
  %v8201 = vld [vmem:[%s1 + $0x10] sm:$0xff]
  %v8202 = vld [vmem:[%s1 + $0x18] sm:$0xff]
  %v8203 = vld [vmem:[%s1 + $0x20] sm:$0xff]
  %v8204 = vld [vmem:[%s1 + $0x28] sm:$0xff]
  %v8205 = vld [vmem:[%s1 + $0x30] sm:$0xff]
  %v8206 = vld [vmem:[%s1 + $0x38] sm:$0xff]
  %v8207 = vld [vmem:[%s1 + $0x40] sm:$0xff]
  %v8208 = vld [vmem:[%s1 + $0x48] sm:$0xff]
  %v8209 = vld [vmem:[%s1 + $0x50] sm:$0xff]
  %v8210 = vld [vmem:[%s1 + $0x58] sm:$0xff]
  %v8211 = vld [vmem:[%s1 + $0x60] sm:$0xff]
  %v8212 = vld [vmem:[%s1 + $0x68] sm:$0xff]
  %v8213 = vld [vmem:[%s1 + $0x70] sm:$0xff]
  %v8214 = vld [vmem:[%s1 + $0x78] sm:$0xff]
  %v8215 = vld [vmem:[%s1 + $0x80] sm:$0xff]
  %v8216 = vld [vmem:[%s1 + $0x88] sm:$0xff]
  %v8217 = vld [vmem:[%s1 + $0x90] sm:$0xff]
  %v8218 = vld [vmem:[%s1 + $0x98] sm:$0xff]
  %v8219 = vld [vmem:[%s1 + $0xa0] sm:$0xff]
  %v8220 = vld [vmem:[%s1 + $0xa8] sm:$0xff]
  %v8221 = vld [vmem:[%s1 + $0xb0] sm:$0xff]
  %v8222 = vld [vmem:[%s1 + $0xb8] sm:$0xff]
  %v8223 = vld [vmem:[%s1 + $0xc0] sm:$0xff]
  %v8224 = vld [vmem:[%s1 + $0xc8] sm:$0xff]
  %v8225 = vld [vmem:[%s1 + $0xd0] sm:$0xff]
  %v8226 = vld [vmem:[%s1 + $0xd8] sm:$0xff]
  %v8227 = vld [vmem:[%s1 + $0xe0] sm:$0xff]
  %v8228 = vld [vmem:[%s1 + $0xe8] sm:$0xff]
  %v8229 = vld [vmem:[%s1 + $0xf0] sm:$0xff]
  %v8230 = vld [vmem:[%s1 + $0xf8] sm:$0xff]
  %v8263 = vunpack.c.l.b16 %v8199
  %v8264 = vunpack.c.h.b16 %v8199
  %v8265 = vunpack.c.l.b16 %v8200
  %v8266 = vunpack.c.h.b16 %v8200
  %v8267 = vunpack.c.l.b16 %v8201
  %v8268 = vunpack.c.h.b16 %v8201
  %v8269 = vunpack.c.l.b16 %v8202
  %v8270 = vunpack.c.h.b16 %v8202
  %v8271 = vunpack.c.l.b16 %v8203
  %v8272 = vunpack.c.h.b16 %v8203
  %v8273 = vunpack.c.l.b16 %v8204
  %v8274 = vunpack.c.h.b16 %v8204
  %v8275 = vunpack.c.l.b16 %v8205
  %v8276 = vunpack.c.h.b16 %v8205
  %v8277 = vunpack.c.l.b16 %v8206
  %v8278 = vunpack.c.h.b16 %v8206
  %v8279 = vunpack.c.l.b16 %v8207
  %v8280 = vunpack.c.h.b16 %v8207
  %v8281 = vunpack.c.l.b16 %v8208
  %v8282 = vunpack.c.h.b16 %v8208
  %v8283 = vunpack.c.l.b16 %v8209
  %v8284 = vunpack.c.h.b16 %v8209
  %v8285 = vunpack.c.l.b16 %v8210
  %v8286 = vunpack.c.h.b16 %v8210
  %v8287 = vunpack.c.l.b16 %v8211
  %v8288 = vunpack.c.h.b16 %v8211
  %v8289 = vunpack.c.l.b16 %v8212
  %v8290 = vunpack.c.h.b16 %v8212
  %v8291 = vunpack.c.l.b16 %v8213
  %v8292 = vunpack.c.h.b16 %v8213
  %v8293 = vunpack.c.l.b16 %v8214
  %v8294 = vunpack.c.h.b16 %v8214
  %v8295 = vunpack.c.l.b16 %v8215
  %v8296 = vunpack.c.h.b16 %v8215
  %v8297 = vunpack.c.l.b16 %v8216
  %v8298 = vunpack.c.h.b16 %v8216
  %v8299 = vunpack.c.l.b16 %v8217
  %v8300 = vunpack.c.h.b16 %v8217
  %v8301 = vunpack.c.l.b16 %v8218
  %v8302 = vunpack.c.h.b16 %v8218
  %v8303 = vunpack.c.l.b16 %v8219
  %v8304 = vunpack.c.h.b16 %v8219
  %v8305 = vunpack.c.l.b16 %v8220
  %v8306 = vunpack.c.h.b16 %v8220
  %v8307 = vunpack.c.l.b16 %v8221
  %v8308 = vunpack.c.h.b16 %v8221
  %v8309 = vunpack.c.l.b16 %v8222
  %v8310 = vunpack.c.h.b16 %v8222
  %v8311 = vunpack.c.l.b16 %v8223
  %v8312 = vunpack.c.h.b16 %v8223
  %v8313 = vunpack.c.l.b16 %v8224
  %v8314 = vunpack.c.h.b16 %v8224
  %v8315 = vunpack.c.l.b16 %v8225
  %v8316 = vunpack.c.h.b16 %v8225
  %v8317 = vunpack.c.l.b16 %v8226
  %v8318 = vunpack.c.h.b16 %v8226
  %v8319 = vunpack.c.l.b16 %v8227
  %v8320 = vunpack.c.h.b16 %v8227
  %v8321 = vunpack.c.l.b16 %v8228
  %v8322 = vunpack.c.h.b16 %v8228
  %v8323 = vunpack.c.l.b16 %v8229
  %v8324 = vunpack.c.h.b16 %v8229
  %v8325 = vunpack.c.l.b16 %v8230
  %v8326 = vunpack.c.h.b16 %v8230
  %v8327 = vpack.c.b16 %v8267, %v8263
  %v8328 = vpack.c.b16 %v8268, %v8264
  %v8329 = vpack.c.b16 %v8269, %v8265
  %v8330 = vpack.c.b16 %v8270, %v8266
  %v8331 = vpack.c.b16 %v8275, %v8271
  %v8332 = vpack.c.b16 %v8276, %v8272
  %v8333 = vpack.c.b16 %v8277, %v8273
  %v8334 = vpack.c.b16 %v8278, %v8274
  %v8335 = vpack.c.b16 %v8283, %v8279
  %v8336 = vpack.c.b16 %v8284, %v8280
  %v8337 = vpack.c.b16 %v8285, %v8281
  %v8338 = vpack.c.b16 %v8286, %v8282
  %v8339 = vpack.c.b16 %v8291, %v8287
  %v8340 = vpack.c.b16 %v8292, %v8288
  %v8341 = vpack.c.b16 %v8293, %v8289
  %v8342 = vpack.c.b16 %v8294, %v8290
  %v8343 = vpack.c.b16 %v8299, %v8295
  %v8344 = vpack.c.b16 %v8300, %v8296
  %v8345 = vpack.c.b16 %v8301, %v8297
  %v8346 = vpack.c.b16 %v8302, %v8298
  %v8347 = vpack.c.b16 %v8307, %v8303
  %v8348 = vpack.c.b16 %v8308, %v8304
  %v8349 = vpack.c.b16 %v8309, %v8305
  %v8350 = vpack.c.b16 %v8310, %v8306
  %v8351 = vpack.c.b16 %v8315, %v8311
  %v8352 = vpack.c.b16 %v8316, %v8312
  %v8353 = vpack.c.b16 %v8317, %v8313
  %v8354 = vpack.c.b16 %v8318, %v8314
  %v8355 = vpack.c.b16 %v8323, %v8319
  %v8356 = vpack.c.b16 %v8324, %v8320
  %v8357 = vpack.c.b16 %v8325, %v8321
  %v8358 = vpack.c.b16 %v8326, %v8322
  %8391 = vmatprep.subr.bf16.mxu0 %v8356
  %8392 = vmatpush1.bf16.msra.mxu0 %v8355
  %8393 = vmatprep.subr.bf16.mxu0 %v8352
  %8394 = vmatpush1.bf16.msra.mxu0 %v8351
  %8395 = vmatprep.subr.bf16.mxu0 %v8348
  %8396 = vmatpush1.bf16.msra.mxu0 %v8347
  %8397 = vmatprep.subr.bf16.mxu0 %v8344
  %8398 = vmatpush1.bf16.msra.mxu0 %v8343
  %8399 = vmatprep.subr.bf16.mxu0 %v8340
  %8400 = vmatpush1.bf16.msra.mxu0 %v8339
  %8401 = vmatprep.subr.bf16.mxu0 %v8336
  %8402 = vmatpush1.bf16.msra.mxu0 %v8335
  %8403 = vmatprep.subr.bf16.mxu0 %v8332
  %8404 = vmatpush1.bf16.msra.mxu0 %v8331
  %8405 = vmatprep.subr.bf16.mxu0 %v8328
  %8406 = vmatpush1.bf16.msra.mxu0 %v8327
  %8407 = vmatprep.subr.bf16.mxu0 0
  %8408 = vmatpush2.bf16.msra.mxu0 0
  %8409 = vmatprep.subr.bf16.mxu0 0
  %8410 = vmatpush2.bf16.msra.mxu0 0
  %8411 = vmatprep.subr.bf16.mxu0 0
  %8412 = vmatpush2.bf16.msra.mxu0 0
  %8413 = vmatprep.subr.bf16.mxu0 0
  %8414 = vmatpush2.bf16.msra.mxu0 0
  %8415 = vmatprep.subr.bf16.mxu0 0
  %8416 = vmatpush2.bf16.msra.mxu0 0
  %8417 = vmatprep.subr.bf16.mxu0 0
  %8418 = vmatpush2.bf16.msra.mxu0 0
  %8419 = vmatprep.subr.bf16.mxu0 0
  %8420 = vmatpush2.bf16.msra.mxu0 0
  %8421 = vmatprep.subr.bf16.mxu0 0
  %8422 = vmatpush2.bf16.msra.mxu0 0
  %8423 = vmatprep.mubr.bf16.mxu0 0
  %8424 = vmatmul.mubr.bf16.gmra.mxu0 %v8198
  %v8425 = vpop.f32.mrf.mxu0
  %v8426 = vadd.f32 0.0, %v8425
  %v8427 = vpop.f32.mrf.mxu0
  %v8428 = vadd.f32 0.0, %v8427
  %v8429 = vpop.f32.mrf.mxu0
  %v8430 = vpop.f32.mrf.mxu0
  %8431 = vdwg.mxu0
  %8432 = vmatprep.subr.bf16.mxu0 %v8358
  %8433 = vmatpush1.bf16.msra.mxu0 %v8357
  %8434 = vmatprep.subr.bf16.mxu0 %v8354
  %8435 = vmatpush1.bf16.msra.mxu0 %v8353
  %8436 = vmatprep.subr.bf16.mxu0 %v8350
  %8437 = vmatpush1.bf16.msra.mxu0 %v8349
  %8438 = vmatprep.subr.bf16.mxu0 %v8346
  %8439 = vmatpush1.bf16.msra.mxu0 %v8345
  %8440 = vmatprep.subr.bf16.mxu0 %v8342
  %8441 = vmatpush1.bf16.msra.mxu0 %v8341
  %8442 = vmatprep.subr.bf16.mxu0 %v8338
  %8443 = vmatpush1.bf16.msra.mxu0 %v8337
  %8444 = vmatprep.subr.bf16.mxu0 %v8334
  %8445 = vmatpush1.bf16.msra.mxu0 %v8333
  %8446 = vmatprep.subr.bf16.mxu0 %v8330
  %8447 = vmatpush1.bf16.msra.mxu0 %v8329
  %8448 = vmatprep.subr.bf16.mxu0 0
  %8449 = vmatpush2.bf16.msra.mxu0 0
  %8450 = vmatprep.subr.bf16.mxu0 0
  %8451 = vmatpush2.bf16.msra.mxu0 0
  %8452 = vmatprep.subr.bf16.mxu0 0
  %8453 = vmatpush2.bf16.msra.mxu0 0
  %8454 = vmatprep.subr.bf16.mxu0 0
  %8455 = vmatpush2.bf16.msra.mxu0 0
  %8456 = vmatprep.subr.bf16.mxu0 0
  %8457 = vmatpush2.bf16.msra.mxu0 0
  %8458 = vmatprep.subr.bf16.mxu0 0
  %8459 = vmatpush2.bf16.msra.mxu0 0
  %8460 = vmatprep.subr.bf16.mxu0 0
  %8461 = vmatpush2.bf16.msra.mxu0 0
  %8462 = vmatprep.subr.bf16.mxu0 0
  %8463 = vmatpush2.bf16.msra.mxu0 0
  %8464 = vmatprep.mubr.bf16.mxu0 0
  %8465 = vmatmul.mubr.bf16.gmra.mxu0 %v8198
  %v8466 = vpop.f32.mrf.mxu0
  %v8467 = vadd.f32 0.0, %v8466
  %v8468 = vpop.f32.mrf.mxu0
  %v8469 = vadd.f32 0.0, %v8468
  %v8470 = vpop.f32.mrf.mxu0
  %v8471 = vpop.f32.mrf.mxu0
  %8472 = vdwg.mxu0
  %v8473 = vadd.f32 %v8194, %v8426
  %v8474 = vadd.f32 %v8195, %v8428
  %v8475 = vadd.f32 %v8196, %v8467
  %v8476 = vadd.f32 %v8197, %v8469
  %v8477 = vxor.u32 %v8473, 2147483648
  %v8478 = vmul.f32 %v8477, 1.442695
  %v8479 = vpow.pop %v8478
  %v8480 = vadd.f32 %v8479, 1.0
  %v8481 = vrcp.pop %v8480
  %v8482 = vmul.f32 1.0, %v8481
  %v8483 = vxor.u32 %v8474, 2147483648
  %v8484 = vmul.f32 %v8483, 1.442695
  %v8485 = vpow.pop %v8484
  %v8486 = vadd.f32 %v8485, 1.0
  %v8487 = vrcp.pop %v8486
  %v8488 = vmul.f32 1.0, %v8487
  %v8489 = vtanh.pop %v8475
  %v8490 = vxor.u32 %v8476, 2147483648
  %v8491 = vmul.f32 %v8490, 1.442695
  %v8492 = vpow.pop %v8491
  %v8493 = vadd.f32 %v8492, 1.0
  %v8494 = vrcp.pop %v8493
  %v8495 = vmul.f32 1.0, %v8494
  %v8496 = vmul.f32 %v8488, %v8016
  %v8497 = vmul.f32 %v8482, %v8489
  %v8498 = vadd.f32 %v8496, %v8497
  %v8499 = vtanh.pop %v8498
  %v8500 = vmul.f32 %v8495, %v8499
  %s8501 = scalar_lea.vmem %s0, 432
  %v8502 = vld [vmem:[%s8501] sm:$0xff]
  %v8503 = vld [vmem:[%s8501 + $0x8] sm:$0xff]
  %v8504 = vunpack.c.l.bf16 %v8502
  %v8505 = vunpack.c.h.bf16 %v8502
  %v8506 = vunpack.c.l.bf16 %v8503
  %v8507 = vunpack.c.h.bf16 %v8503
  %v8508 = vpack.c.bf16 %v8500, %v8500
  %8509 = vmatprep.subr.bf16.mxu0 %v8356
  %8510 = vmatpush1.bf16.msra.mxu0 %v8355
  %8511 = vmatprep.subr.bf16.mxu0 %v8352
  %8512 = vmatpush1.bf16.msra.mxu0 %v8351
  %8513 = vmatprep.subr.bf16.mxu0 %v8348
  %8514 = vmatpush1.bf16.msra.mxu0 %v8347
  %8515 = vmatprep.subr.bf16.mxu0 %v8344
  %8516 = vmatpush1.bf16.msra.mxu0 %v8343
  %8517 = vmatprep.subr.bf16.mxu0 %v8340
  %8518 = vmatpush1.bf16.msra.mxu0 %v8339
  %8519 = vmatprep.subr.bf16.mxu0 %v8336
  %8520 = vmatpush1.bf16.msra.mxu0 %v8335
  %8521 = vmatprep.subr.bf16.mxu0 %v8332
  %8522 = vmatpush1.bf16.msra.mxu0 %v8331
  %8523 = vmatprep.subr.bf16.mxu0 %v8328
  %8524 = vmatpush1.bf16.msra.mxu0 %v8327
  %8525 = vmatprep.subr.bf16.mxu0 0
  %8526 = vmatpush2.bf16.msra.mxu0 0
  %8527 = vmatprep.subr.bf16.mxu0 0
  %8528 = vmatpush2.bf16.msra.mxu0 0
  %8529 = vmatprep.subr.bf16.mxu0 0
  %8530 = vmatpush2.bf16.msra.mxu0 0
  %8531 = vmatprep.subr.bf16.mxu0 0
  %8532 = vmatpush2.bf16.msra.mxu0 0
  %8533 = vmatprep.subr.bf16.mxu0 0
  %8534 = vmatpush2.bf16.msra.mxu0 0
  %8535 = vmatprep.subr.bf16.mxu0 0
  %8536 = vmatpush2.bf16.msra.mxu0 0
  %8537 = vmatprep.subr.bf16.mxu0 0
  %8538 = vmatpush2.bf16.msra.mxu0 0
  %8539 = vmatprep.subr.bf16.mxu0 0
  %8540 = vmatpush2.bf16.msra.mxu0 0
  %8541 = vmatprep.mubr.bf16.mxu0 0
  %8542 = vmatmul.mubr.bf16.gmra.mxu0 %v8508
  %v8543 = vpop.f32.mrf.mxu0
  %v8544 = vadd.f32 0.0, %v8543
  %v8545 = vpop.f32.mrf.mxu0
  %v8546 = vadd.f32 0.0, %v8545
  %v8547 = vpop.f32.mrf.mxu0
  %v8548 = vpop.f32.mrf.mxu0
  %8549 = vdwg.mxu0
  %8550 = vmatprep.subr.bf16.mxu0 %v8358
  %8551 = vmatpush1.bf16.msra.mxu0 %v8357
  %8552 = vmatprep.subr.bf16.mxu0 %v8354
  %8553 = vmatpush1.bf16.msra.mxu0 %v8353
  %8554 = vmatprep.subr.bf16.mxu0 %v8350
  %8555 = vmatpush1.bf16.msra.mxu0 %v8349
  %8556 = vmatprep.subr.bf16.mxu0 %v8346
  %8557 = vmatpush1.bf16.msra.mxu0 %v8345
  %8558 = vmatprep.subr.bf16.mxu0 %v8342
  %8559 = vmatpush1.bf16.msra.mxu0 %v8341
  %8560 = vmatprep.subr.bf16.mxu0 %v8338
  %8561 = vmatpush1.bf16.msra.mxu0 %v8337
  %8562 = vmatprep.subr.bf16.mxu0 %v8334
  %8563 = vmatpush1.bf16.msra.mxu0 %v8333
  %8564 = vmatprep.subr.bf16.mxu0 %v8330
  %8565 = vmatpush1.bf16.msra.mxu0 %v8329
  %8566 = vmatprep.subr.bf16.mxu0 0
  %8567 = vmatpush2.bf16.msra.mxu0 0
  %8568 = vmatprep.subr.bf16.mxu0 0
  %8569 = vmatpush2.bf16.msra.mxu0 0
  %8570 = vmatprep.subr.bf16.mxu0 0
  %8571 = vmatpush2.bf16.msra.mxu0 0
  %8572 = vmatprep.subr.bf16.mxu0 0
  %8573 = vmatpush2.bf16.msra.mxu0 0
  %8574 = vmatprep.subr.bf16.mxu0 0
  %8575 = vmatpush2.bf16.msra.mxu0 0
  %8576 = vmatprep.subr.bf16.mxu0 0
  %8577 = vmatpush2.bf16.msra.mxu0 0
  %8578 = vmatprep.subr.bf16.mxu0 0
  %8579 = vmatpush2.bf16.msra.mxu0 0
  %8580 = vmatprep.subr.bf16.mxu0 0
  %8581 = vmatpush2.bf16.msra.mxu0 0
  %8582 = vmatprep.mubr.bf16.mxu0 0
  %8583 = vmatmul.mubr.bf16.gmra.mxu0 %v8508
  %v8584 = vpop.f32.mrf.mxu0
  %v8585 = vadd.f32 0.0, %v8584
  %v8586 = vpop.f32.mrf.mxu0
  %v8587 = vadd.f32 0.0, %v8586
  %v8588 = vpop.f32.mrf.mxu0
  %v8589 = vpop.f32.mrf.mxu0
  %8590 = vdwg.mxu0
  %v8591 = vadd.f32 %v8504, %v8544
  %v8592 = vadd.f32 %v8505, %v8546
  %v8593 = vadd.f32 %v8506, %v8585
  %v8594 = vadd.f32 %v8507, %v8587
  %v8595 = vxor.u32 %v8591, 2147483648
  %v8596 = vmul.f32 %v8595, 1.442695
  %v8597 = vpow.pop %v8596
  %v8598 = vadd.f32 %v8597, 1.0
  %v8599 = vrcp.pop %v8598
  %v8600 = vmul.f32 1.0, %v8599
  %v8601 = vxor.u32 %v8592, 2147483648
  %v8602 = vmul.f32 %v8601, 1.442695
  %v8603 = vpow.pop %v8602
  %v8604 = vadd.f32 %v8603, 1.0
  %v8605 = vrcp.pop %v8604
  %v8606 = vmul.f32 1.0, %v8605
  %v8607 = vtanh.pop %v8593
  %v8608 = vxor.u32 %v8594, 2147483648
  %v8609 = vmul.f32 %v8608, 1.442695
  %v8610 = vpow.pop %v8609
  %v8611 = vadd.f32 %v8610, 1.0
  %v8612 = vrcp.pop %v8611
  %v8613 = vmul.f32 1.0, %v8612
  %v8614 = vmul.f32 %v8606, %v8498
  %v8615 = vmul.f32 %v8600, %v8607
  %v8616 = vadd.f32 %v8614, %v8615
  %v8617 = vtanh.pop %v8616
  %v8618 = vmul.f32 %v8613, %v8617
  %v8620 = vcombine.high %v8500, %v8500
  %v8622 = vunpack.c.l.s4 1966171168
  %v8623 = vunpack.c.0.s8 %v8622
  %v8624 = vlaneseq
  %v8625 = vshrl.u32 %v8624, 7
  %v8626 = vsub.s32 %v8623, %v8625
  %v8627 = vrot.slane %v8500, %v8626
  %v8629 = vunpack.c.l.s4 1966171168
  %v8630 = vunpack.c.0.s8 %v8629
  %v8631 = vlaneseq
  %v8632 = vshrl.u32 %v8631, 7
  %v8633 = vsub.s32 %v8630, %v8632
  %v8634 = vrot.slane %v8620, %v8633
  %v8635 = vcombine.high %v8627, %v8627
  %v8636 = vcombine.high %v8634, %v8634
  %v8638 = vunpack.c.l.s4 1966171168
  %v8639 = vunpack.c.0.s8 %v8638
  %v8640 = vlaneseq
  %v8641 = vshrl.u32 %v8640, 7
  %v8642 = vsub.s32 %v8639, %v8641
  %v8643 = vrot.slane %v8627, %v8642
  %v8645 = vunpack.c.l.s4 1966171168
  %v8646 = vunpack.c.0.s8 %v8645
  %v8647 = vlaneseq
  %v8648 = vshrl.u32 %v8647, 7
  %v8649 = vsub.s32 %v8646, %v8648
  %v8650 = vrot.slane %v8634, %v8649
  %v8652 = vunpack.c.l.s4 1966171168
  %v8653 = vunpack.c.0.s8 %v8652
  %v8654 = vlaneseq
  %v8655 = vshrl.u32 %v8654, 7
  %v8656 = vsub.s32 %v8653, %v8655
  %v8657 = vrot.slane %v8635, %v8656
  %v8659 = vunpack.c.l.s4 1966171168
  %v8660 = vunpack.c.0.s8 %v8659
  %v8661 = vlaneseq
  %v8662 = vshrl.u32 %v8661, 7
  %v8663 = vsub.s32 %v8660, %v8662
  %v8664 = vrot.slane %v8636, %v8663
  %v8665 = vcombine.high %v8643, %v8643
  %v8666 = vcombine.high %v8650, %v8650
  %v8667 = vcombine.high %v8657, %v8657
  %v8668 = vcombine.high %v8664, %v8664
  %v8678 = vcombine.high %v8618, %v8618
  %v8680 = vunpack.c.l.s4 1966171168
  %v8681 = vunpack.c.0.s8 %v8680
  %v8682 = vlaneseq
  %v8683 = vshrl.u32 %v8682, 7
  %v8684 = vsub.s32 %v8681, %v8683
  %v8685 = vrot.slane %v8618, %v8684
  %v8687 = vunpack.c.l.s4 1966171168
  %v8688 = vunpack.c.0.s8 %v8687
  %v8689 = vlaneseq
  %v8690 = vshrl.u32 %v8689, 7
  %v8691 = vsub.s32 %v8688, %v8690
  %v8692 = vrot.slane %v8678, %v8691
  %v8693 = vcombine.high %v8685, %v8685
  %v8694 = vcombine.high %v8692, %v8692
  %v8696 = vunpack.c.l.s4 1966171168
  %v8697 = vunpack.c.0.s8 %v8696
  %v8698 = vlaneseq
  %v8699 = vshrl.u32 %v8698, 7
  %v8700 = vsub.s32 %v8697, %v8699
  %v8701 = vrot.slane %v8685, %v8700
  %v8703 = vunpack.c.l.s4 1966171168
  %v8704 = vunpack.c.0.s8 %v8703
  %v8705 = vlaneseq
  %v8706 = vshrl.u32 %v8705, 7
  %v8707 = vsub.s32 %v8704, %v8706
  %v8708 = vrot.slane %v8692, %v8707
  %v8710 = vunpack.c.l.s4 1966171168
  %v8711 = vunpack.c.0.s8 %v8710
  %v8712 = vlaneseq
  %v8713 = vshrl.u32 %v8712, 7
  %v8714 = vsub.s32 %v8711, %v8713
  %v8715 = vrot.slane %v8693, %v8714
  %v8717 = vunpack.c.l.s4 1966171168
  %v8718 = vunpack.c.0.s8 %v8717
  %v8719 = vlaneseq
  %v8720 = vshrl.u32 %v8719, 7
  %v8721 = vsub.s32 %v8718, %v8720
  %v8722 = vrot.slane %v8694, %v8721
  %v8723 = vcombine.high %v8701, %v8701
  %v8724 = vcombine.high %v8708, %v8708
  %v8725 = vcombine.high %v8715, %v8715
  %v8726 = vcombine.high %v8722, %v8722
  %v8727 = vlaneseq
  %v8728 = vshrl.u32 %v8727, 7
  %v8729 = vsub.s32 0, %v8728
  %v8730 = vrot.slane %v8701, %v8729
  %v8731 = vlaneseq
  %v8732 = vshrl.u32 %v8731, 7
  %v8733 = vsub.s32 0, %v8732
  %v8734 = vrot.slane %v8715, %v8733
  %v8735 = vlaneseq
  %v8736 = vshrl.u32 %v8735, 7
  %v8737 = vsub.s32 0, %v8736
  %v8738 = vrot.slane %v8723, %v8737
  %v8739 = vlaneseq
  %v8740 = vshrl.u32 %v8739, 7
  %v8741 = vsub.s32 0, %v8740
  %v8742 = vrot.slane %v8725, %v8741
  %v8743 = vlaneseq
  %v8744 = vshrl.u32 %v8743, 7
  %v8745 = vsub.s32 0, %v8744
  %v8746 = vrot.slane %v8708, %v8745
  %v8747 = vlaneseq
  %v8748 = vshrl.u32 %v8747, 7
  %v8749 = vsub.s32 0, %v8748
  %v8750 = vrot.slane %v8722, %v8749
  %v8751 = vlaneseq
  %v8752 = vshrl.u32 %v8751, 7
  %v8753 = vsub.s32 0, %v8752
  %v8754 = vrot.slane %v8724, %v8753
  %v8755 = vlaneseq
  %v8756 = vshrl.u32 %v8755, 7
  %v8757 = vsub.s32 0, %v8756
  %v8758 = vrot.slane %v8726, %v8757
  %v8767 = vsel %vm606, %v8643, %v8730
  %v8768 = vsel %vm606, %v8657, %v8734
  %v8769 = vsel %vm606, %v8665, %v8738
  %v8770 = vsel %vm606, %v8667, %v8742
  %v8771 = vsel %vm606, %v8650, %v8746
  %v8772 = vsel %vm606, %v8664, %v8750
  %v8773 = vsel %vm606, %v8666, %v8754
  %v8774 = vsel %vm606, %v8668, %v8758
  %v8775 = vpack.c.bf16 %v8767, %v8767
  %v8776 = vpack.c.bf16 %v8768, %v8768
  %v8777 = vpack.c.bf16 %v8769, %v8769
  %v8778 = vpack.c.bf16 %v8770, %v8770
  %v8779 = vpack.c.bf16 %v8771, %v8771
  %v8780 = vpack.c.bf16 %v8772, %v8772
  %v8781 = vpack.c.bf16 %v8773, %v8773
  %v8782 = vpack.c.bf16 %v8774, %v8774
  %v8791 = vunpack.c.l.b16 %v8775
  %v8792 = vunpack.c.l.b16 %v8776
  %v8793 = vunpack.c.l.b16 %v8777
  %v8794 = vunpack.c.l.b16 %v8778
  %v8795 = vunpack.c.l.b16 %v8779
  %v8796 = vunpack.c.l.b16 %v8780
  %v8797 = vunpack.c.l.b16 %v8781
  %v8798 = vunpack.c.l.b16 %v8782
  %v8799 = vpack.c.b16 %v8791, %v8791
  %v8800 = vpack.c.b16 %v8792, %v8792
  %v8801 = vpack.c.b16 %v8793, %v8793
  %v8802 = vpack.c.b16 %v8794, %v8794
  %v8803 = vpack.c.b16 %v8795, %v8795
  %v8804 = vpack.c.b16 %v8796, %v8796
  %v8805 = vpack.c.b16 %v8797, %v8797
  %v8806 = vpack.c.b16 %v8798, %v8798
  %v8807 = vrot.slane %v8799, 7
  %v8808 = vrot.slane %v8800, 7
  %v8809 = vrot.slane %v8801, 7
  %v8810 = vrot.slane %v8802, 7
  %v8811 = vrot.slane %v8803, 7
  %v8812 = vrot.slane %v8804, 7
  %v8813 = vrot.slane %v8805, 7
  %v8814 = vrot.slane %v8806, 7
  %8823 = vst [vmem:[%s4 + $0xc] sm:$0x2] %v8807
  %8824 = vst [vmem:[%s4 + $0x1c] sm:$0x2] %v8808
  %8825 = vst [vmem:[%s4 + $0x2c] sm:$0x2] %v8809
  %8826 = vst [vmem:[%s4 + $0x3c] sm:$0x2] %v8810
  %8827 = vst [vmem:[%s4 + $0x4c] sm:$0x2] %v8811
  %8828 = vst [vmem:[%s4 + $0x5c] sm:$0x2] %v8812
  %8829 = vst [vmem:[%s4 + $0x6c] sm:$0x2] %v8813
  %8830 = vst [vmem:[%s4 + $0x7c] sm:$0x2] %v8814
  %s8831 = scalar_lea.vmem %s0, 448
  %v8832 = vld [vmem:[%s8831] sm:$0xff]
  %v8833 = vld [vmem:[%s8831 + $0x8] sm:$0xff]
  %v8834 = vunpack.c.l.bf16 %v8832
  %v8835 = vunpack.c.h.bf16 %v8832
  %v8836 = vunpack.c.l.bf16 %v8833
  %v8837 = vunpack.c.h.bf16 %v8833
  %v8838 = vpack.c.bf16 %v8618, %v8618
  %v8839 = vld [vmem:[%s1] sm:$0xff]
  %v8840 = vld [vmem:[%s1 + $0x8] sm:$0xff]
  %v8841 = vld [vmem:[%s1 + $0x10] sm:$0xff]
  %v8842 = vld [vmem:[%s1 + $0x18] sm:$0xff]
  %v8843 = vld [vmem:[%s1 + $0x20] sm:$0xff]
  %v8844 = vld [vmem:[%s1 + $0x28] sm:$0xff]
  %v8845 = vld [vmem:[%s1 + $0x30] sm:$0xff]
  %v8846 = vld [vmem:[%s1 + $0x38] sm:$0xff]
  %v8847 = vld [vmem:[%s1 + $0x40] sm:$0xff]
  %v8848 = vld [vmem:[%s1 + $0x48] sm:$0xff]
  %v8849 = vld [vmem:[%s1 + $0x50] sm:$0xff]
  %v8850 = vld [vmem:[%s1 + $0x58] sm:$0xff]
  %v8851 = vld [vmem:[%s1 + $0x60] sm:$0xff]
  %v8852 = vld [vmem:[%s1 + $0x68] sm:$0xff]
  %v8853 = vld [vmem:[%s1 + $0x70] sm:$0xff]
  %v8854 = vld [vmem:[%s1 + $0x78] sm:$0xff]
  %v8855 = vld [vmem:[%s1 + $0x80] sm:$0xff]
  %v8856 = vld [vmem:[%s1 + $0x88] sm:$0xff]
  %v8857 = vld [vmem:[%s1 + $0x90] sm:$0xff]
  %v8858 = vld [vmem:[%s1 + $0x98] sm:$0xff]
  %v8859 = vld [vmem:[%s1 + $0xa0] sm:$0xff]
  %v8860 = vld [vmem:[%s1 + $0xa8] sm:$0xff]
  %v8861 = vld [vmem:[%s1 + $0xb0] sm:$0xff]
  %v8862 = vld [vmem:[%s1 + $0xb8] sm:$0xff]
  %v8863 = vld [vmem:[%s1 + $0xc0] sm:$0xff]
  %v8864 = vld [vmem:[%s1 + $0xc8] sm:$0xff]
  %v8865 = vld [vmem:[%s1 + $0xd0] sm:$0xff]
  %v8866 = vld [vmem:[%s1 + $0xd8] sm:$0xff]
  %v8867 = vld [vmem:[%s1 + $0xe0] sm:$0xff]
  %v8868 = vld [vmem:[%s1 + $0xe8] sm:$0xff]
  %v8869 = vld [vmem:[%s1 + $0xf0] sm:$0xff]
  %v8870 = vld [vmem:[%s1 + $0xf8] sm:$0xff]
  %v8903 = vunpack.c.l.b16 %v8839
  %v8904 = vunpack.c.h.b16 %v8839
  %v8905 = vunpack.c.l.b16 %v8840
  %v8906 = vunpack.c.h.b16 %v8840
  %v8907 = vunpack.c.l.b16 %v8841
  %v8908 = vunpack.c.h.b16 %v8841
  %v8909 = vunpack.c.l.b16 %v8842
  %v8910 = vunpack.c.h.b16 %v8842
  %v8911 = vunpack.c.l.b16 %v8843
  %v8912 = vunpack.c.h.b16 %v8843
  %v8913 = vunpack.c.l.b16 %v8844
  %v8914 = vunpack.c.h.b16 %v8844
  %v8915 = vunpack.c.l.b16 %v8845
  %v8916 = vunpack.c.h.b16 %v8845
  %v8917 = vunpack.c.l.b16 %v8846
  %v8918 = vunpack.c.h.b16 %v8846
  %v8919 = vunpack.c.l.b16 %v8847
  %v8920 = vunpack.c.h.b16 %v8847
  %v8921 = vunpack.c.l.b16 %v8848
  %v8922 = vunpack.c.h.b16 %v8848
  %v8923 = vunpack.c.l.b16 %v8849
  %v8924 = vunpack.c.h.b16 %v8849
  %v8925 = vunpack.c.l.b16 %v8850
  %v8926 = vunpack.c.h.b16 %v8850
  %v8927 = vunpack.c.l.b16 %v8851
  %v8928 = vunpack.c.h.b16 %v8851
  %v8929 = vunpack.c.l.b16 %v8852
  %v8930 = vunpack.c.h.b16 %v8852
  %v8931 = vunpack.c.l.b16 %v8853
  %v8932 = vunpack.c.h.b16 %v8853
  %v8933 = vunpack.c.l.b16 %v8854
  %v8934 = vunpack.c.h.b16 %v8854
  %v8935 = vunpack.c.l.b16 %v8855
  %v8936 = vunpack.c.h.b16 %v8855
  %v8937 = vunpack.c.l.b16 %v8856
  %v8938 = vunpack.c.h.b16 %v8856
  %v8939 = vunpack.c.l.b16 %v8857
  %v8940 = vunpack.c.h.b16 %v8857
  %v8941 = vunpack.c.l.b16 %v8858
  %v8942 = vunpack.c.h.b16 %v8858
  %v8943 = vunpack.c.l.b16 %v8859
  %v8944 = vunpack.c.h.b16 %v8859
  %v8945 = vunpack.c.l.b16 %v8860
  %v8946 = vunpack.c.h.b16 %v8860
  %v8947 = vunpack.c.l.b16 %v8861
  %v8948 = vunpack.c.h.b16 %v8861
  %v8949 = vunpack.c.l.b16 %v8862
  %v8950 = vunpack.c.h.b16 %v8862
  %v8951 = vunpack.c.l.b16 %v8863
  %v8952 = vunpack.c.h.b16 %v8863
  %v8953 = vunpack.c.l.b16 %v8864
  %v8954 = vunpack.c.h.b16 %v8864
  %v8955 = vunpack.c.l.b16 %v8865
  %v8956 = vunpack.c.h.b16 %v8865
  %v8957 = vunpack.c.l.b16 %v8866
  %v8958 = vunpack.c.h.b16 %v8866
  %v8959 = vunpack.c.l.b16 %v8867
  %v8960 = vunpack.c.h.b16 %v8867
  %v8961 = vunpack.c.l.b16 %v8868
  %v8962 = vunpack.c.h.b16 %v8868
  %v8963 = vunpack.c.l.b16 %v8869
  %v8964 = vunpack.c.h.b16 %v8869
  %v8965 = vunpack.c.l.b16 %v8870
  %v8966 = vunpack.c.h.b16 %v8870
  %v8967 = vpack.c.b16 %v8907, %v8903
  %v8968 = vpack.c.b16 %v8908, %v8904
  %v8969 = vpack.c.b16 %v8909, %v8905
  %v8970 = vpack.c.b16 %v8910, %v8906
  %v8971 = vpack.c.b16 %v8915, %v8911
  %v8972 = vpack.c.b16 %v8916, %v8912
  %v8973 = vpack.c.b16 %v8917, %v8913
  %v8974 = vpack.c.b16 %v8918, %v8914
  %v8975 = vpack.c.b16 %v8923, %v8919
  %v8976 = vpack.c.b16 %v8924, %v8920
  %v8977 = vpack.c.b16 %v8925, %v8921
  %v8978 = vpack.c.b16 %v8926, %v8922
  %v8979 = vpack.c.b16 %v8931, %v8927
  %v8980 = vpack.c.b16 %v8932, %v8928
  %v8981 = vpack.c.b16 %v8933, %v8929
  %v8982 = vpack.c.b16 %v8934, %v8930
  %v8983 = vpack.c.b16 %v8939, %v8935
  %v8984 = vpack.c.b16 %v8940, %v8936
  %v8985 = vpack.c.b16 %v8941, %v8937
  %v8986 = vpack.c.b16 %v8942, %v8938
  %v8987 = vpack.c.b16 %v8947, %v8943
  %v8988 = vpack.c.b16 %v8948, %v8944
  %v8989 = vpack.c.b16 %v8949, %v8945
  %v8990 = vpack.c.b16 %v8950, %v8946
  %v8991 = vpack.c.b16 %v8955, %v8951
  %v8992 = vpack.c.b16 %v8956, %v8952
  %v8993 = vpack.c.b16 %v8957, %v8953
  %v8994 = vpack.c.b16 %v8958, %v8954
  %v8995 = vpack.c.b16 %v8963, %v8959
  %v8996 = vpack.c.b16 %v8964, %v8960
  %v8997 = vpack.c.b16 %v8965, %v8961
  %v8998 = vpack.c.b16 %v8966, %v8962
  %9031 = vmatprep.subr.bf16.mxu0 %v8996
  %9032 = vmatpush1.bf16.msra.mxu0 %v8995
  %9033 = vmatprep.subr.bf16.mxu0 %v8992
  %9034 = vmatpush1.bf16.msra.mxu0 %v8991
  %9035 = vmatprep.subr.bf16.mxu0 %v8988
  %9036 = vmatpush1.bf16.msra.mxu0 %v8987
  %9037 = vmatprep.subr.bf16.mxu0 %v8984
  %9038 = vmatpush1.bf16.msra.mxu0 %v8983
  %9039 = vmatprep.subr.bf16.mxu0 %v8980
  %9040 = vmatpush1.bf16.msra.mxu0 %v8979
  %9041 = vmatprep.subr.bf16.mxu0 %v8976
  %9042 = vmatpush1.bf16.msra.mxu0 %v8975
  %9043 = vmatprep.subr.bf16.mxu0 %v8972
  %9044 = vmatpush1.bf16.msra.mxu0 %v8971
  %9045 = vmatprep.subr.bf16.mxu0 %v8968
  %9046 = vmatpush1.bf16.msra.mxu0 %v8967
  %9047 = vmatprep.subr.bf16.mxu0 0
  %9048 = vmatpush2.bf16.msra.mxu0 0
  %9049 = vmatprep.subr.bf16.mxu0 0
  %9050 = vmatpush2.bf16.msra.mxu0 0
  %9051 = vmatprep.subr.bf16.mxu0 0
  %9052 = vmatpush2.bf16.msra.mxu0 0
  %9053 = vmatprep.subr.bf16.mxu0 0
  %9054 = vmatpush2.bf16.msra.mxu0 0
  %9055 = vmatprep.subr.bf16.mxu0 0
  %9056 = vmatpush2.bf16.msra.mxu0 0
  %9057 = vmatprep.subr.bf16.mxu0 0
  %9058 = vmatpush2.bf16.msra.mxu0 0
  %9059 = vmatprep.subr.bf16.mxu0 0
  %9060 = vmatpush2.bf16.msra.mxu0 0
  %9061 = vmatprep.subr.bf16.mxu0 0
  %9062 = vmatpush2.bf16.msra.mxu0 0
  %9063 = vmatprep.mubr.bf16.mxu0 0
  %9064 = vmatmul.mubr.bf16.gmra.mxu0 %v8838
  %v9065 = vpop.f32.mrf.mxu0
  %v9066 = vadd.f32 0.0, %v9065
  %v9067 = vpop.f32.mrf.mxu0
  %v9068 = vadd.f32 0.0, %v9067
  %v9069 = vpop.f32.mrf.mxu0
  %v9070 = vpop.f32.mrf.mxu0
  %9071 = vdwg.mxu0
  %9072 = vmatprep.subr.bf16.mxu0 %v8998
  %9073 = vmatpush1.bf16.msra.mxu0 %v8997
  %9074 = vmatprep.subr.bf16.mxu0 %v8994
  %9075 = vmatpush1.bf16.msra.mxu0 %v8993
  %9076 = vmatprep.subr.bf16.mxu0 %v8990
  %9077 = vmatpush1.bf16.msra.mxu0 %v8989
  %9078 = vmatprep.subr.bf16.mxu0 %v8986
  %9079 = vmatpush1.bf16.msra.mxu0 %v8985
  %9080 = vmatprep.subr.bf16.mxu0 %v8982
  %9081 = vmatpush1.bf16.msra.mxu0 %v8981
  %9082 = vmatprep.subr.bf16.mxu0 %v8978
  %9083 = vmatpush1.bf16.msra.mxu0 %v8977
  %9084 = vmatprep.subr.bf16.mxu0 %v8974
  %9085 = vmatpush1.bf16.msra.mxu0 %v8973
  %9086 = vmatprep.subr.bf16.mxu0 %v8970
  %9087 = vmatpush1.bf16.msra.mxu0 %v8969
  %9088 = vmatprep.subr.bf16.mxu0 0
  %9089 = vmatpush2.bf16.msra.mxu0 0
  %9090 = vmatprep.subr.bf16.mxu0 0
  %9091 = vmatpush2.bf16.msra.mxu0 0
  %9092 = vmatprep.subr.bf16.mxu0 0
  %9093 = vmatpush2.bf16.msra.mxu0 0
  %9094 = vmatprep.subr.bf16.mxu0 0
  %9095 = vmatpush2.bf16.msra.mxu0 0
  %9096 = vmatprep.subr.bf16.mxu0 0
  %9097 = vmatpush2.bf16.msra.mxu0 0
  %9098 = vmatprep.subr.bf16.mxu0 0
  %9099 = vmatpush2.bf16.msra.mxu0 0
  %9100 = vmatprep.subr.bf16.mxu0 0
  %9101 = vmatpush2.bf16.msra.mxu0 0
  %9102 = vmatprep.subr.bf16.mxu0 0
  %9103 = vmatpush2.bf16.msra.mxu0 0
  %9104 = vmatprep.mubr.bf16.mxu0 0
  %9105 = vmatmul.mubr.bf16.gmra.mxu0 %v8838
  %v9106 = vpop.f32.mrf.mxu0
  %v9107 = vadd.f32 0.0, %v9106
  %v9108 = vpop.f32.mrf.mxu0
  %v9109 = vadd.f32 0.0, %v9108
  %v9110 = vpop.f32.mrf.mxu0
  %v9111 = vpop.f32.mrf.mxu0
  %9112 = vdwg.mxu0
  %v9113 = vadd.f32 %v8834, %v9066
  %v9114 = vadd.f32 %v8835, %v9068
  %v9115 = vadd.f32 %v8836, %v9107
  %v9116 = vadd.f32 %v8837, %v9109
  %v9117 = vxor.u32 %v9113, 2147483648
  %v9118 = vmul.f32 %v9117, 1.442695
  %v9119 = vpow.pop %v9118
  %v9120 = vadd.f32 %v9119, 1.0
  %v9121 = vrcp.pop %v9120
  %v9122 = vmul.f32 1.0, %v9121
  %v9123 = vxor.u32 %v9114, 2147483648
  %v9124 = vmul.f32 %v9123, 1.442695
  %v9125 = vpow.pop %v9124
  %v9126 = vadd.f32 %v9125, 1.0
  %v9127 = vrcp.pop %v9126
  %v9128 = vmul.f32 1.0, %v9127
  %v9129 = vtanh.pop %v9115
  %v9130 = vxor.u32 %v9116, 2147483648
  %v9131 = vmul.f32 %v9130, 1.442695
  %v9132 = vpow.pop %v9131
  %v9133 = vadd.f32 %v9132, 1.0
  %v9134 = vrcp.pop %v9133
  %v9135 = vmul.f32 1.0, %v9134
  %v9136 = vmul.f32 %v9128, %v8616
  %v9137 = vmul.f32 %v9122, %v9129
  %v9138 = vadd.f32 %v9136, %v9137
  %v9139 = vtanh.pop %v9138
  %v9140 = vmul.f32 %v9135, %v9139
  %s9141 = scalar_lea.vmem %s0, 464
  %v9142 = vld [vmem:[%s9141] sm:$0xff]
  %v9143 = vld [vmem:[%s9141 + $0x8] sm:$0xff]
  %v9144 = vunpack.c.l.bf16 %v9142
  %v9145 = vunpack.c.h.bf16 %v9142
  %v9146 = vunpack.c.l.bf16 %v9143
  %v9147 = vunpack.c.h.bf16 %v9143
  %v9148 = vpack.c.bf16 %v9140, %v9140
  %9149 = vmatprep.subr.bf16.mxu0 %v8996
  %9150 = vmatpush1.bf16.msra.mxu0 %v8995
  %9151 = vmatprep.subr.bf16.mxu0 %v8992
  %9152 = vmatpush1.bf16.msra.mxu0 %v8991
  %9153 = vmatprep.subr.bf16.mxu0 %v8988
  %9154 = vmatpush1.bf16.msra.mxu0 %v8987
  %9155 = vmatprep.subr.bf16.mxu0 %v8984
  %9156 = vmatpush1.bf16.msra.mxu0 %v8983
  %9157 = vmatprep.subr.bf16.mxu0 %v8980
  %9158 = vmatpush1.bf16.msra.mxu0 %v8979
  %9159 = vmatprep.subr.bf16.mxu0 %v8976
  %9160 = vmatpush1.bf16.msra.mxu0 %v8975
  %9161 = vmatprep.subr.bf16.mxu0 %v8972
  %9162 = vmatpush1.bf16.msra.mxu0 %v8971
  %9163 = vmatprep.subr.bf16.mxu0 %v8968
  %9164 = vmatpush1.bf16.msra.mxu0 %v8967
  %9165 = vmatprep.subr.bf16.mxu0 0
  %9166 = vmatpush2.bf16.msra.mxu0 0
  %9167 = vmatprep.subr.bf16.mxu0 0
  %9168 = vmatpush2.bf16.msra.mxu0 0
  %9169 = vmatprep.subr.bf16.mxu0 0
  %9170 = vmatpush2.bf16.msra.mxu0 0
  %9171 = vmatprep.subr.bf16.mxu0 0
  %9172 = vmatpush2.bf16.msra.mxu0 0
  %9173 = vmatprep.subr.bf16.mxu0 0
  %9174 = vmatpush2.bf16.msra.mxu0 0
  %9175 = vmatprep.subr.bf16.mxu0 0
  %9176 = vmatpush2.bf16.msra.mxu0 0
  %9177 = vmatprep.subr.bf16.mxu0 0
  %9178 = vmatpush2.bf16.msra.mxu0 0
  %9179 = vmatprep.subr.bf16.mxu0 0
  %9180 = vmatpush2.bf16.msra.mxu0 0
  %9181 = vmatprep.mubr.bf16.mxu0 0
  %9182 = vmatmul.mubr.bf16.gmra.mxu0 %v9148
  %v9183 = vpop.f32.mrf.mxu0
  %v9184 = vadd.f32 0.0, %v9183
  %v9185 = vpop.f32.mrf.mxu0
  %v9186 = vadd.f32 0.0, %v9185
  %v9187 = vpop.f32.mrf.mxu0
  %v9188 = vpop.f32.mrf.mxu0
  %9189 = vdwg.mxu0
  %9190 = vmatprep.subr.bf16.mxu0 %v8998
  %9191 = vmatpush1.bf16.msra.mxu0 %v8997
  %9192 = vmatprep.subr.bf16.mxu0 %v8994
  %9193 = vmatpush1.bf16.msra.mxu0 %v8993
  %9194 = vmatprep.subr.bf16.mxu0 %v8990
  %9195 = vmatpush1.bf16.msra.mxu0 %v8989
  %9196 = vmatprep.subr.bf16.mxu0 %v8986
  %9197 = vmatpush1.bf16.msra.mxu0 %v8985
  %9198 = vmatprep.subr.bf16.mxu0 %v8982
  %9199 = vmatpush1.bf16.msra.mxu0 %v8981
  %9200 = vmatprep.subr.bf16.mxu0 %v8978
  %9201 = vmatpush1.bf16.msra.mxu0 %v8977
  %9202 = vmatprep.subr.bf16.mxu0 %v8974
  %9203 = vmatpush1.bf16.msra.mxu0 %v8973
  %9204 = vmatprep.subr.bf16.mxu0 %v8970
  %9205 = vmatpush1.bf16.msra.mxu0 %v8969
  %9206 = vmatprep.subr.bf16.mxu0 0
  %9207 = vmatpush2.bf16.msra.mxu0 0
  %9208 = vmatprep.subr.bf16.mxu0 0
  %9209 = vmatpush2.bf16.msra.mxu0 0
  %9210 = vmatprep.subr.bf16.mxu0 0
  %9211 = vmatpush2.bf16.msra.mxu0 0
  %9212 = vmatprep.subr.bf16.mxu0 0
  %9213 = vmatpush2.bf16.msra.mxu0 0
  %9214 = vmatprep.subr.bf16.mxu0 0
  %9215 = vmatpush2.bf16.msra.mxu0 0
  %9216 = vmatprep.subr.bf16.mxu0 0
  %9217 = vmatpush2.bf16.msra.mxu0 0
  %9218 = vmatprep.subr.bf16.mxu0 0
  %9219 = vmatpush2.bf16.msra.mxu0 0
  %9220 = vmatprep.subr.bf16.mxu0 0
  %9221 = vmatpush2.bf16.msra.mxu0 0
  %9222 = vmatprep.mubr.bf16.mxu0 0
  %9223 = vmatmul.mubr.bf16.gmra.mxu0 %v9148
  %v9224 = vpop.f32.mrf.mxu0
  %v9225 = vadd.f32 0.0, %v9224
  %v9226 = vpop.f32.mrf.mxu0
  %v9227 = vadd.f32 0.0, %v9226
  %v9228 = vpop.f32.mrf.mxu0
  %v9229 = vpop.f32.mrf.mxu0
  %9230 = vdwg.mxu0
  %v9231 = vadd.f32 %v9144, %v9184
  %v9232 = vadd.f32 %v9145, %v9186
  %v9233 = vadd.f32 %v9146, %v9225
  %v9234 = vadd.f32 %v9147, %v9227
  %v9235 = vxor.u32 %v9231, 2147483648
  %v9236 = vmul.f32 %v9235, 1.442695
  %v9237 = vpow.pop %v9236
  %v9238 = vadd.f32 %v9237, 1.0
  %v9239 = vrcp.pop %v9238
  %v9240 = vmul.f32 1.0, %v9239
  %v9241 = vxor.u32 %v9232, 2147483648
  %v9242 = vmul.f32 %v9241, 1.442695
  %v9243 = vpow.pop %v9242
  %v9244 = vadd.f32 %v9243, 1.0
  %v9245 = vrcp.pop %v9244
  %v9246 = vmul.f32 1.0, %v9245
  %v9247 = vtanh.pop %v9233
  %v9248 = vxor.u32 %v9234, 2147483648
  %v9249 = vmul.f32 %v9248, 1.442695
  %v9250 = vpow.pop %v9249
  %v9251 = vadd.f32 %v9250, 1.0
  %v9252 = vrcp.pop %v9251
  %v9253 = vmul.f32 1.0, %v9252
  %v9254 = vmul.f32 %v9246, %v9138
  %v9255 = vmul.f32 %v9240, %v9247
  %v9256 = vadd.f32 %v9254, %v9255
  %v9257 = vtanh.pop %v9256
  %v9258 = vmul.f32 %v9253, %v9257
  %v9260 = vcombine.high %v9140, %v9140
  %v9262 = vunpack.c.l.s4 1966171168
  %v9263 = vunpack.c.0.s8 %v9262
  %v9264 = vlaneseq
  %v9265 = vshrl.u32 %v9264, 7
  %v9266 = vsub.s32 %v9263, %v9265
  %v9267 = vrot.slane %v9140, %v9266
  %v9269 = vunpack.c.l.s4 1966171168
  %v9270 = vunpack.c.0.s8 %v9269
  %v9271 = vlaneseq
  %v9272 = vshrl.u32 %v9271, 7
  %v9273 = vsub.s32 %v9270, %v9272
  %v9274 = vrot.slane %v9260, %v9273
  %v9275 = vcombine.high %v9267, %v9267
  %v9276 = vcombine.high %v9274, %v9274
  %v9278 = vunpack.c.l.s4 1966171168
  %v9279 = vunpack.c.0.s8 %v9278
  %v9280 = vlaneseq
  %v9281 = vshrl.u32 %v9280, 7
  %v9282 = vsub.s32 %v9279, %v9281
  %v9283 = vrot.slane %v9267, %v9282
  %v9285 = vunpack.c.l.s4 1966171168
  %v9286 = vunpack.c.0.s8 %v9285
  %v9287 = vlaneseq
  %v9288 = vshrl.u32 %v9287, 7
  %v9289 = vsub.s32 %v9286, %v9288
  %v9290 = vrot.slane %v9274, %v9289
  %v9292 = vunpack.c.l.s4 1966171168
  %v9293 = vunpack.c.0.s8 %v9292
  %v9294 = vlaneseq
  %v9295 = vshrl.u32 %v9294, 7
  %v9296 = vsub.s32 %v9293, %v9295
  %v9297 = vrot.slane %v9275, %v9296
  %v9299 = vunpack.c.l.s4 1966171168
  %v9300 = vunpack.c.0.s8 %v9299
  %v9301 = vlaneseq
  %v9302 = vshrl.u32 %v9301, 7
  %v9303 = vsub.s32 %v9300, %v9302
  %v9304 = vrot.slane %v9276, %v9303
  %v9305 = vcombine.high %v9283, %v9283
  %v9306 = vcombine.high %v9290, %v9290
  %v9307 = vcombine.high %v9297, %v9297
  %v9308 = vcombine.high %v9304, %v9304
  %v9318 = vcombine.high %v9258, %v9258
  %v9320 = vunpack.c.l.s4 1966171168
  %v9321 = vunpack.c.0.s8 %v9320
  %v9322 = vlaneseq
  %v9323 = vshrl.u32 %v9322, 7
  %v9324 = vsub.s32 %v9321, %v9323
  %v9325 = vrot.slane %v9258, %v9324
  %v9327 = vunpack.c.l.s4 1966171168
  %v9328 = vunpack.c.0.s8 %v9327
  %v9329 = vlaneseq
  %v9330 = vshrl.u32 %v9329, 7
  %v9331 = vsub.s32 %v9328, %v9330
  %v9332 = vrot.slane %v9318, %v9331
  %v9333 = vcombine.high %v9325, %v9325
  %v9334 = vcombine.high %v9332, %v9332
  %v9336 = vunpack.c.l.s4 1966171168
  %v9337 = vunpack.c.0.s8 %v9336
  %v9338 = vlaneseq
  %v9339 = vshrl.u32 %v9338, 7
  %v9340 = vsub.s32 %v9337, %v9339
  %v9341 = vrot.slane %v9325, %v9340
  %v9343 = vunpack.c.l.s4 1966171168
  %v9344 = vunpack.c.0.s8 %v9343
  %v9345 = vlaneseq
  %v9346 = vshrl.u32 %v9345, 7
  %v9347 = vsub.s32 %v9344, %v9346
  %v9348 = vrot.slane %v9332, %v9347
  %v9350 = vunpack.c.l.s4 1966171168
  %v9351 = vunpack.c.0.s8 %v9350
  %v9352 = vlaneseq
  %v9353 = vshrl.u32 %v9352, 7
  %v9354 = vsub.s32 %v9351, %v9353
  %v9355 = vrot.slane %v9333, %v9354
  %v9357 = vunpack.c.l.s4 1966171168
  %v9358 = vunpack.c.0.s8 %v9357
  %v9359 = vlaneseq
  %v9360 = vshrl.u32 %v9359, 7
  %v9361 = vsub.s32 %v9358, %v9360
  %v9362 = vrot.slane %v9334, %v9361
  %v9363 = vcombine.high %v9341, %v9341
  %v9364 = vcombine.high %v9348, %v9348
  %v9365 = vcombine.high %v9355, %v9355
  %v9366 = vcombine.high %v9362, %v9362
  %v9367 = vlaneseq
  %v9368 = vshrl.u32 %v9367, 7
  %v9369 = vsub.s32 0, %v9368
  %v9370 = vrot.slane %v9341, %v9369
  %v9371 = vlaneseq
  %v9372 = vshrl.u32 %v9371, 7
  %v9373 = vsub.s32 0, %v9372
  %v9374 = vrot.slane %v9355, %v9373
  %v9375 = vlaneseq
  %v9376 = vshrl.u32 %v9375, 7
  %v9377 = vsub.s32 0, %v9376
  %v9378 = vrot.slane %v9363, %v9377
  %v9379 = vlaneseq
  %v9380 = vshrl.u32 %v9379, 7
  %v9381 = vsub.s32 0, %v9380
  %v9382 = vrot.slane %v9365, %v9381
  %v9383 = vlaneseq
  %v9384 = vshrl.u32 %v9383, 7
  %v9385 = vsub.s32 0, %v9384
  %v9386 = vrot.slane %v9348, %v9385
  %v9387 = vlaneseq
  %v9388 = vshrl.u32 %v9387, 7
  %v9389 = vsub.s32 0, %v9388
  %v9390 = vrot.slane %v9362, %v9389
  %v9391 = vlaneseq
  %v9392 = vshrl.u32 %v9391, 7
  %v9393 = vsub.s32 0, %v9392
  %v9394 = vrot.slane %v9364, %v9393
  %v9395 = vlaneseq
  %v9396 = vshrl.u32 %v9395, 7
  %v9397 = vsub.s32 0, %v9396
  %v9398 = vrot.slane %v9366, %v9397
  %v9407 = vsel %vm606, %v9283, %v9370
  %v9408 = vsel %vm606, %v9297, %v9374
  %v9409 = vsel %vm606, %v9305, %v9378
  %v9410 = vsel %vm606, %v9307, %v9382
  %v9411 = vsel %vm606, %v9290, %v9386
  %v9412 = vsel %vm606, %v9304, %v9390
  %v9413 = vsel %vm606, %v9306, %v9394
  %v9414 = vsel %vm606, %v9308, %v9398
  %v9415 = vpack.c.bf16 %v9407, %v9407
  %v9416 = vpack.c.bf16 %v9408, %v9408
  %v9417 = vpack.c.bf16 %v9409, %v9409
  %v9418 = vpack.c.bf16 %v9410, %v9410
  %v9419 = vpack.c.bf16 %v9411, %v9411
  %v9420 = vpack.c.bf16 %v9412, %v9412
  %v9421 = vpack.c.bf16 %v9413, %v9413
  %v9422 = vpack.c.bf16 %v9414, %v9414
  %v9431 = vunpack.c.l.b16 %v9415
  %v9432 = vunpack.c.l.b16 %v9416
  %v9433 = vunpack.c.l.b16 %v9417
  %v9434 = vunpack.c.l.b16 %v9418
  %v9435 = vunpack.c.l.b16 %v9419
  %v9436 = vunpack.c.l.b16 %v9420
  %v9437 = vunpack.c.l.b16 %v9421
  %v9438 = vunpack.c.l.b16 %v9422
  %v9439 = vpack.c.b16 %v9431, %v9431
  %v9440 = vpack.c.b16 %v9432, %v9432
  %v9441 = vpack.c.b16 %v9433, %v9433
  %v9442 = vpack.c.b16 %v9434, %v9434
  %v9443 = vpack.c.b16 %v9435, %v9435
  %v9444 = vpack.c.b16 %v9436, %v9436
  %v9445 = vpack.c.b16 %v9437, %v9437
  %v9446 = vpack.c.b16 %v9438, %v9438
  %v9447 = vrot.slane %v9439, 6
  %v9448 = vrot.slane %v9440, 6
  %v9449 = vrot.slane %v9441, 6
  %v9450 = vrot.slane %v9442, 6
  %v9451 = vrot.slane %v9443, 6
  %v9452 = vrot.slane %v9444, 6
  %v9453 = vrot.slane %v9445, 6
  %v9454 = vrot.slane %v9446, 6
  %9463 = vst [vmem:[%s4 + $0xc] sm:$0x4] %v9447
  %9464 = vst [vmem:[%s4 + $0x1c] sm:$0x4] %v9448
  %9465 = vst [vmem:[%s4 + $0x2c] sm:$0x4] %v9449
  %9466 = vst [vmem:[%s4 + $0x3c] sm:$0x4] %v9450
  %9467 = vst [vmem:[%s4 + $0x4c] sm:$0x4] %v9451
  %9468 = vst [vmem:[%s4 + $0x5c] sm:$0x4] %v9452
  %9469 = vst [vmem:[%s4 + $0x6c] sm:$0x4] %v9453
  %9470 = vst [vmem:[%s4 + $0x7c] sm:$0x4] %v9454
  %s9471 = scalar_lea.vmem %s0, 480
  %v9472 = vld [vmem:[%s9471] sm:$0xff]
  %v9473 = vld [vmem:[%s9471 + $0x8] sm:$0xff]
  %v9474 = vunpack.c.l.bf16 %v9472
  %v9475 = vunpack.c.h.bf16 %v9472
  %v9476 = vunpack.c.l.bf16 %v9473
  %v9477 = vunpack.c.h.bf16 %v9473
  %v9478 = vpack.c.bf16 %v9258, %v9258
  %v9479 = vld [vmem:[%s1] sm:$0xff]
  %v9480 = vld [vmem:[%s1 + $0x8] sm:$0xff]
  %v9481 = vld [vmem:[%s1 + $0x10] sm:$0xff]
  %v9482 = vld [vmem:[%s1 + $0x18] sm:$0xff]
  %v9483 = vld [vmem:[%s1 + $0x20] sm:$0xff]
  %v9484 = vld [vmem:[%s1 + $0x28] sm:$0xff]
  %v9485 = vld [vmem:[%s1 + $0x30] sm:$0xff]
  %v9486 = vld [vmem:[%s1 + $0x38] sm:$0xff]
  %v9487 = vld [vmem:[%s1 + $0x40] sm:$0xff]
  %v9488 = vld [vmem:[%s1 + $0x48] sm:$0xff]
  %v9489 = vld [vmem:[%s1 + $0x50] sm:$0xff]
  %v9490 = vld [vmem:[%s1 + $0x58] sm:$0xff]
  %v9491 = vld [vmem:[%s1 + $0x60] sm:$0xff]
  %v9492 = vld [vmem:[%s1 + $0x68] sm:$0xff]
  %v9493 = vld [vmem:[%s1 + $0x70] sm:$0xff]
  %v9494 = vld [vmem:[%s1 + $0x78] sm:$0xff]
  %v9495 = vld [vmem:[%s1 + $0x80] sm:$0xff]
  %v9496 = vld [vmem:[%s1 + $0x88] sm:$0xff]
  %v9497 = vld [vmem:[%s1 + $0x90] sm:$0xff]
  %v9498 = vld [vmem:[%s1 + $0x98] sm:$0xff]
  %v9499 = vld [vmem:[%s1 + $0xa0] sm:$0xff]
  %v9500 = vld [vmem:[%s1 + $0xa8] sm:$0xff]
  %v9501 = vld [vmem:[%s1 + $0xb0] sm:$0xff]
  %v9502 = vld [vmem:[%s1 + $0xb8] sm:$0xff]
  %v9503 = vld [vmem:[%s1 + $0xc0] sm:$0xff]
  %v9504 = vld [vmem:[%s1 + $0xc8] sm:$0xff]
  %v9505 = vld [vmem:[%s1 + $0xd0] sm:$0xff]
  %v9506 = vld [vmem:[%s1 + $0xd8] sm:$0xff]
  %v9507 = vld [vmem:[%s1 + $0xe0] sm:$0xff]
  %v9508 = vld [vmem:[%s1 + $0xe8] sm:$0xff]
  %v9509 = vld [vmem:[%s1 + $0xf0] sm:$0xff]
  %v9510 = vld [vmem:[%s1 + $0xf8] sm:$0xff]
  %v9543 = vunpack.c.l.b16 %v9479
  %v9544 = vunpack.c.h.b16 %v9479
  %v9545 = vunpack.c.l.b16 %v9480
  %v9546 = vunpack.c.h.b16 %v9480
  %v9547 = vunpack.c.l.b16 %v9481
  %v9548 = vunpack.c.h.b16 %v9481
  %v9549 = vunpack.c.l.b16 %v9482
  %v9550 = vunpack.c.h.b16 %v9482
  %v9551 = vunpack.c.l.b16 %v9483
  %v9552 = vunpack.c.h.b16 %v9483
  %v9553 = vunpack.c.l.b16 %v9484
  %v9554 = vunpack.c.h.b16 %v9484
  %v9555 = vunpack.c.l.b16 %v9485
  %v9556 = vunpack.c.h.b16 %v9485
  %v9557 = vunpack.c.l.b16 %v9486
  %v9558 = vunpack.c.h.b16 %v9486
  %v9559 = vunpack.c.l.b16 %v9487
  %v9560 = vunpack.c.h.b16 %v9487
  %v9561 = vunpack.c.l.b16 %v9488
  %v9562 = vunpack.c.h.b16 %v9488
  %v9563 = vunpack.c.l.b16 %v9489
  %v9564 = vunpack.c.h.b16 %v9489
  %v9565 = vunpack.c.l.b16 %v9490
  %v9566 = vunpack.c.h.b16 %v9490
  %v9567 = vunpack.c.l.b16 %v9491
  %v9568 = vunpack.c.h.b16 %v9491
  %v9569 = vunpack.c.l.b16 %v9492
  %v9570 = vunpack.c.h.b16 %v9492
  %v9571 = vunpack.c.l.b16 %v9493
  %v9572 = vunpack.c.h.b16 %v9493
  %v9573 = vunpack.c.l.b16 %v9494
  %v9574 = vunpack.c.h.b16 %v9494
  %v9575 = vunpack.c.l.b16 %v9495
  %v9576 = vunpack.c.h.b16 %v9495
  %v9577 = vunpack.c.l.b16 %v9496
  %v9578 = vunpack.c.h.b16 %v9496
  %v9579 = vunpack.c.l.b16 %v9497
  %v9580 = vunpack.c.h.b16 %v9497
  %v9581 = vunpack.c.l.b16 %v9498
  %v9582 = vunpack.c.h.b16 %v9498
  %v9583 = vunpack.c.l.b16 %v9499
  %v9584 = vunpack.c.h.b16 %v9499
  %v9585 = vunpack.c.l.b16 %v9500
  %v9586 = vunpack.c.h.b16 %v9500
  %v9587 = vunpack.c.l.b16 %v9501
  %v9588 = vunpack.c.h.b16 %v9501
  %v9589 = vunpack.c.l.b16 %v9502
  %v9590 = vunpack.c.h.b16 %v9502
  %v9591 = vunpack.c.l.b16 %v9503
  %v9592 = vunpack.c.h.b16 %v9503
  %v9593 = vunpack.c.l.b16 %v9504
  %v9594 = vunpack.c.h.b16 %v9504
  %v9595 = vunpack.c.l.b16 %v9505
  %v9596 = vunpack.c.h.b16 %v9505
  %v9597 = vunpack.c.l.b16 %v9506
  %v9598 = vunpack.c.h.b16 %v9506
  %v9599 = vunpack.c.l.b16 %v9507
  %v9600 = vunpack.c.h.b16 %v9507
  %v9601 = vunpack.c.l.b16 %v9508
  %v9602 = vunpack.c.h.b16 %v9508
  %v9603 = vunpack.c.l.b16 %v9509
  %v9604 = vunpack.c.h.b16 %v9509
  %v9605 = vunpack.c.l.b16 %v9510
  %v9606 = vunpack.c.h.b16 %v9510
  %v9607 = vpack.c.b16 %v9547, %v9543
  %v9608 = vpack.c.b16 %v9548, %v9544
  %v9609 = vpack.c.b16 %v9549, %v9545
  %v9610 = vpack.c.b16 %v9550, %v9546
  %v9611 = vpack.c.b16 %v9555, %v9551
  %v9612 = vpack.c.b16 %v9556, %v9552
  %v9613 = vpack.c.b16 %v9557, %v9553
  %v9614 = vpack.c.b16 %v9558, %v9554
  %v9615 = vpack.c.b16 %v9563, %v9559
  %v9616 = vpack.c.b16 %v9564, %v9560
  %v9617 = vpack.c.b16 %v9565, %v9561
  %v9618 = vpack.c.b16 %v9566, %v9562
  %v9619 = vpack.c.b16 %v9571, %v9567
  %v9620 = vpack.c.b16 %v9572, %v9568
  %v9621 = vpack.c.b16 %v9573, %v9569
  %v9622 = vpack.c.b16 %v9574, %v9570
  %v9623 = vpack.c.b16 %v9579, %v9575
  %v9624 = vpack.c.b16 %v9580, %v9576
  %v9625 = vpack.c.b16 %v9581, %v9577
  %v9626 = vpack.c.b16 %v9582, %v9578
  %v9627 = vpack.c.b16 %v9587, %v9583
  %v9628 = vpack.c.b16 %v9588, %v9584
  %v9629 = vpack.c.b16 %v9589, %v9585
  %v9630 = vpack.c.b16 %v9590, %v9586
  %v9631 = vpack.c.b16 %v9595, %v9591
  %v9632 = vpack.c.b16 %v9596, %v9592
  %v9633 = vpack.c.b16 %v9597, %v9593
  %v9634 = vpack.c.b16 %v9598, %v9594
  %v9635 = vpack.c.b16 %v9603, %v9599
  %v9636 = vpack.c.b16 %v9604, %v9600
  %v9637 = vpack.c.b16 %v9605, %v9601
  %v9638 = vpack.c.b16 %v9606, %v9602
  %9671 = vmatprep.subr.bf16.mxu0 %v9636
  %9672 = vmatpush1.bf16.msra.mxu0 %v9635
  %9673 = vmatprep.subr.bf16.mxu0 %v9632
  %9674 = vmatpush1.bf16.msra.mxu0 %v9631
  %9675 = vmatprep.subr.bf16.mxu0 %v9628
  %9676 = vmatpush1.bf16.msra.mxu0 %v9627
  %9677 = vmatprep.subr.bf16.mxu0 %v9624
  %9678 = vmatpush1.bf16.msra.mxu0 %v9623
  %9679 = vmatprep.subr.bf16.mxu0 %v9620
  %9680 = vmatpush1.bf16.msra.mxu0 %v9619
  %9681 = vmatprep.subr.bf16.mxu0 %v9616
  %9682 = vmatpush1.bf16.msra.mxu0 %v9615
  %9683 = vmatprep.subr.bf16.mxu0 %v9612
  %9684 = vmatpush1.bf16.msra.mxu0 %v9611
  %9685 = vmatprep.subr.bf16.mxu0 %v9608
  %9686 = vmatpush1.bf16.msra.mxu0 %v9607
  %9687 = vmatprep.subr.bf16.mxu0 0
  %9688 = vmatpush2.bf16.msra.mxu0 0
  %9689 = vmatprep.subr.bf16.mxu0 0
  %9690 = vmatpush2.bf16.msra.mxu0 0
  %9691 = vmatprep.subr.bf16.mxu0 0
  %9692 = vmatpush2.bf16.msra.mxu0 0
  %9693 = vmatprep.subr.bf16.mxu0 0
  %9694 = vmatpush2.bf16.msra.mxu0 0
  %9695 = vmatprep.subr.bf16.mxu0 0
  %9696 = vmatpush2.bf16.msra.mxu0 0
  %9697 = vmatprep.subr.bf16.mxu0 0
  %9698 = vmatpush2.bf16.msra.mxu0 0
  %9699 = vmatprep.subr.bf16.mxu0 0
  %9700 = vmatpush2.bf16.msra.mxu0 0
  %9701 = vmatprep.subr.bf16.mxu0 0
  %9702 = vmatpush2.bf16.msra.mxu0 0
  %9703 = vmatprep.mubr.bf16.mxu0 0
  %9704 = vmatmul.mubr.bf16.gmra.mxu0 %v9478
  %v9705 = vpop.f32.mrf.mxu0
  %v9706 = vadd.f32 0.0, %v9705
  %v9707 = vpop.f32.mrf.mxu0
  %v9708 = vadd.f32 0.0, %v9707
  %v9709 = vpop.f32.mrf.mxu0
  %v9710 = vpop.f32.mrf.mxu0
  %9711 = vdwg.mxu0
  %9712 = vmatprep.subr.bf16.mxu0 %v9638
  %9713 = vmatpush1.bf16.msra.mxu0 %v9637
  %9714 = vmatprep.subr.bf16.mxu0 %v9634
  %9715 = vmatpush1.bf16.msra.mxu0 %v9633
  %9716 = vmatprep.subr.bf16.mxu0 %v9630
  %9717 = vmatpush1.bf16.msra.mxu0 %v9629
  %9718 = vmatprep.subr.bf16.mxu0 %v9626
  %9719 = vmatpush1.bf16.msra.mxu0 %v9625
  %9720 = vmatprep.subr.bf16.mxu0 %v9622
  %9721 = vmatpush1.bf16.msra.mxu0 %v9621
  %9722 = vmatprep.subr.bf16.mxu0 %v9618
  %9723 = vmatpush1.bf16.msra.mxu0 %v9617
  %9724 = vmatprep.subr.bf16.mxu0 %v9614
  %9725 = vmatpush1.bf16.msra.mxu0 %v9613
  %9726 = vmatprep.subr.bf16.mxu0 %v9610
  %9727 = vmatpush1.bf16.msra.mxu0 %v9609
  %9728 = vmatprep.subr.bf16.mxu0 0
  %9729 = vmatpush2.bf16.msra.mxu0 0
  %9730 = vmatprep.subr.bf16.mxu0 0
  %9731 = vmatpush2.bf16.msra.mxu0 0
  %9732 = vmatprep.subr.bf16.mxu0 0
  %9733 = vmatpush2.bf16.msra.mxu0 0
  %9734 = vmatprep.subr.bf16.mxu0 0
  %9735 = vmatpush2.bf16.msra.mxu0 0
  %9736 = vmatprep.subr.bf16.mxu0 0
  %9737 = vmatpush2.bf16.msra.mxu0 0
  %9738 = vmatprep.subr.bf16.mxu0 0
  %9739 = vmatpush2.bf16.msra.mxu0 0
  %9740 = vmatprep.subr.bf16.mxu0 0
  %9741 = vmatpush2.bf16.msra.mxu0 0
  %9742 = vmatprep.subr.bf16.mxu0 0
  %9743 = vmatpush2.bf16.msra.mxu0 0
  %9744 = vmatprep.mubr.bf16.mxu0 0
  %9745 = vmatmul.mubr.bf16.gmra.mxu0 %v9478
  %v9746 = vpop.f32.mrf.mxu0
  %v9747 = vadd.f32 0.0, %v9746
  %v9748 = vpop.f32.mrf.mxu0
  %v9749 = vadd.f32 0.0, %v9748
  %v9750 = vpop.f32.mrf.mxu0
  %v9751 = vpop.f32.mrf.mxu0
  %9752 = vdwg.mxu0
  %v9753 = vadd.f32 %v9474, %v9706
  %v9754 = vadd.f32 %v9475, %v9708
  %v9755 = vadd.f32 %v9476, %v9747
  %v9756 = vadd.f32 %v9477, %v9749
  %v9757 = vxor.u32 %v9753, 2147483648
  %v9758 = vmul.f32 %v9757, 1.442695
  %v9759 = vpow.pop %v9758
  %v9760 = vadd.f32 %v9759, 1.0
  %v9761 = vrcp.pop %v9760
  %v9762 = vmul.f32 1.0, %v9761
  %v9763 = vxor.u32 %v9754, 2147483648
  %v9764 = vmul.f32 %v9763, 1.442695
  %v9765 = vpow.pop %v9764
  %v9766 = vadd.f32 %v9765, 1.0
  %v9767 = vrcp.pop %v9766
  %v9768 = vmul.f32 1.0, %v9767
  %v9769 = vtanh.pop %v9755
  %v9770 = vxor.u32 %v9756, 2147483648
  %v9771 = vmul.f32 %v9770, 1.442695
  %v9772 = vpow.pop %v9771
  %v9773 = vadd.f32 %v9772, 1.0
  %v9774 = vrcp.pop %v9773
  %v9775 = vmul.f32 1.0, %v9774
  %v9776 = vmul.f32 %v9768, %v9256
  %v9777 = vmul.f32 %v9762, %v9769
  %v9778 = vadd.f32 %v9776, %v9777
  %v9779 = vtanh.pop %v9778
  %v9780 = vmul.f32 %v9775, %v9779
  %s9781 = scalar_lea.vmem %s0, 496
  %v9782 = vld [vmem:[%s9781] sm:$0xff]
  %v9783 = vld [vmem:[%s9781 + $0x8] sm:$0xff]
  %v9784 = vunpack.c.l.bf16 %v9782
  %v9785 = vunpack.c.h.bf16 %v9782
  %v9786 = vunpack.c.l.bf16 %v9783
  %v9787 = vunpack.c.h.bf16 %v9783
  %v9788 = vpack.c.bf16 %v9780, %v9780
  %9789 = vmatprep.subr.bf16.mxu0 %v9636
  %9790 = vmatpush1.bf16.msra.mxu0 %v9635
  %9791 = vmatprep.subr.bf16.mxu0 %v9632
  %9792 = vmatpush1.bf16.msra.mxu0 %v9631
  %9793 = vmatprep.subr.bf16.mxu0 %v9628
  %9794 = vmatpush1.bf16.msra.mxu0 %v9627
  %9795 = vmatprep.subr.bf16.mxu0 %v9624
  %9796 = vmatpush1.bf16.msra.mxu0 %v9623
  %9797 = vmatprep.subr.bf16.mxu0 %v9620
  %9798 = vmatpush1.bf16.msra.mxu0 %v9619
  %9799 = vmatprep.subr.bf16.mxu0 %v9616
  %9800 = vmatpush1.bf16.msra.mxu0 %v9615
  %9801 = vmatprep.subr.bf16.mxu0 %v9612
  %9802 = vmatpush1.bf16.msra.mxu0 %v9611
  %9803 = vmatprep.subr.bf16.mxu0 %v9608
  %9804 = vmatpush1.bf16.msra.mxu0 %v9607
  %9805 = vmatprep.subr.bf16.mxu0 0
  %9806 = vmatpush2.bf16.msra.mxu0 0
  %9807 = vmatprep.subr.bf16.mxu0 0
  %9808 = vmatpush2.bf16.msra.mxu0 0
  %9809 = vmatprep.subr.bf16.mxu0 0
  %9810 = vmatpush2.bf16.msra.mxu0 0
  %9811 = vmatprep.subr.bf16.mxu0 0
  %9812 = vmatpush2.bf16.msra.mxu0 0
  %9813 = vmatprep.subr.bf16.mxu0 0
  %9814 = vmatpush2.bf16.msra.mxu0 0
  %9815 = vmatprep.subr.bf16.mxu0 0
  %9816 = vmatpush2.bf16.msra.mxu0 0
  %9817 = vmatprep.subr.bf16.mxu0 0
  %9818 = vmatpush2.bf16.msra.mxu0 0
  %9819 = vmatprep.subr.bf16.mxu0 0
  %9820 = vmatpush2.bf16.msra.mxu0 0
  %9821 = vmatprep.mubr.bf16.mxu0 0
  %9822 = vmatmul.mubr.bf16.gmra.mxu0 %v9788
  %v9823 = vpop.f32.mrf.mxu0
  %v9824 = vadd.f32 0.0, %v9823
  %v9825 = vpop.f32.mrf.mxu0
  %v9826 = vadd.f32 0.0, %v9825
  %v9827 = vpop.f32.mrf.mxu0
  %v9828 = vpop.f32.mrf.mxu0
  %9829 = vdwg.mxu0
  %9830 = vmatprep.subr.bf16.mxu0 %v9638
  %9831 = vmatpush1.bf16.msra.mxu0 %v9637
  %9832 = vmatprep.subr.bf16.mxu0 %v9634
  %9833 = vmatpush1.bf16.msra.mxu0 %v9633
  %9834 = vmatprep.subr.bf16.mxu0 %v9630
  %9835 = vmatpush1.bf16.msra.mxu0 %v9629
  %9836 = vmatprep.subr.bf16.mxu0 %v9626
  %9837 = vmatpush1.bf16.msra.mxu0 %v9625
  %9838 = vmatprep.subr.bf16.mxu0 %v9622
  %9839 = vmatpush1.bf16.msra.mxu0 %v9621
  %9840 = vmatprep.subr.bf16.mxu0 %v9618
  %9841 = vmatpush1.bf16.msra.mxu0 %v9617
  %9842 = vmatprep.subr.bf16.mxu0 %v9614
  %9843 = vmatpush1.bf16.msra.mxu0 %v9613
  %9844 = vmatprep.subr.bf16.mxu0 %v9610
  %9845 = vmatpush1.bf16.msra.mxu0 %v9609
  %9846 = vmatprep.subr.bf16.mxu0 0
  %9847 = vmatpush2.bf16.msra.mxu0 0
  %9848 = vmatprep.subr.bf16.mxu0 0
  %9849 = vmatpush2.bf16.msra.mxu0 0
  %9850 = vmatprep.subr.bf16.mxu0 0
  %9851 = vmatpush2.bf16.msra.mxu0 0
  %9852 = vmatprep.subr.bf16.mxu0 0
  %9853 = vmatpush2.bf16.msra.mxu0 0
  %9854 = vmatprep.subr.bf16.mxu0 0
  %9855 = vmatpush2.bf16.msra.mxu0 0
  %9856 = vmatprep.subr.bf16.mxu0 0
  %9857 = vmatpush2.bf16.msra.mxu0 0
  %9858 = vmatprep.subr.bf16.mxu0 0
  %9859 = vmatpush2.bf16.msra.mxu0 0
  %9860 = vmatprep.subr.bf16.mxu0 0
  %9861 = vmatpush2.bf16.msra.mxu0 0
  %9862 = vmatprep.mubr.bf16.mxu0 0
  %9863 = vmatmul.mubr.bf16.gmra.mxu0 %v9788
  %v9864 = vpop.f32.mrf.mxu0
  %v9865 = vadd.f32 0.0, %v9864
  %v9866 = vpop.f32.mrf.mxu0
  %v9867 = vadd.f32 0.0, %v9866
  %v9868 = vpop.f32.mrf.mxu0
  %v9869 = vpop.f32.mrf.mxu0
  %9870 = vdwg.mxu0
  %v9871 = vadd.f32 %v9784, %v9824
  %v9872 = vadd.f32 %v9785, %v9826
  %v9873 = vadd.f32 %v9786, %v9865
  %v9874 = vadd.f32 %v9787, %v9867
  %v9875 = vxor.u32 %v9871, 2147483648
  %v9876 = vmul.f32 %v9875, 1.442695
  %v9877 = vpow.pop %v9876
  %v9878 = vadd.f32 %v9877, 1.0
  %v9879 = vrcp.pop %v9878
  %v9880 = vmul.f32 1.0, %v9879
  %v9881 = vxor.u32 %v9872, 2147483648
  %v9882 = vmul.f32 %v9881, 1.442695
  %v9883 = vpow.pop %v9882
  %v9884 = vadd.f32 %v9883, 1.0
  %v9885 = vrcp.pop %v9884
  %v9886 = vmul.f32 1.0, %v9885
  %v9887 = vtanh.pop %v9873
  %v9888 = vxor.u32 %v9874, 2147483648
  %v9889 = vmul.f32 %v9888, 1.442695
  %v9890 = vpow.pop %v9889
  %v9891 = vadd.f32 %v9890, 1.0
  %v9892 = vrcp.pop %v9891
  %v9893 = vmul.f32 1.0, %v9892
  %v9894 = vmul.f32 %v9886, %v9778
  %v9895 = vmul.f32 %v9880, %v9887
  %v9896 = vadd.f32 %v9894, %v9895
  %v9897 = vtanh.pop %v9896
  %v9898 = vmul.f32 %v9893, %v9897
  %v9900 = vcombine.high %v9780, %v9780
  %v9902 = vunpack.c.l.s4 1966171168
  %v9903 = vunpack.c.0.s8 %v9902
  %v9904 = vlaneseq
  %v9905 = vshrl.u32 %v9904, 7
  %v9906 = vsub.s32 %v9903, %v9905
  %v9907 = vrot.slane %v9780, %v9906
  %v9909 = vunpack.c.l.s4 1966171168
  %v9910 = vunpack.c.0.s8 %v9909
  %v9911 = vlaneseq
  %v9912 = vshrl.u32 %v9911, 7
  %v9913 = vsub.s32 %v9910, %v9912
  %v9914 = vrot.slane %v9900, %v9913
  %v9915 = vcombine.high %v9907, %v9907
  %v9916 = vcombine.high %v9914, %v9914
  %v9918 = vunpack.c.l.s4 1966171168
  %v9919 = vunpack.c.0.s8 %v9918
  %v9920 = vlaneseq
  %v9921 = vshrl.u32 %v9920, 7
  %v9922 = vsub.s32 %v9919, %v9921
  %v9923 = vrot.slane %v9907, %v9922
  %v9925 = vunpack.c.l.s4 1966171168
  %v9926 = vunpack.c.0.s8 %v9925
  %v9927 = vlaneseq
  %v9928 = vshrl.u32 %v9927, 7
  %v9929 = vsub.s32 %v9926, %v9928
  %v9930 = vrot.slane %v9914, %v9929
  %v9932 = vunpack.c.l.s4 1966171168
  %v9933 = vunpack.c.0.s8 %v9932
  %v9934 = vlaneseq
  %v9935 = vshrl.u32 %v9934, 7
  %v9936 = vsub.s32 %v9933, %v9935
  %v9937 = vrot.slane %v9915, %v9936
  %v9939 = vunpack.c.l.s4 1966171168
  %v9940 = vunpack.c.0.s8 %v9939
  %v9941 = vlaneseq
  %v9942 = vshrl.u32 %v9941, 7
  %v9943 = vsub.s32 %v9940, %v9942
  %v9944 = vrot.slane %v9916, %v9943
  %v9945 = vcombine.high %v9923, %v9923
  %v9946 = vcombine.high %v9930, %v9930
  %v9947 = vcombine.high %v9937, %v9937
  %v9948 = vcombine.high %v9944, %v9944
  %v9958 = vcombine.high %v9898, %v9898
  %v9960 = vunpack.c.l.s4 1966171168
  %v9961 = vunpack.c.0.s8 %v9960
  %v9962 = vlaneseq
  %v9963 = vshrl.u32 %v9962, 7
  %v9964 = vsub.s32 %v9961, %v9963
  %v9965 = vrot.slane %v9898, %v9964
  %v9967 = vunpack.c.l.s4 1966171168
  %v9968 = vunpack.c.0.s8 %v9967
  %v9969 = vlaneseq
  %v9970 = vshrl.u32 %v9969, 7
  %v9971 = vsub.s32 %v9968, %v9970
  %v9972 = vrot.slane %v9958, %v9971
  %v9973 = vcombine.high %v9965, %v9965
  %v9974 = vcombine.high %v9972, %v9972
  %v9976 = vunpack.c.l.s4 1966171168
  %v9977 = vunpack.c.0.s8 %v9976
  %v9978 = vlaneseq
  %v9979 = vshrl.u32 %v9978, 7
  %v9980 = vsub.s32 %v9977, %v9979
  %v9981 = vrot.slane %v9965, %v9980
  %v9983 = vunpack.c.l.s4 1966171168
  %v9984 = vunpack.c.0.s8 %v9983
  %v9985 = vlaneseq
  %v9986 = vshrl.u32 %v9985, 7
  %v9987 = vsub.s32 %v9984, %v9986
  %v9988 = vrot.slane %v9972, %v9987
  %v9990 = vunpack.c.l.s4 1966171168
  %v9991 = vunpack.c.0.s8 %v9990
  %v9992 = vlaneseq
  %v9993 = vshrl.u32 %v9992, 7
  %v9994 = vsub.s32 %v9991, %v9993
  %v9995 = vrot.slane %v9973, %v9994
  %v9997 = vunpack.c.l.s4 1966171168
  %v9998 = vunpack.c.0.s8 %v9997
  %v9999 = vlaneseq
  %v10000 = vshrl.u32 %v9999, 7
  %v10001 = vsub.s32 %v9998, %v10000
  %v10002 = vrot.slane %v9974, %v10001
  %v10003 = vcombine.high %v9981, %v9981
  %v10004 = vcombine.high %v9988, %v9988
  %v10005 = vcombine.high %v9995, %v9995
  %v10006 = vcombine.high %v10002, %v10002
  %v10007 = vlaneseq
  %v10008 = vshrl.u32 %v10007, 7
  %v10009 = vsub.s32 0, %v10008
  %v10010 = vrot.slane %v9981, %v10009
  %v10011 = vlaneseq
  %v10012 = vshrl.u32 %v10011, 7
  %v10013 = vsub.s32 0, %v10012
  %v10014 = vrot.slane %v9995, %v10013
  %v10015 = vlaneseq
  %v10016 = vshrl.u32 %v10015, 7
  %v10017 = vsub.s32 0, %v10016
  %v10018 = vrot.slane %v10003, %v10017
  %v10019 = vlaneseq
  %v10020 = vshrl.u32 %v10019, 7
  %v10021 = vsub.s32 0, %v10020
  %v10022 = vrot.slane %v10005, %v10021
  %v10023 = vlaneseq
  %v10024 = vshrl.u32 %v10023, 7
  %v10025 = vsub.s32 0, %v10024
  %v10026 = vrot.slane %v9988, %v10025
  %v10027 = vlaneseq
  %v10028 = vshrl.u32 %v10027, 7
  %v10029 = vsub.s32 0, %v10028
  %v10030 = vrot.slane %v10002, %v10029
  %v10031 = vlaneseq
  %v10032 = vshrl.u32 %v10031, 7
  %v10033 = vsub.s32 0, %v10032
  %v10034 = vrot.slane %v10004, %v10033
  %v10035 = vlaneseq
  %v10036 = vshrl.u32 %v10035, 7
  %v10037 = vsub.s32 0, %v10036
  %v10038 = vrot.slane %v10006, %v10037
  %v10047 = vsel %vm606, %v9923, %v10010
  %v10048 = vsel %vm606, %v9937, %v10014
  %v10049 = vsel %vm606, %v9945, %v10018
  %v10050 = vsel %vm606, %v9947, %v10022
  %v10051 = vsel %vm606, %v9930, %v10026
  %v10052 = vsel %vm606, %v9944, %v10030
  %v10053 = vsel %vm606, %v9946, %v10034
  %v10054 = vsel %vm606, %v9948, %v10038
  %v10055 = vpack.c.bf16 %v10047, %v10047
  %v10056 = vpack.c.bf16 %v10048, %v10048
  %v10057 = vpack.c.bf16 %v10049, %v10049
  %v10058 = vpack.c.bf16 %v10050, %v10050
  %v10059 = vpack.c.bf16 %v10051, %v10051
  %v10060 = vpack.c.bf16 %v10052, %v10052
  %v10061 = vpack.c.bf16 %v10053, %v10053
  %v10062 = vpack.c.bf16 %v10054, %v10054
  %v10071 = vunpack.c.l.b16 %v10055
  %v10072 = vunpack.c.l.b16 %v10056
  %v10073 = vunpack.c.l.b16 %v10057
  %v10074 = vunpack.c.l.b16 %v10058
  %v10075 = vunpack.c.l.b16 %v10059
  %v10076 = vunpack.c.l.b16 %v10060
  %v10077 = vunpack.c.l.b16 %v10061
  %v10078 = vunpack.c.l.b16 %v10062
  %v10079 = vpack.c.b16 %v10071, %v10071
  %v10080 = vpack.c.b16 %v10072, %v10072
  %v10081 = vpack.c.b16 %v10073, %v10073
  %v10082 = vpack.c.b16 %v10074, %v10074
  %v10083 = vpack.c.b16 %v10075, %v10075
  %v10084 = vpack.c.b16 %v10076, %v10076
  %v10085 = vpack.c.b16 %v10077, %v10077
  %v10086 = vpack.c.b16 %v10078, %v10078
  %v10087 = vrot.slane %v10079, 5
  %v10088 = vrot.slane %v10080, 5
  %v10089 = vrot.slane %v10081, 5
  %v10090 = vrot.slane %v10082, 5
  %v10091 = vrot.slane %v10083, 5
  %v10092 = vrot.slane %v10084, 5
  %v10093 = vrot.slane %v10085, 5
  %v10094 = vrot.slane %v10086, 5
  %10103 = vst [vmem:[%s4 + $0xc] sm:$0x8] %v10087
  %10104 = vst [vmem:[%s4 + $0x1c] sm:$0x8] %v10088
  %10105 = vst [vmem:[%s4 + $0x2c] sm:$0x8] %v10089
  %10106 = vst [vmem:[%s4 + $0x3c] sm:$0x8] %v10090
  %10107 = vst [vmem:[%s4 + $0x4c] sm:$0x8] %v10091
  %10108 = vst [vmem:[%s4 + $0x5c] sm:$0x8] %v10092
  %10109 = vst [vmem:[%s4 + $0x6c] sm:$0x8] %v10093
  %10110 = vst [vmem:[%s4 + $0x7c] sm:$0x8] %v10094
  %10111 = vst [vmem:[#allocation2] sm:$0xff] %v9898
  %10112 = vst [vmem:[#allocation3] sm:$0xff] %v9896
  %10113 = vst [vmem:[%s5] sm:$0xff] %v9898
  %10114 = vst [vmem:[%s6] sm:$0xff] %v9896
  // Predicated region
  $region22: #{_lambda_.4} parent=0 // pred_check
    _
  $region23: #{_lambda_.4} parent=0 // pred_check_branch
    %10116 = sbr.rel (0) target = $region25
  $region24: #{_lambda_.4} parent=0 // pred_region
    _
  $region25: #{_lambda_.4} parent=0 // pred_fallthru
    _
  // Predicated region
  $region26: #{_lambda_.4} parent=0 // pred_check
    _
  $region27: #{_lambda_.4} parent=0 // pred_check_branch
    %10118 = sbr.rel (0) target = $region29
  $region28: #{_lambda_.4} parent=0 // pred_region
    _
  $region29: #{_lambda_.4} parent=0 // pred_fallthru
    _
  // Predicated region
  $region30: #{_lambda_.4} parent=0 // pred_check
    _
  $region31: #{_lambda_.4} parent=0 // pred_check_branch
    %10120 = sbr.rel (0) target = $region33
  $region32: #{_lambda_.4} parent=0 // pred_region
    _
  $region33: #{_lambda_.4} parent=0 // pred_fallthru
    _
  // Predicated region
  $region34: #{_lambda_.4} parent=0 // pred_check
    _
  $region35: #{_lambda_.4} parent=0 // pred_check_branch
    %10122 = sbr.rel (0) target = $region37
  $region36: #{_lambda_.4} parent=0 // pred_region
    _
  $region37: #{_lambda_.4} parent=0 // pred_fallthru
    _
  // Predicated region
  $region38: #{_lambda_.4} parent=0 // pred_check
    _
  $region39: #{_lambda_.4} parent=0 // pred_check_branch
    %10124 = sbr.rel (0) target = $region41
  $region40: #{_lambda_.4} parent=0 // pred_region
    _
  $region41: #{_lambda_.4} parent=0 // pred_fallthru
    _
  // Predicated region
  $region42: #{_lambda_.4} parent=0 // pred_check
    _
  $region43: #{_lambda_.4} parent=0 // pred_check_branch
    %10126 = sbr.rel (0) target = $region45
  $region44: #{_lambda_.4} parent=0 // pred_region
    _
  $region45: #{_lambda_.4} parent=0 // pred_fallthru
    _

</llo_original>
